<compile_context>
chip_gen: v6e
topology: v6e:2x2x1
jax: 0.10.0
libtpu: 0.0.40
codegen_flags: <defaults>
</compile_context>

<pallas_src>
import functools

import jax
import jax.numpy as jnp
from jax.experimental import pallas as pl
from jax.experimental.pallas import tpu as pltpu

_BN_EPS = 1e-5
_MXU_DTYPE = jnp.bfloat16                 # MXU operand dtype (bf16 native on v5e/v6e/v7x)
_VMEM_LIMIT_BYTES = 48 * 1024 * 1024      # <= v7x 64 MiB physical, leaves headroom
_DEFAULT_BLOCK_BYTES = 2 * 1024 * 1024    # per-stream block target (double-buffered)


# ---------------------------------------------------------------------------
# tiling helpers (budget-driven, per-generation constant above)
# ---------------------------------------------------------------------------
def _divisor_multiple(total, multiple, cap):
    """Largest d <= cap with d % multiple == 0 and total % d == 0 (else None)."""
    best = None
    d = multiple
    while d <= min(total, cap):
        if total % d == 0:
            best = d
        d += multiple
    return best


def _row_tile(rows, row_bytes, block_bytes):
    """Row tile for the folded (rows, W*C) kernels: multiple of 8 sublanes,
    exact divisor of rows (keeps BN stats exact: no padded rows)."""
    target = max(8, block_bytes // max(row_bytes, 1))
    d = _divisor_multiple(rows, 8, target)
    return d if d is not None else rows


def _h_tile(h, row_bytes, block_bytes):
    """H tile for the 3x3 kernel (H sits on an untiled block axis)."""
    target = max(1, block_bytes // max(row_bytes, 1))
    best = 1
    for d in range(1, h + 1):
        if h % d == 0 and d <= target:
            best = d
    return best


def _bn_scale_shift(stats, count, gamma, beta):
    """stats rows = [sum, sum_of_squares] (already reduced over all tiles).

    Training-mode BatchNorm: biased variance, eps=1e-5.  Single-pass variance
    (E[x^2]-mean^2) is clamped at 0 for numerical safety.
    """
    mean = stats[0] / count
    var = jnp.maximum(stats[1] / count - mean * mean, 0.0)
    scale = gamma * jax.lax.rsqrt(var + _BN_EPS)
    shift = beta - mean * scale
    return (scale.reshape(1, -1).astype(jnp.float32),
            shift.reshape(1, -1).astype(jnp.float32))


# ---------------------------------------------------------------------------
# in-kernel fold/unfold between the lane-dense HBM layout (R, W*C) and the
# channel-minor compute layout (W*R, C).  Only static lane slices and aligned
# concatenates (no minor-dim reshapes), so it lowers robustly on Mosaic.
# ---------------------------------------------------------------------------
def _unfold_wc(x, W, C):
    # (R, W*C) -> (W*R, C); row order is (w, r).
    return jnp.concatenate([x[:, w * C:(w + 1) * C] for w in range(W)], axis=0)


def _fold_wc(y, W, C):
    # inverse of _unfold_wc: (W*R, C) -> (R, W*C)
    R = y.shape[0] // W
    return jnp.concatenate([y[w * R:(w + 1) * R, :] for w in range(W)], axis=1)


# ---------------------------------------------------------------------------
# kernels
# ---------------------------------------------------------------------------
def _conv1x1_stats_kernel(x_ref, w_ref, y_ref, stats_ref, *, W, Cin, Cout):
    # 1x1 conv over a lane-dense (TR, W*Cin) tile + per-tile BN-stat partials.
    xcm = _unfold_wc(x_ref[...], W, Cin)                       # (W*TR, Cin) f32
    y = jnp.dot(xcm.astype(_MXU_DTYPE), w_ref[...],
                preferred_element_type=jnp.float32)            # (W*TR, Cout) f32
    y_ref[...] = _fold_wc(y, W, Cout).astype(y_ref.dtype)      # lane-dense store
    stats_ref[0:1, 0:1, :] = jnp.sum(y, axis=0, keepdims=True)[None]
    stats_ref[0:1, 1:2, :] = jnp.sum(y * y, axis=0, keepdims=True)[None]


def _bn_relu_conv1x1_stats_kernel(x_ref, scale_ref, shift_ref, w_ref,
                                  y_ref, stats_ref, *, W, Cin, Cout):
    # Previous layer's BN+ReLU fused into this 1x1 conv's input stage.
    xcm = _unfold_wc(x_ref[...], W, Cin)                       # (W*TR, Cin) f32
    h = jnp.maximum(xcm * scale_ref[...] + shift_ref[...], 0.0)
    y = jnp.dot(h.astype(_MXU_DTYPE), w_ref[...],
                preferred_element_type=jnp.float32)            # (W*TR, Cout) f32
    y_ref[...] = _fold_wc(y, W, Cout).astype(y_ref.dtype)
    stats_ref[0:1, 0:1, :] = jnp.sum(y, axis=0, keepdims=True)[None]
    stats_ref[0:1, 1:2, :] = jnp.sum(y * y, axis=0, keepdims=True)[None]


def _bn_relu_conv3x3_stats_kernel(xm_ref, xt_ref, xb_ref, scale_ref, shift_ref,
                                  w_ref, y_ref, stats_ref):
    # grid = (N, H // TH). Block = 1 batch element x TH rows x full W x C1.
    i = pl.program_id(1)
    nrt = pl.num_programs(1)
    _, TH, W, C1 = xm_ref.shape
    C2 = y_ref.shape[3]

    scale = scale_ref[...].reshape(1, 1, C1)
    shift = shift_ref[...].reshape(1, 1, C1)

    def bn_relu(v):                 # BN1 + ReLU fused into conv2's input stage
        return jnp.maximum(v * scale + shift, 0.0)

    main = bn_relu(xm_ref[...].reshape(TH, W, C1))
    top = bn_relu(xt_ref[...].reshape(1, W, C1))
    bot = bn_relu(xb_ref[...].reshape(1, W, C1))
    # Halo rows come from neighbouring row tiles (clamped index_map); zero them
    # at the image border to realize the conv's zero padding in H.
    top = jnp.where(i > 0, top, jnp.zeros_like(top))
    bot = jnp.where(i < nrt - 1, bot, jnp.zeros_like(bot))

    # H halo on the *untiled* leading axis: trivial concat + static slices.
    xfull = jnp.concatenate([top, main, bot], axis=0)          # (TH+2, W, C1)

    # W +/-1 shifts via XLU rolls + iota edge masks: realizes the conv's zero
    # padding in W without a VMEM scratch round trip (scratch-free im2col).
    wpos = jax.lax.broadcasted_iota(jnp.int32, xfull.shape, 1)
    west = jnp.where(wpos >= 1, pltpu.roll(xfull, 1, axis=1), 0.0)        # x[.., w-1, :]
    east = jnp.where(wpos < W - 1, pltpu.roll(xfull, W - 1, axis=1), 0.0)  # x[.., w+1, :]
    cols = (west, xfull, east)                                 # kx = 0, 1, 2

    # im2col: single MXU matmul with K = 9*C1; tap order matches the HWIO
    # flattening of the weights ((ky*3 + kx)*C1 + c).
    slab = jnp.concatenate(
        [cols[kx][ky:ky + TH] for ky in range(3) for kx in range(3)], axis=-1)
    y = jnp.dot(slab.reshape(TH * W, 9 * C1).astype(_MXU_DTYPE), w_ref[...],
                preferred_element_type=jnp.float32)            # (TH*W, C2)

    # TODO(synk): lane-dense (1, TH, W*C2) store needs a minor-dim relayout of
    # the h-major matmul rows; kept channel-minor here.
    y_ref[...] = y.reshape(1, TH, W, C2).astype(y_ref.dtype)
    stats_ref[0:1, 0:1, :] = jnp.sum(y, axis=0, keepdims=True)[None]
    stats_ref[0:1, 1:2, :] = jnp.sum(y * y, axis=0, keepdims=True)[None]


def _bn_scatteradd_relu_kernel(y_ref, x_ref, scale_ref, shift_ref, s_ref, o_ref,
                               *, W, Cin, Cout):
    # bn3 + out.index_add_(1, indices, identity) + relu, all in one tiled pass.
    ycm = _unfold_wc(y_ref[...], W, Cout)                      # (W*TR, Cout)
    xcm = _unfold_wc(x_ref[...], W, Cin)                       # (W*TR, Cin)
    out = ycm * scale_ref[...] + shift_ref[...]
    # identity add kept in f32 (exact residual path; handles arbitrary indices)
    out = out + jnp.dot(xcm, s_ref[...], preferred_element_type=jnp.float32)
    o_ref[...] = _fold_wc(jnp.maximum(out, 0.0), W, Cout).astype(o_ref.dtype)


# ---------------------------------------------------------------------------
# pallas_call wrappers
# ---------------------------------------------------------------------------
def conv1x1_stats(x_rows, w, W, block_bytes):
    rows, wcin = x_rows.shape
    Cin = wcin // W
    Cout = w.shape[1]
    row_bytes = W * (Cin + Cout) * 4 * 2
    TR = _row_tile(rows, row_bytes, block_bytes)
    g = rows // TR
    kern = functools.partial(_conv1x1_stats_kernel, W=W, Cin=Cin, Cout=Cout)
    return pl.pallas_call(
        kern,
        out_shape=(jax.ShapeDtypeStruct((rows, W * Cout), jnp.float32),
                   jax.ShapeDtypeStruct((g, 2, Cout), jnp.float32)),
        grid=(g,),
        in_specs=[pl.BlockSpec((TR, W * Cin), lambda i: (i, 0)),
                  pl.BlockSpec((Cin, Cout), lambda i: (0, 0))],       # resident weights
        out_specs=(pl.BlockSpec((TR, W * Cout), lambda i: (i, 0)),
                   pl.BlockSpec((1, 2, Cout), lambda i: (i, 0, 0))),  # per-tile partials
        compiler_params=pltpu.CompilerParams(
            dimension_semantics=("parallel",),
            vmem_limit_bytes=_VMEM_LIMIT_BYTES),
    )(x_rows, w)


def bn_relu_conv1x1_stats(x_rows, scale, shift, w, W, block_bytes):
    rows, wcin = x_rows.shape
    Cin = wcin // W
    Cout = w.shape[1]
    row_bytes = W * (Cin + Cout) * 4 * 2
    TR = _row_tile(rows, row_bytes, block_bytes)
    g = rows // TR
    kern = functools.partial(_bn_relu_conv1x1_stats_kernel, W=W, Cin=Cin, Cout=Cout)
    return pl.pallas_call(
        kern,
        out_shape=(jax.ShapeDtypeStruct((rows, W * Cout), jnp.float32),
                   jax.ShapeDtypeStruct((g, 2, Cout), jnp.float32)),
        grid=(g,),
        in_specs=[pl.BlockSpec((TR, W * Cin), lambda i: (i, 0)),
                  pl.BlockSpec((1, Cin), lambda i: (0, 0)),
                  pl.BlockSpec((1, Cin), lambda i: (0, 0)),
                  pl.BlockSpec((Cin, Cout), lambda i: (0, 0))],
        out_specs=(pl.BlockSpec((TR, W * Cout), lambda i: (i, 0)),
                   pl.BlockSpec((1, 2, Cout), lambda i: (i, 0, 0))),
        compiler_params=pltpu.CompilerParams(
            dimension_semantics=("parallel",),
            vmem_limit_bytes=_VMEM_LIMIT_BYTES),
    )(x_rows, scale, shift, w)


def bn_relu_conv3x3_stats(x4d, scale, shift, w_flat, cout, block_bytes):
    N, H, W, Cin = x4d.shape
    row_bytes = W * (Cin + cout) * 4 * 2 + W * 9 * Cin * 4
    TH = _h_tile(H, row_bytes, block_bytes)
    gh = H // TH

    def main_map(n, i):
        return (n, i, 0, 0)

    def top_map(n, i):          # 1-row halo above (block dim 1 => row index)
        return (n, jnp.maximum(i * TH - 1, 0), 0, 0)

    def bot_map(n, i):          # 1-row halo below
        return (n, jnp.minimum(i * TH + TH, H - 1), 0, 0)

    def const2(n, i):
        return (0, 0)

    def stats_map(n, i):
        return (n * gh + i, 0, 0)

    return pl.pallas_call(
        _bn_relu_conv3x3_stats_kernel,
        out_shape=(jax.ShapeDtypeStruct((N, H, W, cout), jnp.float32),
                   jax.ShapeDtypeStruct((N * gh, 2, cout), jnp.float32)),
        grid=(N, gh),
        in_specs=[pl.BlockSpec((1, TH, W, Cin), main_map),
                  pl.BlockSpec((1, 1, W, Cin), top_map),
                  pl.BlockSpec((1, 1, W, Cin), bot_map),
                  pl.BlockSpec((1, Cin), const2),
                  pl.BlockSpec((1, Cin), const2),
                  pl.BlockSpec((9 * Cin, cout), const2)],             # resident weights
        out_specs=(pl.BlockSpec((1, TH, W, cout), main_map),
                   pl.BlockSpec((1, 2, cout), stats_map)),            # per-tile partials
        compiler_params=pltpu.CompilerParams(
            dimension_semantics=("parallel", "parallel"),
            vmem_limit_bytes=_VMEM_LIMIT_BYTES),
    )(x4d, x4d, x4d, scale, shift, w_flat)


def bn_scatteradd_relu(y_rows, x_rows, scale, shift, scatter, W, block_bytes):
    rows, wcout = y_rows.shape
    Cout = wcout // W
    Cin = x_rows.shape[1] // W
    row_bytes = W * (2 * Cout + Cin) * 4 * 2
    TR = _row_tile(rows, row_bytes, block_bytes)
    kern = functools.partial(_bn_scatteradd_relu_kernel, W=W, Cin=Cin, Cout=Cout)
    return pl.pallas_call(
        kern,
        out_shape=jax.ShapeDtypeStruct((rows, W * Cout), jnp.float32),
        grid=(rows // TR,),
        in_specs=[pl.BlockSpec((TR, W * Cout), lambda i: (i, 0)),
                  pl.BlockSpec((TR, W * Cin), lambda i: (i, 0)),
                  pl.BlockSpec((1, Cout), lambda i: (0, 0)),
                  pl.BlockSpec((1, Cout), lambda i: (0, 0)),
                  pl.BlockSpec((Cin, Cout), lambda i: (0, 0))],
        out_specs=pl.BlockSpec((TR, W * Cout), lambda i: (i, 0)),
        compiler_params=pltpu.CompilerParams(
            dimension_semantics=("parallel",),
            vmem_limit_bytes=_VMEM_LIMIT_BYTES),
    )(y_rows, x_rows, scale, shift, scatter)


# ---------------------------------------------------------------------------
# module
# ---------------------------------------------------------------------------
class BottleneckPallas:
    """Pallas TPU equivalent of fedcore `Bottleneck` (training-mode BN,
    bias-free convs, stride=1, downsample=None)."""

    expansion = 4

    def __init__(self, sizes, key, stride=1, block_bytes=_DEFAULT_BLOCK_BYTES):
        # TODO(synk): stride>1 conv2 and the optional `downsample` submodule are
        # not implemented (module defaults are stride=1 / downsample=None).
        assert stride == 1
        self.block_bytes = int(block_bytes)
        c1_out, c1_in = int(sizes['conv1'][0]), int(sizes['conv1'][1])
        c2_out, c2_in = int(sizes['conv2'][0]), int(sizes['conv2'][1])
        c3_out, c3_in = int(sizes['conv3'][0]), int(sizes['conv3'][1])
        assert c2_in == c1_out and c3_in == c2_out
        k1, k2, k3, k4, k5, k6 = jax.random.split(key, 6)

        def uconv(k, shape, fan_in):
            return (jax.random.uniform(k, shape, jnp.float32, -1.0, 1.0)
                    / jnp.sqrt(float(fan_in)))

        # Conv weights kept in matmul-friendly layouts (f32 masters for the
        # reference; bf16 copies feed the MXU inside the kernels):
        #   1x1 conv -> (Cin, Cout); 3x3 conv -> HWIO, flattened to (9*Cin, Cout)
        self.w1 = uconv(k1, (c1_in, c1_out), c1_in)
        self.w2_hwio = uconv(k2, (3, 3, c2_in, c2_out), 9 * c2_in)
        self.w3 = uconv(k3, (c3_in, c3_out), c3_in)
        self.w1_mxu = self.w1.astype(_MXU_DTYPE)
        self.w2_mxu = self.w2_hwio.reshape(9 * c2_in, c2_out).astype(_MXU_DTYPE)
        self.w3_mxu = self.w3.astype(_MXU_DTYPE)

        self.g1 = 1.0 + 0.1 * jax.random.normal(k4, (c1_out,), jnp.float32)
        self.b1 = 0.05 * jnp.arange(c1_out, dtype=jnp.float32)
        self.g2 = 1.0 + 0.1 * jax.random.normal(k5, (c2_out,), jnp.float32)
        self.b2 = 0.05 * jnp.arange(c2_out, dtype=jnp.float32)
        self.g3 = 1.0 + 0.1 * jax.random.normal(k6, (c3_out,), jnp.float32)
        self.b3 = 0.05 * jnp.arange(c3_out, dtype=jnp.float32)

        # register_buffer('indices', zeros(...)) -> all-zero channel indices.
        self.indices = jnp.zeros((int(sizes['indices']),), jnp.int32)
        # out.index_add_(1, indices, identity) == out += identity @ one_hot(indices)
        self.scatter = jax.nn.one_hot(self.indices, c3_out, dtype=jnp.float32)

        self.c = (c1_in, c1_out, c2_out, c3_out)

    def __call__(self, x_nchw):
        c0, c1, c2, c3 = self.c
        # TODO(synk): fuse NCHW<->NHWC into the first/last kernels (saves two
        # full-tensor HBM round trips); kept at the wrapper level here.
        x = jnp.transpose(x_nchw, (0, 2, 3, 1)).astype(jnp.float32)   # NHWC
        N, H, W, _ = x.shape
        M = N * H * W
        x_rows = x.reshape(N * H, W * c0)     # folded lane-dense view (free reshape)

        # conv1 (1x1) + BN1 per-tile statistics
        y1, s1 = conv1x1_stats(x_rows, self.w1_mxu, W, self.block_bytes)
        sc1, sh1 = _bn_scale_shift(jnp.sum(s1, axis=0), M, self.g1, self.b1)

        # BN1+ReLU fused into conv2 (3x3, pad=1) + BN2 per-tile statistics
        y2, s2 = bn_relu_conv3x3_stats(y1.reshape(N, H, W, c1), sc1, sh1,
                                       self.w2_mxu, c2, self.block_bytes)
        sc2, sh2 = _bn_scale_shift(jnp.sum(s2, axis=0), M, self.g2, self.b2)

        # BN2+ReLU fused into conv3 (1x1) + BN3 per-tile statistics
        y3, s3 = bn_relu_conv1x1_stats(y2.reshape(N * H, W * c2), sc2, sh2,
                                       self.w3_mxu, W, self.block_bytes)
        sc3, sh3 = _bn_scale_shift(jnp.sum(s3, axis=0), M, self.g3, self.b3)

        # BN3 + index_add_(identity) + ReLU
        out_rows = bn_scatteradd_relu(y3, x_rows, sc3, sh3, self.scatter, W,
                                      self.block_bytes)
        return jnp.transpose(out_rows.reshape(N, H, W, c3), (0, 3, 1, 2))


# ---------------------------------------------------------------------------
# pure-XLA reference (same math, torch-equivalent, full f32) for a self-check
# ---------------------------------------------------------------------------
def _reference_forward(mod, x_nchw):
    x = jnp.transpose(x_nchw, (0, 2, 3, 1)).astype(jnp.float32)
    c0, c1, c2, c3 = mod.c

    def conv(h, w_hwio, pad):
        return jax.lax.conv_general_dilated(
            h, w_hwio, window_strides=(1, 1), padding=pad,
            dimension_numbers=('NHWC', 'HWIO', 'NHWC'))

    def bn(h, g, b):
        mean = jnp.mean(h, axis=(0, 1, 2))
        var = jnp.var(h, axis=(0, 1, 2))          # biased (training-mode)
        return (h - mean) * jax.lax.rsqrt(var + _BN_EPS) * g + b

    h = jnp.maximum(bn(conv(x, mod.w1.reshape(1, 1, c0, c1), 'VALID'),
                       mod.g1, mod.b1), 0.0)
    h = jnp.maximum(bn(conv(h, mod.w2_hwio, ((1, 1), (1, 1))),
                       mod.g2, mod.b2), 0.0)
    h = bn(conv(h, mod.w3.reshape(1, 1, c2, c3), 'VALID'), mod.g3, mod.b3)
    h = h + jnp.einsum('nhwc,cd->nhwd', x, mod.scatter)
    h = jnp.maximum(h, 0.0)
    return jnp.transpose(h, (0, 3, 1, 2))


if __name__ == "__main__":
    key = jax.random.PRNGKey(0)
    kx, kp = jax.random.split(key)

    # sizes[name] = (out_channels, in_channels); indices length = identity channels
    sizes = {'conv1': (8, 4), 'conv2': (8, 8), 'conv3': (16, 8), 'indices': 4}
    x = jax.random.normal(kx, (2, 4, 16, 16), jnp.float32)          # NCHW input

    block = BottleneckPallas(sizes, kp, stride=1)
    out = jax.block_until_ready(jax.jit(block)(x))
    assert out.shape == (2, 16, 16, 16) and out.dtype == jnp.float32

    ref = jax.block_until_ready(_reference_forward(block, x))
    max_err = float(jnp.max(jnp.abs(out - ref)))
    mean_err = float(jnp.mean(jnp.abs(out - ref)))
    # Tolerances sized for bf16 MXU operands vs. the full-f32 XLA reference
    # (structural bugs show up as O(1) errors; bf16 rounding stays well below).
    assert max_err < 0.12 and mean_err < 0.03, (max_err, mean_err)

    # Second run with tiny tiles: exercises multi-row-tile, halo-fetch and
    # per-tile partial-stat paths; must agree with the big-tile run up to
    # f32 accumulation-order / rare bf16 rounding-boundary noise.
    block_small = BottleneckPallas(sizes, kp, stride=1, block_bytes=4096)
    out_small = jax.block_until_ready(jax.jit(block_small)(x))
    tile_err = float(jnp.max(jnp.abs(out - out_small)))
    assert tile_err < 1e-2, tile_err

    print("KERNEL_OK")
</pallas_src>

<mosaic_0001>
module attributes {stable_mosaic.version = 11 : i64} {
  func.func @_conv1x1_stats_kernel(%arg0: i32, %arg1: memref<32x64xf32, #tpu.memory_space<vmem>>, %arg2: memref<4x8xbf16, #tpu.memory_space<vmem>>, %arg3: memref<32x128xf32, #tpu.memory_space<vmem>>, %arg4: memref<1x2x8xf32, #tpu.memory_space<vmem>>) attributes {dimension_semantics = [#tpu.dimension_semantics<parallel>], iteration_bounds = array<i64: 1>, scalar_prefetch = 0 : i64, scratch_operands = 0 : i64, tpu.core_type = #tpu.core_type<tc>, window_params = [{transform_indices = @transform_0, window_bounds = array<i64: 32, 64>}, {pipeline_mode = #tpu.pipeline_mode<synchronous>, transform_indices = @transform_1, window_bounds = array<i64: 4, 8>}, {transform_indices = @transform_2, window_bounds = array<i64: 32, 128>}, {transform_indices = @transform_3, window_bounds = array<i64: 1, 2, 8>}]} {
    %c0 = arith.constant 0 : index
    %c0_0 = arith.constant 0 : index
    %0 = vector.load %arg1[%c0, %c0_0] : memref<32x64xf32, #tpu.memory_space<vmem>>, vector<32x64xf32>
    %1 = vector.extract_strided_slice %0 {offsets = [0, 0], sizes = [32, 4], strides = [1, 1]} : vector<32x64xf32> to vector<32x4xf32>
    %2 = vector.extract_strided_slice %0 {offsets = [0, 4], sizes = [32, 4], strides = [1, 1]} : vector<32x64xf32> to vector<32x4xf32>
    %3 = vector.extract_strided_slice %0 {offsets = [0, 8], sizes = [32, 4], strides = [1, 1]} : vector<32x64xf32> to vector<32x4xf32>
    %4 = vector.extract_strided_slice %0 {offsets = [0, 12], sizes = [32, 4], strides = [1, 1]} : vector<32x64xf32> to vector<32x4xf32>
    %5 = vector.extract_strided_slice %0 {offsets = [0, 16], sizes = [32, 4], strides = [1, 1]} : vector<32x64xf32> to vector<32x4xf32>
    %6 = vector.extract_strided_slice %0 {offsets = [0, 20], sizes = [32, 4], strides = [1, 1]} : vector<32x64xf32> to vector<32x4xf32>
    %7 = vector.extract_strided_slice %0 {offsets = [0, 24], sizes = [32, 4], strides = [1, 1]} : vector<32x64xf32> to vector<32x4xf32>
    %8 = vector.extract_strided_slice %0 {offsets = [0, 28], sizes = [32, 4], strides = [1, 1]} : vector<32x64xf32> to vector<32x4xf32>
    %9 = vector.extract_strided_slice %0 {offsets = [0, 32], sizes = [32, 4], strides = [1, 1]} : vector<32x64xf32> to vector<32x4xf32>
    %10 = vector.extract_strided_slice %0 {offsets = [0, 36], sizes = [32, 4], strides = [1, 1]} : vector<32x64xf32> to vector<32x4xf32>
    %11 = vector.extract_strided_slice %0 {offsets = [0, 40], sizes = [32, 4], strides = [1, 1]} : vector<32x64xf32> to vector<32x4xf32>
    %12 = vector.extract_strided_slice %0 {offsets = [0, 44], sizes = [32, 4], strides = [1, 1]} : vector<32x64xf32> to vector<32x4xf32>
    %13 = vector.extract_strided_slice %0 {offsets = [0, 48], sizes = [32, 4], strides = [1, 1]} : vector<32x64xf32> to vector<32x4xf32>
    %14 = vector.extract_strided_slice %0 {offsets = [0, 52], sizes = [32, 4], strides = [1, 1]} : vector<32x64xf32> to vector<32x4xf32>
    %15 = vector.extract_strided_slice %0 {offsets = [0, 56], sizes = [32, 4], strides = [1, 1]} : vector<32x64xf32> to vector<32x4xf32>
    %16 = vector.extract_strided_slice %0 {offsets = [0, 60], sizes = [32, 4], strides = [1, 1]} : vector<32x64xf32> to vector<32x4xf32>
    %17 = tpu.concatenate %1, %2, %3, %4, %5, %6, %7, %8, %9, %10, %11, %12, %13, %14, %15, %16 in 0 : vector<32x4xf32>, vector<32x4xf32>, vector<32x4xf32>, vector<32x4xf32>, vector<32x4xf32>, vector<32x4xf32>, vector<32x4xf32>, vector<32x4xf32>, vector<32x4xf32>, vector<32x4xf32>, vector<32x4xf32>, vector<32x4xf32>, vector<32x4xf32>, vector<32x4xf32>, vector<32x4xf32>, vector<32x4xf32> -> vector<512x4xf32>
    %18 = arith.truncf %17 : vector<512x4xf32> to vector<512x4xbf16>
    %c0_1 = arith.constant 0 : index
    %c0_2 = arith.constant 0 : index
    %19 = vector.load %arg2[%c0_1, %c0_2] : memref<4x8xbf16, #tpu.memory_space<vmem>>, vector<4x8xbf16>
    %cst = arith.constant dense<0.000000e+00> : vector<512x8xf32>
    %20 = tpu.matmul %18, %19, %cst {dimension_numbers = #tpu.dot_dimension_numbers<[1], [0], [0], [1], [0, 0, 1, 1], [], []>} : vector<512x4xbf16>, vector<4x8xbf16>, vector<512x8xf32> -> vector<512x8xf32>
    %21 = vector.extract_strided_slice %20 {offsets = [0, 0], sizes = [32, 8], strides = [1, 1]} : vector<512x8xf32> to vector<32x8xf32>
    %22 = vector.extract_strided_slice %20 {offsets = [32, 0], sizes = [32, 8], strides = [1, 1]} : vector<512x8xf32> to vector<32x8xf32>
    %23 = vector.extract_strided_slice %20 {offsets = [64, 0], sizes = [32, 8], strides = [1, 1]} : vector<512x8xf32> to vector<32x8xf32>
    %24 = vector.extract_strided_slice %20 {offsets = [96, 0], sizes = [32, 8], strides = [1, 1]} : vector<512x8xf32> to vector<32x8xf32>
    %25 = vector.extract_strided_slice %20 {offsets = [128, 0], sizes = [32, 8], strides = [1, 1]} : vector<512x8xf32> to vector<32x8xf32>
    %26 = vector.extract_strided_slice %20 {offsets = [160, 0], sizes = [32, 8], strides = [1, 1]} : vector<512x8xf32> to vector<32x8xf32>
    %27 = vector.extract_strided_slice %20 {offsets = [192, 0], sizes = [32, 8], strides = [1, 1]} : vector<512x8xf32> to vector<32x8xf32>
    %28 = vector.extract_strided_slice %20 {offsets = [224, 0], sizes = [32, 8], strides = [1, 1]} : vector<512x8xf32> to vector<32x8xf32>
    %29 = vector.extract_strided_slice %20 {offsets = [256, 0], sizes = [32, 8], strides = [1, 1]} : vector<512x8xf32> to vector<32x8xf32>
    %30 = vector.extract_strided_slice %20 {offsets = [288, 0], sizes = [32, 8], strides = [1, 1]} : vector<512x8xf32> to vector<32x8xf32>
    %31 = vector.extract_strided_slice %20 {offsets = [320, 0], sizes = [32, 8], strides = [1, 1]} : vector<512x8xf32> to vector<32x8xf32>
    %32 = vector.extract_strided_slice %20 {offsets = [352, 0], sizes = [32, 8], strides = [1, 1]} : vector<512x8xf32> to vector<32x8xf32>
    %33 = vector.extract_strided_slice %20 {offsets = [384, 0], sizes = [32, 8], strides = [1, 1]} : vector<512x8xf32> to vector<32x8xf32>
    %34 = vector.extract_strided_slice %20 {offsets = [416, 0], sizes = [32, 8], strides = [1, 1]} : vector<512x8xf32> to vector<32x8xf32>
    %35 = vector.extract_strided_slice %20 {offsets = [448, 0], sizes = [32, 8], strides = [1, 1]} : vector<512x8xf32> to vector<32x8xf32>
    %36 = vector.extract_strided_slice %20 {offsets = [480, 0], sizes = [32, 8], strides = [1, 1]} : vector<512x8xf32> to vector<32x8xf32>
    %37 = tpu.concatenate %21, %22, %23, %24, %25, %26, %27, %28, %29, %30, %31, %32, %33, %34, %35, %36 in 1 : vector<32x8xf32>, vector<32x8xf32>, vector<32x8xf32>, vector<32x8xf32>, vector<32x8xf32>, vector<32x8xf32>, vector<32x8xf32>, vector<32x8xf32>, vector<32x8xf32>, vector<32x8xf32>, vector<32x8xf32>, vector<32x8xf32>, vector<32x8xf32>, vector<32x8xf32>, vector<32x8xf32>, vector<32x8xf32> -> vector<32x128xf32>
    %c0_3 = arith.constant 0 : index
    %c0_4 = arith.constant 0 : index
    %38 = vector.load %arg3[%c0_3, %c0_4] : memref<32x128xf32, #tpu.memory_space<vmem>>, vector<32x128xf32>
    tpu.vector_store %arg3[%c0_3, %c0_4], %37 {strides = array<i32>} : memref<32x128xf32, #tpu.memory_space<vmem>>, vector<32x128xf32>,
    %cst_5 = arith.constant dense<0.000000e+00> : vector<8xf32>
    %39 = vector.multi_reduction <add>, %20, %cst_5 [0] : vector<512x8xf32> to vector<8xf32>
    %40 = vector.shape_cast %39 : vector<8xf32> to vector<1x8xf32>
    %41 = vector.shape_cast %40 : vector<1x8xf32> to vector<1x1x8xf32>
    %c0_6 = arith.constant 0 : index
    %c0_7 = arith.constant 0 : index
    %c0_8 = arith.constant 0 : index
    %42 = vector.load %arg4[%c0_6, %c0_7, %c0_8] : memref<1x2x8xf32, #tpu.memory_space<vmem>>, vector<1x1x8xf32>
    tpu.vector_store %arg4[%c0_6, %c0_7, %c0_8], %41 {strides = array<i32>} : memref<1x2x8xf32, #tpu.memory_space<vmem>>, vector<1x1x8xf32>,
    %43 = arith.mulf %20, %20 : vector<512x8xf32>
    %cst_9 = arith.constant dense<0.000000e+00> : vector<8xf32>
    %44 = vector.multi_reduction <add>, %43, %cst_9 [0] : vector<512x8xf32> to vector<8xf32>
    %45 = vector.shape_cast %44 : vector<8xf32> to vector<1x8xf32>
    %46 = vector.shape_cast %45 : vector<1x8xf32> to vector<1x1x8xf32>
    %c0_10 = arith.constant 0 : index
    %c1 = arith.constant 1 : index
    %c0_11 = arith.constant 0 : index
    %47 = vector.load %arg4[%c0_10, %c1, %c0_11] : memref<1x2x8xf32, #tpu.memory_space<vmem>>, vector<1x1x8xf32>
    tpu.vector_store %arg4[%c0_10, %c1, %c0_11], %46 {strides = array<i32>} : memref<1x2x8xf32, #tpu.memory_space<vmem>>, vector<1x1x8xf32>,
    return
  }
  func.func @transform_0(%arg0: i32) -> (i32, i32) {
    %c0_i32 = arith.constant 0 : i32
    %c0_i32_0 = arith.constant 0 : i32
    return %arg0, %c0_i32 : i32, i32
  }
  func.func @transform_1(%arg0: i32) -> (i32, i32) {
    %c0_i32 = arith.constant 0 : i32
    %c0_i32_0 = arith.constant 0 : i32
    %c0_i32_1 = arith.constant 0 : i32
    return %c0_i32, %c0_i32_0 : i32, i32
  }
  func.func @transform_2(%arg0: i32) -> (i32, i32) {
    %c0_i32 = arith.constant 0 : i32
    %c0_i32_0 = arith.constant 0 : i32
    return %arg0, %c0_i32 : i32, i32
  }
  func.func @transform_3(%arg0: i32) -> (i32, i32, i32) {
    %c0_i32 = arith.constant 0 : i32
    %c0_i32_0 = arith.constant 0 : i32
    %c0_i32_1 = arith.constant 0 : i32
    return %arg0, %c0_i32, %c0_i32_0 : i32, i32, i32
  }
}

module attributes {stable_mosaic.version = 11 : i64} {
  func.func @_bn_relu_conv3x3_stats_kernel(%arg0: i32, %arg1: i32, %arg2: memref<1x16x16x8xf32, #tpu.memory_space<vmem>>, %arg3: memref<1x1x16x8xf32, #tpu.memory_space<vmem>>, %arg4: memref<1x1x16x8xf32, #tpu.memory_space<vmem>>, %arg5: memref<1x8xf32, #tpu.memory_space<vmem>>, %arg6: memref<1x8xf32, #tpu.memory_space<vmem>>, %arg7: memref<72x8xbf16, #tpu.memory_space<vmem>>, %arg8: memref<1x16x16x8xf32, #tpu.memory_space<vmem>>, %arg9: memref<1x2x8xf32, #tpu.memory_space<vmem>>) attributes {dimension_semantics = [#tpu.dimension_semantics<parallel>, #tpu.dimension_semantics<parallel>], iteration_bounds = array<i64: 2, 1>, scalar_prefetch = 0 : i64, scratch_operands = 0 : i64, tpu.core_type = #tpu.core_type<tc>, window_params = [{transform_indices = @transform_0, window_bounds = array<i64: 1, 16, 16, 8>}, {transform_indices = @transform_1, window_bounds = array<i64: 1, 1, 16, 8>}, {transform_indices = @transform_2, window_bounds = array<i64: 1, 1, 16, 8>}, {pipeline_mode = #tpu.pipeline_mode<synchronous>, transform_indices = @transform_3, window_bounds = array<i64: 1, 8>}, {pipeline_mode = #tpu.pipeline_mode<synchronous>, transform_indices = @transform_4, window_bounds = array<i64: 1, 8>}, {pipeline_mode = #tpu.pipeline_mode<synchronous>, transform_indices = @transform_5, window_bounds = array<i64: 72, 8>}, {transform_indices = @transform_6, window_bounds = array<i64: 1, 16, 16, 8>}, {transform_indices = @transform_7, window_bounds = array<i64: 1, 2, 8>}]} {
    %c0 = arith.constant 0 : index
    %c0_0 = arith.constant 0 : index
    %0 = vector.load %arg5[%c0, %c0_0] : memref<1x8xf32, #tpu.memory_space<vmem>>, vector<1x8xf32>
    %1 = vector.shape_cast %0 : vector<1x8xf32> to vector<1x1x8xf32>
    %c0_1 = arith.constant 0 : index
    %c0_2 = arith.constant 0 : index
    %2 = vector.load %arg6[%c0_1, %c0_2] : memref<1x8xf32, #tpu.memory_space<vmem>>, vector<1x8xf32>
    %3 = vector.shape_cast %2 : vector<1x8xf32> to vector<1x1x8xf32>
    %c0_3 = arith.constant 0 : index
    %c0_4 = arith.constant 0 : index
    %c0_5 = arith.constant 0 : index
    %c0_6 = arith.constant 0 : index
    %4 = vector.load %arg2[%c0_3, %c0_4, %c0_5, %c0_6] : memref<1x16x16x8xf32, #tpu.memory_space<vmem>>, vector<1x16x16x8xf32>
    %5 = vector.shape_cast %4 : vector<1x16x16x8xf32> to vector<16x16x8xf32>
    %6 = vector.broadcast %1 : vector<1x1x8xf32> to vector<16x16x8xf32>
    %7 = arith.mulf %5, %6 : vector<16x16x8xf32>
    %8 = vector.broadcast %3 : vector<1x1x8xf32> to vector<16x16x8xf32>
    %9 = arith.addf %7, %8 : vector<16x16x8xf32>
    %cst = arith.constant 0.000000e+00 : f32
    %10 = vector.broadcast %cst : f32 to vector<16x16x8xf32>
    %11 = arith.maximumf %9, %10 : vector<16x16x8xf32>
    %c0_7 = arith.constant 0 : index
    %c0_8 = arith.constant 0 : index
    %c0_9 = arith.constant 0 : index
    %c0_10 = arith.constant 0 : index
    %12 = vector.load %arg3[%c0_7, %c0_8, %c0_9, %c0_10] : memref<1x1x16x8xf32, #tpu.memory_space<vmem>>, vector<1x1x16x8xf32>
    %13 = vector.shape_cast %12 : vector<1x1x16x8xf32> to vector<1x16x8xf32>
    %14 = vector.broadcast %1 : vector<1x1x8xf32> to vector<1x16x8xf32>
    %15 = arith.mulf %13, %14 : vector<1x16x8xf32>
    %16 = vector.broadcast %3 : vector<1x1x8xf32> to vector<1x16x8xf32>
    %17 = arith.addf %15, %16 : vector<1x16x8xf32>
    %cst_11 = arith.constant 0.000000e+00 : f32
    %18 = vector.broadcast %cst_11 : f32 to vector<1x16x8xf32>
    %19 = arith.maximumf %17, %18 : vector<1x16x8xf32>
    %c0_12 = arith.constant 0 : index
    %c0_13 = arith.constant 0 : index
    %c0_14 = arith.constant 0 : index
    %c0_15 = arith.constant 0 : index
    %20 = vector.load %arg4[%c0_12, %c0_13, %c0_14, %c0_15] : memref<1x1x16x8xf32, #tpu.memory_space<vmem>>, vector<1x1x16x8xf32>
    %21 = vector.shape_cast %20 : vector<1x1x16x8xf32> to vector<1x16x8xf32>
    %22 = vector.broadcast %1 : vector<1x1x8xf32> to vector<1x16x8xf32>
    %23 = arith.mulf %21, %22 : vector<1x16x8xf32>
    %24 = vector.broadcast %3 : vector<1x1x8xf32> to vector<1x16x8xf32>
    %25 = arith.addf %23, %24 : vector<1x16x8xf32>
    %cst_16 = arith.constant 0.000000e+00 : f32
    %26 = vector.broadcast %cst_16 : f32 to vector<1x16x8xf32>
    %27 = arith.maximumf %25, %26 : vector<1x16x8xf32>
    %c0_i32 = arith.constant 0 : i32
    %28 = arith.cmpi sgt, %arg1, %c0_i32 : i32
    %cst_17 = arith.constant 0.000000e+00 : f32
    %29 = vector.broadcast %cst_17 : f32 to vector<1x16x8xf32>
    %30 = arith.select %28, %19, %29 : vector<1x16x8xf32>
    %c0_i32_18 = arith.constant 0 : i32
    %31 = arith.cmpi slt, %arg1, %c0_i32_18 : i32
    %cst_19 = arith.constant 0.000000e+00 : f32
    %32 = vector.broadcast %cst_19 : f32 to vector<1x16x8xf32>
    %33 = arith.select %31, %27, %32 : vector<1x16x8xf32>
    %34 = tpu.concatenate %30, %11, %33 in 0 : vector<1x16x8xf32>, vector<16x16x8xf32>, vector<1x16x8xf32> -> vector<18x16x8xf32>
    %35 = tpu.iota {dimensions = array<i32: 1>} : vector<18x16x8xi32>
    %c1_i32 = arith.constant 1 : i32
    %36 = vector.broadcast %c1_i32 : i32 to vector<18x16x8xi32>
    %37 = arith.cmpi sge, %35, %36 : vector<18x16x8xi32>
    %c1_i32_20 = arith.constant 1 : i32
    %38 = tpu.dynamic_rotate %34 by %c1_i32_20 dim 1 : vector<18x16x8xf32>, i32 -> vector<18x16x8xf32>
    %cst_21 = arith.constant 0.000000e+00 : f32
    %39 = vector.broadcast %cst_21 : f32 to vector<18x16x8xf32>
    %40 = arith.select %37, %38, %39 : vector<18x16x8xi1>, vector<18x16x8xf32>
    %c15_i32 = arith.constant 15 : i32
    %41 = vector.broadcast %c15_i32 : i32 to vector<18x16x8xi32>
    %42 = arith.cmpi slt, %35, %41 : vector<18x16x8xi32>
    %c15_i32_22 = arith.constant 15 : i32
    %43 = tpu.dynamic_rotate %34 by %c15_i32_22 dim 1 : vector<18x16x8xf32>, i32 -> vector<18x16x8xf32>
    %cst_23 = arith.constant 0.000000e+00 : f32
    %44 = vector.broadcast %cst_23 : f32 to vector<18x16x8xf32>
    %45 = arith.select %42, %43, %44 : vector<18x16x8xi1>, vector<18x16x8xf32>
    %46 = vector.extract_strided_slice %40 {offsets = [0, 0, 0], sizes = [16, 16, 8], strides = [1, 1, 1]} : vector<18x16x8xf32> to vector<16x16x8xf32>
    %47 = vector.extract_strided_slice %34 {offsets = [0, 0, 0], sizes = [16, 16, 8], strides = [1, 1, 1]} : vector<18x16x8xf32> to vector<16x16x8xf32>
    %48 = vector.extract_strided_slice %45 {offsets = [0, 0, 0], sizes = [16, 16, 8], strides = [1, 1, 1]} : vector<18x16x8xf32> to vector<16x16x8xf32>
    %49 = vector.extract_strided_slice %40 {offsets = [1, 0, 0], sizes = [16, 16, 8], strides = [1, 1, 1]} : vector<18x16x8xf32> to vector<16x16x8xf32>
    %50 = vector.extract_strided_slice %34 {offsets = [1, 0, 0], sizes = [16, 16, 8], strides = [1, 1, 1]} : vector<18x16x8xf32> to vector<16x16x8xf32>
    %51 = vector.extract_strided_slice %45 {offsets = [1, 0, 0], sizes = [16, 16, 8], strides = [1, 1, 1]} : vector<18x16x8xf32> to vector<16x16x8xf32>
    %52 = vector.extract_strided_slice %40 {offsets = [2, 0, 0], sizes = [16, 16, 8], strides = [1, 1, 1]} : vector<18x16x8xf32> to vector<16x16x8xf32>
    %53 = vector.extract_strided_slice %34 {offsets = [2, 0, 0], sizes = [16, 16, 8], strides = [1, 1, 1]} : vector<18x16x8xf32> to vector<16x16x8xf32>
    %54 = vector.extract_strided_slice %45 {offsets = [2, 0, 0], sizes = [16, 16, 8], strides = [1, 1, 1]} : vector<18x16x8xf32> to vector<16x16x8xf32>
    %55 = tpu.concatenate %46, %47, %48, %49, %50, %51, %52, %53, %54 in 2 : vector<16x16x8xf32>, vector<16x16x8xf32>, vector<16x16x8xf32>, vector<16x16x8xf32>, vector<16x16x8xf32>, vector<16x16x8xf32>, vector<16x16x8xf32>, vector<16x16x8xf32>, vector<16x16x8xf32> -> vector<16x16x72xf32>
    %56 = vector.shape_cast %55 : vector<16x16x72xf32> to vector<256x72xf32>
    %57 = arith.truncf %56 : vector<256x72xf32> to vector<256x72xbf16>
    %c0_24 = arith.constant 0 : index
    %c0_25 = arith.constant 0 : index
    %58 = vector.load %arg7[%c0_24, %c0_25] : memref<72x8xbf16, #tpu.memory_space<vmem>>, vector<72x8xbf16>
    %cst_26 = arith.constant dense<0.000000e+00> : vector<256x8xf32>
    %59 = tpu.matmul %57, %58, %cst_26 {dimension_numbers = #tpu.dot_dimension_numbers<[1], [0], [0], [1], [0, 0, 1, 1], [], []>} : vector<256x72xbf16>, vector<72x8xbf16>, vector<256x8xf32> -> vector<256x8xf32>
    %60 = vector.shape_cast %59 : vector<256x8xf32> to vector<1x16x16x8xf32>
    %c0_27 = arith.constant 0 : index
    %c0_28 = arith.constant 0 : index
    %c0_29 = arith.constant 0 : index
    %c0_30 = arith.constant 0 : index
    %61 = vector.load %arg8[%c0_27, %c0_28, %c0_29, %c0_30] : memref<1x16x16x8xf32, #tpu.memory_space<vmem>>, vector<1x16x16x8xf32>
    tpu.vector_store %arg8[%c0_27, %c0_28, %c0_29, %c0_30], %60 {strides = array<i32>} : memref<1x16x16x8xf32, #tpu.memory_space<vmem>>, vector<1x16x16x8xf32>,
    %cst_31 = arith.constant dense<0.000000e+00> : vector<8xf32>
    %62 = vector.multi_reduction <add>, %59, %cst_31 [0] : vector<256x8xf32> to vector<8xf32>
    %63 = vector.shape_cast %62 : vector<8xf32> to vector<1x8xf32>
    %64 = vector.shape_cast %63 : vector<1x8xf32> to vector<1x1x8xf32>
    %c0_32 = arith.constant 0 : index
    %c0_33 = arith.constant 0 : index
    %c0_34 = arith.constant 0 : index
    %65 = vector.load %arg9[%c0_32, %c0_33, %c0_34] : memref<1x2x8xf32, #tpu.memory_space<vmem>>, vector<1x1x8xf32>
    tpu.vector_store %arg9[%c0_32, %c0_33, %c0_34], %64 {strides = array<i32>} : memref<1x2x8xf32, #tpu.memory_space<vmem>>, vector<1x1x8xf32>,
    %66 = arith.mulf %59, %59 : vector<256x8xf32>
    %cst_35 = arith.constant dense<0.000000e+00> : vector<8xf32>
    %67 = vector.multi_reduction <add>, %66, %cst_35 [0] : vector<256x8xf32> to vector<8xf32>
    %68 = vector.shape_cast %67 : vector<8xf32> to vector<1x8xf32>
    %69 = vector.shape_cast %68 : vector<1x8xf32> to vector<1x1x8xf32>
    %c0_36 = arith.constant 0 : index
    %c1 = arith.constant 1 : index
    %c0_37 = arith.constant 0 : index
    %70 = vector.load %arg9[%c0_36, %c1, %c0_37] : memref<1x2x8xf32, #tpu.memory_space<vmem>>, vector<1x1x8xf32>
    tpu.vector_store %arg9[%c0_36, %c1, %c0_37], %69 {strides = array<i32>} : memref<1x2x8xf32, #tpu.memory_space<vmem>>, vector<1x1x8xf32>,
    return
  }
  func.func @transform_0(%arg0: i32, %arg1: i32) -> (i32, i32, i32, i32) {
    %c0_i32 = arith.constant 0 : i32
    %c0_i32_0 = arith.constant 0 : i32
    %c0_i32_1 = arith.constant 0 : i32
    return %arg0, %arg1, %c0_i32, %c0_i32_0 : i32, i32, i32, i32
  }
  func.func @transform_1(%arg0: i32, %arg1: i32) -> (i32, i32, i32, i32) {
    %c16_i32 = arith.constant 16 : i32
    %0 = arith.muli %arg1, %c16_i32 : i32
    %c1_i32 = arith.constant 1 : i32
    %1 = arith.subi %0, %c1_i32 : i32
    %c0_i32 = arith.constant 0 : i32
    %2 = arith.maxsi %1, %c0_i32 : i32
    %c0_i32_0 = arith.constant 0 : i32
    %c0_i32_1 = arith.constant 0 : i32
    %c0_i32_2 = arith.constant 0 : i32
    return %arg0, %2, %c0_i32_0, %c0_i32_1 : i32, i32, i32, i32
  }
  func.func @transform_2(%arg0: i32, %arg1: i32) -> (i32, i32, i32, i32) {
    %c16_i32 = arith.constant 16 : i32
    %0 = arith.muli %arg1, %c16_i32 : i32
    %c16_i32_0 = arith.constant 16 : i32
    %1 = arith.addi %0, %c16_i32_0 : i32
    %c15_i32 = arith.constant 15 : i32
    %2 = arith.minsi %1, %c15_i32 : i32
    %c0_i32 = arith.constant 0 : i32
    %c0_i32_1 = arith.constant 0 : i32
    %c0_i32_2 = arith.constant 0 : i32
    return %arg0, %2, %c0_i32, %c0_i32_1 : i32, i32, i32, i32
  }
  func.func @transform_3(%arg0: i32, %arg1: i32) -> (i32, i32) {
    %c0_i32 = arith.constant 0 : i32
    %c0_i32_0 = arith.constant 0 : i32
    %c0_i32_1 = arith.constant 0 : i32
    return %c0_i32, %c0_i32_0 : i32, i32
  }
  func.func @transform_4(%arg0: i32, %arg1: i32) -> (i32, i32) {
    %c0_i32 = arith.constant 0 : i32
    %c0_i32_0 = arith.constant 0 : i32
    %c0_i32_1 = arith.constant 0 : i32
    return %c0_i32, %c0_i32_0 : i32, i32
  }
  func.func @transform_5(%arg0: i32, %arg1: i32) -> (i32, i32) {
    %c0_i32 = arith.constant 0 : i32
    %c0_i32_0 = arith.constant 0 : i32
    %c0_i32_1 = arith.constant 0 : i32
    return %c0_i32, %c0_i32_0 : i32, i32
  }
  func.func @transform_6(%arg0: i32, %arg1: i32) -> (i32, i32, i32, i32) {
    %c0_i32 = arith.constant 0 : i32
    %c0_i32_0 = arith.constant 0 : i32
    %c0_i32_1 = arith.constant 0 : i32
    return %arg0, %arg1, %c0_i32, %c0_i32_0 : i32, i32, i32, i32
  }
  func.func @transform_7(%arg0: i32, %arg1: i32) -> (i32, i32, i32) {
    %c1_i32 = arith.constant 1 : i32
    %0 = arith.muli %arg0, %c1_i32 : i32
    %1 = arith.addi %0, %arg1 : i32
    %c0_i32 = arith.constant 0 : i32
    %c0_i32_0 = arith.constant 0 : i32
    %c0_i32_1 = arith.constant 0 : i32
    return %1, %c0_i32, %c0_i32_0 : i32, i32, i32
  }
}

module attributes {stable_mosaic.version = 11 : i64} {
  func.func @_bn_relu_conv1x1_stats_kernel(%arg0: i32, %arg1: memref<32x128xf32, #tpu.memory_space<vmem>>, %arg2: memref<1x8xf32, #tpu.memory_space<vmem>>, %arg3: memref<1x8xf32, #tpu.memory_space<vmem>>, %arg4: memref<8x16xbf16, #tpu.memory_space<vmem>>, %arg5: memref<32x256xf32, #tpu.memory_space<vmem>>, %arg6: memref<1x2x16xf32, #tpu.memory_space<vmem>>) attributes {dimension_semantics = [#tpu.dimension_semantics<parallel>], iteration_bounds = array<i64: 1>, scalar_prefetch = 0 : i64, scratch_operands = 0 : i64, tpu.core_type = #tpu.core_type<tc>, window_params = [{transform_indices = @transform_0, window_bounds = array<i64: 32, 128>}, {pipeline_mode = #tpu.pipeline_mode<synchronous>, transform_indices = @transform_1, window_bounds = array<i64: 1, 8>}, {pipeline_mode = #tpu.pipeline_mode<synchronous>, transform_indices = @transform_2, window_bounds = array<i64: 1, 8>}, {pipeline_mode = #tpu.pipeline_mode<synchronous>, transform_indices = @transform_3, window_bounds = array<i64: 8, 16>}, {transform_indices = @transform_4, window_bounds = array<i64: 32, 256>}, {transform_indices = @transform_5, window_bounds = array<i64: 1, 2, 16>}]} {
    %c0 = arith.constant 0 : index
    %c0_0 = arith.constant 0 : index
    %0 = vector.load %arg1[%c0, %c0_0] : memref<32x128xf32, #tpu.memory_space<vmem>>, vector<32x128xf32>
    %1 = vector.extract_strided_slice %0 {offsets = [0, 0], sizes = [32, 8], strides = [1, 1]} : vector<32x128xf32> to vector<32x8xf32>
    %2 = vector.extract_strided_slice %0 {offsets = [0, 8], sizes = [32, 8], strides = [1, 1]} : vector<32x128xf32> to vector<32x8xf32>
    %3 = vector.extract_strided_slice %0 {offsets = [0, 16], sizes = [32, 8], strides = [1, 1]} : vector<32x128xf32> to vector<32x8xf32>
    %4 = vector.extract_strided_slice %0 {offsets = [0, 24], sizes = [32, 8], strides = [1, 1]} : vector<32x128xf32> to vector<32x8xf32>
    %5 = vector.extract_strided_slice %0 {offsets = [0, 32], sizes = [32, 8], strides = [1, 1]} : vector<32x128xf32> to vector<32x8xf32>
    %6 = vector.extract_strided_slice %0 {offsets = [0, 40], sizes = [32, 8], strides = [1, 1]} : vector<32x128xf32> to vector<32x8xf32>
    %7 = vector.extract_strided_slice %0 {offsets = [0, 48], sizes = [32, 8], strides = [1, 1]} : vector<32x128xf32> to vector<32x8xf32>
    %8 = vector.extract_strided_slice %0 {offsets = [0, 56], sizes = [32, 8], strides = [1, 1]} : vector<32x128xf32> to vector<32x8xf32>
    %9 = vector.extract_strided_slice %0 {offsets = [0, 64], sizes = [32, 8], strides = [1, 1]} : vector<32x128xf32> to vector<32x8xf32>
    %10 = vector.extract_strided_slice %0 {offsets = [0, 72], sizes = [32, 8], strides = [1, 1]} : vector<32x128xf32> to vector<32x8xf32>
    %11 = vector.extract_strided_slice %0 {offsets = [0, 80], sizes = [32, 8], strides = [1, 1]} : vector<32x128xf32> to vector<32x8xf32>
    %12 = vector.extract_strided_slice %0 {offsets = [0, 88], sizes = [32, 8], strides = [1, 1]} : vector<32x128xf32> to vector<32x8xf32>
    %13 = vector.extract_strided_slice %0 {offsets = [0, 96], sizes = [32, 8], strides = [1, 1]} : vector<32x128xf32> to vector<32x8xf32>
    %14 = vector.extract_strided_slice %0 {offsets = [0, 104], sizes = [32, 8], strides = [1, 1]} : vector<32x128xf32> to vector<32x8xf32>
    %15 = vector.extract_strided_slice %0 {offsets = [0, 112], sizes = [32, 8], strides = [1, 1]} : vector<32x128xf32> to vector<32x8xf32>
    %16 = vector.extract_strided_slice %0 {offsets = [0, 120], sizes = [32, 8], strides = [1, 1]} : vector<32x128xf32> to vector<32x8xf32>
    %17 = tpu.concatenate %1, %2, %3, %4, %5, %6, %7, %8, %9, %10, %11, %12, %13, %14, %15, %16 in 0 : vector<32x8xf32>, vector<32x8xf32>, vector<32x8xf32>, vector<32x8xf32>, vector<32x8xf32>, vector<32x8xf32>, vector<32x8xf32>, vector<32x8xf32>, vector<32x8xf32>, vector<32x8xf32>, vector<32x8xf32>, vector<32x8xf32>, vector<32x8xf32>, vector<32x8xf32>, vector<32x8xf32>, vector<32x8xf32> -> vector<512x8xf32>
    %c0_1 = arith.constant 0 : index
    %c0_2 = arith.constant 0 : index
    %18 = vector.load %arg2[%c0_1, %c0_2] : memref<1x8xf32, #tpu.memory_space<vmem>>, vector<1x8xf32>
    %19 = vector.broadcast %18 : vector<1x8xf32> to vector<512x8xf32>
    %20 = arith.mulf %17, %19 : vector<512x8xf32>
    %c0_3 = arith.constant 0 : index
    %c0_4 = arith.constant 0 : index
    %21 = vector.load %arg3[%c0_3, %c0_4] : memref<1x8xf32, #tpu.memory_space<vmem>>, vector<1x8xf32>
    %22 = vector.broadcast %21 : vector<1x8xf32> to vector<512x8xf32>
    %23 = arith.addf %20, %22 : vector<512x8xf32>
    %cst = arith.constant 0.000000e+00 : f32
    %24 = vector.broadcast %cst : f32 to vector<512x8xf32>
    %25 = arith.maximumf %23, %24 : vector<512x8xf32>
    %26 = arith.truncf %25 : vector<512x8xf32> to vector<512x8xbf16>
    %c0_5 = arith.constant 0 : index
    %c0_6 = arith.constant 0 : index
    %27 = vector.load %arg4[%c0_5, %c0_6] : memref<8x16xbf16, #tpu.memory_space<vmem>>, vector<8x16xbf16>
    %cst_7 = arith.constant dense<0.000000e+00> : vector<512x16xf32>
    %28 = tpu.matmul %26, %27, %cst_7 {dimension_numbers = #tpu.dot_dimension_numbers<[1], [0], [0], [1], [0, 0, 1, 1], [], []>} : vector<512x8xbf16>, vector<8x16xbf16>, vector<512x16xf32> -> vector<512x16xf32>
    %29 = vector.extract_strided_slice %28 {offsets = [0, 0], sizes = [32, 16], strides = [1, 1]} : vector<512x16xf32> to vector<32x16xf32>
    %30 = vector.extract_strided_slice %28 {offsets = [32, 0], sizes = [32, 16], strides = [1, 1]} : vector<512x16xf32> to vector<32x16xf32>
    %31 = vector.extract_strided_slice %28 {offsets = [64, 0], sizes = [32, 16], strides = [1, 1]} : vector<512x16xf32> to vector<32x16xf32>
    %32 = vector.extract_strided_slice %28 {offsets = [96, 0], sizes = [32, 16], strides = [1, 1]} : vector<512x16xf32> to vector<32x16xf32>
    %33 = vector.extract_strided_slice %28 {offsets = [128, 0], sizes = [32, 16], strides = [1, 1]} : vector<512x16xf32> to vector<32x16xf32>
    %34 = vector.extract_strided_slice %28 {offsets = [160, 0], sizes = [32, 16], strides = [1, 1]} : vector<512x16xf32> to vector<32x16xf32>
    %35 = vector.extract_strided_slice %28 {offsets = [192, 0], sizes = [32, 16], strides = [1, 1]} : vector<512x16xf32> to vector<32x16xf32>
    %36 = vector.extract_strided_slice %28 {offsets = [224, 0], sizes = [32, 16], strides = [1, 1]} : vector<512x16xf32> to vector<32x16xf32>
    %37 = vector.extract_strided_slice %28 {offsets = [256, 0], sizes = [32, 16], strides = [1, 1]} : vector<512x16xf32> to vector<32x16xf32>
    %38 = vector.extract_strided_slice %28 {offsets = [288, 0], sizes = [32, 16], strides = [1, 1]} : vector<512x16xf32> to vector<32x16xf32>
    %39 = vector.extract_strided_slice %28 {offsets = [320, 0], sizes = [32, 16], strides = [1, 1]} : vector<512x16xf32> to vector<32x16xf32>
    %40 = vector.extract_strided_slice %28 {offsets = [352, 0], sizes = [32, 16], strides = [1, 1]} : vector<512x16xf32> to vector<32x16xf32>
    %41 = vector.extract_strided_slice %28 {offsets = [384, 0], sizes = [32, 16], strides = [1, 1]} : vector<512x16xf32> to vector<32x16xf32>
    %42 = vector.extract_strided_slice %28 {offsets = [416, 0], sizes = [32, 16], strides = [1, 1]} : vector<512x16xf32> to vector<32x16xf32>
    %43 = vector.extract_strided_slice %28 {offsets = [448, 0], sizes = [32, 16], strides = [1, 1]} : vector<512x16xf32> to vector<32x16xf32>
    %44 = vector.extract_strided_slice %28 {offsets = [480, 0], sizes = [32, 16], strides = [1, 1]} : vector<512x16xf32> to vector<32x16xf32>
    %45 = tpu.concatenate %29, %30, %31, %32, %33, %34, %35, %36, %37, %38, %39, %40, %41, %42, %43, %44 in 1 : vector<32x16xf32>, vector<32x16xf32>, vector<32x16xf32>, vector<32x16xf32>, vector<32x16xf32>, vector<32x16xf32>, vector<32x16xf32>, vector<32x16xf32>, vector<32x16xf32>, vector<32x16xf32>, vector<32x16xf32>, vector<32x16xf32>, vector<32x16xf32>, vector<32x16xf32>, vector<32x16xf32>, vector<32x16xf32> -> vector<32x256xf32>
    %c0_8 = arith.constant 0 : index
    %c0_9 = arith.constant 0 : index
    %46 = vector.load %arg5[%c0_8, %c0_9] : memref<32x256xf32, #tpu.memory_space<vmem>>, vector<32x256xf32>
    tpu.vector_store %arg5[%c0_8, %c0_9], %45 {strides = array<i32>} : memref<32x256xf32, #tpu.memory_space<vmem>>, vector<32x256xf32>,
    %cst_10 = arith.constant dense<0.000000e+00> : vector<16xf32>
    %47 = vector.multi_reduction <add>, %28, %cst_10 [0] : vector<512x16xf32> to vector<16xf32>
    %48 = vector.shape_cast %47 : vector<16xf32> to vector<1x16xf32>
    %49 = vector.shape_cast %48 : vector<1x16xf32> to vector<1x1x16xf32>
    %c0_11 = arith.constant 0 : index
    %c0_12 = arith.constant 0 : index
    %c0_13 = arith.constant 0 : index
    %50 = vector.load %arg6[%c0_11, %c0_12, %c0_13] : memref<1x2x16xf32, #tpu.memory_space<vmem>>, vector<1x1x16xf32>
    tpu.vector_store %arg6[%c0_11, %c0_12, %c0_13], %49 {strides = array<i32>} : memref<1x2x16xf32, #tpu.memory_space<vmem>>, vector<1x1x16xf32>,
    %51 = arith.mulf %28, %28 : vector<512x16xf32>
    %cst_14 = arith.constant dense<0.000000e+00> : vector<16xf32>
    %52 = vector.multi_reduction <add>, %51, %cst_14 [0] : vector<512x16xf32> to vector<16xf32>
    %53 = vector.shape_cast %52 : vector<16xf32> to vector<1x16xf32>
    %54 = vector.shape_cast %53 : vector<1x16xf32> to vector<1x1x16xf32>
    %c0_15 = arith.constant 0 : index
    %c1 = arith.constant 1 : index
    %c0_16 = arith.constant 0 : index
    %55 = vector.load %arg6[%c0_15, %c1, %c0_16] : memref<1x2x16xf32, #tpu.memory_space<vmem>>, vector<1x1x16xf32>
    tpu.vector_store %arg6[%c0_15, %c1, %c0_16], %54 {strides = array<i32>} : memref<1x2x16xf32, #tpu.memory_space<vmem>>, vector<1x1x16xf32>,
    return
  }
  func.func @transform_0(%arg0: i32) -> (i32, i32) {
    %c0_i32 = arith.constant 0 : i32
    %c0_i32_0 = arith.constant 0 : i32
    return %arg0, %c0_i32 : i32, i32
  }
  func.func @transform_1(%arg0: i32) -> (i32, i32) {
    %c0_i32 = arith.constant 0 : i32
    %c0_i32_0 = arith.constant 0 : i32
    %c0_i32_1 = arith.constant 0 : i32
    return %c0_i32, %c0_i32_0 : i32, i32
  }
  func.func @transform_2(%arg0: i32) -> (i32, i32) {
    %c0_i32 = arith.constant 0 : i32
    %c0_i32_0 = arith.constant 0 : i32
    %c0_i32_1 = arith.constant 0 : i32
    return %c0_i32, %c0_i32_0 : i32, i32
  }
  func.func @transform_3(%arg0: i32) -> (i32, i32) {
    %c0_i32 = arith.constant 0 : i32
    %c0_i32_0 = arith.constant 0 : i32
    %c0_i32_1 = arith.constant 0 : i32
    return %c0_i32, %c0_i32_0 : i32, i32
  }
  func.func @transform_4(%arg0: i32) -> (i32, i32) {
    %c0_i32 = arith.constant 0 : i32
    %c0_i32_0 = arith.constant 0 : i32
    return %arg0, %c0_i32 : i32, i32
  }
  func.func @transform_5(%arg0: i32) -> (i32, i32, i32) {
    %c0_i32 = arith.constant 0 : i32
    %c0_i32_0 = arith.constant 0 : i32
    %c0_i32_1 = arith.constant 0 : i32
    return %arg0, %c0_i32, %c0_i32_0 : i32, i32, i32
  }
}

module attributes {stable_mosaic.version = 11 : i64} {
  func.func @_bn_scatteradd_relu_kernel(%arg0: i32, %arg1: memref<32x256xf32, #tpu.memory_space<vmem>>, %arg2: memref<32x64xf32, #tpu.memory_space<vmem>>, %arg3: memref<1x16xf32, #tpu.memory_space<vmem>>, %arg4: memref<1x16xf32, #tpu.memory_space<vmem>>, %arg5: memref<4x16xf32, #tpu.memory_space<vmem>>, %arg6: memref<32x256xf32, #tpu.memory_space<vmem>>) attributes {dimension_semantics = [#tpu.dimension_semantics<parallel>], iteration_bounds = array<i64: 1>, scalar_prefetch = 0 : i64, scratch_operands = 0 : i64, tpu.core_type = #tpu.core_type<tc>, window_params = [{transform_indices = @transform_0, window_bounds = array<i64: 32, 256>}, {transform_indices = @transform_1, window_bounds = array<i64: 32, 64>}, {pipeline_mode = #tpu.pipeline_mode<synchronous>, transform_indices = @transform_2, window_bounds = array<i64: 1, 16>}, {pipeline_mode = #tpu.pipeline_mode<synchronous>, transform_indices = @transform_3, window_bounds = array<i64: 1, 16>}, {pipeline_mode = #tpu.pipeline_mode<synchronous>, transform_indices = @transform_4, window_bounds = array<i64: 4, 16>}, {transform_indices = @transform_5, window_bounds = array<i64: 32, 256>}]} {
    %c0 = arith.constant 0 : index
    %c0_0 = arith.constant 0 : index
    %0 = vector.load %arg1[%c0, %c0_0] : memref<32x256xf32, #tpu.memory_space<vmem>>, vector<32x256xf32>
    %1 = vector.extract_strided_slice %0 {offsets = [0, 0], sizes = [32, 16], strides = [1, 1]} : vector<32x256xf32> to vector<32x16xf32>
    %2 = vector.extract_strided_slice %0 {offsets = [0, 16], sizes = [32, 16], strides = [1, 1]} : vector<32x256xf32> to vector<32x16xf32>
    %3 = vector.extract_strided_slice %0 {offsets = [0, 32], sizes = [32, 16], strides = [1, 1]} : vector<32x256xf32> to vector<32x16xf32>
    %4 = vector.extract_strided_slice %0 {offsets = [0, 48], sizes = [32, 16], strides = [1, 1]} : vector<32x256xf32> to vector<32x16xf32>
    %5 = vector.extract_strided_slice %0 {offsets = [0, 64], sizes = [32, 16], strides = [1, 1]} : vector<32x256xf32> to vector<32x16xf32>
    %6 = vector.extract_strided_slice %0 {offsets = [0, 80], sizes = [32, 16], strides = [1, 1]} : vector<32x256xf32> to vector<32x16xf32>
    %7 = vector.extract_strided_slice %0 {offsets = [0, 96], sizes = [32, 16], strides = [1, 1]} : vector<32x256xf32> to vector<32x16xf32>
    %8 = vector.extract_strided_slice %0 {offsets = [0, 112], sizes = [32, 16], strides = [1, 1]} : vector<32x256xf32> to vector<32x16xf32>
    %9 = vector.extract_strided_slice %0 {offsets = [0, 128], sizes = [32, 16], strides = [1, 1]} : vector<32x256xf32> to vector<32x16xf32>
    %10 = vector.extract_strided_slice %0 {offsets = [0, 144], sizes = [32, 16], strides = [1, 1]} : vector<32x256xf32> to vector<32x16xf32>
    %11 = vector.extract_strided_slice %0 {offsets = [0, 160], sizes = [32, 16], strides = [1, 1]} : vector<32x256xf32> to vector<32x16xf32>
    %12 = vector.extract_strided_slice %0 {offsets = [0, 176], sizes = [32, 16], strides = [1, 1]} : vector<32x256xf32> to vector<32x16xf32>
    %13 = vector.extract_strided_slice %0 {offsets = [0, 192], sizes = [32, 16], strides = [1, 1]} : vector<32x256xf32> to vector<32x16xf32>
    %14 = vector.extract_strided_slice %0 {offsets = [0, 208], sizes = [32, 16], strides = [1, 1]} : vector<32x256xf32> to vector<32x16xf32>
    %15 = vector.extract_strided_slice %0 {offsets = [0, 224], sizes = [32, 16], strides = [1, 1]} : vector<32x256xf32> to vector<32x16xf32>
    %16 = vector.extract_strided_slice %0 {offsets = [0, 240], sizes = [32, 16], strides = [1, 1]} : vector<32x256xf32> to vector<32x16xf32>
    %17 = tpu.concatenate %1, %2, %3, %4, %5, %6, %7, %8, %9, %10, %11, %12, %13, %14, %15, %16 in 0 : vector<32x16xf32>, vector<32x16xf32>, vector<32x16xf32>, vector<32x16xf32>, vector<32x16xf32>, vector<32x16xf32>, vector<32x16xf32>, vector<32x16xf32>, vector<32x16xf32>, vector<32x16xf32>, vector<32x16xf32>, vector<32x16xf32>, vector<32x16xf32>, vector<32x16xf32>, vector<32x16xf32>, vector<32x16xf32> -> vector<512x16xf32>
    %c0_1 = arith.constant 0 : index
    %c0_2 = arith.constant 0 : index
    %18 = vector.load %arg2[%c0_1, %c0_2] : memref<32x64xf32, #tpu.memory_space<vmem>>, vector<32x64xf32>
    %19 = vector.extract_strided_slice %18 {offsets = [0, 0], sizes = [32, 4], strides = [1, 1]} : vector<32x64xf32> to vector<32x4xf32>
    %20 = vector.extract_strided_slice %18 {offsets = [0, 4], sizes = [32, 4], strides = [1, 1]} : vector<32x64xf32> to vector<32x4xf32>
    %21 = vector.extract_strided_slice %18 {offsets = [0, 8], sizes = [32, 4], strides = [1, 1]} : vector<32x64xf32> to vector<32x4xf32>
    %22 = vector.extract_strided_slice %18 {offsets = [0, 12], sizes = [32, 4], strides = [1, 1]} : vector<32x64xf32> to vector<32x4xf32>
    %23 = vector.extract_strided_slice %18 {offsets = [0, 16], sizes = [32, 4], strides = [1, 1]} : vector<32x64xf32> to vector<32x4xf32>
    %24 = vector.extract_strided_slice %18 {offsets = [0, 20], sizes = [32, 4], strides = [1, 1]} : vector<32x64xf32> to vector<32x4xf32>
    %25 = vector.extract_strided_slice %18 {offsets = [0, 24], sizes = [32, 4], strides = [1, 1]} : vector<32x64xf32> to vector<32x4xf32>
    %26 = vector.extract_strided_slice %18 {offsets = [0, 28], sizes = [32, 4], strides = [1, 1]} : vector<32x64xf32> to vector<32x4xf32>
    %27 = vector.extract_strided_slice %18 {offsets = [0, 32], sizes = [32, 4], strides = [1, 1]} : vector<32x64xf32> to vector<32x4xf32>
    %28 = vector.extract_strided_slice %18 {offsets = [0, 36], sizes = [32, 4], strides = [1, 1]} : vector<32x64xf32> to vector<32x4xf32>
    %29 = vector.extract_strided_slice %18 {offsets = [0, 40], sizes = [32, 4], strides = [1, 1]} : vector<32x64xf32> to vector<32x4xf32>
    %30 = vector.extract_strided_slice %18 {offsets = [0, 44], sizes = [32, 4], strides = [1, 1]} : vector<32x64xf32> to vector<32x4xf32>
    %31 = vector.extract_strided_slice %18 {offsets = [0, 48], sizes = [32, 4], strides = [1, 1]} : vector<32x64xf32> to vector<32x4xf32>
    %32 = vector.extract_strided_slice %18 {offsets = [0, 52], sizes = [32, 4], strides = [1, 1]} : vector<32x64xf32> to vector<32x4xf32>
    %33 = vector.extract_strided_slice %18 {offsets = [0, 56], sizes = [32, 4], strides = [1, 1]} : vector<32x64xf32> to vector<32x4xf32>
    %34 = vector.extract_strided_slice %18 {offsets = [0, 60], sizes = [32, 4], strides = [1, 1]} : vector<32x64xf32> to vector<32x4xf32>
    %35 = tpu.concatenate %19, %20, %21, %22, %23, %24, %25, %26, %27, %28, %29, %30, %31, %32, %33, %34 in 0 : vector<32x4xf32>, vector<32x4xf32>, vector<32x4xf32>, vector<32x4xf32>, vector<32x4xf32>, vector<32x4xf32>, vector<32x4xf32>, vector<32x4xf32>, vector<32x4xf32>, vector<32x4xf32>, vector<32x4xf32>, vector<32x4xf32>, vector<32x4xf32>, vector<32x4xf32>, vector<32x4xf32>, vector<32x4xf32> -> vector<512x4xf32>
    %c0_3 = arith.constant 0 : index
    %c0_4 = arith.constant 0 : index
    %36 = vector.load %arg3[%c0_3, %c0_4] : memref<1x16xf32, #tpu.memory_space<vmem>>, vector<1x16xf32>
    %37 = vector.broadcast %36 : vector<1x16xf32> to vector<512x16xf32>
    %38 = arith.mulf %17, %37 : vector<512x16xf32>
    %c0_5 = arith.constant 0 : index
    %c0_6 = arith.constant 0 : index
    %39 = vector.load %arg4[%c0_5, %c0_6] : memref<1x16xf32, #tpu.memory_space<vmem>>, vector<1x16xf32>
    %40 = vector.broadcast %39 : vector<1x16xf32> to vector<512x16xf32>
    %41 = arith.addf %38, %40 : vector<512x16xf32>
    %c0_7 = arith.constant 0 : index
    %c0_8 = arith.constant 0 : index
    %42 = vector.load %arg5[%c0_7, %c0_8] : memref<4x16xf32, #tpu.memory_space<vmem>>, vector<4x16xf32>
    %cst = arith.constant dense<0.000000e+00> : vector<512x16xf32>
    %43 = tpu.matmul %35, %42, %cst {dimension_numbers = #tpu.dot_dimension_numbers<[1], [0], [0], [1], [0, 0, 1, 1], [], []>} : vector<512x4xf32>, vector<4x16xf32>, vector<512x16xf32> -> vector<512x16xf32>
    %44 = arith.addf %41, %43 : vector<512x16xf32>
    %cst_9 = arith.constant 0.000000e+00 : f32
    %45 = vector.broadcast %cst_9 : f32 to vector<512x16xf32>
    %46 = arith.maximumf %44, %45 : vector<512x16xf32>
    %47 = vector.extract_strided_slice %46 {offsets = [0, 0], sizes = [32, 16], strides = [1, 1]} : vector<512x16xf32> to vector<32x16xf32>
    %48 = vector.extract_strided_slice %46 {offsets = [32, 0], sizes = [32, 16], strides = [1, 1]} : vector<512x16xf32> to vector<32x16xf32>
    %49 = vector.extract_strided_slice %46 {offsets = [64, 0], sizes = [32, 16], strides = [1, 1]} : vector<512x16xf32> to vector<32x16xf32>
    %50 = vector.extract_strided_slice %46 {offsets = [96, 0], sizes = [32, 16], strides = [1, 1]} : vector<512x16xf32> to vector<32x16xf32>
    %51 = vector.extract_strided_slice %46 {offsets = [128, 0], sizes = [32, 16], strides = [1, 1]} : vector<512x16xf32> to vector<32x16xf32>
    %52 = vector.extract_strided_slice %46 {offsets = [160, 0], sizes = [32, 16], strides = [1, 1]} : vector<512x16xf32> to vector<32x16xf32>
    %53 = vector.extract_strided_slice %46 {offsets = [192, 0], sizes = [32, 16], strides = [1, 1]} : vector<512x16xf32> to vector<32x16xf32>
    %54 = vector.extract_strided_slice %46 {offsets = [224, 0], sizes = [32, 16], strides = [1, 1]} : vector<512x16xf32> to vector<32x16xf32>
    %55 = vector.extract_strided_slice %46 {offsets = [256, 0], sizes = [32, 16], strides = [1, 1]} : vector<512x16xf32> to vector<32x16xf32>
    %56 = vector.extract_strided_slice %46 {offsets = [288, 0], sizes = [32, 16], strides = [1, 1]} : vector<512x16xf32> to vector<32x16xf32>
    %57 = vector.extract_strided_slice %46 {offsets = [320, 0], sizes = [32, 16], strides = [1, 1]} : vector<512x16xf32> to vector<32x16xf32>
    %58 = vector.extract_strided_slice %46 {offsets = [352, 0], sizes = [32, 16], strides = [1, 1]} : vector<512x16xf32> to vector<32x16xf32>
    %59 = vector.extract_strided_slice %46 {offsets = [384, 0], sizes = [32, 16], strides = [1, 1]} : vector<512x16xf32> to vector<32x16xf32>
    %60 = vector.extract_strided_slice %46 {offsets = [416, 0], sizes = [32, 16], strides = [1, 1]} : vector<512x16xf32> to vector<32x16xf32>
    %61 = vector.extract_strided_slice %46 {offsets = [448, 0], sizes = [32, 16], strides = [1, 1]} : vector<512x16xf32> to vector<32x16xf32>
    %62 = vector.extract_strided_slice %46 {offsets = [480, 0], sizes = [32, 16], strides = [1, 1]} : vector<512x16xf32> to vector<32x16xf32>
    %63 = tpu.concatenate %47, %48, %49, %50, %51, %52, %53, %54, %55, %56, %57, %58, %59, %60, %61, %62 in 1 : vector<32x16xf32>, vector<32x16xf32>, vector<32x16xf32>, vector<32x16xf32>, vector<32x16xf32>, vector<32x16xf32>, vector<32x16xf32>, vector<32x16xf32>, vector<32x16xf32>, vector<32x16xf32>, vector<32x16xf32>, vector<32x16xf32>, vector<32x16xf32>, vector<32x16xf32>, vector<32x16xf32>, vector<32x16xf32> -> vector<32x256xf32>
    %c0_10 = arith.constant 0 : index
    %c0_11 = arith.constant 0 : index
    %64 = vector.load %arg6[%c0_10, %c0_11] : memref<32x256xf32, #tpu.memory_space<vmem>>, vector<32x256xf32>
    tpu.vector_store %arg6[%c0_10, %c0_11], %63 {strides = array<i32>} : memref<32x256xf32, #tpu.memory_space<vmem>>, vector<32x256xf32>,
    return
  }
  func.func @transform_0(%arg0: i32) -> (i32, i32) {
    %c0_i32 = arith.constant 0 : i32
    %c0_i32_0 = arith.constant 0 : i32
    return %arg0, %c0_i32 : i32, i32
  }
  func.func @transform_1(%arg0: i32) -> (i32, i32) {
    %c0_i32 = arith.constant 0 : i32
    %c0_i32_0 = arith.constant 0 : i32
    return %arg0, %c0_i32 : i32, i32
  }
  func.func @transform_2(%arg0: i32) -> (i32, i32) {
    %c0_i32 = arith.constant 0 : i32
    %c0_i32_0 = arith.constant 0 : i32
    %c0_i32_1 = arith.constant 0 : i32
    return %c0_i32, %c0_i32_0 : i32, i32
  }
  func.func @transform_3(%arg0: i32) -> (i32, i32) {
    %c0_i32 = arith.constant 0 : i32
    %c0_i32_0 = arith.constant 0 : i32
    %c0_i32_1 = arith.constant 0 : i32
    return %c0_i32, %c0_i32_0 : i32, i32
  }
  func.func @transform_4(%arg0: i32) -> (i32, i32) {
    %c0_i32 = arith.constant 0 : i32
    %c0_i32_0 = arith.constant 0 : i32
    %c0_i32_1 = arith.constant 0 : i32
    return %c0_i32, %c0_i32_0 : i32, i32
  }
  func.func @transform_5(%arg0: i32) -> (i32, i32) {
    %c0_i32 = arith.constant 0 : i32
    %c0_i32_0 = arith.constant 0 : i32
    return %arg0, %c0_i32 : i32, i32
  }
}

</mosaic_0001>

<llo_original>
// kernel: _unnamed_function_.4
$region0: #{_unnamed_function_.4}
  #allocation0 [shape = 'u32[]', space=smem, size = 0x4, offset = 0x4, fixed_abs, tag = 'smem constant byte address 0x4 - core index']
  #allocation1 [shape = 'u32[144,128]{1,0:T(1,128)}', space=vmem, size = 0x12000, scoped, tag = 'internal scratch']
  %s0 = inlined_call_operand.vmem [shape: f32[32,64], index: 0, kind: input, shape index: {}]
  %s1 = inlined_call_operand.vmem [shape: bf16[4,8], index: 1, kind: input, shape index: {}]
  %s2 = inlined_call_operand.vmem [shape: f32[32,128], index: 2, kind: output, shape index: {0}]
  %s3 = inlined_call_operand.vmem [shape: f32[1,2,8], index: 3, kind: output, shape index: {1}]
  %4 = xla_tuple %s2, %s3
  %s5 = sld [smem:[#allocation0]]
  $region26: #{_unnamed_function_.4} parent=0
    _
  %s7 = ssub.s32 1, %s5
  %s8 = scalar_select 0, %s7, %s5
  // Predicated region
  $region2: #{_unnamed_function_.4} parent=0 // pred_check
    _
  $region3: #{_unnamed_function_.4} parent=0 // pred_check_branch
    %10 = sbr.rel (0) target = $region5
  $region4: #{_unnamed_function_.4} parent=0 // pred_region
    _
  $region5: #{_unnamed_function_.4} parent=0 // pred_fallthru
    _
  // Predicated region
  $region6: #{_unnamed_function_.4} parent=0 // pred_check
    _
  $region7: #{_unnamed_function_.4} parent=0 // pred_check_branch
    %12 = sbr.rel (0) target = $region9
  $region8: #{_unnamed_function_.4} parent=0 // pred_region
    _
  $region9: #{_unnamed_function_.4} parent=0 // pred_fallthru
    _
  %v14 = vld [vmem:[%s0] sm:$0xff]
  %v15 = vld [vmem:[%s0 + $0x8] sm:$0xff]
  %v16 = vld [vmem:[%s0 + $0x10] sm:$0xff]
  %v17 = vld [vmem:[%s0 + $0x18] sm:$0xff]
  %22 = vrot.lane.b32.xlu0 %v14, 124
  %v23 = vpop.permute.xlu0 %22
  %24 = vrot.lane.b32.xlu0 %v15, 124
  %v25 = vpop.permute.xlu0 %24
  %26 = vrot.lane.b32.xlu0 %v16, 124
  %v27 = vpop.permute.xlu0 %26
  %28 = vrot.lane.b32.xlu0 %v17, 124
  %v29 = vpop.permute.xlu0 %28
  %34 = vrot.lane.b32.xlu0 %v14, 120
  %v35 = vpop.permute.xlu0 %34
  %36 = vrot.lane.b32.xlu0 %v15, 120
  %v37 = vpop.permute.xlu0 %36
  %38 = vrot.lane.b32.xlu0 %v16, 120
  %v39 = vpop.permute.xlu0 %38
  %40 = vrot.lane.b32.xlu0 %v17, 120
  %v41 = vpop.permute.xlu0 %40
  %46 = vrot.lane.b32.xlu0 %v14, 116
  %v47 = vpop.permute.xlu0 %46
  %48 = vrot.lane.b32.xlu0 %v15, 116
  %v49 = vpop.permute.xlu0 %48
  %50 = vrot.lane.b32.xlu0 %v16, 116
  %v51 = vpop.permute.xlu0 %50
  %52 = vrot.lane.b32.xlu0 %v17, 116
  %v53 = vpop.permute.xlu0 %52
  %58 = vrot.lane.b32.xlu0 %v14, 112
  %v59 = vpop.permute.xlu0 %58
  %60 = vrot.lane.b32.xlu0 %v15, 112
  %v61 = vpop.permute.xlu0 %60
  %62 = vrot.lane.b32.xlu0 %v16, 112
  %v63 = vpop.permute.xlu0 %62
  %64 = vrot.lane.b32.xlu0 %v17, 112
  %v65 = vpop.permute.xlu0 %64
  %70 = vrot.lane.b32.xlu0 %v14, 108
  %v71 = vpop.permute.xlu0 %70
  %72 = vrot.lane.b32.xlu0 %v15, 108
  %v73 = vpop.permute.xlu0 %72
  %74 = vrot.lane.b32.xlu0 %v16, 108
  %v75 = vpop.permute.xlu0 %74
  %76 = vrot.lane.b32.xlu0 %v17, 108
  %v77 = vpop.permute.xlu0 %76
  %82 = vrot.lane.b32.xlu0 %v14, 104
  %v83 = vpop.permute.xlu0 %82
  %84 = vrot.lane.b32.xlu0 %v15, 104
  %v85 = vpop.permute.xlu0 %84
  %86 = vrot.lane.b32.xlu0 %v16, 104
  %v87 = vpop.permute.xlu0 %86
  %88 = vrot.lane.b32.xlu0 %v17, 104
  %v89 = vpop.permute.xlu0 %88
  %94 = vrot.lane.b32.xlu0 %v14, 100
  %v95 = vpop.permute.xlu0 %94
  %96 = vrot.lane.b32.xlu0 %v15, 100
  %v97 = vpop.permute.xlu0 %96
  %98 = vrot.lane.b32.xlu0 %v16, 100
  %v99 = vpop.permute.xlu0 %98
  %100 = vrot.lane.b32.xlu0 %v17, 100
  %v101 = vpop.permute.xlu0 %100
  %106 = vrot.lane.b32.xlu0 %v14, 96
  %v107 = vpop.permute.xlu0 %106
  %108 = vrot.lane.b32.xlu0 %v15, 96
  %v109 = vpop.permute.xlu0 %108
  %110 = vrot.lane.b32.xlu0 %v16, 96
  %v111 = vpop.permute.xlu0 %110
  %112 = vrot.lane.b32.xlu0 %v17, 96
  %v113 = vpop.permute.xlu0 %112
  %118 = vrot.lane.b32.xlu0 %v14, 92
  %v119 = vpop.permute.xlu0 %118
  %120 = vrot.lane.b32.xlu0 %v15, 92
  %v121 = vpop.permute.xlu0 %120
  %122 = vrot.lane.b32.xlu0 %v16, 92
  %v123 = vpop.permute.xlu0 %122
  %124 = vrot.lane.b32.xlu0 %v17, 92
  %v125 = vpop.permute.xlu0 %124
  %130 = vrot.lane.b32.xlu0 %v14, 88
  %v131 = vpop.permute.xlu0 %130
  %132 = vrot.lane.b32.xlu0 %v15, 88
  %v133 = vpop.permute.xlu0 %132
  %134 = vrot.lane.b32.xlu0 %v16, 88
  %v135 = vpop.permute.xlu0 %134
  %136 = vrot.lane.b32.xlu0 %v17, 88
  %v137 = vpop.permute.xlu0 %136
  %142 = vrot.lane.b32.xlu0 %v14, 84
  %v143 = vpop.permute.xlu0 %142
  %144 = vrot.lane.b32.xlu0 %v15, 84
  %v145 = vpop.permute.xlu0 %144
  %146 = vrot.lane.b32.xlu0 %v16, 84
  %v147 = vpop.permute.xlu0 %146
  %148 = vrot.lane.b32.xlu0 %v17, 84
  %v149 = vpop.permute.xlu0 %148
  %154 = vrot.lane.b32.xlu0 %v14, 80
  %v155 = vpop.permute.xlu0 %154
  %156 = vrot.lane.b32.xlu0 %v15, 80
  %v157 = vpop.permute.xlu0 %156
  %158 = vrot.lane.b32.xlu0 %v16, 80
  %v159 = vpop.permute.xlu0 %158
  %160 = vrot.lane.b32.xlu0 %v17, 80
  %v161 = vpop.permute.xlu0 %160
  %166 = vrot.lane.b32.xlu0 %v14, 76
  %v167 = vpop.permute.xlu0 %166
  %168 = vrot.lane.b32.xlu0 %v15, 76
  %v169 = vpop.permute.xlu0 %168
  %170 = vrot.lane.b32.xlu0 %v16, 76
  %v171 = vpop.permute.xlu0 %170
  %172 = vrot.lane.b32.xlu0 %v17, 76
  %v173 = vpop.permute.xlu0 %172
  %178 = vrot.lane.b32.xlu0 %v14, 72
  %v179 = vpop.permute.xlu0 %178
  %180 = vrot.lane.b32.xlu0 %v15, 72
  %v181 = vpop.permute.xlu0 %180
  %182 = vrot.lane.b32.xlu0 %v16, 72
  %v183 = vpop.permute.xlu0 %182
  %184 = vrot.lane.b32.xlu0 %v17, 72
  %v185 = vpop.permute.xlu0 %184
  %190 = vrot.lane.b32.xlu0 %v14, 68
  %v191 = vpop.permute.xlu0 %190
  %192 = vrot.lane.b32.xlu0 %v15, 68
  %v193 = vpop.permute.xlu0 %192
  %194 = vrot.lane.b32.xlu0 %v16, 68
  %v195 = vpop.permute.xlu0 %194
  %196 = vrot.lane.b32.xlu0 %v17, 68
  %v197 = vpop.permute.xlu0 %196
  %v202 = vpack.c.bf16 %v15, %v14
  %v203 = vpack.c.bf16 %v17, %v16
  %v204 = vpack.c.bf16 %v25, %v23
  %v205 = vpack.c.bf16 %v29, %v27
  %v206 = vpack.c.bf16 %v37, %v35
  %v207 = vpack.c.bf16 %v41, %v39
  %v208 = vpack.c.bf16 %v49, %v47
  %v209 = vpack.c.bf16 %v53, %v51
  %v210 = vpack.c.bf16 %v61, %v59
  %v211 = vpack.c.bf16 %v65, %v63
  %v212 = vpack.c.bf16 %v73, %v71
  %v213 = vpack.c.bf16 %v77, %v75
  %v214 = vpack.c.bf16 %v85, %v83
  %v215 = vpack.c.bf16 %v89, %v87
  %v216 = vpack.c.bf16 %v97, %v95
  %v217 = vpack.c.bf16 %v101, %v99
  %v218 = vpack.c.bf16 %v109, %v107
  %v219 = vpack.c.bf16 %v113, %v111
  %v220 = vpack.c.bf16 %v121, %v119
  %v221 = vpack.c.bf16 %v125, %v123
  %v222 = vpack.c.bf16 %v133, %v131
  %v223 = vpack.c.bf16 %v137, %v135
  %v224 = vpack.c.bf16 %v145, %v143
  %v225 = vpack.c.bf16 %v149, %v147
  %v226 = vpack.c.bf16 %v157, %v155
  %v227 = vpack.c.bf16 %v161, %v159
  %v228 = vpack.c.bf16 %v169, %v167
  %v229 = vpack.c.bf16 %v173, %v171
  %v230 = vpack.c.bf16 %v181, %v179
  %v231 = vpack.c.bf16 %v185, %v183
  %v232 = vpack.c.bf16 %v193, %v191
  %v233 = vpack.c.bf16 %v197, %v195
  %v234 = vld [vmem:[%s1] sm:$0x3]
  %vm235 = vcmask 31744
  %v237 = vsel %vm235, %v202, 0
  %v240 = vsel %vm235, %v203, 0
  %v243 = vsel %vm235, %v204, 0
  %v246 = vsel %vm235, %v205, 0
  %v249 = vsel %vm235, %v206, 0
  %v252 = vsel %vm235, %v207, 0
  %v255 = vsel %vm235, %v208, 0
  %v258 = vsel %vm235, %v209, 0
  %v261 = vsel %vm235, %v210, 0
  %v264 = vsel %vm235, %v211, 0
  %v267 = vsel %vm235, %v212, 0
  %v270 = vsel %vm235, %v213, 0
  %v273 = vsel %vm235, %v214, 0
  %v276 = vsel %vm235, %v215, 0
  %v279 = vsel %vm235, %v216, 0
  %v282 = vsel %vm235, %v217, 0
  %v285 = vsel %vm235, %v218, 0
  %v288 = vsel %vm235, %v219, 0
  %v291 = vsel %vm235, %v220, 0
  %v294 = vsel %vm235, %v221, 0
  %v297 = vsel %vm235, %v222, 0
  %v300 = vsel %vm235, %v223, 0
  %v303 = vsel %vm235, %v224, 0
  %v306 = vsel %vm235, %v225, 0
  %v309 = vsel %vm235, %v226, 0
  %v312 = vsel %vm235, %v227, 0
  %v315 = vsel %vm235, %v228, 0
  %v318 = vsel %vm235, %v229, 0
  %v321 = vsel %vm235, %v230, 0
  %v324 = vsel %vm235, %v231, 0
  %v327 = vsel %vm235, %v232, 0
  %v330 = vsel %vm235, %v233, 0
  %vm332 = vcmask 1041408
  %v334 = vsel %vm332, %v234, 0
  %336 = vmatprep.subr.bf16.mxu0 0
  %337 = vmatpush1.bf16.msra.mxu0 0
  %338 = vmatprep.subr.bf16.mxu0 0
  %339 = vmatpush1.bf16.msra.mxu0 0
  %340 = vmatprep.subr.bf16.mxu0 0
  %341 = vmatpush1.bf16.msra.mxu0 0
  %342 = vmatprep.subr.bf16.mxu0 0
  %343 = vmatpush1.bf16.msra.mxu0 0
  %344 = vmatprep.subr.bf16.mxu0 0
  %345 = vmatpush1.bf16.msra.mxu0 0
  %346 = vmatprep.subr.bf16.mxu0 0
  %347 = vmatpush1.bf16.msra.mxu0 0
  %348 = vmatprep.subr.bf16.mxu0 0
  %349 = vmatpush1.bf16.msra.mxu0 0
  %350 = vmatprep.subr.bf16.mxu0 0
  %351 = vmatpush1.bf16.msra.mxu0 %v334
  %352 = vmatprep.subr.bf16.mxu0 0
  %353 = vmatpush2.bf16.msra.mxu0 0
  %354 = vmatprep.subr.bf16.mxu0 0
  %355 = vmatpush2.bf16.msra.mxu0 0
  %356 = vmatprep.subr.bf16.mxu0 0
  %357 = vmatpush2.bf16.msra.mxu0 0
  %358 = vmatprep.subr.bf16.mxu0 0
  %359 = vmatpush2.bf16.msra.mxu0 0
  %360 = vmatprep.subr.bf16.mxu0 0
  %361 = vmatpush2.bf16.msra.mxu0 0
  %362 = vmatprep.subr.bf16.mxu0 0
  %363 = vmatpush2.bf16.msra.mxu0 0
  %364 = vmatprep.subr.bf16.mxu0 0
  %365 = vmatpush2.bf16.msra.mxu0 0
  %366 = vmatprep.subr.bf16.mxu0 0
  %367 = vmatpush2.bf16.msra.mxu0 0
  %368 = vmatprep.mubr.bf16.mxu0 0
  %369 = vmatmul.mubr.bf16.gmra.mxu0 %v237
  %v370 = vpop.f32.mrf.mxu0
  %v371 = vadd.f32 0.0, %v370
  %v372 = vpop.f32.mrf.mxu0
  %v373 = vpop.f32.mrf.mxu0
  %v374 = vadd.f32 0.0, %v373
  %v375 = vpop.f32.mrf.mxu0
  %376 = vmatprep.mubr.bf16.mxu0 0
  %377 = vmatmul.mubr.bf16.gmra.mxu0 %v240
  %v378 = vpop.f32.mrf.mxu0
  %v379 = vadd.f32 0.0, %v378
  %v380 = vpop.f32.mrf.mxu0
  %v381 = vpop.f32.mrf.mxu0
  %v382 = vadd.f32 0.0, %v381
  %v383 = vpop.f32.mrf.mxu0
  %384 = vmatprep.mubr.bf16.mxu0 0
  %385 = vmatmul.mubr.bf16.gmra.mxu0 %v243
  %v386 = vpop.f32.mrf.mxu0
  %v387 = vadd.f32 0.0, %v386
  %v388 = vpop.f32.mrf.mxu0
  %v389 = vpop.f32.mrf.mxu0
  %v390 = vadd.f32 0.0, %v389
  %v391 = vpop.f32.mrf.mxu0
  %392 = vmatprep.mubr.bf16.mxu0 0
  %393 = vmatmul.mubr.bf16.gmra.mxu0 %v246
  %v394 = vpop.f32.mrf.mxu0
  %v395 = vadd.f32 0.0, %v394
  %v396 = vpop.f32.mrf.mxu0
  %v397 = vpop.f32.mrf.mxu0
  %v398 = vadd.f32 0.0, %v397
  %v399 = vpop.f32.mrf.mxu0
  %400 = vmatprep.mubr.bf16.mxu0 0
  %401 = vmatmul.mubr.bf16.gmra.mxu0 %v249
  %v402 = vpop.f32.mrf.mxu0
  %v403 = vadd.f32 0.0, %v402
  %v404 = vpop.f32.mrf.mxu0
  %v405 = vpop.f32.mrf.mxu0
  %v406 = vadd.f32 0.0, %v405
  %v407 = vpop.f32.mrf.mxu0
  %408 = vmatprep.mubr.bf16.mxu0 0
  %409 = vmatmul.mubr.bf16.gmra.mxu0 %v252
  %v410 = vpop.f32.mrf.mxu0
  %v411 = vadd.f32 0.0, %v410
  %v412 = vpop.f32.mrf.mxu0
  %v413 = vpop.f32.mrf.mxu0
  %v414 = vadd.f32 0.0, %v413
  %v415 = vpop.f32.mrf.mxu0
  %416 = vmatprep.mubr.bf16.mxu0 0
  %417 = vmatmul.mubr.bf16.gmra.mxu0 %v255
  %v418 = vpop.f32.mrf.mxu0
  %v419 = vadd.f32 0.0, %v418
  %v420 = vpop.f32.mrf.mxu0
  %v421 = vpop.f32.mrf.mxu0
  %v422 = vadd.f32 0.0, %v421
  %v423 = vpop.f32.mrf.mxu0
  %424 = vmatprep.mubr.bf16.mxu0 0
  %425 = vmatmul.mubr.bf16.gmra.mxu0 %v258
  %v426 = vpop.f32.mrf.mxu0
  %v427 = vadd.f32 0.0, %v426
  %v428 = vpop.f32.mrf.mxu0
  %v429 = vpop.f32.mrf.mxu0
  %v430 = vadd.f32 0.0, %v429
  %v431 = vpop.f32.mrf.mxu0
  %432 = vmatprep.mubr.bf16.mxu0 0
  %433 = vmatmul.mubr.bf16.gmra.mxu0 %v261
  %v434 = vpop.f32.mrf.mxu0
  %v435 = vadd.f32 0.0, %v434
  %v436 = vpop.f32.mrf.mxu0
  %v437 = vpop.f32.mrf.mxu0
  %v438 = vadd.f32 0.0, %v437
  %v439 = vpop.f32.mrf.mxu0
  %440 = vmatprep.mubr.bf16.mxu0 0
  %441 = vmatmul.mubr.bf16.gmra.mxu0 %v264
  %v442 = vpop.f32.mrf.mxu0
  %v443 = vadd.f32 0.0, %v442
  %v444 = vpop.f32.mrf.mxu0
  %v445 = vpop.f32.mrf.mxu0
  %v446 = vadd.f32 0.0, %v445
  %v447 = vpop.f32.mrf.mxu0
  %448 = vmatprep.mubr.bf16.mxu0 0
  %449 = vmatmul.mubr.bf16.gmra.mxu0 %v267
  %v450 = vpop.f32.mrf.mxu0
  %v451 = vadd.f32 0.0, %v450
  %v452 = vpop.f32.mrf.mxu0
  %v453 = vpop.f32.mrf.mxu0
  %v454 = vadd.f32 0.0, %v453
  %v455 = vpop.f32.mrf.mxu0
  %456 = vmatprep.mubr.bf16.mxu0 0
  %457 = vmatmul.mubr.bf16.gmra.mxu0 %v270
  %v458 = vpop.f32.mrf.mxu0
  %v459 = vadd.f32 0.0, %v458
  %v460 = vpop.f32.mrf.mxu0
  %v461 = vpop.f32.mrf.mxu0
  %v462 = vadd.f32 0.0, %v461
  %v463 = vpop.f32.mrf.mxu0
  %464 = vmatprep.mubr.bf16.mxu0 0
  %465 = vmatmul.mubr.bf16.gmra.mxu0 %v273
  %v466 = vpop.f32.mrf.mxu0
  %v467 = vadd.f32 0.0, %v466
  %v468 = vpop.f32.mrf.mxu0
  %v469 = vpop.f32.mrf.mxu0
  %v470 = vadd.f32 0.0, %v469
  %v471 = vpop.f32.mrf.mxu0
  %472 = vmatprep.mubr.bf16.mxu0 0
  %473 = vmatmul.mubr.bf16.gmra.mxu0 %v276
  %v474 = vpop.f32.mrf.mxu0
  %v475 = vadd.f32 0.0, %v474
  %v476 = vpop.f32.mrf.mxu0
  %v477 = vpop.f32.mrf.mxu0
  %v478 = vadd.f32 0.0, %v477
  %v479 = vpop.f32.mrf.mxu0
  %480 = vmatprep.mubr.bf16.mxu0 0
  %481 = vmatmul.mubr.bf16.gmra.mxu0 %v279
  %v482 = vpop.f32.mrf.mxu0
  %v483 = vadd.f32 0.0, %v482
  %v484 = vpop.f32.mrf.mxu0
  %v485 = vpop.f32.mrf.mxu0
  %v486 = vadd.f32 0.0, %v485
  %v487 = vpop.f32.mrf.mxu0
  %488 = vmatprep.mubr.bf16.mxu0 0
  %489 = vmatmul.mubr.bf16.gmra.mxu0 %v282
  %v490 = vpop.f32.mrf.mxu0
  %v491 = vadd.f32 0.0, %v490
  %v492 = vpop.f32.mrf.mxu0
  %v493 = vpop.f32.mrf.mxu0
  %v494 = vadd.f32 0.0, %v493
  %v495 = vpop.f32.mrf.mxu0
  %496 = vmatprep.mubr.bf16.mxu0 0
  %497 = vmatmul.mubr.bf16.gmra.mxu0 %v285
  %v498 = vpop.f32.mrf.mxu0
  %v499 = vadd.f32 0.0, %v498
  %v500 = vpop.f32.mrf.mxu0
  %v501 = vpop.f32.mrf.mxu0
  %v502 = vadd.f32 0.0, %v501
  %v503 = vpop.f32.mrf.mxu0
  %504 = vmatprep.mubr.bf16.mxu0 0
  %505 = vmatmul.mubr.bf16.gmra.mxu0 %v288
  %v506 = vpop.f32.mrf.mxu0
  %v507 = vadd.f32 0.0, %v506
  %v508 = vpop.f32.mrf.mxu0
  %v509 = vpop.f32.mrf.mxu0
  %v510 = vadd.f32 0.0, %v509
  %v511 = vpop.f32.mrf.mxu0
  %512 = vmatprep.mubr.bf16.mxu0 0
  %513 = vmatmul.mubr.bf16.gmra.mxu0 %v291
  %v514 = vpop.f32.mrf.mxu0
  %v515 = vadd.f32 0.0, %v514
  %v516 = vpop.f32.mrf.mxu0
  %v517 = vpop.f32.mrf.mxu0
  %v518 = vadd.f32 0.0, %v517
  %v519 = vpop.f32.mrf.mxu0
  %520 = vmatprep.mubr.bf16.mxu0 0
  %521 = vmatmul.mubr.bf16.gmra.mxu0 %v294
  %v522 = vpop.f32.mrf.mxu0
  %v523 = vadd.f32 0.0, %v522
  %v524 = vpop.f32.mrf.mxu0
  %v525 = vpop.f32.mrf.mxu0
  %v526 = vadd.f32 0.0, %v525
  %v527 = vpop.f32.mrf.mxu0
  %528 = vmatprep.mubr.bf16.mxu0 0
  %529 = vmatmul.mubr.bf16.gmra.mxu0 %v297
  %v530 = vpop.f32.mrf.mxu0
  %v531 = vadd.f32 0.0, %v530
  %v532 = vpop.f32.mrf.mxu0
  %v533 = vpop.f32.mrf.mxu0
  %v534 = vadd.f32 0.0, %v533
  %v535 = vpop.f32.mrf.mxu0
  %536 = vmatprep.mubr.bf16.mxu0 0
  %537 = vmatmul.mubr.bf16.gmra.mxu0 %v300
  %v538 = vpop.f32.mrf.mxu0
  %v539 = vadd.f32 0.0, %v538
  %v540 = vpop.f32.mrf.mxu0
  %v541 = vpop.f32.mrf.mxu0
  %v542 = vadd.f32 0.0, %v541
  %v543 = vpop.f32.mrf.mxu0
  %544 = vmatprep.mubr.bf16.mxu0 0
  %545 = vmatmul.mubr.bf16.gmra.mxu0 %v303
  %v546 = vpop.f32.mrf.mxu0
  %v547 = vadd.f32 0.0, %v546
  %v548 = vpop.f32.mrf.mxu0
  %v549 = vpop.f32.mrf.mxu0
  %v550 = vadd.f32 0.0, %v549
  %v551 = vpop.f32.mrf.mxu0
  %552 = vmatprep.mubr.bf16.mxu0 0
  %553 = vmatmul.mubr.bf16.gmra.mxu0 %v306
  %v554 = vpop.f32.mrf.mxu0
  %v555 = vadd.f32 0.0, %v554
  %v556 = vpop.f32.mrf.mxu0
  %v557 = vpop.f32.mrf.mxu0
  %v558 = vadd.f32 0.0, %v557
  %v559 = vpop.f32.mrf.mxu0
  %560 = vmatprep.mubr.bf16.mxu0 0
  %561 = vmatmul.mubr.bf16.gmra.mxu0 %v309
  %v562 = vpop.f32.mrf.mxu0
  %v563 = vadd.f32 0.0, %v562
  %v564 = vpop.f32.mrf.mxu0
  %v565 = vpop.f32.mrf.mxu0
  %v566 = vadd.f32 0.0, %v565
  %v567 = vpop.f32.mrf.mxu0
  %568 = vmatprep.mubr.bf16.mxu0 0
  %569 = vmatmul.mubr.bf16.gmra.mxu0 %v312
  %v570 = vpop.f32.mrf.mxu0
  %v571 = vadd.f32 0.0, %v570
  %v572 = vpop.f32.mrf.mxu0
  %v573 = vpop.f32.mrf.mxu0
  %v574 = vadd.f32 0.0, %v573
  %v575 = vpop.f32.mrf.mxu0
  %576 = vmatprep.mubr.bf16.mxu0 0
  %577 = vmatmul.mubr.bf16.gmra.mxu0 %v315
  %v578 = vpop.f32.mrf.mxu0
  %v579 = vadd.f32 0.0, %v578
  %v580 = vpop.f32.mrf.mxu0
  %v581 = vpop.f32.mrf.mxu0
  %v582 = vadd.f32 0.0, %v581
  %v583 = vpop.f32.mrf.mxu0
  %584 = vmatprep.mubr.bf16.mxu0 0
  %585 = vmatmul.mubr.bf16.gmra.mxu0 %v318
  %v586 = vpop.f32.mrf.mxu0
  %v587 = vadd.f32 0.0, %v586
  %v588 = vpop.f32.mrf.mxu0
  %v589 = vpop.f32.mrf.mxu0
  %v590 = vadd.f32 0.0, %v589
  %v591 = vpop.f32.mrf.mxu0
  %592 = vmatprep.mubr.bf16.mxu0 0
  %593 = vmatmul.mubr.bf16.gmra.mxu0 %v321
  %v594 = vpop.f32.mrf.mxu0
  %v595 = vadd.f32 0.0, %v594
  %v596 = vpop.f32.mrf.mxu0
  %v597 = vpop.f32.mrf.mxu0
  %v598 = vadd.f32 0.0, %v597
  %v599 = vpop.f32.mrf.mxu0
  %600 = vmatprep.mubr.bf16.mxu0 0
  %601 = vmatmul.mubr.bf16.gmra.mxu0 %v324
  %v602 = vpop.f32.mrf.mxu0
  %v603 = vadd.f32 0.0, %v602
  %v604 = vpop.f32.mrf.mxu0
  %v605 = vpop.f32.mrf.mxu0
  %v606 = vadd.f32 0.0, %v605
  %v607 = vpop.f32.mrf.mxu0
  %608 = vmatprep.mubr.bf16.mxu0 0
  %609 = vmatmul.mubr.bf16.gmra.mxu0 %v327
  %v610 = vpop.f32.mrf.mxu0
  %v611 = vadd.f32 0.0, %v610
  %v612 = vpop.f32.mrf.mxu0
  %v613 = vpop.f32.mrf.mxu0
  %v614 = vadd.f32 0.0, %v613
  %v615 = vpop.f32.mrf.mxu0
  %616 = vmatprep.mubr.bf16.mxu0 0
  %617 = vmatmul.mubr.bf16.gmra.mxu0 %v330
  %v618 = vpop.f32.mrf.mxu0
  %v619 = vadd.f32 0.0, %v618
  %v620 = vpop.f32.mrf.mxu0
  %v621 = vpop.f32.mrf.mxu0
  %v622 = vadd.f32 0.0, %v621
  %v623 = vpop.f32.mrf.mxu0
  %624 = vdwg.mxu0
  %629 = vrot.lane.b32.xlu0 %v387, 8
  %v630 = vpop.permute.xlu0 %629
  %631 = vrot.lane.b32.xlu0 %v390, 8
  %v632 = vpop.permute.xlu0 %631
  %633 = vrot.lane.b32.xlu0 %v395, 8
  %v634 = vpop.permute.xlu0 %633
  %635 = vrot.lane.b32.xlu0 %v398, 8
  %v636 = vpop.permute.xlu0 %635
  %645 = vrot.lane.b32.xlu0 %v403, 16
  %v646 = vpop.permute.xlu0 %645
  %647 = vrot.lane.b32.xlu0 %v406, 16
  %v648 = vpop.permute.xlu0 %647
  %649 = vrot.lane.b32.xlu0 %v411, 16
  %v650 = vpop.permute.xlu0 %649
  %651 = vrot.lane.b32.xlu0 %v414, 16
  %v652 = vpop.permute.xlu0 %651
  %661 = vrot.lane.b32.xlu0 %v419, 24
  %v662 = vpop.permute.xlu0 %661
  %663 = vrot.lane.b32.xlu0 %v422, 24
  %v664 = vpop.permute.xlu0 %663
  %665 = vrot.lane.b32.xlu0 %v427, 24
  %v666 = vpop.permute.xlu0 %665
  %667 = vrot.lane.b32.xlu0 %v430, 24
  %v668 = vpop.permute.xlu0 %667
  %677 = vrot.lane.b32.xlu0 %v435, 32
  %v678 = vpop.permute.xlu0 %677
  %679 = vrot.lane.b32.xlu0 %v438, 32
  %v680 = vpop.permute.xlu0 %679
  %681 = vrot.lane.b32.xlu0 %v443, 32
  %v682 = vpop.permute.xlu0 %681
  %683 = vrot.lane.b32.xlu0 %v446, 32
  %v684 = vpop.permute.xlu0 %683
  %693 = vrot.lane.b32.xlu0 %v451, 40
  %v694 = vpop.permute.xlu0 %693
  %695 = vrot.lane.b32.xlu0 %v454, 40
  %v696 = vpop.permute.xlu0 %695
  %697 = vrot.lane.b32.xlu0 %v459, 40
  %v698 = vpop.permute.xlu0 %697
  %699 = vrot.lane.b32.xlu0 %v462, 40
  %v700 = vpop.permute.xlu0 %699
  %709 = vrot.lane.b32.xlu0 %v467, 48
  %v710 = vpop.permute.xlu0 %709
  %711 = vrot.lane.b32.xlu0 %v470, 48
  %v712 = vpop.permute.xlu0 %711
  %713 = vrot.lane.b32.xlu0 %v475, 48
  %v714 = vpop.permute.xlu0 %713
  %715 = vrot.lane.b32.xlu0 %v478, 48
  %v716 = vpop.permute.xlu0 %715
  %725 = vrot.lane.b32.xlu0 %v483, 56
  %v726 = vpop.permute.xlu0 %725
  %727 = vrot.lane.b32.xlu0 %v486, 56
  %v728 = vpop.permute.xlu0 %727
  %729 = vrot.lane.b32.xlu0 %v491, 56
  %v730 = vpop.permute.xlu0 %729
  %731 = vrot.lane.b32.xlu0 %v494, 56
  %v732 = vpop.permute.xlu0 %731
  %741 = vrot.lane.b32.xlu0 %v499, 64
  %v742 = vpop.permute.xlu0 %741
  %743 = vrot.lane.b32.xlu0 %v502, 64
  %v744 = vpop.permute.xlu0 %743
  %745 = vrot.lane.b32.xlu0 %v507, 64
  %v746 = vpop.permute.xlu0 %745
  %747 = vrot.lane.b32.xlu0 %v510, 64
  %v748 = vpop.permute.xlu0 %747
  %757 = vrot.lane.b32.xlu0 %v515, 72
  %v758 = vpop.permute.xlu0 %757
  %759 = vrot.lane.b32.xlu0 %v518, 72
  %v760 = vpop.permute.xlu0 %759
  %761 = vrot.lane.b32.xlu0 %v523, 72
  %v762 = vpop.permute.xlu0 %761
  %763 = vrot.lane.b32.xlu0 %v526, 72
  %v764 = vpop.permute.xlu0 %763
  %773 = vrot.lane.b32.xlu0 %v531, 80
  %v774 = vpop.permute.xlu0 %773
  %775 = vrot.lane.b32.xlu0 %v534, 80
  %v776 = vpop.permute.xlu0 %775
  %777 = vrot.lane.b32.xlu0 %v539, 80
  %v778 = vpop.permute.xlu0 %777
  %779 = vrot.lane.b32.xlu0 %v542, 80
  %v780 = vpop.permute.xlu0 %779
  %789 = vrot.lane.b32.xlu0 %v547, 88
  %v790 = vpop.permute.xlu0 %789
  %791 = vrot.lane.b32.xlu0 %v550, 88
  %v792 = vpop.permute.xlu0 %791
  %793 = vrot.lane.b32.xlu0 %v555, 88
  %v794 = vpop.permute.xlu0 %793
  %795 = vrot.lane.b32.xlu0 %v558, 88
  %v796 = vpop.permute.xlu0 %795
  %805 = vrot.lane.b32.xlu0 %v563, 96
  %v806 = vpop.permute.xlu0 %805
  %807 = vrot.lane.b32.xlu0 %v566, 96
  %v808 = vpop.permute.xlu0 %807
  %809 = vrot.lane.b32.xlu0 %v571, 96
  %v810 = vpop.permute.xlu0 %809
  %811 = vrot.lane.b32.xlu0 %v574, 96
  %v812 = vpop.permute.xlu0 %811
  %821 = vrot.lane.b32.xlu0 %v579, 104
  %v822 = vpop.permute.xlu0 %821
  %823 = vrot.lane.b32.xlu0 %v582, 104
  %v824 = vpop.permute.xlu0 %823
  %825 = vrot.lane.b32.xlu0 %v587, 104
  %v826 = vpop.permute.xlu0 %825
  %827 = vrot.lane.b32.xlu0 %v590, 104
  %v828 = vpop.permute.xlu0 %827
  %837 = vrot.lane.b32.xlu0 %v595, 112
  %v838 = vpop.permute.xlu0 %837
  %839 = vrot.lane.b32.xlu0 %v598, 112
  %v840 = vpop.permute.xlu0 %839
  %841 = vrot.lane.b32.xlu0 %v603, 112
  %v842 = vpop.permute.xlu0 %841
  %843 = vrot.lane.b32.xlu0 %v606, 112
  %v844 = vpop.permute.xlu0 %843
  %853 = vrot.lane.b32.xlu0 %v611, 120
  %v854 = vpop.permute.xlu0 %853
  %855 = vrot.lane.b32.xlu0 %v614, 120
  %v856 = vpop.permute.xlu0 %855
  %857 = vrot.lane.b32.xlu0 %v619, 120
  %v858 = vpop.permute.xlu0 %857
  %859 = vrot.lane.b32.xlu0 %v622, 120
  %v860 = vpop.permute.xlu0 %859
  %vm865 = vcmask 64512
  %v866 = vsel %vm865, %v371, %v630
  %v867 = vsel %vm865, %v374, %v632
  %v868 = vsel %vm865, %v379, %v634
  %v869 = vsel %vm865, %v382, %v636
  %vm870 = vcmask 130048
  %v871 = vsel %vm870, %v866, %v646
  %v872 = vsel %vm870, %v867, %v648
  %v873 = vsel %vm870, %v868, %v650
  %v874 = vsel %vm870, %v869, %v652
  %vm875 = vcmask 195584
  %v876 = vsel %vm875, %v871, %v662
  %v877 = vsel %vm875, %v872, %v664
  %v878 = vsel %vm875, %v873, %v666
  %v879 = vsel %vm875, %v874, %v668
  %vm880 = vcmask 261120
  %v881 = vsel %vm880, %v876, %v678
  %v882 = vsel %vm880, %v877, %v680
  %v883 = vsel %vm880, %v878, %v682
  %v884 = vsel %vm880, %v879, %v684
  %vm885 = vcmask 326656
  %v886 = vsel %vm885, %v881, %v694
  %v887 = vsel %vm885, %v882, %v696
  %v888 = vsel %vm885, %v883, %v698
  %v889 = vsel %vm885, %v884, %v700
  %vm890 = vcmask 392192
  %v891 = vsel %vm890, %v886, %v710
  %v892 = vsel %vm890, %v887, %v712
  %v893 = vsel %vm890, %v888, %v714
  %v894 = vsel %vm890, %v889, %v716
  %vm895 = vcmask 457728
  %v896 = vsel %vm895, %v891, %v726
  %v897 = vsel %vm895, %v892, %v728
  %v898 = vsel %vm895, %v893, %v730
  %v899 = vsel %vm895, %v894, %v732
  %vm900 = vcmask 523264
  %v901 = vsel %vm900, %v896, %v742
  %v902 = vsel %vm900, %v897, %v744
  %v903 = vsel %vm900, %v898, %v746
  %v904 = vsel %vm900, %v899, %v748
  %vm905 = vcmask 588800
  %v906 = vsel %vm905, %v901, %v758
  %v907 = vsel %vm905, %v902, %v760
  %v908 = vsel %vm905, %v903, %v762
  %v909 = vsel %vm905, %v904, %v764
  %vm910 = vcmask 654336
  %v911 = vsel %vm910, %v906, %v774
  %v912 = vsel %vm910, %v907, %v776
  %v913 = vsel %vm910, %v908, %v778
  %v914 = vsel %vm910, %v909, %v780
  %vm915 = vcmask 719872
  %v916 = vsel %vm915, %v911, %v790
  %v917 = vsel %vm915, %v912, %v792
  %v918 = vsel %vm915, %v913, %v794
  %v919 = vsel %vm915, %v914, %v796
  %vm920 = vcmask 785408
  %v921 = vsel %vm920, %v916, %v806
  %v922 = vsel %vm920, %v917, %v808
  %v923 = vsel %vm920, %v918, %v810
  %v924 = vsel %vm920, %v919, %v812
  %vm925 = vcmask 850944
  %v926 = vsel %vm925, %v921, %v822
  %v927 = vsel %vm925, %v922, %v824
  %v928 = vsel %vm925, %v923, %v826
  %v929 = vsel %vm925, %v924, %v828
  %vm930 = vcmask 916480
  %v931 = vsel %vm930, %v926, %v838
  %v932 = vsel %vm930, %v927, %v840
  %v933 = vsel %vm930, %v928, %v842
  %v934 = vsel %vm930, %v929, %v844
  %vm935 = vcmask 982016
  %v936 = vsel %vm935, %v931, %v854
  %v937 = vsel %vm935, %v932, %v856
  %v938 = vsel %vm935, %v933, %v858
  %v939 = vsel %vm935, %v934, %v860
  %940 = vst [vmem:[%s2] sm:$0xff] %v936
  %941 = vst [vmem:[%s2 + $0x8] sm:$0xff] %v937
  %942 = vst [vmem:[%s2 + $0x10] sm:$0xff] %v938
  %943 = vst [vmem:[%s2 + $0x18] sm:$0xff] %v939
  %v944 = vsel %vm865, %v371, 0.0
  %v945 = vsel %vm865, %v374, 0.0
  %v946 = vadd.f32 %v944, %v945
  %v947 = vsel %vm865, %v379, 0.0
  %v948 = vadd.f32 %v946, %v947
  %v949 = vsel %vm865, %v382, 0.0
  %v950 = vadd.f32 %v948, %v949
  %v951 = vsel %vm865, %v387, 0.0
  %v952 = vadd.f32 %v950, %v951
  %v953 = vsel %vm865, %v390, 0.0
  %v954 = vadd.f32 %v952, %v953
  %v955 = vsel %vm865, %v395, 0.0
  %v956 = vadd.f32 %v954, %v955
  %v957 = vsel %vm865, %v398, 0.0
  %v958 = vadd.f32 %v956, %v957
  %v959 = vsel %vm865, %v403, 0.0
  %v960 = vadd.f32 %v958, %v959
  %v961 = vsel %vm865, %v406, 0.0
  %v962 = vadd.f32 %v960, %v961
  %v963 = vsel %vm865, %v411, 0.0
  %v964 = vadd.f32 %v962, %v963
  %v965 = vsel %vm865, %v414, 0.0
  %v966 = vadd.f32 %v964, %v965
  %v967 = vsel %vm865, %v419, 0.0
  %v968 = vadd.f32 %v966, %v967
  %v969 = vsel %vm865, %v422, 0.0
  %v970 = vadd.f32 %v968, %v969
  %v971 = vsel %vm865, %v427, 0.0
  %v972 = vadd.f32 %v970, %v971
  %v973 = vsel %vm865, %v430, 0.0
  %v974 = vadd.f32 %v972, %v973
  %v975 = vsel %vm865, %v435, 0.0
  %v976 = vadd.f32 %v974, %v975
  %v977 = vsel %vm865, %v438, 0.0
  %v978 = vadd.f32 %v976, %v977
  %v979 = vsel %vm865, %v443, 0.0
  %v980 = vadd.f32 %v978, %v979
  %v981 = vsel %vm865, %v446, 0.0
  %v982 = vadd.f32 %v980, %v981
  %v983 = vsel %vm865, %v451, 0.0
  %v984 = vadd.f32 %v982, %v983
  %v985 = vsel %vm865, %v454, 0.0
  %v986 = vadd.f32 %v984, %v985
  %v987 = vsel %vm865, %v459, 0.0
  %v988 = vadd.f32 %v986, %v987
  %v989 = vsel %vm865, %v462, 0.0
  %v990 = vadd.f32 %v988, %v989
  %v991 = vsel %vm865, %v467, 0.0
  %v992 = vadd.f32 %v990, %v991
  %v993 = vsel %vm865, %v470, 0.0
  %v994 = vadd.f32 %v992, %v993
  %v995 = vsel %vm865, %v475, 0.0
  %v996 = vadd.f32 %v994, %v995
  %v997 = vsel %vm865, %v478, 0.0
  %v998 = vadd.f32 %v996, %v997
  %v999 = vsel %vm865, %v483, 0.0
  %v1000 = vadd.f32 %v998, %v999
  %v1001 = vsel %vm865, %v486, 0.0
  %v1002 = vadd.f32 %v1000, %v1001
  %v1003 = vsel %vm865, %v491, 0.0
  %v1004 = vadd.f32 %v1002, %v1003
  %v1005 = vsel %vm865, %v494, 0.0
  %v1006 = vadd.f32 %v1004, %v1005
  %v1007 = vsel %vm865, %v499, 0.0
  %v1008 = vadd.f32 %v1006, %v1007
  %v1009 = vsel %vm865, %v502, 0.0
  %v1010 = vadd.f32 %v1008, %v1009
  %v1011 = vsel %vm865, %v507, 0.0
  %v1012 = vadd.f32 %v1010, %v1011
  %v1013 = vsel %vm865, %v510, 0.0
  %v1014 = vadd.f32 %v1012, %v1013
  %v1015 = vsel %vm865, %v515, 0.0
  %v1016 = vadd.f32 %v1014, %v1015
  %v1017 = vsel %vm865, %v518, 0.0
  %v1018 = vadd.f32 %v1016, %v1017
  %v1019 = vsel %vm865, %v523, 0.0
  %v1020 = vadd.f32 %v1018, %v1019
  %v1021 = vsel %vm865, %v526, 0.0
  %v1022 = vadd.f32 %v1020, %v1021
  %v1023 = vsel %vm865, %v531, 0.0
  %v1024 = vadd.f32 %v1022, %v1023
  %v1025 = vsel %vm865, %v534, 0.0
  %v1026 = vadd.f32 %v1024, %v1025
  %v1027 = vsel %vm865, %v539, 0.0
  %v1028 = vadd.f32 %v1026, %v1027
  %v1029 = vsel %vm865, %v542, 0.0
  %v1030 = vadd.f32 %v1028, %v1029
  %v1031 = vsel %vm865, %v547, 0.0
  %v1032 = vadd.f32 %v1030, %v1031
  %v1033 = vsel %vm865, %v550, 0.0
  %v1034 = vadd.f32 %v1032, %v1033
  %v1035 = vsel %vm865, %v555, 0.0
  %v1036 = vadd.f32 %v1034, %v1035
  %v1037 = vsel %vm865, %v558, 0.0
  %v1038 = vadd.f32 %v1036, %v1037
  %v1039 = vsel %vm865, %v563, 0.0
  %v1040 = vadd.f32 %v1038, %v1039
  %v1041 = vsel %vm865, %v566, 0.0
  %v1042 = vadd.f32 %v1040, %v1041
  %v1043 = vsel %vm865, %v571, 0.0
  %v1044 = vadd.f32 %v1042, %v1043
  %v1045 = vsel %vm865, %v574, 0.0
  %v1046 = vadd.f32 %v1044, %v1045
  %v1047 = vsel %vm865, %v579, 0.0
  %v1048 = vadd.f32 %v1046, %v1047
  %v1049 = vsel %vm865, %v582, 0.0
  %v1050 = vadd.f32 %v1048, %v1049
  %v1051 = vsel %vm865, %v587, 0.0
  %v1052 = vadd.f32 %v1050, %v1051
  %v1053 = vsel %vm865, %v590, 0.0
  %v1054 = vadd.f32 %v1052, %v1053
  %v1055 = vsel %vm865, %v595, 0.0
  %v1056 = vadd.f32 %v1054, %v1055
  %v1057 = vsel %vm865, %v598, 0.0
  %v1058 = vadd.f32 %v1056, %v1057
  %v1059 = vsel %vm865, %v603, 0.0
  %v1060 = vadd.f32 %v1058, %v1059
  %v1061 = vsel %vm865, %v606, 0.0
  %v1062 = vadd.f32 %v1060, %v1061
  %v1063 = vsel %vm865, %v611, 0.0
  %v1064 = vadd.f32 %v1062, %v1063
  %v1065 = vsel %vm865, %v614, 0.0
  %v1066 = vadd.f32 %v1064, %v1065
  %v1067 = vsel %vm865, %v619, 0.0
  %v1068 = vadd.f32 %v1066, %v1067
  %v1069 = vsel %vm865, %v622, 0.0
  %v1070 = vadd.f32 %v1068, %v1069
  %v1071 = vrot.slane %v1070, 4
  %v1072 = vadd.f32 %v1070, %v1071
  %v1073 = vrot.slane %v1072, 2
  %v1074 = vadd.f32 %v1072, %v1073
  %v1075 = vrot.slane %v1074, 1
  %v1076 = vadd.f32 %v1074, %v1075
  %vm1077 = vcmask 57344
  %1078 = vst.msk [vmem:[%s3] sm:$0x1] %vm1077, %v1076
  %v1079 = vmul.f32 %v371, %v371
  %v1080 = vmul.f32 %v374, %v374
  %v1081 = vmul.f32 %v379, %v379
  %v1082 = vmul.f32 %v382, %v382
  %v1083 = vmul.f32 %v387, %v387
  %v1084 = vmul.f32 %v390, %v390
  %v1085 = vmul.f32 %v395, %v395
  %v1086 = vmul.f32 %v398, %v398
  %v1087 = vmul.f32 %v403, %v403
  %v1088 = vmul.f32 %v406, %v406
  %v1089 = vmul.f32 %v411, %v411
  %v1090 = vmul.f32 %v414, %v414
  %v1091 = vmul.f32 %v419, %v419
  %v1092 = vmul.f32 %v422, %v422
  %v1093 = vmul.f32 %v427, %v427
  %v1094 = vmul.f32 %v430, %v430
  %v1095 = vmul.f32 %v435, %v435
  %v1096 = vmul.f32 %v438, %v438
  %v1097 = vmul.f32 %v443, %v443
  %v1098 = vmul.f32 %v446, %v446
  %v1099 = vmul.f32 %v451, %v451
  %v1100 = vmul.f32 %v454, %v454
  %v1101 = vmul.f32 %v459, %v459
  %v1102 = vmul.f32 %v462, %v462
  %v1103 = vmul.f32 %v467, %v467
  %v1104 = vmul.f32 %v470, %v470
  %v1105 = vmul.f32 %v475, %v475
  %v1106 = vmul.f32 %v478, %v478
  %v1107 = vmul.f32 %v483, %v483
  %v1108 = vmul.f32 %v486, %v486
  %v1109 = vmul.f32 %v491, %v491
  %v1110 = vmul.f32 %v494, %v494
  %v1111 = vmul.f32 %v499, %v499
  %v1112 = vmul.f32 %v502, %v502
  %v1113 = vmul.f32 %v507, %v507
  %v1114 = vmul.f32 %v510, %v510
  %v1115 = vmul.f32 %v515, %v515
  %v1116 = vmul.f32 %v518, %v518
  %v1117 = vmul.f32 %v523, %v523
  %v1118 = vmul.f32 %v526, %v526
  %v1119 = vmul.f32 %v531, %v531
  %v1120 = vmul.f32 %v534, %v534
  %v1121 = vmul.f32 %v539, %v539
  %v1122 = vmul.f32 %v542, %v542
  %v1123 = vmul.f32 %v547, %v547
  %v1124 = vmul.f32 %v550, %v550
  %v1125 = vmul.f32 %v555, %v555
  %v1126 = vmul.f32 %v558, %v558
  %v1127 = vmul.f32 %v563, %v563
  %v1128 = vmul.f32 %v566, %v566
  %v1129 = vmul.f32 %v571, %v571
  %v1130 = vmul.f32 %v574, %v574
  %v1131 = vmul.f32 %v579, %v579
  %v1132 = vmul.f32 %v582, %v582
  %v1133 = vmul.f32 %v587, %v587
  %v1134 = vmul.f32 %v590, %v590
  %v1135 = vmul.f32 %v595, %v595
  %v1136 = vmul.f32 %v598, %v598
  %v1137 = vmul.f32 %v603, %v603
  %v1138 = vmul.f32 %v606, %v606
  %v1139 = vmul.f32 %v611, %v611
  %v1140 = vmul.f32 %v614, %v614
  %v1141 = vmul.f32 %v619, %v619
  %v1142 = vmul.f32 %v622, %v622
  %v1143 = vsel %vm865, %v1079, 0.0
  %v1144 = vsel %vm865, %v1080, 0.0
  %v1145 = vadd.f32 %v1143, %v1144
  %v1146 = vsel %vm865, %v1081, 0.0
  %v1147 = vadd.f32 %v1145, %v1146
  %v1148 = vsel %vm865, %v1082, 0.0
  %v1149 = vadd.f32 %v1147, %v1148
  %v1150 = vsel %vm865, %v1083, 0.0
  %v1151 = vadd.f32 %v1149, %v1150
  %v1152 = vsel %vm865, %v1084, 0.0
  %v1153 = vadd.f32 %v1151, %v1152
  %v1154 = vsel %vm865, %v1085, 0.0
  %v1155 = vadd.f32 %v1153, %v1154
  %v1156 = vsel %vm865, %v1086, 0.0
  %v1157 = vadd.f32 %v1155, %v1156
  %v1158 = vsel %vm865, %v1087, 0.0
  %v1159 = vadd.f32 %v1157, %v1158
  %v1160 = vsel %vm865, %v1088, 0.0
  %v1161 = vadd.f32 %v1159, %v1160
  %v1162 = vsel %vm865, %v1089, 0.0
  %v1163 = vadd.f32 %v1161, %v1162
  %v1164 = vsel %vm865, %v1090, 0.0
  %v1165 = vadd.f32 %v1163, %v1164
  %v1166 = vsel %vm865, %v1091, 0.0
  %v1167 = vadd.f32 %v1165, %v1166
  %v1168 = vsel %vm865, %v1092, 0.0
  %v1169 = vadd.f32 %v1167, %v1168
  %v1170 = vsel %vm865, %v1093, 0.0
  %v1171 = vadd.f32 %v1169, %v1170
  %v1172 = vsel %vm865, %v1094, 0.0
  %v1173 = vadd.f32 %v1171, %v1172
  %v1174 = vsel %vm865, %v1095, 0.0
  %v1175 = vadd.f32 %v1173, %v1174
  %v1176 = vsel %vm865, %v1096, 0.0
  %v1177 = vadd.f32 %v1175, %v1176
  %v1178 = vsel %vm865, %v1097, 0.0
  %v1179 = vadd.f32 %v1177, %v1178
  %v1180 = vsel %vm865, %v1098, 0.0
  %v1181 = vadd.f32 %v1179, %v1180
  %v1182 = vsel %vm865, %v1099, 0.0
  %v1183 = vadd.f32 %v1181, %v1182
  %v1184 = vsel %vm865, %v1100, 0.0
  %v1185 = vadd.f32 %v1183, %v1184
  %v1186 = vsel %vm865, %v1101, 0.0
  %v1187 = vadd.f32 %v1185, %v1186
  %v1188 = vsel %vm865, %v1102, 0.0
  %v1189 = vadd.f32 %v1187, %v1188
  %v1190 = vsel %vm865, %v1103, 0.0
  %v1191 = vadd.f32 %v1189, %v1190
  %v1192 = vsel %vm865, %v1104, 0.0
  %v1193 = vadd.f32 %v1191, %v1192
  %v1194 = vsel %vm865, %v1105, 0.0
  %v1195 = vadd.f32 %v1193, %v1194
  %v1196 = vsel %vm865, %v1106, 0.0
  %v1197 = vadd.f32 %v1195, %v1196
  %v1198 = vsel %vm865, %v1107, 0.0
  %v1199 = vadd.f32 %v1197, %v1198
  %v1200 = vsel %vm865, %v1108, 0.0
  %v1201 = vadd.f32 %v1199, %v1200
  %v1202 = vsel %vm865, %v1109, 0.0
  %v1203 = vadd.f32 %v1201, %v1202
  %v1204 = vsel %vm865, %v1110, 0.0
  %v1205 = vadd.f32 %v1203, %v1204
  %v1206 = vsel %vm865, %v1111, 0.0
  %v1207 = vadd.f32 %v1205, %v1206
  %v1208 = vsel %vm865, %v1112, 0.0
  %v1209 = vadd.f32 %v1207, %v1208
  %v1210 = vsel %vm865, %v1113, 0.0
  %v1211 = vadd.f32 %v1209, %v1210
  %v1212 = vsel %vm865, %v1114, 0.0
  %v1213 = vadd.f32 %v1211, %v1212
  %v1214 = vsel %vm865, %v1115, 0.0
  %v1215 = vadd.f32 %v1213, %v1214
  %v1216 = vsel %vm865, %v1116, 0.0
  %v1217 = vadd.f32 %v1215, %v1216
  %v1218 = vsel %vm865, %v1117, 0.0
  %v1219 = vadd.f32 %v1217, %v1218
  %v1220 = vsel %vm865, %v1118, 0.0
  %v1221 = vadd.f32 %v1219, %v1220
  %v1222 = vsel %vm865, %v1119, 0.0
  %v1223 = vadd.f32 %v1221, %v1222
  %v1224 = vsel %vm865, %v1120, 0.0
  %v1225 = vadd.f32 %v1223, %v1224
  %v1226 = vsel %vm865, %v1121, 0.0
  %v1227 = vadd.f32 %v1225, %v1226
  %v1228 = vsel %vm865, %v1122, 0.0
  %v1229 = vadd.f32 %v1227, %v1228
  %v1230 = vsel %vm865, %v1123, 0.0
  %v1231 = vadd.f32 %v1229, %v1230
  %v1232 = vsel %vm865, %v1124, 0.0
  %v1233 = vadd.f32 %v1231, %v1232
  %v1234 = vsel %vm865, %v1125, 0.0
  %v1235 = vadd.f32 %v1233, %v1234
  %v1236 = vsel %vm865, %v1126, 0.0
  %v1237 = vadd.f32 %v1235, %v1236
  %v1238 = vsel %vm865, %v1127, 0.0
  %v1239 = vadd.f32 %v1237, %v1238
  %v1240 = vsel %vm865, %v1128, 0.0
  %v1241 = vadd.f32 %v1239, %v1240
  %v1242 = vsel %vm865, %v1129, 0.0
  %v1243 = vadd.f32 %v1241, %v1242
  %v1244 = vsel %vm865, %v1130, 0.0
  %v1245 = vadd.f32 %v1243, %v1244
  %v1246 = vsel %vm865, %v1131, 0.0
  %v1247 = vadd.f32 %v1245, %v1246
  %v1248 = vsel %vm865, %v1132, 0.0
  %v1249 = vadd.f32 %v1247, %v1248
  %v1250 = vsel %vm865, %v1133, 0.0
  %v1251 = vadd.f32 %v1249, %v1250
  %v1252 = vsel %vm865, %v1134, 0.0
  %v1253 = vadd.f32 %v1251, %v1252
  %v1254 = vsel %vm865, %v1135, 0.0
  %v1255 = vadd.f32 %v1253, %v1254
  %v1256 = vsel %vm865, %v1136, 0.0
  %v1257 = vadd.f32 %v1255, %v1256
  %v1258 = vsel %vm865, %v1137, 0.0
  %v1259 = vadd.f32 %v1257, %v1258
  %v1260 = vsel %vm865, %v1138, 0.0
  %v1261 = vadd.f32 %v1259, %v1260
  %v1262 = vsel %vm865, %v1139, 0.0
  %v1263 = vadd.f32 %v1261, %v1262
  %v1264 = vsel %vm865, %v1140, 0.0
  %v1265 = vadd.f32 %v1263, %v1264
  %v1266 = vsel %vm865, %v1141, 0.0
  %v1267 = vadd.f32 %v1265, %v1266
  %v1268 = vsel %vm865, %v1142, 0.0
  %v1269 = vadd.f32 %v1267, %v1268
  %v1270 = vrot.slane %v1269, 4
  %v1271 = vadd.f32 %v1269, %v1270
  %v1272 = vrot.slane %v1271, 2
  %v1273 = vadd.f32 %v1271, %v1272
  %v1274 = vrot.slane %v1273, 1
  %v1275 = vadd.f32 %v1273, %v1274
  %1276 = vst.msk [vmem:[%s3 + $0x1] sm:$0x1] %vm1077, %v1275
  // Predicated region
  $region10: #{_unnamed_function_.4} parent=0 // pred_check
    _
  $region11: #{_unnamed_function_.4} parent=0 // pred_check_branch
    %1278 = sbr.rel (0) target = $region13
  $region12: #{_unnamed_function_.4} parent=0 // pred_region
    _
  $region13: #{_unnamed_function_.4} parent=0 // pred_fallthru
    _
  // Predicated region
  $region14: #{_unnamed_function_.4} parent=0 // pred_check
    _
  $region15: #{_unnamed_function_.4} parent=0 // pred_check_branch
    %1280 = sbr.rel (0) target = $region17
  $region16: #{_unnamed_function_.4} parent=0 // pred_region
    _
  $region17: #{_unnamed_function_.4} parent=0 // pred_fallthru
    _
  // Predicated region
  $region18: #{_unnamed_function_.4} parent=0 // pred_check
    _
  $region19: #{_unnamed_function_.4} parent=0 // pred_check_branch
    %1282 = sbr.rel (0) target = $region21
  $region20: #{_unnamed_function_.4} parent=0 // pred_region
    _
  $region21: #{_unnamed_function_.4} parent=0 // pred_fallthru
    _
  // Predicated region
  $region22: #{_unnamed_function_.4} parent=0 // pred_check
    _
  $region23: #{_unnamed_function_.4} parent=0 // pred_check_branch
    %1284 = sbr.rel (0) target = $region25
  $region24: #{_unnamed_function_.4} parent=0 // pred_region
    _
  $region25: #{_unnamed_function_.4} parent=0 // pred_fallthru
    _

// kernel: _unnamed_function_.5
$region0: #{_unnamed_function_.5}
  #allocation0 [shape = 'u32[]', space=smem, size = 0x4, offset = 0x4, fixed_abs, tag = 'smem constant byte address 0x4 - core index']
  #allocation1 [shape = 'u32[144,128]{1,0:T(1,128)}', space=vmem, size = 0x12000, scoped, tag = 'internal scratch']
  %s0 = inlined_call_operand.vmem [shape: f32[2,16,16,8], index: 0, kind: input, shape index: {}, may-alias: {0,1,2}]
  %s1 = inlined_call_operand.vmem [shape: f32[2,16,16,8], index: 1, kind: input, shape index: {}, may-alias: {0,1,2}]
  %s2 = inlined_call_operand.vmem [shape: f32[2,16,16,8], index: 2, kind: input, shape index: {}, may-alias: {0,1,2}]
  %s3 = inlined_call_operand.vmem [shape: f32[1,8], index: 3, kind: input, shape index: {}]
  %s4 = inlined_call_operand.vmem [shape: f32[1,8], index: 4, kind: input, shape index: {}]
  %s5 = inlined_call_operand.vmem [shape: bf16[72,8], index: 5, kind: input, shape index: {}]
  %s6 = inlined_call_operand.vmem [shape: f32[2,16,16,8], index: 6, kind: output, shape index: {0}]
  %s7 = inlined_call_operand.vmem [shape: f32[2,2,8], index: 7, kind: output, shape index: {1}]
  %8 = xla_tuple %s6, %s7
  %s9 = sld [smem:[#allocation0]]
  $region65: #{_unnamed_function_.5} parent=0
    _
  %s11 = ssub.s32 1, %s9
  %s12 = scalar_select 0, %s11, %s9
  loop: start=0, step=1, limit=4
  $region2: #{_unnamed_function_.5} parent=0 // loop_pre_header
    _
  $region3: #{_unnamed_function_.5} parent=0 // loop_header
    %s14 = sphi 0, %s18
    %p15 = scmp.ge.s32.totalorder %s14, 4
    %s21 = sphi 0, %s33
    %s22 = sphi 0, %s29
    %s23 = sphi 0, %s21
    %s24 = sphi 0, %s22
    %s25 = sphi 0, %s23
    %s26 = sphi 0, %s24
    %s38 = sphi 0, %s40
    %s41 = sphi 0, %s38
    %s42 = sphi 0, %s41
    %s58 = sphi 0, %s42
    %s74 = sphi 0, %s76
    %s77 = sphi 0, %s74
    %s78 = sphi 0, %s77
    %s94 = sphi 0, %s78
    %s110 = sphi 0, %s112
    %s113 = sphi 0, %s110
    %s114 = sphi 0, %s113
    %s130 = sphi 0, %s114
    %s134 = sphi 0, %s134
    %s136 = sphi 0, %s134
    %s137 = sphi 0, %s136
    %s151 = sphi 0, %s137
    %s155 = sphi 0, %s155
    %s157 = sphi 0, %s155
    %s158 = sphi 0, %s157
    %s172 = sphi 0, %s158
    %s176 = sphi 0, %s176
    %s178 = sphi 0, %s176
    %s179 = sphi 0, %s178
    %s193 = sphi 0, %s179
    %s201 = sphi 0, %s203
    %s204 = sphi 0, %s201
    %s205 = sphi 0, %s204
    %s221 = sphi 0, %s205
    %s229 = sphi 0, %s231
    %s232 = sphi 0, %s229
    %s233 = sphi 0, %s232
    %s249 = sphi 0, %s233
  $region4: #{_unnamed_function_.5} parent=0 // loop_header_branch
    %17 = sbr.rel (%p15) target = $region8
  $region5: #{_unnamed_function_.5} parent=0 // loop_body
    %s19 = ssub.s32 %s14, 1
    %s20 = ssub.s32 %s14, 2
    %s27 = sadd.s32 1, %s22
    %p28 = scmp.ge.s32.totalorder %s27, 1
    %s29 = scalar_select %p28, 0, %s27
    %s30 = sadd.s32 1, %s21
    %s31 = scalar_select %p28, %s30, %s21
    %p32 = scmp.ge.s32.totalorder %s31, 2
    %s33 = scalar_select %p32, 0, %s31
    %s34 = ssub.s32 %s21, %s33
    %s35 = ssub.s32 %s22, %s29
    %s36 = sor.u32 %s34, %s35
    %p37 = scmp.eq.s32.totalorder %s36, 0
    %s39 = sadd.s32 %s38, 1
    %s40 = scalar_select %p37, %s38, %s39
    %p43 = pneg %p37
    %p44 = scmp.eq.s32.totalorder %s14, 1
    %p45 = por %p43, %p44
    %p46 = scmp.ne.s32.totalorder %s38, %s41
    %p47 = scmp.eq.s32.totalorder %s14, 0
    %p48 = por %p46, %p47
    %p49 = scmp.ne.s32.totalorder %s38, %s41
    %p50 = scmp.eq.s32.totalorder %s19, 1
    %p51 = por %p49, %p50
    %p52 = scmp.ne.s32.totalorder %s41, %s42
    %p53 = scmp.eq.s32.totalorder %s19, 0
    %p54 = por %p52, %p53
    %p55 = scmp.ne.s32.totalorder %s41, %s42
    %p56 = scmp.eq.s32.totalorder %s20, 1
    %p57 = por %p55, %p56
    %p59 = scmp.ne.s32.totalorder %s42, %s58
    %p60 = scmp.eq.s32.totalorder %s20, 0
    %p61 = por %p59, %p60
    %s62 = smul.u32 %s22, 16
    %s63 = ssub.s32 %s62, 1
    %p64 = scmp.gt.s32.totalorder %s63, 0
    %s65 = scalar_select %p64, %s63, 0
    %s66 = smul.u32 %s29, 16
    %s67 = ssub.s32 %s66, 1
    %p68 = scmp.gt.s32.totalorder %s67, 0
    %s69 = scalar_select %p68, %s67, 0
    %s70 = ssub.s32 %s21, %s33
    %s71 = ssub.s32 %s65, %s69
    %s72 = sor.u32 %s70, %s71
    %p73 = scmp.eq.s32.totalorder %s72, 0
    %s75 = sadd.s32 %s74, 1
    %s76 = scalar_select %p73, %s74, %s75
    %p79 = pneg %p73
    %p80 = scmp.eq.s32.totalorder %s14, 1
    %p81 = por %p79, %p80
    %p82 = scmp.ne.s32.totalorder %s74, %s77
    %p83 = scmp.eq.s32.totalorder %s14, 0
    %p84 = por %p82, %p83
    %p85 = scmp.ne.s32.totalorder %s74, %s77
    %p86 = scmp.eq.s32.totalorder %s19, 1
    %p87 = por %p85, %p86
    %p88 = scmp.ne.s32.totalorder %s77, %s78
    %p89 = scmp.eq.s32.totalorder %s19, 0
    %p90 = por %p88, %p89
    %p91 = scmp.ne.s32.totalorder %s77, %s78
    %p92 = scmp.eq.s32.totalorder %s20, 1
    %p93 = por %p91, %p92
    %p95 = scmp.ne.s32.totalorder %s78, %s94
    %p96 = scmp.eq.s32.totalorder %s20, 0
    %p97 = por %p95, %p96
    %s98 = smul.u32 %s22, 16
    %s99 = sadd.s32 %s98, 16
    %p100 = scmp.lt.s32.totalorder %s99, 15
    %s101 = scalar_select %p100, %s99, 15
    %s102 = smul.u32 %s29, 16
    %s103 = sadd.s32 %s102, 16
    %p104 = scmp.lt.s32.totalorder %s103, 15
    %s105 = scalar_select %p104, %s103, 15
    %s106 = ssub.s32 %s21, %s33
    %s107 = ssub.s32 %s101, %s105
    %s108 = sor.u32 %s106, %s107
    %p109 = scmp.eq.s32.totalorder %s108, 0
    %s111 = sadd.s32 %s110, 1
    %s112 = scalar_select %p109, %s110, %s111
    %p115 = pneg %p109
    %p116 = scmp.eq.s32.totalorder %s14, 1
    %p117 = por %p115, %p116
    %p118 = scmp.ne.s32.totalorder %s110, %s113
    %p119 = scmp.eq.s32.totalorder %s14, 0
    %p120 = por %p118, %p119
    %p121 = scmp.ne.s32.totalorder %s110, %s113
    %p122 = scmp.eq.s32.totalorder %s19, 1
    %p123 = por %p121, %p122
    %p124 = scmp.ne.s32.totalorder %s113, %s114
    %p125 = scmp.eq.s32.totalorder %s19, 0
    %p126 = por %p124, %p125
    %p127 = scmp.ne.s32.totalorder %s113, %s114
    %p128 = scmp.eq.s32.totalorder %s20, 1
    %p129 = por %p127, %p128
    %p131 = scmp.ne.s32.totalorder %s114, %s130
    %p132 = scmp.eq.s32.totalorder %s20, 0
    %p133 = por %p131, %p132
    %s135 = sadd.s32 %s134, 1
    %p138 = scmp.eq.s32.totalorder %s14, 1
    %p139 = scmp.ne.s32.totalorder %s134, %s136
    %p140 = scmp.eq.s32.totalorder %s14, 0
    %p141 = por %p139, %p140
    %p142 = scmp.ne.s32.totalorder %s134, %s136
    %p143 = scmp.eq.s32.totalorder %s19, 1
    %p144 = por %p142, %p143
    %p145 = scmp.ne.s32.totalorder %s136, %s137
    %p146 = scmp.eq.s32.totalorder %s19, 0
    %p147 = por %p145, %p146
    %p148 = scmp.ne.s32.totalorder %s136, %s137
    %p149 = scmp.eq.s32.totalorder %s20, 1
    %p150 = por %p148, %p149
    %p152 = scmp.ne.s32.totalorder %s137, %s151
    %p153 = scmp.eq.s32.totalorder %s20, 0
    %p154 = por %p152, %p153
    %s156 = sadd.s32 %s155, 1
    %p159 = scmp.eq.s32.totalorder %s14, 1
    %p160 = scmp.ne.s32.totalorder %s155, %s157
    %p161 = scmp.eq.s32.totalorder %s14, 0
    %p162 = por %p160, %p161
    %p163 = scmp.ne.s32.totalorder %s155, %s157
    %p164 = scmp.eq.s32.totalorder %s19, 1
    %p165 = por %p163, %p164
    %p166 = scmp.ne.s32.totalorder %s157, %s158
    %p167 = scmp.eq.s32.totalorder %s19, 0
    %p168 = por %p166, %p167
    %p169 = scmp.ne.s32.totalorder %s157, %s158
    %p170 = scmp.eq.s32.totalorder %s20, 1
    %p171 = por %p169, %p170
    %p173 = scmp.ne.s32.totalorder %s158, %s172
    %p174 = scmp.eq.s32.totalorder %s20, 0
    %p175 = por %p173, %p174
    %s177 = sadd.s32 %s176, 1
    %p180 = scmp.eq.s32.totalorder %s14, 1
    %p181 = scmp.ne.s32.totalorder %s176, %s178
    %p182 = scmp.eq.s32.totalorder %s14, 0
    %p183 = por %p181, %p182
    %p184 = scmp.ne.s32.totalorder %s176, %s178
    %p185 = scmp.eq.s32.totalorder %s19, 1
    %p186 = por %p184, %p185
    %p187 = scmp.ne.s32.totalorder %s178, %s179
    %p188 = scmp.eq.s32.totalorder %s19, 0
    %p189 = por %p187, %p188
    %p190 = scmp.ne.s32.totalorder %s178, %s179
    %p191 = scmp.eq.s32.totalorder %s20, 1
    %p192 = por %p190, %p191
    %p194 = scmp.ne.s32.totalorder %s179, %s193
    %p195 = scmp.eq.s32.totalorder %s20, 0
    %p196 = por %p194, %p195
    %s197 = ssub.s32 %s21, %s33
    %s198 = ssub.s32 %s22, %s29
    %s199 = sor.u32 %s197, %s198
    %p200 = scmp.eq.s32.totalorder %s199, 0
    %s202 = sadd.s32 %s201, 1
    %s203 = scalar_select %p200, %s201, %s202
    %p206 = pneg %p200
    %p207 = scmp.eq.s32.totalorder %s14, 1
    %p208 = por %p206, %p207
    %p209 = scmp.ne.s32.totalorder %s201, %s204
    %p210 = scmp.eq.s32.totalorder %s14, 0
    %p211 = por %p209, %p210
    %p212 = scmp.ne.s32.totalorder %s201, %s204
    %p213 = scmp.eq.s32.totalorder %s19, 1
    %p214 = por %p212, %p213
    %p215 = scmp.ne.s32.totalorder %s204, %s205
    %p216 = scmp.eq.s32.totalorder %s19, 0
    %p217 = por %p215, %p216
    %p218 = scmp.ne.s32.totalorder %s204, %s205
    %p219 = scmp.eq.s32.totalorder %s20, 1
    %p220 = por %p218, %p219
    %p222 = scmp.ne.s32.totalorder %s205, %s221
    %p223 = scmp.eq.s32.totalorder %s20, 0
    %p224 = por %p222, %p223
    %s225 = sadd.s32 %s21, %s22
    %s226 = sadd.s32 %s33, %s29
    %s227 = ssub.s32 %s225, %s226
    %p228 = scmp.eq.s32.totalorder %s227, 0
    %s230 = sadd.s32 %s229, 1
    %s231 = scalar_select %p228, %s229, %s230
    %p234 = pneg %p228
    %p235 = scmp.eq.s32.totalorder %s14, 1
    %p236 = por %p234, %p235
    %p237 = scmp.ne.s32.totalorder %s229, %s232
    %p238 = scmp.eq.s32.totalorder %s14, 0
    %p239 = por %p237, %p238
    %p240 = scmp.ne.s32.totalorder %s229, %s232
    %p241 = scmp.eq.s32.totalorder %s19, 1
    %p242 = por %p240, %p241
    %p243 = scmp.ne.s32.totalorder %s232, %s233
    %p244 = scmp.eq.s32.totalorder %s19, 0
    %p245 = por %p243, %p244
    %p246 = scmp.ne.s32.totalorder %s232, %s233
    %p247 = scmp.eq.s32.totalorder %s20, 1
    %p248 = por %p246, %p247
    %p250 = scmp.ne.s32.totalorder %s233, %s249
    %p251 = scmp.eq.s32.totalorder %s20, 0
    %p252 = por %p250, %p251
    %p253 = scmp.le.s32.totalorder 1, %s14
    %p254 = scmp.lt.s32.totalorder %s14, 3
    %p255 = pnand %p253, %p254
    %p256 = pneg %p255
    // Predicated region
    $region9: #{_unnamed_function_.5} parent=5 // pred_check
      _
    $region10: #{_unnamed_function_.5} parent=5 // pred_check_branch
      %258 = sbr.rel (%p255) target = $region12
    $region11: #{_unnamed_function_.5} parent=5 // pred_region
      %s259 = ssub.s32 %s14, 1
      // Predicated region
      $region13: #{_unnamed_function_.5} parent=11 // pred_check
        %p260 = pneg %p147
      $region14: #{_unnamed_function_.5} parent=11 // pred_check_branch
        %262 = sbr.rel (%p260) target = $region16
      $region15: #{_unnamed_function_.5} parent=11 // pred_region
        _
      $region16: #{_unnamed_function_.5} parent=11 // pred_fallthru
        _
      // Predicated region
      $region17: #{_unnamed_function_.5} parent=11 // pred_check
        %p263 = pneg %p168
      $region18: #{_unnamed_function_.5} parent=11 // pred_check_branch
        %265 = sbr.rel (%p263) target = $region20
      $region19: #{_unnamed_function_.5} parent=11 // pred_region
        _
      $region20: #{_unnamed_function_.5} parent=11 // pred_fallthru
        _
      // Predicated region
      $region21: #{_unnamed_function_.5} parent=11 // pred_check
        %p266 = pneg %p189
      $region22: #{_unnamed_function_.5} parent=11 // pred_check_branch
        %268 = sbr.rel (%p266) target = $region24
      $region23: #{_unnamed_function_.5} parent=11 // pred_region
        _
      $region24: #{_unnamed_function_.5} parent=11 // pred_fallthru
        _
    $region12: #{_unnamed_function_.5} parent=5 // pred_fallthru
      _
    %p269 = scmp.lt.s32.totalorder %s14, 2
    // Predicated region
    $region25: #{_unnamed_function_.5} parent=5 // pred_check
      %p270 = pneg %p269
    $region26: #{_unnamed_function_.5} parent=5 // pred_check_branch
      %272 = sbr.rel (%p270) target = $region28
    $region27: #{_unnamed_function_.5} parent=5 // pred_region
      // Predicated region
      $region29: #{_unnamed_function_.5} parent=27 // pred_check
        %p273 = pneg %p48
      $region30: #{_unnamed_function_.5} parent=27 // pred_check_branch
        %275 = sbr.rel (%p273) target = $region32
      $region31: #{_unnamed_function_.5} parent=27 // pred_region
        %s276 = smul.u32 16, %s22
        %p277 = scmp.lt.s32.totalorder %s21, 1
        %s278 = scalar_select %p277, %s21, 1
        %p279 = scmp.lt.s32.totalorder %s276, 15
        %s280 = scalar_select %p279, %s276, 15
        %s281 = smul.addr %s280, 2
        %s282 = smul.addr %s278, 32
        %s283 = sadd.s32 %s281, %s282
        %s284 = smul.addr %s283, 8
        %s285 = scalar_lea.vmem %s0, %s284
        %s286 = smul.u32 16, %s22
      $region32: #{_unnamed_function_.5} parent=27 // pred_fallthru
        _
      // Predicated region
      $region33: #{_unnamed_function_.5} parent=27 // pred_check
        %p287 = pneg %p84
      $region34: #{_unnamed_function_.5} parent=27 // pred_check_branch
        %289 = sbr.rel (%p287) target = $region36
      $region35: #{_unnamed_function_.5} parent=27 // pred_region
        %s290 = smul.u32 %s22, 16
        %s291 = ssub.s32 %s290, 1
        %p292 = scmp.gt.s32.totalorder %s291, 0
        %s293 = scalar_select %p292, %s291, 0
        %p294 = scmp.lt.s32.totalorder %s21, 1
        %s295 = scalar_select %p294, %s21, 1
        %p296 = scmp.lt.s32.totalorder %s293, 15
        %s297 = scalar_select %p296, %s293, 15
        %s298 = smul.addr %s297, 2
        %s299 = smul.addr %s295, 32
        %s300 = sadd.s32 %s298, %s299
        %s301 = smul.addr %s300, 8
        %s302 = scalar_lea.vmem %s1, %s301
        %s303 = smul.u32 %s22, 16
        %s304 = ssub.s32 %s303, 1
        %p305 = scmp.gt.s32.totalorder %s304, 0
        %s306 = scalar_select %p305, %s304, 0
      $region36: #{_unnamed_function_.5} parent=27 // pred_fallthru
        _
      // Predicated region
      $region37: #{_unnamed_function_.5} parent=27 // pred_check
        %p307 = pneg %p120
      $region38: #{_unnamed_function_.5} parent=27 // pred_check_branch
        %309 = sbr.rel (%p307) target = $region40
      $region39: #{_unnamed_function_.5} parent=27 // pred_region
        %s310 = smul.u32 %s22, 16
        %s311 = sadd.s32 %s310, 16
        %p312 = scmp.lt.s32.totalorder %s311, 15
        %s313 = scalar_select %p312, %s311, 15
        %p314 = scmp.lt.s32.totalorder %s21, 1
        %s315 = scalar_select %p314, %s21, 1
        %p316 = scmp.lt.s32.totalorder %s313, 15
        %s317 = scalar_select %p316, %s313, 15
        %s318 = smul.addr %s317, 2
        %s319 = smul.addr %s315, 32
        %s320 = sadd.s32 %s318, %s319
        %s321 = smul.addr %s320, 8
        %s322 = scalar_lea.vmem %s2, %s321
        %s323 = smul.u32 %s22, 16
        %s324 = sadd.s32 %s323, 16
        %p325 = scmp.lt.s32.totalorder %s324, 15
        %s326 = scalar_select %p325, %s324, 15
      $region40: #{_unnamed_function_.5} parent=27 // pred_fallthru
        _
    $region28: #{_unnamed_function_.5} parent=5 // pred_fallthru
      _
    %p327 = scmp.le.s32.totalorder 1, %s14
    %p328 = scmp.lt.s32.totalorder %s14, 3
    %p329 = pnand %p327, %p328
    %p330 = pneg %p329
    // Predicated region
    $region41: #{_unnamed_function_.5} parent=5 // pred_check
      _
    $region42: #{_unnamed_function_.5} parent=5 // pred_check_branch
      %332 = sbr.rel (%p329) target = $region44
    $region43: #{_unnamed_function_.5} parent=5 // pred_region
      %s333 = ssub.s32 %s14, 1
      %s334 = smul.u32 16, %s24
      %p335 = scmp.lt.s32.totalorder %s23, 1
      %s336 = scalar_select %p335, %s23, 1
      %p337 = scmp.lt.s32.totalorder %s334, 15
      %s338 = scalar_select %p337, %s334, 15
      %s339 = smul.addr %s338, 2
      %s340 = smul.addr %s336, 32
      %s341 = sadd.s32 %s339, %s340
      %s342 = smul.addr %s341, 8
      %s343 = scalar_lea.vmem %s0, %s342
      %p344 = pneg %p54
      %p345 = pneg %p51
      %s346 = smul.u32 %s24, 16
      %s347 = ssub.s32 %s346, 1
      %p348 = scmp.gt.s32.totalorder %s347, 0
      %s349 = scalar_select %p348, %s347, 0
      %p350 = scmp.lt.s32.totalorder %s23, 1
      %s351 = scalar_select %p350, %s23, 1
      %p352 = scmp.lt.s32.totalorder %s349, 15
      %s353 = scalar_select %p352, %s349, 15
      %s354 = smul.addr %s353, 2
      %s355 = smul.addr %s351, 32
      %s356 = sadd.s32 %s354, %s355
      %s357 = smul.addr %s356, 8
      %s358 = scalar_lea.vmem %s1, %s357
      %p359 = pneg %p90
      %p360 = pneg %p87
      %s361 = smul.u32 %s24, 16
      %s362 = sadd.s32 %s361, 16
      %p363 = scmp.lt.s32.totalorder %s362, 15
      %s364 = scalar_select %p363, %s362, 15
      %p365 = scmp.lt.s32.totalorder %s23, 1
      %s366 = scalar_select %p365, %s23, 1
      %p367 = scmp.lt.s32.totalorder %s364, 15
      %s368 = scalar_select %p367, %s364, 15
      %s369 = smul.addr %s368, 2
      %s370 = smul.addr %s366, 32
      %s371 = sadd.s32 %s369, %s370
      %s372 = smul.addr %s371, 8
      %s373 = scalar_lea.vmem %s2, %s372
      %p374 = pneg %p126
      %p375 = pneg %p123
      %p376 = pneg %p147
      %p377 = pneg %p144
      %p378 = pneg %p168
      %p379 = pneg %p165
      %p380 = pneg %p189
      %p381 = pneg %p186
      %p382 = pneg %p217
      %p383 = pneg %p214
      %s384 = smul.u32 16, %s24
      %p385 = scmp.lt.s32.totalorder %s23, 1
      %s386 = scalar_select %p385, %s23, 1
      %p387 = scmp.lt.s32.totalorder %s384, 15
      %s388 = scalar_select %p387, %s384, 15
      %s389 = smul.addr %s388, 2
      %s390 = smul.addr %s386, 32
      %s391 = sadd.s32 %s389, %s390
      %s392 = smul.addr %s391, 8
      %s393 = scalar_lea.vmem %s6, %s392
      %p394 = pneg %p245
      %p395 = pneg %p242
      %s396 = sadd.s32 %s23, %s24
      %p397 = scmp.lt.s32.totalorder %s396, 1
      %s398 = scalar_select %p397, %s396, 1
      %s399 = smul.addr %s398, 2
      %s400 = scalar_lea.vmem %s7, %s399
      %s401 = smul.u32 16, %s24
      %p402 = scmp.lt.s32.totalorder %s23, 1
      %s403 = scalar_select %p402, %s23, 1
      %p404 = scmp.lt.s32.totalorder %s401, 15
      %s405 = scalar_select %p404, %s401, 15
      %s406 = smul.addr %s405, 2
      %s407 = smul.addr %s403, 32
      %s408 = sadd.s32 %s406, %s407
      %s409 = smul.addr %s408, 8
      %s410 = scalar_lea.vmem %s0, %s409
      %s411 = smul.u32 16, %s24
      %s412 = smul.u32 %s24, 16
      %s413 = ssub.s32 %s412, 1
      %p414 = scmp.gt.s32.totalorder %s413, 0
      %s415 = scalar_select %p414, %s413, 0
      %p416 = scmp.lt.s32.totalorder %s23, 1
      %s417 = scalar_select %p416, %s23, 1
      %p418 = scmp.lt.s32.totalorder %s415, 15
      %s419 = scalar_select %p418, %s415, 15
      %s420 = smul.addr %s419, 2
      %s421 = smul.addr %s417, 32
      %s422 = sadd.s32 %s420, %s421
      %s423 = smul.addr %s422, 8
      %s424 = scalar_lea.vmem %s1, %s423
      %s425 = smul.u32 %s24, 16
      %s426 = ssub.s32 %s425, 1
      %p427 = scmp.gt.s32.totalorder %s426, 0
      %s428 = scalar_select %p427, %s426, 0
      %s429 = smul.u32 %s24, 16
      %s430 = sadd.s32 %s429, 16
      %p431 = scmp.lt.s32.totalorder %s430, 15
      %s432 = scalar_select %p431, %s430, 15
      %p433 = scmp.lt.s32.totalorder %s23, 1
      %s434 = scalar_select %p433, %s23, 1
      %p435 = scmp.lt.s32.totalorder %s432, 15
      %s436 = scalar_select %p435, %s432, 15
      %s437 = smul.addr %s436, 2
      %s438 = smul.addr %s434, 32
      %s439 = sadd.s32 %s437, %s438
      %s440 = smul.addr %s439, 8
      %s441 = scalar_lea.vmem %s2, %s440
      %s442 = smul.u32 %s24, 16
      %s443 = sadd.s32 %s442, 16
      %p444 = scmp.lt.s32.totalorder %s443, 15
      %s445 = scalar_select %p444, %s443, 15
      %s446 = smul.u32 16, %s24
      %p447 = scmp.lt.s32.totalorder %s23, 1
      %s448 = scalar_select %p447, %s23, 1
      %p449 = scmp.lt.s32.totalorder %s446, 15
      %s450 = scalar_select %p449, %s446, 15
      %s451 = smul.addr %s450, 2
      %s452 = smul.addr %s448, 32
      %s453 = sadd.s32 %s451, %s452
      %s454 = smul.addr %s453, 8
      %s455 = scalar_lea.vmem %s6, %s454
      %s456 = smul.u32 16, %s24
      %s457 = sadd.s32 %s23, %s24
      %p458 = scmp.lt.s32.totalorder %s457, 1
      %s459 = scalar_select %p458, %s457, 1
      %s460 = smul.addr %s459, 2
      %s461 = scalar_lea.vmem %s7, %s460
      %s462 = sadd.s32 %s23, %s24
      %v464 = vld [vmem:[%s3] sm:$0x1]
      %v465 = vld [vmem:[%s4] sm:$0x1]
      %v466 = vld [vmem:[%s410] sm:$0xff]
      %v467 = vld [vmem:[%s410 + $0x8] sm:$0xff]
      %v468 = vld [vmem:[%s410 + $0x10] sm:$0xff]
      %v469 = vld [vmem:[%s410 + $0x18] sm:$0xff]
      %v470 = vld [vmem:[%s410 + $0x20] sm:$0xff]
      %v471 = vld [vmem:[%s410 + $0x28] sm:$0xff]
      %v472 = vld [vmem:[%s410 + $0x30] sm:$0xff]
      %v473 = vld [vmem:[%s410 + $0x38] sm:$0xff]
      %v474 = vld [vmem:[%s410 + $0x40] sm:$0xff]
      %v475 = vld [vmem:[%s410 + $0x48] sm:$0xff]
      %v476 = vld [vmem:[%s410 + $0x50] sm:$0xff]
      %v477 = vld [vmem:[%s410 + $0x58] sm:$0xff]
      %v478 = vld [vmem:[%s410 + $0x60] sm:$0xff]
      %v479 = vld [vmem:[%s410 + $0x68] sm:$0xff]
      %v480 = vld [vmem:[%s410 + $0x70] sm:$0xff]
      %v481 = vld [vmem:[%s410 + $0x78] sm:$0xff]
      %v482 = vld [vmem:[%s410 + $0x80] sm:$0xff]
      %v483 = vld [vmem:[%s410 + $0x88] sm:$0xff]
      %v484 = vld [vmem:[%s410 + $0x90] sm:$0xff]
      %v485 = vld [vmem:[%s410 + $0x98] sm:$0xff]
      %v486 = vld [vmem:[%s410 + $0xa0] sm:$0xff]
      %v487 = vld [vmem:[%s410 + $0xa8] sm:$0xff]
      %v488 = vld [vmem:[%s410 + $0xb0] sm:$0xff]
      %v489 = vld [vmem:[%s410 + $0xb8] sm:$0xff]
      %v490 = vld [vmem:[%s410 + $0xc0] sm:$0xff]
      %v491 = vld [vmem:[%s410 + $0xc8] sm:$0xff]
      %v492 = vld [vmem:[%s410 + $0xd0] sm:$0xff]
      %v493 = vld [vmem:[%s410 + $0xd8] sm:$0xff]
      %v494 = vld [vmem:[%s410 + $0xe0] sm:$0xff]
      %v495 = vld [vmem:[%s410 + $0xe8] sm:$0xff]
      %v496 = vld [vmem:[%s410 + $0xf0] sm:$0xff]
      %v497 = vld [vmem:[%s410 + $0xf8] sm:$0xff]
      %v499 = vlaneseq
      %v500 = vshrl.u32 %v499, 7
      %v501 = vsub.s32 0, %v500
      %v502 = vrot.slane %v464, %v501
      %v504 = vmul.f32 %v466, %v502
      %v505 = vmul.f32 %v467, %v502
      %v506 = vmul.f32 %v468, %v502
      %v507 = vmul.f32 %v469, %v502
      %v508 = vmul.f32 %v470, %v502
      %v509 = vmul.f32 %v471, %v502
      %v510 = vmul.f32 %v472, %v502
      %v511 = vmul.f32 %v473, %v502
      %v512 = vmul.f32 %v474, %v502
      %v513 = vmul.f32 %v475, %v502
      %v514 = vmul.f32 %v476, %v502
      %v515 = vmul.f32 %v477, %v502
      %v516 = vmul.f32 %v478, %v502
      %v517 = vmul.f32 %v479, %v502
      %v518 = vmul.f32 %v480, %v502
      %v519 = vmul.f32 %v481, %v502
      %v520 = vmul.f32 %v482, %v502
      %v521 = vmul.f32 %v483, %v502
      %v522 = vmul.f32 %v484, %v502
      %v523 = vmul.f32 %v485, %v502
      %v524 = vmul.f32 %v486, %v502
      %v525 = vmul.f32 %v487, %v502
      %v526 = vmul.f32 %v488, %v502
      %v527 = vmul.f32 %v489, %v502
      %v528 = vmul.f32 %v490, %v502
      %v529 = vmul.f32 %v491, %v502
      %v530 = vmul.f32 %v492, %v502
      %v531 = vmul.f32 %v493, %v502
      %v532 = vmul.f32 %v494, %v502
      %v533 = vmul.f32 %v495, %v502
      %v534 = vmul.f32 %v496, %v502
      %v535 = vmul.f32 %v497, %v502
      %v537 = vlaneseq
      %v538 = vshrl.u32 %v537, 7
      %v539 = vsub.s32 0, %v538
      %v540 = vrot.slane %v465, %v539
      %v542 = vadd.f32 %v504, %v540
      %v543 = vadd.f32 %v505, %v540
      %v544 = vadd.f32 %v506, %v540
      %v545 = vadd.f32 %v507, %v540
      %v546 = vadd.f32 %v508, %v540
      %v547 = vadd.f32 %v509, %v540
      %v548 = vadd.f32 %v510, %v540
      %v549 = vadd.f32 %v511, %v540
      %v550 = vadd.f32 %v512, %v540
      %v551 = vadd.f32 %v513, %v540
      %v552 = vadd.f32 %v514, %v540
      %v553 = vadd.f32 %v515, %v540
      %v554 = vadd.f32 %v516, %v540
      %v555 = vadd.f32 %v517, %v540
      %v556 = vadd.f32 %v518, %v540
      %v557 = vadd.f32 %v519, %v540
      %v558 = vadd.f32 %v520, %v540
      %v559 = vadd.f32 %v521, %v540
      %v560 = vadd.f32 %v522, %v540
      %v561 = vadd.f32 %v523, %v540
      %v562 = vadd.f32 %v524, %v540
      %v563 = vadd.f32 %v525, %v540
      %v564 = vadd.f32 %v526, %v540
      %v565 = vadd.f32 %v527, %v540
      %v566 = vadd.f32 %v528, %v540
      %v567 = vadd.f32 %v529, %v540
      %v568 = vadd.f32 %v530, %v540
      %v569 = vadd.f32 %v531, %v540
      %v570 = vadd.f32 %v532, %v540
      %v571 = vadd.f32 %v533, %v540
      %v572 = vadd.f32 %v534, %v540
      %v573 = vadd.f32 %v535, %v540
      %v574 = vmax.f32 %v542, 0.0
      %v575 = vmax.f32 %v543, 0.0
      %v576 = vmax.f32 %v544, 0.0
      %v577 = vmax.f32 %v545, 0.0
      %v578 = vmax.f32 %v546, 0.0
      %v579 = vmax.f32 %v547, 0.0
      %v580 = vmax.f32 %v548, 0.0
      %v581 = vmax.f32 %v549, 0.0
      %v582 = vmax.f32 %v550, 0.0
      %v583 = vmax.f32 %v551, 0.0
      %v584 = vmax.f32 %v552, 0.0
      %v585 = vmax.f32 %v553, 0.0
      %v586 = vmax.f32 %v554, 0.0
      %v587 = vmax.f32 %v555, 0.0
      %v588 = vmax.f32 %v556, 0.0
      %v589 = vmax.f32 %v557, 0.0
      %v590 = vmax.f32 %v558, 0.0
      %v591 = vmax.f32 %v559, 0.0
      %v592 = vmax.f32 %v560, 0.0
      %v593 = vmax.f32 %v561, 0.0
      %v594 = vmax.f32 %v562, 0.0
      %v595 = vmax.f32 %v563, 0.0
      %v596 = vmax.f32 %v564, 0.0
      %v597 = vmax.f32 %v565, 0.0
      %v598 = vmax.f32 %v566, 0.0
      %v599 = vmax.f32 %v567, 0.0
      %v600 = vmax.f32 %v568, 0.0
      %v601 = vmax.f32 %v569, 0.0
      %v602 = vmax.f32 %v570, 0.0
      %v603 = vmax.f32 %v571, 0.0
      %v604 = vmax.f32 %v572, 0.0
      %v605 = vmax.f32 %v573, 0.0
      %v606 = vld [vmem:[%s424] sm:$0xff]
      %v607 = vld [vmem:[%s424 + $0x8] sm:$0xff]
      %v608 = vmul.f32 %v606, %v502
      %v609 = vmul.f32 %v607, %v502
      %v610 = vadd.f32 %v608, %v540
      %v611 = vadd.f32 %v609, %v540
      %v612 = vmax.f32 %v610, 0.0
      %v613 = vmax.f32 %v611, 0.0
      %v614 = vld [vmem:[%s441] sm:$0xff]
      %v615 = vld [vmem:[%s441 + $0x8] sm:$0xff]
      %v616 = vmul.f32 %v614, %v502
      %v617 = vmul.f32 %v615, %v502
      %v618 = vadd.f32 %v616, %v540
      %v619 = vadd.f32 %v617, %v540
      %v620 = vmax.f32 %v618, 0.0
      %v621 = vmax.f32 %v619, 0.0
      %p622 = scmp.gt.s32.totalorder %s24, 0
      %s623 = scalar_select %p622, 1, 0
      %v624 = vstv %s623
      %vm625 = vcmp.eq.s32.totalorder %v624, 1
      %v626 = vsel %vm625, %v612, 0.0
      %v627 = vsel %vm625, %v613, 0.0
      %p628 = scmp.lt.s32.totalorder %s24, 0
      %s629 = scalar_select %p628, 1, 0
      %v630 = vstv %s629
      %vm631 = vcmp.eq.s32.totalorder %v630, 1
      %v632 = vsel %vm631, %v620, 0.0
      %v633 = vsel %vm631, %v621, 0.0
      %v634 = vlaneseq
      %v635 = vshrl.u32 %v634, 7
      %v636 = vadd.s32 %v635, 8
      %vm637 = vcmp.ge.s32.totalorder %v635, 1
      %vm638 = vcmp.ge.s32.totalorder %v636, 1
      %v639 = vrot.slane %v626, 7
      %v640 = vrot.slane %v574, 7
      %v641 = vrot.slane %v576, 7
      %v642 = vrot.slane %v578, 7
      %v643 = vrot.slane %v580, 7
      %v644 = vrot.slane %v582, 7
      %v645 = vrot.slane %v584, 7
      %v646 = vrot.slane %v586, 7
      %v647 = vrot.slane %v588, 7
      %v648 = vrot.slane %v590, 7
      %v649 = vrot.slane %v592, 7
      %v650 = vrot.slane %v594, 7
      %v651 = vrot.slane %v596, 7
      %v652 = vrot.slane %v598, 7
      %v653 = vrot.slane %v600, 7
      %v654 = vrot.slane %v602, 7
      %v655 = vrot.slane %v604, 7
      %v656 = vrot.slane %v632, 7
      %v657 = vrot.slane %v627, 7
      %v658 = vrot.slane %v575, 7
      %v659 = vrot.slane %v577, 7
      %v660 = vrot.slane %v579, 7
      %v661 = vrot.slane %v581, 7
      %v662 = vrot.slane %v583, 7
      %v663 = vrot.slane %v585, 7
      %v664 = vrot.slane %v587, 7
      %v665 = vrot.slane %v589, 7
      %v666 = vrot.slane %v591, 7
      %v667 = vrot.slane %v593, 7
      %v668 = vrot.slane %v595, 7
      %v669 = vrot.slane %v597, 7
      %v670 = vrot.slane %v599, 7
      %v671 = vrot.slane %v601, 7
      %v672 = vrot.slane %v603, 7
      %v673 = vrot.slane %v605, 7
      %v674 = vrot.slane %v633, 7
      %vm675 = vcmp.lt.s32.totalorder %v635, 1
      %v676 = vsel %vm675, %v639, %v657
      %v677 = vsel %vm675, %v640, %v658
      %v678 = vsel %vm675, %v641, %v659
      %v679 = vsel %vm675, %v642, %v660
      %v680 = vsel %vm675, %v643, %v661
      %v681 = vsel %vm675, %v644, %v662
      %v682 = vsel %vm675, %v645, %v663
      %v683 = vsel %vm675, %v646, %v664
      %v684 = vsel %vm675, %v647, %v665
      %v685 = vsel %vm675, %v648, %v666
      %v686 = vsel %vm675, %v649, %v667
      %v687 = vsel %vm675, %v650, %v668
      %v688 = vsel %vm675, %v651, %v669
      %v689 = vsel %vm675, %v652, %v670
      %v690 = vsel %vm675, %v653, %v671
      %v691 = vsel %vm675, %v654, %v672
      %v692 = vsel %vm675, %v655, %v673
      %v693 = vsel %vm675, %v656, %v674
      %v694 = vsel %vm675, %v657, %v639
      %v695 = vsel %vm675, %v658, %v640
      %v696 = vsel %vm675, %v659, %v641
      %v697 = vsel %vm675, %v660, %v642
      %v698 = vsel %vm675, %v661, %v643
      %v699 = vsel %vm675, %v662, %v644
      %v700 = vsel %vm675, %v663, %v645
      %v701 = vsel %vm675, %v664, %v646
      %v702 = vsel %vm675, %v665, %v647
      %v703 = vsel %vm675, %v666, %v648
      %v704 = vsel %vm675, %v667, %v649
      %v705 = vsel %vm675, %v668, %v650
      %v706 = vsel %vm675, %v669, %v651
      %v707 = vsel %vm675, %v670, %v652
      %v708 = vsel %vm675, %v671, %v653
      %v709 = vsel %vm675, %v672, %v654
      %v710 = vsel %vm675, %v673, %v655
      %v711 = vsel %vm675, %v674, %v656
      %v712 = vsel %vm637, %v694, 0.0
      %v713 = vsel %vm638, %v676, 0.0
      %v714 = vsel %vm637, %v695, 0.0
      %v715 = vsel %vm638, %v677, 0.0
      %v716 = vsel %vm637, %v696, 0.0
      %v717 = vsel %vm638, %v678, 0.0
      %v718 = vsel %vm637, %v697, 0.0
      %v719 = vsel %vm638, %v679, 0.0
      %v720 = vsel %vm637, %v698, 0.0
      %v721 = vsel %vm638, %v680, 0.0
      %v722 = vsel %vm637, %v699, 0.0
      %v723 = vsel %vm638, %v681, 0.0
      %v724 = vsel %vm637, %v700, 0.0
      %v725 = vsel %vm638, %v682, 0.0
      %v726 = vsel %vm637, %v701, 0.0
      %v727 = vsel %vm638, %v683, 0.0
      %v728 = vsel %vm637, %v702, 0.0
      %v729 = vsel %vm638, %v684, 0.0
      %v730 = vsel %vm637, %v703, 0.0
      %v731 = vsel %vm638, %v685, 0.0
      %v732 = vsel %vm637, %v704, 0.0
      %v733 = vsel %vm638, %v686, 0.0
      %v734 = vsel %vm637, %v705, 0.0
      %v735 = vsel %vm638, %v687, 0.0
      %v736 = vsel %vm637, %v706, 0.0
      %v737 = vsel %vm638, %v688, 0.0
      %v738 = vsel %vm637, %v707, 0.0
      %v739 = vsel %vm638, %v689, 0.0
      %v740 = vsel %vm637, %v708, 0.0
      %v741 = vsel %vm638, %v690, 0.0
      %v742 = vsel %vm637, %v709, 0.0
      %v743 = vsel %vm638, %v691, 0.0
      %v744 = vsel %vm637, %v710, 0.0
      %v745 = vsel %vm638, %v692, 0.0
      %v746 = vsel %vm637, %v711, 0.0
      %v747 = vsel %vm638, %v693, 0.0
      %vm748 = vcmp.lt.s32.totalorder %v635, 15
      %vm749 = vcmp.lt.s32.totalorder %v636, 15
      %v750 = vrot.slane %v626, 1
      %v751 = vrot.slane %v574, 1
      %v752 = vrot.slane %v576, 1
      %v753 = vrot.slane %v578, 1
      %v754 = vrot.slane %v580, 1
      %v755 = vrot.slane %v582, 1
      %v756 = vrot.slane %v584, 1
      %v757 = vrot.slane %v586, 1
      %v758 = vrot.slane %v588, 1
      %v759 = vrot.slane %v590, 1
      %v760 = vrot.slane %v592, 1
      %v761 = vrot.slane %v594, 1
      %v762 = vrot.slane %v596, 1
      %v763 = vrot.slane %v598, 1
      %v764 = vrot.slane %v600, 1
      %v765 = vrot.slane %v602, 1
      %v766 = vrot.slane %v604, 1
      %v767 = vrot.slane %v632, 1
      %v768 = vrot.slane %v627, 1
      %v769 = vrot.slane %v575, 1
      %v770 = vrot.slane %v577, 1
      %v771 = vrot.slane %v579, 1
      %v772 = vrot.slane %v581, 1
      %v773 = vrot.slane %v583, 1
      %v774 = vrot.slane %v585, 1
      %v775 = vrot.slane %v587, 1
      %v776 = vrot.slane %v589, 1
      %v777 = vrot.slane %v591, 1
      %v778 = vrot.slane %v593, 1
      %v779 = vrot.slane %v595, 1
      %v780 = vrot.slane %v597, 1
      %v781 = vrot.slane %v599, 1
      %v782 = vrot.slane %v601, 1
      %v783 = vrot.slane %v603, 1
      %v784 = vrot.slane %v605, 1
      %v785 = vrot.slane %v633, 1
      %vm786 = vcmp.lt.s32.totalorder %v635, 7
      %v787 = vsel %vm786, %v750, %v768
      %v788 = vsel %vm786, %v751, %v769
      %v789 = vsel %vm786, %v752, %v770
      %v790 = vsel %vm786, %v753, %v771
      %v791 = vsel %vm786, %v754, %v772
      %v792 = vsel %vm786, %v755, %v773
      %v793 = vsel %vm786, %v756, %v774
      %v794 = vsel %vm786, %v757, %v775
      %v795 = vsel %vm786, %v758, %v776
      %v796 = vsel %vm786, %v759, %v777
      %v797 = vsel %vm786, %v760, %v778
      %v798 = vsel %vm786, %v761, %v779
      %v799 = vsel %vm786, %v762, %v780
      %v800 = vsel %vm786, %v763, %v781
      %v801 = vsel %vm786, %v764, %v782
      %v802 = vsel %vm786, %v765, %v783
      %v803 = vsel %vm786, %v766, %v784
      %v804 = vsel %vm786, %v767, %v785
      %v805 = vsel %vm786, %v768, %v750
      %v806 = vsel %vm786, %v769, %v751
      %v807 = vsel %vm786, %v770, %v752
      %v808 = vsel %vm786, %v771, %v753
      %v809 = vsel %vm786, %v772, %v754
      %v810 = vsel %vm786, %v773, %v755
      %v811 = vsel %vm786, %v774, %v756
      %v812 = vsel %vm786, %v775, %v757
      %v813 = vsel %vm786, %v776, %v758
      %v814 = vsel %vm786, %v777, %v759
      %v815 = vsel %vm786, %v778, %v760
      %v816 = vsel %vm786, %v779, %v761
      %v817 = vsel %vm786, %v780, %v762
      %v818 = vsel %vm786, %v781, %v763
      %v819 = vsel %vm786, %v782, %v764
      %v820 = vsel %vm786, %v783, %v765
      %v821 = vsel %vm786, %v784, %v766
      %v822 = vsel %vm786, %v785, %v767
      %v823 = vsel %vm748, %v787, 0.0
      %v824 = vsel %vm749, %v805, 0.0
      %v825 = vsel %vm748, %v788, 0.0
      %v826 = vsel %vm749, %v806, 0.0
      %v827 = vsel %vm748, %v789, 0.0
      %v828 = vsel %vm749, %v807, 0.0
      %v829 = vsel %vm748, %v790, 0.0
      %v830 = vsel %vm749, %v808, 0.0
      %v831 = vsel %vm748, %v791, 0.0
      %v832 = vsel %vm749, %v809, 0.0
      %v833 = vsel %vm748, %v792, 0.0
      %v834 = vsel %vm749, %v810, 0.0
      %v835 = vsel %vm748, %v793, 0.0
      %v836 = vsel %vm749, %v811, 0.0
      %v837 = vsel %vm748, %v794, 0.0
      %v838 = vsel %vm749, %v812, 0.0
      %v839 = vsel %vm748, %v795, 0.0
      %v840 = vsel %vm749, %v813, 0.0
      %v841 = vsel %vm748, %v796, 0.0
      %v842 = vsel %vm749, %v814, 0.0
      %v843 = vsel %vm748, %v797, 0.0
      %v844 = vsel %vm749, %v815, 0.0
      %v845 = vsel %vm748, %v798, 0.0
      %v846 = vsel %vm749, %v816, 0.0
      %v847 = vsel %vm748, %v799, 0.0
      %v848 = vsel %vm749, %v817, 0.0
      %v849 = vsel %vm748, %v800, 0.0
      %v850 = vsel %vm749, %v818, 0.0
      %v851 = vsel %vm748, %v801, 0.0
      %v852 = vsel %vm749, %v819, 0.0
      %v853 = vsel %vm748, %v802, 0.0
      %v854 = vsel %vm749, %v820, 0.0
      %v855 = vsel %vm748, %v803, 0.0
      %v856 = vsel %vm749, %v821, 0.0
      %v857 = vsel %vm748, %v804, 0.0
      %v858 = vsel %vm749, %v822, 0.0
      %891 = vrot.lane.b32.xlu0 %v626, 8
      %v892 = vpop.permute.xlu0 %891
      %893 = vrot.lane.b32.xlu0 %v627, 8
      %v894 = vpop.permute.xlu0 %893
      %895 = vrot.lane.b32.xlu0 %v574, 8
      %v896 = vpop.permute.xlu0 %895
      %897 = vrot.lane.b32.xlu0 %v575, 8
      %v898 = vpop.permute.xlu0 %897
      %899 = vrot.lane.b32.xlu0 %v576, 8
      %v900 = vpop.permute.xlu0 %899
      %901 = vrot.lane.b32.xlu0 %v577, 8
      %v902 = vpop.permute.xlu0 %901
      %903 = vrot.lane.b32.xlu0 %v578, 8
      %v904 = vpop.permute.xlu0 %903
      %905 = vrot.lane.b32.xlu0 %v579, 8
      %v906 = vpop.permute.xlu0 %905
      %907 = vrot.lane.b32.xlu0 %v580, 8
      %v908 = vpop.permute.xlu0 %907
      %909 = vrot.lane.b32.xlu0 %v581, 8
      %v910 = vpop.permute.xlu0 %909
      %911 = vrot.lane.b32.xlu0 %v582, 8
      %v912 = vpop.permute.xlu0 %911
      %913 = vrot.lane.b32.xlu0 %v583, 8
      %v914 = vpop.permute.xlu0 %913
      %915 = vrot.lane.b32.xlu0 %v584, 8
      %v916 = vpop.permute.xlu0 %915
      %917 = vrot.lane.b32.xlu0 %v585, 8
      %v918 = vpop.permute.xlu0 %917
      %919 = vrot.lane.b32.xlu0 %v586, 8
      %v920 = vpop.permute.xlu0 %919
      %921 = vrot.lane.b32.xlu0 %v587, 8
      %v922 = vpop.permute.xlu0 %921
      %923 = vrot.lane.b32.xlu0 %v588, 8
      %v924 = vpop.permute.xlu0 %923
      %925 = vrot.lane.b32.xlu0 %v589, 8
      %v926 = vpop.permute.xlu0 %925
      %927 = vrot.lane.b32.xlu0 %v590, 8
      %v928 = vpop.permute.xlu0 %927
      %929 = vrot.lane.b32.xlu0 %v591, 8
      %v930 = vpop.permute.xlu0 %929
      %931 = vrot.lane.b32.xlu0 %v592, 8
      %v932 = vpop.permute.xlu0 %931
      %933 = vrot.lane.b32.xlu0 %v593, 8
      %v934 = vpop.permute.xlu0 %933
      %935 = vrot.lane.b32.xlu0 %v594, 8
      %v936 = vpop.permute.xlu0 %935
      %937 = vrot.lane.b32.xlu0 %v595, 8
      %v938 = vpop.permute.xlu0 %937
      %939 = vrot.lane.b32.xlu0 %v596, 8
      %v940 = vpop.permute.xlu0 %939
      %941 = vrot.lane.b32.xlu0 %v597, 8
      %v942 = vpop.permute.xlu0 %941
      %943 = vrot.lane.b32.xlu0 %v598, 8
      %v944 = vpop.permute.xlu0 %943
      %945 = vrot.lane.b32.xlu0 %v599, 8
      %v946 = vpop.permute.xlu0 %945
      %947 = vrot.lane.b32.xlu0 %v600, 8
      %v948 = vpop.permute.xlu0 %947
      %949 = vrot.lane.b32.xlu0 %v601, 8
      %v950 = vpop.permute.xlu0 %949
      %951 = vrot.lane.b32.xlu0 %v602, 8
      %v952 = vpop.permute.xlu0 %951
      %953 = vrot.lane.b32.xlu0 %v603, 8
      %v954 = vpop.permute.xlu0 %953
      %1019 = vrot.lane.b32.xlu0 %v823, 16
      %v1020 = vpop.permute.xlu0 %1019
      %1021 = vrot.lane.b32.xlu0 %v824, 16
      %v1022 = vpop.permute.xlu0 %1021
      %1023 = vrot.lane.b32.xlu0 %v825, 16
      %v1024 = vpop.permute.xlu0 %1023
      %1025 = vrot.lane.b32.xlu0 %v826, 16
      %v1026 = vpop.permute.xlu0 %1025
      %1027 = vrot.lane.b32.xlu0 %v827, 16
      %v1028 = vpop.permute.xlu0 %1027
      %1029 = vrot.lane.b32.xlu0 %v828, 16
      %v1030 = vpop.permute.xlu0 %1029
      %1031 = vrot.lane.b32.xlu0 %v829, 16
      %v1032 = vpop.permute.xlu0 %1031
      %1033 = vrot.lane.b32.xlu0 %v830, 16
      %v1034 = vpop.permute.xlu0 %1033
      %1035 = vrot.lane.b32.xlu0 %v831, 16
      %v1036 = vpop.permute.xlu0 %1035
      %1037 = vrot.lane.b32.xlu0 %v832, 16
      %v1038 = vpop.permute.xlu0 %1037
      %1039 = vrot.lane.b32.xlu0 %v833, 16
      %v1040 = vpop.permute.xlu0 %1039
      %1041 = vrot.lane.b32.xlu0 %v834, 16
      %v1042 = vpop.permute.xlu0 %1041
      %1043 = vrot.lane.b32.xlu0 %v835, 16
      %v1044 = vpop.permute.xlu0 %1043
      %1045 = vrot.lane.b32.xlu0 %v836, 16
      %v1046 = vpop.permute.xlu0 %1045
      %1047 = vrot.lane.b32.xlu0 %v837, 16
      %v1048 = vpop.permute.xlu0 %1047
      %1049 = vrot.lane.b32.xlu0 %v838, 16
      %v1050 = vpop.permute.xlu0 %1049
      %1051 = vrot.lane.b32.xlu0 %v839, 16
      %v1052 = vpop.permute.xlu0 %1051
      %1053 = vrot.lane.b32.xlu0 %v840, 16
      %v1054 = vpop.permute.xlu0 %1053
      %1055 = vrot.lane.b32.xlu0 %v841, 16
      %v1056 = vpop.permute.xlu0 %1055
      %1057 = vrot.lane.b32.xlu0 %v842, 16
      %v1058 = vpop.permute.xlu0 %1057
      %1059 = vrot.lane.b32.xlu0 %v843, 16
      %v1060 = vpop.permute.xlu0 %1059
      %1061 = vrot.lane.b32.xlu0 %v844, 16
      %v1062 = vpop.permute.xlu0 %1061
      %1063 = vrot.lane.b32.xlu0 %v845, 16
      %v1064 = vpop.permute.xlu0 %1063
      %1065 = vrot.lane.b32.xlu0 %v846, 16
      %v1066 = vpop.permute.xlu0 %1065
      %1067 = vrot.lane.b32.xlu0 %v847, 16
      %v1068 = vpop.permute.xlu0 %1067
      %1069 = vrot.lane.b32.xlu0 %v848, 16
      %v1070 = vpop.permute.xlu0 %1069
      %1071 = vrot.lane.b32.xlu0 %v849, 16
      %v1072 = vpop.permute.xlu0 %1071
      %1073 = vrot.lane.b32.xlu0 %v850, 16
      %v1074 = vpop.permute.xlu0 %1073
      %1075 = vrot.lane.b32.xlu0 %v851, 16
      %v1076 = vpop.permute.xlu0 %1075
      %1077 = vrot.lane.b32.xlu0 %v852, 16
      %v1078 = vpop.permute.xlu0 %1077
      %1079 = vrot.lane.b32.xlu0 %v853, 16
      %v1080 = vpop.permute.xlu0 %1079
      %1081 = vrot.lane.b32.xlu0 %v854, 16
      %v1082 = vpop.permute.xlu0 %1081
      %1147 = vrot.lane.b32.xlu0 %v714, 24
      %v1148 = vpop.permute.xlu0 %1147
      %1149 = vrot.lane.b32.xlu0 %v715, 24
      %v1150 = vpop.permute.xlu0 %1149
      %1151 = vrot.lane.b32.xlu0 %v716, 24
      %v1152 = vpop.permute.xlu0 %1151
      %1153 = vrot.lane.b32.xlu0 %v717, 24
      %v1154 = vpop.permute.xlu0 %1153
      %1155 = vrot.lane.b32.xlu0 %v718, 24
      %v1156 = vpop.permute.xlu0 %1155
      %1157 = vrot.lane.b32.xlu0 %v719, 24
      %v1158 = vpop.permute.xlu0 %1157
      %1159 = vrot.lane.b32.xlu0 %v720, 24
      %v1160 = vpop.permute.xlu0 %1159
      %1161 = vrot.lane.b32.xlu0 %v721, 24
      %v1162 = vpop.permute.xlu0 %1161
      %1163 = vrot.lane.b32.xlu0 %v722, 24
      %v1164 = vpop.permute.xlu0 %1163
      %1165 = vrot.lane.b32.xlu0 %v723, 24
      %v1166 = vpop.permute.xlu0 %1165
      %1167 = vrot.lane.b32.xlu0 %v724, 24
      %v1168 = vpop.permute.xlu0 %1167
      %1169 = vrot.lane.b32.xlu0 %v725, 24
      %v1170 = vpop.permute.xlu0 %1169
      %1171 = vrot.lane.b32.xlu0 %v726, 24
      %v1172 = vpop.permute.xlu0 %1171
      %1173 = vrot.lane.b32.xlu0 %v727, 24
      %v1174 = vpop.permute.xlu0 %1173
      %1175 = vrot.lane.b32.xlu0 %v728, 24
      %v1176 = vpop.permute.xlu0 %1175
      %1177 = vrot.lane.b32.xlu0 %v729, 24
      %v1178 = vpop.permute.xlu0 %1177
      %1179 = vrot.lane.b32.xlu0 %v730, 24
      %v1180 = vpop.permute.xlu0 %1179
      %1181 = vrot.lane.b32.xlu0 %v731, 24
      %v1182 = vpop.permute.xlu0 %1181
      %1183 = vrot.lane.b32.xlu0 %v732, 24
      %v1184 = vpop.permute.xlu0 %1183
      %1185 = vrot.lane.b32.xlu0 %v733, 24
      %v1186 = vpop.permute.xlu0 %1185
      %1187 = vrot.lane.b32.xlu0 %v734, 24
      %v1188 = vpop.permute.xlu0 %1187
      %1189 = vrot.lane.b32.xlu0 %v735, 24
      %v1190 = vpop.permute.xlu0 %1189
      %1191 = vrot.lane.b32.xlu0 %v736, 24
      %v1192 = vpop.permute.xlu0 %1191
      %1193 = vrot.lane.b32.xlu0 %v737, 24
      %v1194 = vpop.permute.xlu0 %1193
      %1195 = vrot.lane.b32.xlu0 %v738, 24
      %v1196 = vpop.permute.xlu0 %1195
      %1197 = vrot.lane.b32.xlu0 %v739, 24
      %v1198 = vpop.permute.xlu0 %1197
      %1199 = vrot.lane.b32.xlu0 %v740, 24
      %v1200 = vpop.permute.xlu0 %1199
      %1201 = vrot.lane.b32.xlu0 %v741, 24
      %v1202 = vpop.permute.xlu0 %1201
      %1203 = vrot.lane.b32.xlu0 %v742, 24
      %v1204 = vpop.permute.xlu0 %1203
      %1205 = vrot.lane.b32.xlu0 %v743, 24
      %v1206 = vpop.permute.xlu0 %1205
      %1207 = vrot.lane.b32.xlu0 %v744, 24
      %v1208 = vpop.permute.xlu0 %1207
      %1209 = vrot.lane.b32.xlu0 %v745, 24
      %v1210 = vpop.permute.xlu0 %1209
      %1245 = vrot.lane.b32.xlu0 %v574, 32
      %v1246 = vpop.permute.xlu0 %1245
      %1247 = vrot.lane.b32.xlu0 %v575, 32
      %v1248 = vpop.permute.xlu0 %1247
      %1249 = vrot.lane.b32.xlu0 %v576, 32
      %v1250 = vpop.permute.xlu0 %1249
      %1251 = vrot.lane.b32.xlu0 %v577, 32
      %v1252 = vpop.permute.xlu0 %1251
      %1253 = vrot.lane.b32.xlu0 %v578, 32
      %v1254 = vpop.permute.xlu0 %1253
      %1255 = vrot.lane.b32.xlu0 %v579, 32
      %v1256 = vpop.permute.xlu0 %1255
      %1257 = vrot.lane.b32.xlu0 %v580, 32
      %v1258 = vpop.permute.xlu0 %1257
      %1259 = vrot.lane.b32.xlu0 %v581, 32
      %v1260 = vpop.permute.xlu0 %1259
      %1261 = vrot.lane.b32.xlu0 %v582, 32
      %v1262 = vpop.permute.xlu0 %1261
      %1263 = vrot.lane.b32.xlu0 %v583, 32
      %v1264 = vpop.permute.xlu0 %1263
      %1265 = vrot.lane.b32.xlu0 %v584, 32
      %v1266 = vpop.permute.xlu0 %1265
      %1267 = vrot.lane.b32.xlu0 %v585, 32
      %v1268 = vpop.permute.xlu0 %1267
      %1269 = vrot.lane.b32.xlu0 %v586, 32
      %v1270 = vpop.permute.xlu0 %1269
      %1271 = vrot.lane.b32.xlu0 %v587, 32
      %v1272 = vpop.permute.xlu0 %1271
      %1273 = vrot.lane.b32.xlu0 %v588, 32
      %v1274 = vpop.permute.xlu0 %1273
      %1275 = vrot.lane.b32.xlu0 %v589, 32
      %v1276 = vpop.permute.xlu0 %1275
      %1277 = vrot.lane.b32.xlu0 %v590, 32
      %v1278 = vpop.permute.xlu0 %1277
      %1279 = vrot.lane.b32.xlu0 %v591, 32
      %v1280 = vpop.permute.xlu0 %1279
      %1281 = vrot.lane.b32.xlu0 %v592, 32
      %v1282 = vpop.permute.xlu0 %1281
      %1283 = vrot.lane.b32.xlu0 %v593, 32
      %v1284 = vpop.permute.xlu0 %1283
      %1285 = vrot.lane.b32.xlu0 %v594, 32
      %v1286 = vpop.permute.xlu0 %1285
      %1287 = vrot.lane.b32.xlu0 %v595, 32
      %v1288 = vpop.permute.xlu0 %1287
      %1289 = vrot.lane.b32.xlu0 %v596, 32
      %v1290 = vpop.permute.xlu0 %1289
      %1291 = vrot.lane.b32.xlu0 %v597, 32
      %v1292 = vpop.permute.xlu0 %1291
      %1293 = vrot.lane.b32.xlu0 %v598, 32
      %v1294 = vpop.permute.xlu0 %1293
      %1295 = vrot.lane.b32.xlu0 %v599, 32
      %v1296 = vpop.permute.xlu0 %1295
      %1297 = vrot.lane.b32.xlu0 %v600, 32
      %v1298 = vpop.permute.xlu0 %1297
      %1299 = vrot.lane.b32.xlu0 %v601, 32
      %v1300 = vpop.permute.xlu0 %1299
      %1301 = vrot.lane.b32.xlu0 %v602, 32
      %v1302 = vpop.permute.xlu0 %1301
      %1303 = vrot.lane.b32.xlu0 %v603, 32
      %v1304 = vpop.permute.xlu0 %1303
      %1305 = vrot.lane.b32.xlu0 %v604, 32
      %v1306 = vpop.permute.xlu0 %1305
      %1307 = vrot.lane.b32.xlu0 %v605, 32
      %v1308 = vpop.permute.xlu0 %1307
      %1343 = vrot.lane.b32.xlu0 %v825, 40
      %v1344 = vpop.permute.xlu0 %1343
      %1345 = vrot.lane.b32.xlu0 %v826, 40
      %v1346 = vpop.permute.xlu0 %1345
      %1347 = vrot.lane.b32.xlu0 %v827, 40
      %v1348 = vpop.permute.xlu0 %1347
      %1349 = vrot.lane.b32.xlu0 %v828, 40
      %v1350 = vpop.permute.xlu0 %1349
      %1351 = vrot.lane.b32.xlu0 %v829, 40
      %v1352 = vpop.permute.xlu0 %1351
      %1353 = vrot.lane.b32.xlu0 %v830, 40
      %v1354 = vpop.permute.xlu0 %1353
      %1355 = vrot.lane.b32.xlu0 %v831, 40
      %v1356 = vpop.permute.xlu0 %1355
      %1357 = vrot.lane.b32.xlu0 %v832, 40
      %v1358 = vpop.permute.xlu0 %1357
      %1359 = vrot.lane.b32.xlu0 %v833, 40
      %v1360 = vpop.permute.xlu0 %1359
      %1361 = vrot.lane.b32.xlu0 %v834, 40
      %v1362 = vpop.permute.xlu0 %1361
      %1363 = vrot.lane.b32.xlu0 %v835, 40
      %v1364 = vpop.permute.xlu0 %1363
      %1365 = vrot.lane.b32.xlu0 %v836, 40
      %v1366 = vpop.permute.xlu0 %1365
      %1367 = vrot.lane.b32.xlu0 %v837, 40
      %v1368 = vpop.permute.xlu0 %1367
      %1369 = vrot.lane.b32.xlu0 %v838, 40
      %v1370 = vpop.permute.xlu0 %1369
      %1371 = vrot.lane.b32.xlu0 %v839, 40
      %v1372 = vpop.permute.xlu0 %1371
      %1373 = vrot.lane.b32.xlu0 %v840, 40
      %v1374 = vpop.permute.xlu0 %1373
      %1375 = vrot.lane.b32.xlu0 %v841, 40
      %v1376 = vpop.permute.xlu0 %1375
      %1377 = vrot.lane.b32.xlu0 %v842, 40
      %v1378 = vpop.permute.xlu0 %1377
      %1379 = vrot.lane.b32.xlu0 %v843, 40
      %v1380 = vpop.permute.xlu0 %1379
      %1381 = vrot.lane.b32.xlu0 %v844, 40
      %v1382 = vpop.permute.xlu0 %1381
      %1383 = vrot.lane.b32.xlu0 %v845, 40
      %v1384 = vpop.permute.xlu0 %1383
      %1385 = vrot.lane.b32.xlu0 %v846, 40
      %v1386 = vpop.permute.xlu0 %1385
      %1387 = vrot.lane.b32.xlu0 %v847, 40
      %v1388 = vpop.permute.xlu0 %1387
      %1389 = vrot.lane.b32.xlu0 %v848, 40
      %v1390 = vpop.permute.xlu0 %1389
      %1391 = vrot.lane.b32.xlu0 %v849, 40
      %v1392 = vpop.permute.xlu0 %1391
      %1393 = vrot.lane.b32.xlu0 %v850, 40
      %v1394 = vpop.permute.xlu0 %1393
      %1395 = vrot.lane.b32.xlu0 %v851, 40
      %v1396 = vpop.permute.xlu0 %1395
      %1397 = vrot.lane.b32.xlu0 %v852, 40
      %v1398 = vpop.permute.xlu0 %1397
      %1399 = vrot.lane.b32.xlu0 %v853, 40
      %v1400 = vpop.permute.xlu0 %1399
      %1401 = vrot.lane.b32.xlu0 %v854, 40
      %v1402 = vpop.permute.xlu0 %1401
      %1403 = vrot.lane.b32.xlu0 %v855, 40
      %v1404 = vpop.permute.xlu0 %1403
      %1405 = vrot.lane.b32.xlu0 %v856, 40
      %v1406 = vpop.permute.xlu0 %1405
      %1441 = vrot.lane.b32.xlu0 %v716, 48
      %v1442 = vpop.permute.xlu0 %1441
      %1443 = vrot.lane.b32.xlu0 %v717, 48
      %v1444 = vpop.permute.xlu0 %1443
      %1445 = vrot.lane.b32.xlu0 %v718, 48
      %v1446 = vpop.permute.xlu0 %1445
      %1447 = vrot.lane.b32.xlu0 %v719, 48
      %v1448 = vpop.permute.xlu0 %1447
      %1449 = vrot.lane.b32.xlu0 %v720, 48
      %v1450 = vpop.permute.xlu0 %1449
      %1451 = vrot.lane.b32.xlu0 %v721, 48
      %v1452 = vpop.permute.xlu0 %1451
      %1453 = vrot.lane.b32.xlu0 %v722, 48
      %v1454 = vpop.permute.xlu0 %1453
      %1455 = vrot.lane.b32.xlu0 %v723, 48
      %v1456 = vpop.permute.xlu0 %1455
      %1457 = vrot.lane.b32.xlu0 %v724, 48
      %v1458 = vpop.permute.xlu0 %1457
      %1459 = vrot.lane.b32.xlu0 %v725, 48
      %v1460 = vpop.permute.xlu0 %1459
      %1461 = vrot.lane.b32.xlu0 %v726, 48
      %v1462 = vpop.permute.xlu0 %1461
      %1463 = vrot.lane.b32.xlu0 %v727, 48
      %v1464 = vpop.permute.xlu0 %1463
      %1465 = vrot.lane.b32.xlu0 %v728, 48
      %v1466 = vpop.permute.xlu0 %1465
      %1467 = vrot.lane.b32.xlu0 %v729, 48
      %v1468 = vpop.permute.xlu0 %1467
      %1469 = vrot.lane.b32.xlu0 %v730, 48
      %v1470 = vpop.permute.xlu0 %1469
      %1471 = vrot.lane.b32.xlu0 %v731, 48
      %v1472 = vpop.permute.xlu0 %1471
      %1473 = vrot.lane.b32.xlu0 %v732, 48
      %v1474 = vpop.permute.xlu0 %1473
      %1475 = vrot.lane.b32.xlu0 %v733, 48
      %v1476 = vpop.permute.xlu0 %1475
      %1477 = vrot.lane.b32.xlu0 %v734, 48
      %v1478 = vpop.permute.xlu0 %1477
      %1479 = vrot.lane.b32.xlu0 %v735, 48
      %v1480 = vpop.permute.xlu0 %1479
      %1481 = vrot.lane.b32.xlu0 %v736, 48
      %v1482 = vpop.permute.xlu0 %1481
      %1483 = vrot.lane.b32.xlu0 %v737, 48
      %v1484 = vpop.permute.xlu0 %1483
      %1485 = vrot.lane.b32.xlu0 %v738, 48
      %v1486 = vpop.permute.xlu0 %1485
      %1487 = vrot.lane.b32.xlu0 %v739, 48
      %v1488 = vpop.permute.xlu0 %1487
      %1489 = vrot.lane.b32.xlu0 %v740, 48
      %v1490 = vpop.permute.xlu0 %1489
      %1491 = vrot.lane.b32.xlu0 %v741, 48
      %v1492 = vpop.permute.xlu0 %1491
      %1493 = vrot.lane.b32.xlu0 %v742, 48
      %v1494 = vpop.permute.xlu0 %1493
      %1495 = vrot.lane.b32.xlu0 %v743, 48
      %v1496 = vpop.permute.xlu0 %1495
      %1497 = vrot.lane.b32.xlu0 %v744, 48
      %v1498 = vpop.permute.xlu0 %1497
      %1499 = vrot.lane.b32.xlu0 %v745, 48
      %v1500 = vpop.permute.xlu0 %1499
      %1501 = vrot.lane.b32.xlu0 %v746, 48
      %v1502 = vpop.permute.xlu0 %1501
      %1503 = vrot.lane.b32.xlu0 %v747, 48
      %v1504 = vpop.permute.xlu0 %1503
      %1539 = vrot.lane.b32.xlu0 %v576, 56
      %v1540 = vpop.permute.xlu0 %1539
      %1541 = vrot.lane.b32.xlu0 %v577, 56
      %v1542 = vpop.permute.xlu0 %1541
      %1543 = vrot.lane.b32.xlu0 %v578, 56
      %v1544 = vpop.permute.xlu0 %1543
      %1545 = vrot.lane.b32.xlu0 %v579, 56
      %v1546 = vpop.permute.xlu0 %1545
      %1547 = vrot.lane.b32.xlu0 %v580, 56
      %v1548 = vpop.permute.xlu0 %1547
      %1549 = vrot.lane.b32.xlu0 %v581, 56
      %v1550 = vpop.permute.xlu0 %1549
      %1551 = vrot.lane.b32.xlu0 %v582, 56
      %v1552 = vpop.permute.xlu0 %1551
      %1553 = vrot.lane.b32.xlu0 %v583, 56
      %v1554 = vpop.permute.xlu0 %1553
      %1555 = vrot.lane.b32.xlu0 %v584, 56
      %v1556 = vpop.permute.xlu0 %1555
      %1557 = vrot.lane.b32.xlu0 %v585, 56
      %v1558 = vpop.permute.xlu0 %1557
      %1559 = vrot.lane.b32.xlu0 %v586, 56
      %v1560 = vpop.permute.xlu0 %1559
      %1561 = vrot.lane.b32.xlu0 %v587, 56
      %v1562 = vpop.permute.xlu0 %1561
      %1563 = vrot.lane.b32.xlu0 %v588, 56
      %v1564 = vpop.permute.xlu0 %1563
      %1565 = vrot.lane.b32.xlu0 %v589, 56
      %v1566 = vpop.permute.xlu0 %1565
      %1567 = vrot.lane.b32.xlu0 %v590, 56
      %v1568 = vpop.permute.xlu0 %1567
      %1569 = vrot.lane.b32.xlu0 %v591, 56
      %v1570 = vpop.permute.xlu0 %1569
      %1571 = vrot.lane.b32.xlu0 %v592, 56
      %v1572 = vpop.permute.xlu0 %1571
      %1573 = vrot.lane.b32.xlu0 %v593, 56
      %v1574 = vpop.permute.xlu0 %1573
      %1575 = vrot.lane.b32.xlu0 %v594, 56
      %v1576 = vpop.permute.xlu0 %1575
      %1577 = vrot.lane.b32.xlu0 %v595, 56
      %v1578 = vpop.permute.xlu0 %1577
      %1579 = vrot.lane.b32.xlu0 %v596, 56
      %v1580 = vpop.permute.xlu0 %1579
      %1581 = vrot.lane.b32.xlu0 %v597, 56
      %v1582 = vpop.permute.xlu0 %1581
      %1583 = vrot.lane.b32.xlu0 %v598, 56
      %v1584 = vpop.permute.xlu0 %1583
      %1585 = vrot.lane.b32.xlu0 %v599, 56
      %v1586 = vpop.permute.xlu0 %1585
      %1587 = vrot.lane.b32.xlu0 %v600, 56
      %v1588 = vpop.permute.xlu0 %1587
      %1589 = vrot.lane.b32.xlu0 %v601, 56
      %v1590 = vpop.permute.xlu0 %1589
      %1591 = vrot.lane.b32.xlu0 %v602, 56
      %v1592 = vpop.permute.xlu0 %1591
      %1593 = vrot.lane.b32.xlu0 %v603, 56
      %v1594 = vpop.permute.xlu0 %1593
      %1595 = vrot.lane.b32.xlu0 %v604, 56
      %v1596 = vpop.permute.xlu0 %1595
      %1597 = vrot.lane.b32.xlu0 %v605, 56
      %v1598 = vpop.permute.xlu0 %1597
      %1599 = vrot.lane.b32.xlu0 %v632, 56
      %v1600 = vpop.permute.xlu0 %1599
      %1601 = vrot.lane.b32.xlu0 %v633, 56
      %v1602 = vpop.permute.xlu0 %1601
      %1637 = vrot.lane.b32.xlu0 %v827, 64
      %v1638 = vpop.permute.xlu0 %1637
      %1639 = vrot.lane.b32.xlu0 %v828, 64
      %v1640 = vpop.permute.xlu0 %1639
      %1641 = vrot.lane.b32.xlu0 %v829, 64
      %v1642 = vpop.permute.xlu0 %1641
      %1643 = vrot.lane.b32.xlu0 %v830, 64
      %v1644 = vpop.permute.xlu0 %1643
      %1645 = vrot.lane.b32.xlu0 %v831, 64
      %v1646 = vpop.permute.xlu0 %1645
      %1647 = vrot.lane.b32.xlu0 %v832, 64
      %v1648 = vpop.permute.xlu0 %1647
      %1649 = vrot.lane.b32.xlu0 %v833, 64
      %v1650 = vpop.permute.xlu0 %1649
      %1651 = vrot.lane.b32.xlu0 %v834, 64
      %v1652 = vpop.permute.xlu0 %1651
      %1653 = vrot.lane.b32.xlu0 %v835, 64
      %v1654 = vpop.permute.xlu0 %1653
      %1655 = vrot.lane.b32.xlu0 %v836, 64
      %v1656 = vpop.permute.xlu0 %1655
      %1657 = vrot.lane.b32.xlu0 %v837, 64
      %v1658 = vpop.permute.xlu0 %1657
      %1659 = vrot.lane.b32.xlu0 %v838, 64
      %v1660 = vpop.permute.xlu0 %1659
      %1661 = vrot.lane.b32.xlu0 %v839, 64
      %v1662 = vpop.permute.xlu0 %1661
      %1663 = vrot.lane.b32.xlu0 %v840, 64
      %v1664 = vpop.permute.xlu0 %1663
      %1665 = vrot.lane.b32.xlu0 %v841, 64
      %v1666 = vpop.permute.xlu0 %1665
      %1667 = vrot.lane.b32.xlu0 %v842, 64
      %v1668 = vpop.permute.xlu0 %1667
      %1669 = vrot.lane.b32.xlu0 %v843, 64
      %v1670 = vpop.permute.xlu0 %1669
      %1671 = vrot.lane.b32.xlu0 %v844, 64
      %v1672 = vpop.permute.xlu0 %1671
      %1673 = vrot.lane.b32.xlu0 %v845, 64
      %v1674 = vpop.permute.xlu0 %1673
      %1675 = vrot.lane.b32.xlu0 %v846, 64
      %v1676 = vpop.permute.xlu0 %1675
      %1677 = vrot.lane.b32.xlu0 %v847, 64
      %v1678 = vpop.permute.xlu0 %1677
      %1679 = vrot.lane.b32.xlu0 %v848, 64
      %v1680 = vpop.permute.xlu0 %1679
      %1681 = vrot.lane.b32.xlu0 %v849, 64
      %v1682 = vpop.permute.xlu0 %1681
      %1683 = vrot.lane.b32.xlu0 %v850, 64
      %v1684 = vpop.permute.xlu0 %1683
      %1685 = vrot.lane.b32.xlu0 %v851, 64
      %v1686 = vpop.permute.xlu0 %1685
      %1687 = vrot.lane.b32.xlu0 %v852, 64
      %v1688 = vpop.permute.xlu0 %1687
      %1689 = vrot.lane.b32.xlu0 %v853, 64
      %v1690 = vpop.permute.xlu0 %1689
      %1691 = vrot.lane.b32.xlu0 %v854, 64
      %v1692 = vpop.permute.xlu0 %1691
      %1693 = vrot.lane.b32.xlu0 %v855, 64
      %v1694 = vpop.permute.xlu0 %1693
      %1695 = vrot.lane.b32.xlu0 %v856, 64
      %v1696 = vpop.permute.xlu0 %1695
      %1697 = vrot.lane.b32.xlu0 %v857, 64
      %v1698 = vpop.permute.xlu0 %1697
      %1699 = vrot.lane.b32.xlu0 %v858, 64
      %v1700 = vpop.permute.xlu0 %1699
      %vm1733 = vcmask 64512
      %v1734 = vsel %vm1733, %v712, %v892
      %v1735 = vsel %vm1733, %v713, %v894
      %v1736 = vsel %vm1733, %v714, %v896
      %v1737 = vsel %vm1733, %v715, %v898
      %v1738 = vsel %vm1733, %v716, %v900
      %v1739 = vsel %vm1733, %v717, %v902
      %v1740 = vsel %vm1733, %v718, %v904
      %v1741 = vsel %vm1733, %v719, %v906
      %v1742 = vsel %vm1733, %v720, %v908
      %v1743 = vsel %vm1733, %v721, %v910
      %v1744 = vsel %vm1733, %v722, %v912
      %v1745 = vsel %vm1733, %v723, %v914
      %v1746 = vsel %vm1733, %v724, %v916
      %v1747 = vsel %vm1733, %v725, %v918
      %v1748 = vsel %vm1733, %v726, %v920
      %v1749 = vsel %vm1733, %v727, %v922
      %v1750 = vsel %vm1733, %v728, %v924
      %v1751 = vsel %vm1733, %v729, %v926
      %v1752 = vsel %vm1733, %v730, %v928
      %v1753 = vsel %vm1733, %v731, %v930
      %v1754 = vsel %vm1733, %v732, %v932
      %v1755 = vsel %vm1733, %v733, %v934
      %v1756 = vsel %vm1733, %v734, %v936
      %v1757 = vsel %vm1733, %v735, %v938
      %v1758 = vsel %vm1733, %v736, %v940
      %v1759 = vsel %vm1733, %v737, %v942
      %v1760 = vsel %vm1733, %v738, %v944
      %v1761 = vsel %vm1733, %v739, %v946
      %v1762 = vsel %vm1733, %v740, %v948
      %v1763 = vsel %vm1733, %v741, %v950
      %v1764 = vsel %vm1733, %v742, %v952
      %v1765 = vsel %vm1733, %v743, %v954
      %vm1766 = vcmask 130048
      %v1767 = vsel %vm1766, %v1734, %v1020
      %v1768 = vsel %vm1766, %v1735, %v1022
      %v1769 = vsel %vm1766, %v1736, %v1024
      %v1770 = vsel %vm1766, %v1737, %v1026
      %v1771 = vsel %vm1766, %v1738, %v1028
      %v1772 = vsel %vm1766, %v1739, %v1030
      %v1773 = vsel %vm1766, %v1740, %v1032
      %v1774 = vsel %vm1766, %v1741, %v1034
      %v1775 = vsel %vm1766, %v1742, %v1036
      %v1776 = vsel %vm1766, %v1743, %v1038
      %v1777 = vsel %vm1766, %v1744, %v1040
      %v1778 = vsel %vm1766, %v1745, %v1042
      %v1779 = vsel %vm1766, %v1746, %v1044
      %v1780 = vsel %vm1766, %v1747, %v1046
      %v1781 = vsel %vm1766, %v1748, %v1048
      %v1782 = vsel %vm1766, %v1749, %v1050
      %v1783 = vsel %vm1766, %v1750, %v1052
      %v1784 = vsel %vm1766, %v1751, %v1054
      %v1785 = vsel %vm1766, %v1752, %v1056
      %v1786 = vsel %vm1766, %v1753, %v1058
      %v1787 = vsel %vm1766, %v1754, %v1060
      %v1788 = vsel %vm1766, %v1755, %v1062
      %v1789 = vsel %vm1766, %v1756, %v1064
      %v1790 = vsel %vm1766, %v1757, %v1066
      %v1791 = vsel %vm1766, %v1758, %v1068
      %v1792 = vsel %vm1766, %v1759, %v1070
      %v1793 = vsel %vm1766, %v1760, %v1072
      %v1794 = vsel %vm1766, %v1761, %v1074
      %v1795 = vsel %vm1766, %v1762, %v1076
      %v1796 = vsel %vm1766, %v1763, %v1078
      %v1797 = vsel %vm1766, %v1764, %v1080
      %v1798 = vsel %vm1766, %v1765, %v1082
      %vm1799 = vcmask 195584
      %v1800 = vsel %vm1799, %v1767, %v1148
      %v1801 = vsel %vm1799, %v1768, %v1150
      %v1802 = vsel %vm1799, %v1769, %v1152
      %v1803 = vsel %vm1799, %v1770, %v1154
      %v1804 = vsel %vm1799, %v1771, %v1156
      %v1805 = vsel %vm1799, %v1772, %v1158
      %v1806 = vsel %vm1799, %v1773, %v1160
      %v1807 = vsel %vm1799, %v1774, %v1162
      %v1808 = vsel %vm1799, %v1775, %v1164
      %v1809 = vsel %vm1799, %v1776, %v1166
      %v1810 = vsel %vm1799, %v1777, %v1168
      %v1811 = vsel %vm1799, %v1778, %v1170
      %v1812 = vsel %vm1799, %v1779, %v1172
      %v1813 = vsel %vm1799, %v1780, %v1174
      %v1814 = vsel %vm1799, %v1781, %v1176
      %v1815 = vsel %vm1799, %v1782, %v1178
      %v1816 = vsel %vm1799, %v1783, %v1180
      %v1817 = vsel %vm1799, %v1784, %v1182
      %v1818 = vsel %vm1799, %v1785, %v1184
      %v1819 = vsel %vm1799, %v1786, %v1186
      %v1820 = vsel %vm1799, %v1787, %v1188
      %v1821 = vsel %vm1799, %v1788, %v1190
      %v1822 = vsel %vm1799, %v1789, %v1192
      %v1823 = vsel %vm1799, %v1790, %v1194
      %v1824 = vsel %vm1799, %v1791, %v1196
      %v1825 = vsel %vm1799, %v1792, %v1198
      %v1826 = vsel %vm1799, %v1793, %v1200
      %v1827 = vsel %vm1799, %v1794, %v1202
      %v1828 = vsel %vm1799, %v1795, %v1204
      %v1829 = vsel %vm1799, %v1796, %v1206
      %v1830 = vsel %vm1799, %v1797, %v1208
      %v1831 = vsel %vm1799, %v1798, %v1210
      %vm1832 = vcmask 261120
      %v1833 = vsel %vm1832, %v1800, %v1246
      %v1834 = vsel %vm1832, %v1801, %v1248
      %v1835 = vsel %vm1832, %v1802, %v1250
      %v1836 = vsel %vm1832, %v1803, %v1252
      %v1837 = vsel %vm1832, %v1804, %v1254
      %v1838 = vsel %vm1832, %v1805, %v1256
      %v1839 = vsel %vm1832, %v1806, %v1258
      %v1840 = vsel %vm1832, %v1807, %v1260
      %v1841 = vsel %vm1832, %v1808, %v1262
      %v1842 = vsel %vm1832, %v1809, %v1264
      %v1843 = vsel %vm1832, %v1810, %v1266
      %v1844 = vsel %vm1832, %v1811, %v1268
      %v1845 = vsel %vm1832, %v1812, %v1270
      %v1846 = vsel %vm1832, %v1813, %v1272
      %v1847 = vsel %vm1832, %v1814, %v1274
      %v1848 = vsel %vm1832, %v1815, %v1276
      %v1849 = vsel %vm1832, %v1816, %v1278
      %v1850 = vsel %vm1832, %v1817, %v1280
      %v1851 = vsel %vm1832, %v1818, %v1282
      %v1852 = vsel %vm1832, %v1819, %v1284
      %v1853 = vsel %vm1832, %v1820, %v1286
      %v1854 = vsel %vm1832, %v1821, %v1288
      %v1855 = vsel %vm1832, %v1822, %v1290
      %v1856 = vsel %vm1832, %v1823, %v1292
      %v1857 = vsel %vm1832, %v1824, %v1294
      %v1858 = vsel %vm1832, %v1825, %v1296
      %v1859 = vsel %vm1832, %v1826, %v1298
      %v1860 = vsel %vm1832, %v1827, %v1300
      %v1861 = vsel %vm1832, %v1828, %v1302
      %v1862 = vsel %vm1832, %v1829, %v1304
      %v1863 = vsel %vm1832, %v1830, %v1306
      %v1864 = vsel %vm1832, %v1831, %v1308
      %vm1865 = vcmask 326656
      %v1866 = vsel %vm1865, %v1833, %v1344
      %v1867 = vsel %vm1865, %v1834, %v1346
      %v1868 = vsel %vm1865, %v1835, %v1348
      %v1869 = vsel %vm1865, %v1836, %v1350
      %v1870 = vsel %vm1865, %v1837, %v1352
      %v1871 = vsel %vm1865, %v1838, %v1354
      %v1872 = vsel %vm1865, %v1839, %v1356
      %v1873 = vsel %vm1865, %v1840, %v1358
      %v1874 = vsel %vm1865, %v1841, %v1360
      %v1875 = vsel %vm1865, %v1842, %v1362
      %v1876 = vsel %vm1865, %v1843, %v1364
      %v1877 = vsel %vm1865, %v1844, %v1366
      %v1878 = vsel %vm1865, %v1845, %v1368
      %v1879 = vsel %vm1865, %v1846, %v1370
      %v1880 = vsel %vm1865, %v1847, %v1372
      %v1881 = vsel %vm1865, %v1848, %v1374
      %v1882 = vsel %vm1865, %v1849, %v1376
      %v1883 = vsel %vm1865, %v1850, %v1378
      %v1884 = vsel %vm1865, %v1851, %v1380
      %v1885 = vsel %vm1865, %v1852, %v1382
      %v1886 = vsel %vm1865, %v1853, %v1384
      %v1887 = vsel %vm1865, %v1854, %v1386
      %v1888 = vsel %vm1865, %v1855, %v1388
      %v1889 = vsel %vm1865, %v1856, %v1390
      %v1890 = vsel %vm1865, %v1857, %v1392
      %v1891 = vsel %vm1865, %v1858, %v1394
      %v1892 = vsel %vm1865, %v1859, %v1396
      %v1893 = vsel %vm1865, %v1860, %v1398
      %v1894 = vsel %vm1865, %v1861, %v1400
      %v1895 = vsel %vm1865, %v1862, %v1402
      %v1896 = vsel %vm1865, %v1863, %v1404
      %v1897 = vsel %vm1865, %v1864, %v1406
      %vm1898 = vcmask 392192
      %v1899 = vsel %vm1898, %v1866, %v1442
      %v1900 = vsel %vm1898, %v1867, %v1444
      %v1901 = vsel %vm1898, %v1868, %v1446
      %v1902 = vsel %vm1898, %v1869, %v1448
      %v1903 = vsel %vm1898, %v1870, %v1450
      %v1904 = vsel %vm1898, %v1871, %v1452
      %v1905 = vsel %vm1898, %v1872, %v1454
      %v1906 = vsel %vm1898, %v1873, %v1456
      %v1907 = vsel %vm1898, %v1874, %v1458
      %v1908 = vsel %vm1898, %v1875, %v1460
      %v1909 = vsel %vm1898, %v1876, %v1462
      %v1910 = vsel %vm1898, %v1877, %v1464
      %v1911 = vsel %vm1898, %v1878, %v1466
      %v1912 = vsel %vm1898, %v1879, %v1468
      %v1913 = vsel %vm1898, %v1880, %v1470
      %v1914 = vsel %vm1898, %v1881, %v1472
      %v1915 = vsel %vm1898, %v1882, %v1474
      %v1916 = vsel %vm1898, %v1883, %v1476
      %v1917 = vsel %vm1898, %v1884, %v1478
      %v1918 = vsel %vm1898, %v1885, %v1480
      %v1919 = vsel %vm1898, %v1886, %v1482
      %v1920 = vsel %vm1898, %v1887, %v1484
      %v1921 = vsel %vm1898, %v1888, %v1486
      %v1922 = vsel %vm1898, %v1889, %v1488
      %v1923 = vsel %vm1898, %v1890, %v1490
      %v1924 = vsel %vm1898, %v1891, %v1492
      %v1925 = vsel %vm1898, %v1892, %v1494
      %v1926 = vsel %vm1898, %v1893, %v1496
      %v1927 = vsel %vm1898, %v1894, %v1498
      %v1928 = vsel %vm1898, %v1895, %v1500
      %v1929 = vsel %vm1898, %v1896, %v1502
      %v1930 = vsel %vm1898, %v1897, %v1504
      %vm1931 = vcmask 457728
      %v1932 = vsel %vm1931, %v1899, %v1540
      %v1933 = vsel %vm1931, %v1900, %v1542
      %v1934 = vsel %vm1931, %v1901, %v1544
      %v1935 = vsel %vm1931, %v1902, %v1546
      %v1936 = vsel %vm1931, %v1903, %v1548
      %v1937 = vsel %vm1931, %v1904, %v1550
      %v1938 = vsel %vm1931, %v1905, %v1552
      %v1939 = vsel %vm1931, %v1906, %v1554
      %v1940 = vsel %vm1931, %v1907, %v1556
      %v1941 = vsel %vm1931, %v1908, %v1558
      %v1942 = vsel %vm1931, %v1909, %v1560
      %v1943 = vsel %vm1931, %v1910, %v1562
      %v1944 = vsel %vm1931, %v1911, %v1564
      %v1945 = vsel %vm1931, %v1912, %v1566
      %v1946 = vsel %vm1931, %v1913, %v1568
      %v1947 = vsel %vm1931, %v1914, %v1570
      %v1948 = vsel %vm1931, %v1915, %v1572
      %v1949 = vsel %vm1931, %v1916, %v1574
      %v1950 = vsel %vm1931, %v1917, %v1576
      %v1951 = vsel %vm1931, %v1918, %v1578
      %v1952 = vsel %vm1931, %v1919, %v1580
      %v1953 = vsel %vm1931, %v1920, %v1582
      %v1954 = vsel %vm1931, %v1921, %v1584
      %v1955 = vsel %vm1931, %v1922, %v1586
      %v1956 = vsel %vm1931, %v1923, %v1588
      %v1957 = vsel %vm1931, %v1924, %v1590
      %v1958 = vsel %vm1931, %v1925, %v1592
      %v1959 = vsel %vm1931, %v1926, %v1594
      %v1960 = vsel %vm1931, %v1927, %v1596
      %v1961 = vsel %vm1931, %v1928, %v1598
      %v1962 = vsel %vm1931, %v1929, %v1600
      %v1963 = vsel %vm1931, %v1930, %v1602
      %vm1964 = vcmask 523264
      %v1965 = vsel %vm1964, %v1932, %v1638
      %v1966 = vsel %vm1964, %v1933, %v1640
      %v1967 = vsel %vm1964, %v1934, %v1642
      %v1968 = vsel %vm1964, %v1935, %v1644
      %v1969 = vsel %vm1964, %v1936, %v1646
      %v1970 = vsel %vm1964, %v1937, %v1648
      %v1971 = vsel %vm1964, %v1938, %v1650
      %v1972 = vsel %vm1964, %v1939, %v1652
      %v1973 = vsel %vm1964, %v1940, %v1654
      %v1974 = vsel %vm1964, %v1941, %v1656
      %v1975 = vsel %vm1964, %v1942, %v1658
      %v1976 = vsel %vm1964, %v1943, %v1660
      %v1977 = vsel %vm1964, %v1944, %v1662
      %v1978 = vsel %vm1964, %v1945, %v1664
      %v1979 = vsel %vm1964, %v1946, %v1666
      %v1980 = vsel %vm1964, %v1947, %v1668
      %v1981 = vsel %vm1964, %v1948, %v1670
      %v1982 = vsel %vm1964, %v1949, %v1672
      %v1983 = vsel %vm1964, %v1950, %v1674
      %v1984 = vsel %vm1964, %v1951, %v1676
      %v1985 = vsel %vm1964, %v1952, %v1678
      %v1986 = vsel %vm1964, %v1953, %v1680
      %v1987 = vsel %vm1964, %v1954, %v1682
      %v1988 = vsel %vm1964, %v1955, %v1684
      %v1989 = vsel %vm1964, %v1956, %v1686
      %v1990 = vsel %vm1964, %v1957, %v1688
      %v1991 = vsel %vm1964, %v1958, %v1690
      %v1992 = vsel %vm1964, %v1959, %v1692
      %v1993 = vsel %vm1964, %v1960, %v1694
      %v1994 = vsel %vm1964, %v1961, %v1696
      %v1995 = vsel %vm1964, %v1962, %v1698
      %v1996 = vsel %vm1964, %v1963, %v1700
      %v1997 = vpack.c.bf16 %v1966, %v1965
      %v1998 = vpack.c.bf16 %v1968, %v1967
      %v1999 = vpack.c.bf16 %v1970, %v1969
      %v2000 = vpack.c.bf16 %v1972, %v1971
      %v2001 = vpack.c.bf16 %v1974, %v1973
      %v2002 = vpack.c.bf16 %v1976, %v1975
      %v2003 = vpack.c.bf16 %v1978, %v1977
      %v2004 = vpack.c.bf16 %v1980, %v1979
      %v2005 = vpack.c.bf16 %v1982, %v1981
      %v2006 = vpack.c.bf16 %v1984, %v1983
      %v2007 = vpack.c.bf16 %v1986, %v1985
      %v2008 = vpack.c.bf16 %v1988, %v1987
      %v2009 = vpack.c.bf16 %v1990, %v1989
      %v2010 = vpack.c.bf16 %v1992, %v1991
      %v2011 = vpack.c.bf16 %v1994, %v1993
      %v2012 = vpack.c.bf16 %v1996, %v1995
      %v2013 = vld [vmem:[%s5] sm:$0xf]
      %v2014 = vld [vmem:[%s5 + $0x4] sm:$0xf]
      %v2015 = vld [vmem:[%s5 + $0x8] sm:$0xf]
      %v2016 = vld [vmem:[%s5 + $0xc] sm:$0xf]
      %v2017 = vld [vmem:[%s5 + $0x10] sm:$0xf]
      %v2018 = vld [vmem:[%s5 + $0x14] sm:$0xf]
      %v2019 = vld [vmem:[%s5 + $0x18] sm:$0xf]
      %v2020 = vld [vmem:[%s5 + $0x1c] sm:$0xf]
      %v2021 = vld [vmem:[%s5 + $0x20] sm:$0xf]
      %v2031 = vunpack.c.l.b16 %v2013
      %v2032 = vunpack.c.l.b16 %v2014
      %v2033 = vunpack.c.l.b16 %v2015
      %v2034 = vunpack.c.l.b16 %v2016
      %v2035 = vunpack.c.l.b16 %v2017
      %v2036 = vunpack.c.l.b16 %v2018
      %v2037 = vunpack.c.l.b16 %v2019
      %v2038 = vunpack.c.l.b16 %v2020
      %v2039 = vunpack.c.l.b16 %v2021
      %v2040 = vpack.c.b16 %v2032, %v2031
      %v2041 = vpack.c.b16 %v2034, %v2033
      %v2042 = vpack.c.b16 %v2036, %v2035
      %v2043 = vpack.c.b16 %v2038, %v2037
      %v2044 = vpack.c.b16 %v2039, %v2039
      %vm2049 = vcmask 588800
      %v2051 = vsel %vm2049, %v1997, 0
      %v2054 = vsel %vm2049, %v1998, 0
      %v2057 = vsel %vm2049, %v1999, 0
      %v2060 = vsel %vm2049, %v2000, 0
      %v2063 = vsel %vm2049, %v2001, 0
      %v2066 = vsel %vm2049, %v2002, 0
      %v2069 = vsel %vm2049, %v2003, 0
      %v2072 = vsel %vm2049, %v2004, 0
      %v2075 = vsel %vm2049, %v2005, 0
      %v2078 = vsel %vm2049, %v2006, 0
      %v2081 = vsel %vm2049, %v2007, 0
      %v2084 = vsel %vm2049, %v2008, 0
      %v2087 = vsel %vm2049, %v2009, 0
      %v2090 = vsel %vm2049, %v2010, 0
      %v2093 = vsel %vm2049, %v2011, 0
      %v2096 = vsel %vm2049, %v2012, 0
      %vm2098 = vcmask 1043456
      %v2100 = vsel %vm2098, %v2044, 0
      %2102 = vmatprep.subr.bf16.mxu0 0
      %2103 = vmatpush1.bf16.msra.mxu0 0
      %2104 = vmatprep.subr.bf16.mxu0 0
      %2105 = vmatpush1.bf16.msra.mxu0 0
      %2106 = vmatprep.subr.bf16.mxu0 0
      %2107 = vmatpush1.bf16.msra.mxu0 0
      %2108 = vmatprep.subr.bf16.mxu0 0
      %2109 = vmatpush1.bf16.msra.mxu0 %v2100
      %2110 = vmatprep.subr.bf16.mxu0 0
      %2111 = vmatpush1.bf16.msra.mxu0 %v2043
      %2112 = vmatprep.subr.bf16.mxu0 0
      %2113 = vmatpush1.bf16.msra.mxu0 %v2042
      %2114 = vmatprep.subr.bf16.mxu0 0
      %2115 = vmatpush1.bf16.msra.mxu0 %v2041
      %2116 = vmatprep.subr.bf16.mxu0 0
      %2117 = vmatpush1.bf16.msra.mxu0 %v2040
      %2118 = vmatprep.subr.bf16.mxu0 0
      %2119 = vmatpush2.bf16.msra.mxu0 0
      %2120 = vmatprep.subr.bf16.mxu0 0
      %2121 = vmatpush2.bf16.msra.mxu0 0
      %2122 = vmatprep.subr.bf16.mxu0 0
      %2123 = vmatpush2.bf16.msra.mxu0 0
      %2124 = vmatprep.subr.bf16.mxu0 0
      %2125 = vmatpush2.bf16.msra.mxu0 0
      %2126 = vmatprep.subr.bf16.mxu0 0
      %2127 = vmatpush2.bf16.msra.mxu0 0
      %2128 = vmatprep.subr.bf16.mxu0 0
      %2129 = vmatpush2.bf16.msra.mxu0 0
      %2130 = vmatprep.subr.bf16.mxu0 0
      %2131 = vmatpush2.bf16.msra.mxu0 0
      %2132 = vmatprep.subr.bf16.mxu0 0
      %2133 = vmatpush2.bf16.msra.mxu0 0
      %2134 = vmatprep.mubr.bf16.mxu0 0
      %2135 = vmatmul.mubr.bf16.gmra.mxu0 %v2051
      %v2136 = vpop.f32.mrf.mxu0
      %v2137 = vadd.f32 0.0, %v2136
      %v2138 = vpop.f32.mrf.mxu0
      %v2139 = vpop.f32.mrf.mxu0
      %v2140 = vadd.f32 0.0, %v2139
      %v2141 = vpop.f32.mrf.mxu0
      %2142 = vmatprep.mubr.bf16.mxu0 0
      %2143 = vmatmul.mubr.bf16.gmra.mxu0 %v2054
      %v2144 = vpop.f32.mrf.mxu0
      %v2145 = vadd.f32 0.0, %v2144
      %v2146 = vpop.f32.mrf.mxu0
      %v2147 = vpop.f32.mrf.mxu0
      %v2148 = vadd.f32 0.0, %v2147
      %v2149 = vpop.f32.mrf.mxu0
      %2150 = vmatprep.mubr.bf16.mxu0 0
      %2151 = vmatmul.mubr.bf16.gmra.mxu0 %v2057
      %v2152 = vpop.f32.mrf.mxu0
      %v2153 = vadd.f32 0.0, %v2152
      %v2154 = vpop.f32.mrf.mxu0
      %v2155 = vpop.f32.mrf.mxu0
      %v2156 = vadd.f32 0.0, %v2155
      %v2157 = vpop.f32.mrf.mxu0
      %2158 = vmatprep.mubr.bf16.mxu0 0
      %2159 = vmatmul.mubr.bf16.gmra.mxu0 %v2060
      %v2160 = vpop.f32.mrf.mxu0
      %v2161 = vadd.f32 0.0, %v2160
      %v2162 = vpop.f32.mrf.mxu0
      %v2163 = vpop.f32.mrf.mxu0
      %v2164 = vadd.f32 0.0, %v2163
      %v2165 = vpop.f32.mrf.mxu0
      %2166 = vmatprep.mubr.bf16.mxu0 0
      %2167 = vmatmul.mubr.bf16.gmra.mxu0 %v2063
      %v2168 = vpop.f32.mrf.mxu0
      %v2169 = vadd.f32 0.0, %v2168
      %v2170 = vpop.f32.mrf.mxu0
      %v2171 = vpop.f32.mrf.mxu0
      %v2172 = vadd.f32 0.0, %v2171
      %v2173 = vpop.f32.mrf.mxu0
      %2174 = vmatprep.mubr.bf16.mxu0 0
      %2175 = vmatmul.mubr.bf16.gmra.mxu0 %v2066
      %v2176 = vpop.f32.mrf.mxu0
      %v2177 = vadd.f32 0.0, %v2176
      %v2178 = vpop.f32.mrf.mxu0
      %v2179 = vpop.f32.mrf.mxu0
      %v2180 = vadd.f32 0.0, %v2179
      %v2181 = vpop.f32.mrf.mxu0
      %2182 = vmatprep.mubr.bf16.mxu0 0
      %2183 = vmatmul.mubr.bf16.gmra.mxu0 %v2069
      %v2184 = vpop.f32.mrf.mxu0
      %v2185 = vadd.f32 0.0, %v2184
      %v2186 = vpop.f32.mrf.mxu0
      %v2187 = vpop.f32.mrf.mxu0
      %v2188 = vadd.f32 0.0, %v2187
      %v2189 = vpop.f32.mrf.mxu0
      %2190 = vmatprep.mubr.bf16.mxu0 0
      %2191 = vmatmul.mubr.bf16.gmra.mxu0 %v2072
      %v2192 = vpop.f32.mrf.mxu0
      %v2193 = vadd.f32 0.0, %v2192
      %v2194 = vpop.f32.mrf.mxu0
      %v2195 = vpop.f32.mrf.mxu0
      %v2196 = vadd.f32 0.0, %v2195
      %v2197 = vpop.f32.mrf.mxu0
      %2198 = vmatprep.mubr.bf16.mxu0 0
      %2199 = vmatmul.mubr.bf16.gmra.mxu0 %v2075
      %v2200 = vpop.f32.mrf.mxu0
      %v2201 = vadd.f32 0.0, %v2200
      %v2202 = vpop.f32.mrf.mxu0
      %v2203 = vpop.f32.mrf.mxu0
      %v2204 = vadd.f32 0.0, %v2203
      %v2205 = vpop.f32.mrf.mxu0
      %2206 = vmatprep.mubr.bf16.mxu0 0
      %2207 = vmatmul.mubr.bf16.gmra.mxu0 %v2078
      %v2208 = vpop.f32.mrf.mxu0
      %v2209 = vadd.f32 0.0, %v2208
      %v2210 = vpop.f32.mrf.mxu0
      %v2211 = vpop.f32.mrf.mxu0
      %v2212 = vadd.f32 0.0, %v2211
      %v2213 = vpop.f32.mrf.mxu0
      %2214 = vmatprep.mubr.bf16.mxu0 0
      %2215 = vmatmul.mubr.bf16.gmra.mxu0 %v2081
      %v2216 = vpop.f32.mrf.mxu0
      %v2217 = vadd.f32 0.0, %v2216
      %v2218 = vpop.f32.mrf.mxu0
      %v2219 = vpop.f32.mrf.mxu0
      %v2220 = vadd.f32 0.0, %v2219
      %v2221 = vpop.f32.mrf.mxu0
      %2222 = vmatprep.mubr.bf16.mxu0 0
      %2223 = vmatmul.mubr.bf16.gmra.mxu0 %v2084
      %v2224 = vpop.f32.mrf.mxu0
      %v2225 = vadd.f32 0.0, %v2224
      %v2226 = vpop.f32.mrf.mxu0
      %v2227 = vpop.f32.mrf.mxu0
      %v2228 = vadd.f32 0.0, %v2227
      %v2229 = vpop.f32.mrf.mxu0
      %2230 = vmatprep.mubr.bf16.mxu0 0
      %2231 = vmatmul.mubr.bf16.gmra.mxu0 %v2087
      %v2232 = vpop.f32.mrf.mxu0
      %v2233 = vadd.f32 0.0, %v2232
      %v2234 = vpop.f32.mrf.mxu0
      %v2235 = vpop.f32.mrf.mxu0
      %v2236 = vadd.f32 0.0, %v2235
      %v2237 = vpop.f32.mrf.mxu0
      %2238 = vmatprep.mubr.bf16.mxu0 0
      %2239 = vmatmul.mubr.bf16.gmra.mxu0 %v2090
      %v2240 = vpop.f32.mrf.mxu0
      %v2241 = vadd.f32 0.0, %v2240
      %v2242 = vpop.f32.mrf.mxu0
      %v2243 = vpop.f32.mrf.mxu0
      %v2244 = vadd.f32 0.0, %v2243
      %v2245 = vpop.f32.mrf.mxu0
      %2246 = vmatprep.mubr.bf16.mxu0 0
      %2247 = vmatmul.mubr.bf16.gmra.mxu0 %v2093
      %v2248 = vpop.f32.mrf.mxu0
      %v2249 = vadd.f32 0.0, %v2248
      %v2250 = vpop.f32.mrf.mxu0
      %v2251 = vpop.f32.mrf.mxu0
      %v2252 = vadd.f32 0.0, %v2251
      %v2253 = vpop.f32.mrf.mxu0
      %2254 = vmatprep.mubr.bf16.mxu0 0
      %2255 = vmatmul.mubr.bf16.gmra.mxu0 %v2096
      %v2256 = vpop.f32.mrf.mxu0
      %v2257 = vadd.f32 0.0, %v2256
      %v2258 = vpop.f32.mrf.mxu0
      %v2259 = vpop.f32.mrf.mxu0
      %v2260 = vadd.f32 0.0, %v2259
      %v2261 = vpop.f32.mrf.mxu0
      %2262 = vdwg.mxu0
      %2263 = vst.msk [vmem:[%s455] sm:$0xff] %vm1733, %v2137
      %2264 = vst.msk [vmem:[%s455 + $0x8] sm:$0xff] %vm1733, %v2140
      %2265 = vst.msk [vmem:[%s455 + $0x10] sm:$0xff] %vm1733, %v2145
      %2266 = vst.msk [vmem:[%s455 + $0x18] sm:$0xff] %vm1733, %v2148
      %2267 = vst.msk [vmem:[%s455 + $0x20] sm:$0xff] %vm1733, %v2153
      %2268 = vst.msk [vmem:[%s455 + $0x28] sm:$0xff] %vm1733, %v2156
      %2269 = vst.msk [vmem:[%s455 + $0x30] sm:$0xff] %vm1733, %v2161
      %2270 = vst.msk [vmem:[%s455 + $0x38] sm:$0xff] %vm1733, %v2164
      %2271 = vst.msk [vmem:[%s455 + $0x40] sm:$0xff] %vm1733, %v2169
      %2272 = vst.msk [vmem:[%s455 + $0x48] sm:$0xff] %vm1733, %v2172
      %2273 = vst.msk [vmem:[%s455 + $0x50] sm:$0xff] %vm1733, %v2177
      %2274 = vst.msk [vmem:[%s455 + $0x58] sm:$0xff] %vm1733, %v2180
      %2275 = vst.msk [vmem:[%s455 + $0x60] sm:$0xff] %vm1733, %v2185
      %2276 = vst.msk [vmem:[%s455 + $0x68] sm:$0xff] %vm1733, %v2188
      %2277 = vst.msk [vmem:[%s455 + $0x70] sm:$0xff] %vm1733, %v2193
      %2278 = vst.msk [vmem:[%s455 + $0x78] sm:$0xff] %vm1733, %v2196
      %2279 = vst.msk [vmem:[%s455 + $0x80] sm:$0xff] %vm1733, %v2201
      %2280 = vst.msk [vmem:[%s455 + $0x88] sm:$0xff] %vm1733, %v2204
      %2281 = vst.msk [vmem:[%s455 + $0x90] sm:$0xff] %vm1733, %v2209
      %2282 = vst.msk [vmem:[%s455 + $0x98] sm:$0xff] %vm1733, %v2212
      %2283 = vst.msk [vmem:[%s455 + $0xa0] sm:$0xff] %vm1733, %v2217
      %2284 = vst.msk [vmem:[%s455 + $0xa8] sm:$0xff] %vm1733, %v2220
      %2285 = vst.msk [vmem:[%s455 + $0xb0] sm:$0xff] %vm1733, %v2225
      %2286 = vst.msk [vmem:[%s455 + $0xb8] sm:$0xff] %vm1733, %v2228
      %2287 = vst.msk [vmem:[%s455 + $0xc0] sm:$0xff] %vm1733, %v2233
      %2288 = vst.msk [vmem:[%s455 + $0xc8] sm:$0xff] %vm1733, %v2236
      %2289 = vst.msk [vmem:[%s455 + $0xd0] sm:$0xff] %vm1733, %v2241
      %2290 = vst.msk [vmem:[%s455 + $0xd8] sm:$0xff] %vm1733, %v2244
      %2291 = vst.msk [vmem:[%s455 + $0xe0] sm:$0xff] %vm1733, %v2249
      %2292 = vst.msk [vmem:[%s455 + $0xe8] sm:$0xff] %vm1733, %v2252
      %2293 = vst.msk [vmem:[%s455 + $0xf0] sm:$0xff] %vm1733, %v2257
      %2294 = vst.msk [vmem:[%s455 + $0xf8] sm:$0xff] %vm1733, %v2260
      %v2295 = vsel %vm1733, %v2137, 0.0
      %v2296 = vsel %vm1733, %v2140, 0.0
      %v2297 = vadd.f32 %v2295, %v2296
      %v2298 = vsel %vm1733, %v2145, 0.0
      %v2299 = vadd.f32 %v2297, %v2298
      %v2300 = vsel %vm1733, %v2148, 0.0
      %v2301 = vadd.f32 %v2299, %v2300
      %v2302 = vsel %vm1733, %v2153, 0.0
      %v2303 = vadd.f32 %v2301, %v2302
      %v2304 = vsel %vm1733, %v2156, 0.0
      %v2305 = vadd.f32 %v2303, %v2304
      %v2306 = vsel %vm1733, %v2161, 0.0
      %v2307 = vadd.f32 %v2305, %v2306
      %v2308 = vsel %vm1733, %v2164, 0.0
      %v2309 = vadd.f32 %v2307, %v2308
      %v2310 = vsel %vm1733, %v2169, 0.0
      %v2311 = vadd.f32 %v2309, %v2310
      %v2312 = vsel %vm1733, %v2172, 0.0
      %v2313 = vadd.f32 %v2311, %v2312
      %v2314 = vsel %vm1733, %v2177, 0.0
      %v2315 = vadd.f32 %v2313, %v2314
      %v2316 = vsel %vm1733, %v2180, 0.0
      %v2317 = vadd.f32 %v2315, %v2316
      %v2318 = vsel %vm1733, %v2185, 0.0
      %v2319 = vadd.f32 %v2317, %v2318
      %v2320 = vsel %vm1733, %v2188, 0.0
      %v2321 = vadd.f32 %v2319, %v2320
      %v2322 = vsel %vm1733, %v2193, 0.0
      %v2323 = vadd.f32 %v2321, %v2322
      %v2324 = vsel %vm1733, %v2196, 0.0
      %v2325 = vadd.f32 %v2323, %v2324
      %v2326 = vsel %vm1733, %v2201, 0.0
      %v2327 = vadd.f32 %v2325, %v2326
      %v2328 = vsel %vm1733, %v2204, 0.0
      %v2329 = vadd.f32 %v2327, %v2328
      %v2330 = vsel %vm1733, %v2209, 0.0
      %v2331 = vadd.f32 %v2329, %v2330
      %v2332 = vsel %vm1733, %v2212, 0.0
      %v2333 = vadd.f32 %v2331, %v2332
      %v2334 = vsel %vm1733, %v2217, 0.0
      %v2335 = vadd.f32 %v2333, %v2334
      %v2336 = vsel %vm1733, %v2220, 0.0
      %v2337 = vadd.f32 %v2335, %v2336
      %v2338 = vsel %vm1733, %v2225, 0.0
      %v2339 = vadd.f32 %v2337, %v2338
      %v2340 = vsel %vm1733, %v2228, 0.0
      %v2341 = vadd.f32 %v2339, %v2340
      %v2342 = vsel %vm1733, %v2233, 0.0
      %v2343 = vadd.f32 %v2341, %v2342
      %v2344 = vsel %vm1733, %v2236, 0.0
      %v2345 = vadd.f32 %v2343, %v2344
      %v2346 = vsel %vm1733, %v2241, 0.0
      %v2347 = vadd.f32 %v2345, %v2346
      %v2348 = vsel %vm1733, %v2244, 0.0
      %v2349 = vadd.f32 %v2347, %v2348
      %v2350 = vsel %vm1733, %v2249, 0.0
      %v2351 = vadd.f32 %v2349, %v2350
      %v2352 = vsel %vm1733, %v2252, 0.0
      %v2353 = vadd.f32 %v2351, %v2352
      %v2354 = vsel %vm1733, %v2257, 0.0
      %v2355 = vadd.f32 %v2353, %v2354
      %v2356 = vsel %vm1733, %v2260, 0.0
      %v2357 = vadd.f32 %v2355, %v2356
      %v2358 = vrot.slane %v2357, 4
      %v2359 = vadd.f32 %v2357, %v2358
      %v2360 = vrot.slane %v2359, 2
      %v2361 = vadd.f32 %v2359, %v2360
      %v2362 = vrot.slane %v2361, 1
      %v2363 = vadd.f32 %v2361, %v2362
      %vm2364 = vcmask 57344
      %2365 = vst.msk [vmem:[%s461] sm:$0x1] %vm2364, %v2363
      %v2366 = vmul.f32 %v2137, %v2137
      %v2367 = vmul.f32 %v2140, %v2140
      %v2368 = vmul.f32 %v2145, %v2145
      %v2369 = vmul.f32 %v2148, %v2148
      %v2370 = vmul.f32 %v2153, %v2153
      %v2371 = vmul.f32 %v2156, %v2156
      %v2372 = vmul.f32 %v2161, %v2161
      %v2373 = vmul.f32 %v2164, %v2164
      %v2374 = vmul.f32 %v2169, %v2169
      %v2375 = vmul.f32 %v2172, %v2172
      %v2376 = vmul.f32 %v2177, %v2177
      %v2377 = vmul.f32 %v2180, %v2180
      %v2378 = vmul.f32 %v2185, %v2185
      %v2379 = vmul.f32 %v2188, %v2188
      %v2380 = vmul.f32 %v2193, %v2193
      %v2381 = vmul.f32 %v2196, %v2196
      %v2382 = vmul.f32 %v2201, %v2201
      %v2383 = vmul.f32 %v2204, %v2204
      %v2384 = vmul.f32 %v2209, %v2209
      %v2385 = vmul.f32 %v2212, %v2212
      %v2386 = vmul.f32 %v2217, %v2217
      %v2387 = vmul.f32 %v2220, %v2220
      %v2388 = vmul.f32 %v2225, %v2225
      %v2389 = vmul.f32 %v2228, %v2228
      %v2390 = vmul.f32 %v2233, %v2233
      %v2391 = vmul.f32 %v2236, %v2236
      %v2392 = vmul.f32 %v2241, %v2241
      %v2393 = vmul.f32 %v2244, %v2244
      %v2394 = vmul.f32 %v2249, %v2249
      %v2395 = vmul.f32 %v2252, %v2252
      %v2396 = vmul.f32 %v2257, %v2257
      %v2397 = vmul.f32 %v2260, %v2260
      %v2398 = vsel %vm1733, %v2366, 0.0
      %v2399 = vsel %vm1733, %v2367, 0.0
      %v2400 = vadd.f32 %v2398, %v2399
      %v2401 = vsel %vm1733, %v2368, 0.0
      %v2402 = vadd.f32 %v2400, %v2401
      %v2403 = vsel %vm1733, %v2369, 0.0
      %v2404 = vadd.f32 %v2402, %v2403
      %v2405 = vsel %vm1733, %v2370, 0.0
      %v2406 = vadd.f32 %v2404, %v2405
      %v2407 = vsel %vm1733, %v2371, 0.0
      %v2408 = vadd.f32 %v2406, %v2407
      %v2409 = vsel %vm1733, %v2372, 0.0
      %v2410 = vadd.f32 %v2408, %v2409
      %v2411 = vsel %vm1733, %v2373, 0.0
      %v2412 = vadd.f32 %v2410, %v2411
      %v2413 = vsel %vm1733, %v2374, 0.0
      %v2414 = vadd.f32 %v2412, %v2413
      %v2415 = vsel %vm1733, %v2375, 0.0
      %v2416 = vadd.f32 %v2414, %v2415
      %v2417 = vsel %vm1733, %v2376, 0.0
      %v2418 = vadd.f32 %v2416, %v2417
      %v2419 = vsel %vm1733, %v2377, 0.0
      %v2420 = vadd.f32 %v2418, %v2419
      %v2421 = vsel %vm1733, %v2378, 0.0
      %v2422 = vadd.f32 %v2420, %v2421
      %v2423 = vsel %vm1733, %v2379, 0.0
      %v2424 = vadd.f32 %v2422, %v2423
      %v2425 = vsel %vm1733, %v2380, 0.0
      %v2426 = vadd.f32 %v2424, %v2425
      %v2427 = vsel %vm1733, %v2381, 0.0
      %v2428 = vadd.f32 %v2426, %v2427
      %v2429 = vsel %vm1733, %v2382, 0.0
      %v2430 = vadd.f32 %v2428, %v2429
      %v2431 = vsel %vm1733, %v2383, 0.0
      %v2432 = vadd.f32 %v2430, %v2431
      %v2433 = vsel %vm1733, %v2384, 0.0
      %v2434 = vadd.f32 %v2432, %v2433
      %v2435 = vsel %vm1733, %v2385, 0.0
      %v2436 = vadd.f32 %v2434, %v2435
      %v2437 = vsel %vm1733, %v2386, 0.0
      %v2438 = vadd.f32 %v2436, %v2437
      %v2439 = vsel %vm1733, %v2387, 0.0
      %v2440 = vadd.f32 %v2438, %v2439
      %v2441 = vsel %vm1733, %v2388, 0.0
      %v2442 = vadd.f32 %v2440, %v2441
      %v2443 = vsel %vm1733, %v2389, 0.0
      %v2444 = vadd.f32 %v2442, %v2443
      %v2445 = vsel %vm1733, %v2390, 0.0
      %v2446 = vadd.f32 %v2444, %v2445
      %v2447 = vsel %vm1733, %v2391, 0.0
      %v2448 = vadd.f32 %v2446, %v2447
      %v2449 = vsel %vm1733, %v2392, 0.0
      %v2450 = vadd.f32 %v2448, %v2449
      %v2451 = vsel %vm1733, %v2393, 0.0
      %v2452 = vadd.f32 %v2450, %v2451
      %v2453 = vsel %vm1733, %v2394, 0.0
      %v2454 = vadd.f32 %v2452, %v2453
      %v2455 = vsel %vm1733, %v2395, 0.0
      %v2456 = vadd.f32 %v2454, %v2455
      %v2457 = vsel %vm1733, %v2396, 0.0
      %v2458 = vadd.f32 %v2456, %v2457
      %v2459 = vsel %vm1733, %v2397, 0.0
      %v2460 = vadd.f32 %v2458, %v2459
      %v2461 = vrot.slane %v2460, 4
      %v2462 = vadd.f32 %v2460, %v2461
      %v2463 = vrot.slane %v2462, 2
      %v2464 = vadd.f32 %v2462, %v2463
      %v2465 = vrot.slane %v2464, 1
      %v2466 = vadd.f32 %v2464, %v2465
      %2467 = vst.msk [vmem:[%s461 + $0x1] sm:$0x1] %vm2364, %v2466
      %s2468 = smul.u32 16, %s24
      %p2469 = scmp.lt.s32.totalorder %s23, 1
      %s2470 = scalar_select %p2469, %s23, 1
      %p2471 = scmp.lt.s32.totalorder %s2468, 15
      %s2472 = scalar_select %p2471, %s2468, 15
      %s2473 = smul.addr %s2472, 2
      %s2474 = smul.addr %s2470, 32
      %s2475 = sadd.s32 %s2473, %s2474
      %s2476 = smul.addr %s2475, 8
      %s2477 = scalar_lea.vmem %s6, %s2476
      %s2478 = sadd.s32 %s23, %s24
      %p2479 = scmp.lt.s32.totalorder %s2478, 1
      %s2480 = scalar_select %p2479, %s2478, 1
      %s2481 = smul.addr %s2480, 2
      %s2482 = scalar_lea.vmem %s7, %s2481
      // Predicated region
      $region45: #{_unnamed_function_.5} parent=43 // pred_check
        %p2483 = pneg %p214
      $region46: #{_unnamed_function_.5} parent=43 // pred_check_branch
        %2485 = sbr.rel (%p2483) target = $region48
      $region47: #{_unnamed_function_.5} parent=43 // pred_region
        %s2486 = smul.u32 16, %s24
      $region48: #{_unnamed_function_.5} parent=43 // pred_fallthru
        _
      // Predicated region
      $region49: #{_unnamed_function_.5} parent=43 // pred_check
        %p2487 = pneg %p242
      $region50: #{_unnamed_function_.5} parent=43 // pred_check_branch
        %2489 = sbr.rel (%p2487) target = $region52
      $region51: #{_unnamed_function_.5} parent=43 // pred_region
        %s2490 = sadd.s32 %s23, %s24
      $region52: #{_unnamed_function_.5} parent=43 // pred_fallthru
        _
    $region44: #{_unnamed_function_.5} parent=5 // pred_fallthru
      _
    %p2491 = scmp.le.s32.totalorder 2, %s14
    // Predicated region
    $region53: #{_unnamed_function_.5} parent=5 // pred_check
      %p2492 = pneg %p2491
    $region54: #{_unnamed_function_.5} parent=5 // pred_check_branch
      %2494 = sbr.rel (%p2492) target = $region56
    $region55: #{_unnamed_function_.5} parent=5 // pred_region
      %s2495 = ssub.s32 %s14, 2
      // Predicated region
      $region57: #{_unnamed_function_.5} parent=55 // pred_check
        %p2496 = pneg %p220
      $region58: #{_unnamed_function_.5} parent=55 // pred_check_branch
        %2498 = sbr.rel (%p2496) target = $region60
      $region59: #{_unnamed_function_.5} parent=55 // pred_region
        %s2499 = smul.u32 16, %s26
        %p2500 = scmp.lt.s32.totalorder %s25, 1
        %s2501 = scalar_select %p2500, %s25, 1
        %p2502 = scmp.lt.s32.totalorder %s2499, 15
        %s2503 = scalar_select %p2502, %s2499, 15
        %s2504 = smul.addr %s2503, 2
        %s2505 = smul.addr %s2501, 32
        %s2506 = sadd.s32 %s2504, %s2505
        %s2507 = smul.addr %s2506, 8
        %s2508 = scalar_lea.vmem %s6, %s2507
      $region60: #{_unnamed_function_.5} parent=55 // pred_fallthru
        _
      // Predicated region
      $region61: #{_unnamed_function_.5} parent=55 // pred_check
        %p2509 = pneg %p248
      $region62: #{_unnamed_function_.5} parent=55 // pred_check_branch
        %2511 = sbr.rel (%p2509) target = $region64
      $region63: #{_unnamed_function_.5} parent=55 // pred_region
        %s2512 = sadd.s32 %s25, %s26
        %p2513 = scmp.lt.s32.totalorder %s2512, 1
        %s2514 = scalar_select %p2513, %s2512, 1
        %s2515 = smul.addr %s2514, 2
        %s2516 = scalar_lea.vmem %s7, %s2515
      $region64: #{_unnamed_function_.5} parent=55 // pred_fallthru
        _
    $region56: #{_unnamed_function_.5} parent=5 // pred_fallthru
      _
  $region6: #{_unnamed_function_.5} parent=0 // loop_footer
    %s18 = sadd.s32 1, %s14
  $region7: #{_unnamed_function_.5} parent=0 // loop_footer_branch
    %13 = sbr.rel target = $region3
  $region8: #{_unnamed_function_.5} parent=0 // loop_exit
    _

// kernel: _unnamed_function_.7
$region0: #{_unnamed_function_.7}
  #allocation0 [shape = 'u32[]', space=smem, size = 0x4, offset = 0x4, fixed_abs, tag = 'smem constant byte address 0x4 - core index']
  #allocation1 [shape = 'u32[144,128]{1,0:T(1,128)}', space=vmem, size = 0x12000, scoped, tag = 'internal scratch']
  %s0 = inlined_call_operand.vmem [shape: f32[32,256], index: 0, kind: input, shape index: {}]
  %s1 = inlined_call_operand.vmem [shape: f32[32,64], index: 1, kind: input, shape index: {}]
  %s2 = inlined_call_operand.vmem [shape: f32[1,16], index: 2, kind: input, shape index: {}]
  %s3 = inlined_call_operand.vmem [shape: f32[1,16], index: 3, kind: input, shape index: {}]
  %s4 = inlined_call_operand.vmem [shape: f32[4,16], index: 4, kind: input, shape index: {}]
  %s5 = inlined_call_operand.vmem [shape: f32[32,256], index: 5, kind: output, shape index: {}]
  %s6 = sld [smem:[#allocation0]]
  $region30: #{_unnamed_function_.7} parent=0
    _
  %s8 = ssub.s32 1, %s6
  %s9 = scalar_select 0, %s8, %s6
  // Predicated region
  $region2: #{_unnamed_function_.7} parent=0 // pred_check
    _
  $region3: #{_unnamed_function_.7} parent=0 // pred_check_branch
    %11 = sbr.rel (0) target = $region5
  $region4: #{_unnamed_function_.7} parent=0 // pred_region
    _
  $region5: #{_unnamed_function_.7} parent=0 // pred_fallthru
    _
  // Predicated region
  $region6: #{_unnamed_function_.7} parent=0 // pred_check
    _
  $region7: #{_unnamed_function_.7} parent=0 // pred_check_branch
    %13 = sbr.rel (0) target = $region9
  $region8: #{_unnamed_function_.7} parent=0 // pred_region
    _
  $region9: #{_unnamed_function_.7} parent=0 // pred_fallthru
    _
  // Predicated region
  $region10: #{_unnamed_function_.7} parent=0 // pred_check
    _
  $region11: #{_unnamed_function_.7} parent=0 // pred_check_branch
    %15 = sbr.rel (0) target = $region13
  $region12: #{_unnamed_function_.7} parent=0 // pred_region
    _
  $region13: #{_unnamed_function_.7} parent=0 // pred_fallthru
    _
  // Predicated region
  $region14: #{_unnamed_function_.7} parent=0 // pred_check
    _
  $region15: #{_unnamed_function_.7} parent=0 // pred_check_branch
    %17 = sbr.rel (0) target = $region17
  $region16: #{_unnamed_function_.7} parent=0 // pred_region
    _
  $region17: #{_unnamed_function_.7} parent=0 // pred_fallthru
    _
  // Predicated region
  $region18: #{_unnamed_function_.7} parent=0 // pred_check
    _
  $region19: #{_unnamed_function_.7} parent=0 // pred_check_branch
    %19 = sbr.rel (0) target = $region21
  $region20: #{_unnamed_function_.7} parent=0 // pred_region
    _
  $region21: #{_unnamed_function_.7} parent=0 // pred_fallthru
    _
  %v20 = vld [vmem:[%s0] sm:$0xff]
  %v21 = vld [vmem:[%s0 + $0x8] sm:$0xff]
  %v22 = vld [vmem:[%s0 + $0x10] sm:$0xff]
  %v23 = vld [vmem:[%s0 + $0x18] sm:$0xff]
  %v24 = vld [vmem:[%s0 + $0x20] sm:$0xff]
  %v25 = vld [vmem:[%s0 + $0x28] sm:$0xff]
  %v26 = vld [vmem:[%s0 + $0x30] sm:$0xff]
  %v27 = vld [vmem:[%s0 + $0x38] sm:$0xff]
  %32 = vrot.lane.b32.xlu0 %v20, 112
  %v33 = vpop.permute.xlu0 %32
  %34 = vrot.lane.b32.xlu0 %v22, 112
  %v35 = vpop.permute.xlu0 %34
  %36 = vrot.lane.b32.xlu0 %v24, 112
  %v37 = vpop.permute.xlu0 %36
  %38 = vrot.lane.b32.xlu0 %v26, 112
  %v39 = vpop.permute.xlu0 %38
  %44 = vrot.lane.b32.xlu0 %v20, 96
  %v45 = vpop.permute.xlu0 %44
  %46 = vrot.lane.b32.xlu0 %v22, 96
  %v47 = vpop.permute.xlu0 %46
  %48 = vrot.lane.b32.xlu0 %v24, 96
  %v49 = vpop.permute.xlu0 %48
  %50 = vrot.lane.b32.xlu0 %v26, 96
  %v51 = vpop.permute.xlu0 %50
  %56 = vrot.lane.b32.xlu0 %v20, 80
  %v57 = vpop.permute.xlu0 %56
  %58 = vrot.lane.b32.xlu0 %v22, 80
  %v59 = vpop.permute.xlu0 %58
  %60 = vrot.lane.b32.xlu0 %v24, 80
  %v61 = vpop.permute.xlu0 %60
  %62 = vrot.lane.b32.xlu0 %v26, 80
  %v63 = vpop.permute.xlu0 %62
  %68 = vrot.lane.b32.xlu0 %v20, 64
  %v69 = vpop.permute.xlu0 %68
  %70 = vrot.lane.b32.xlu0 %v22, 64
  %v71 = vpop.permute.xlu0 %70
  %72 = vrot.lane.b32.xlu0 %v24, 64
  %v73 = vpop.permute.xlu0 %72
  %74 = vrot.lane.b32.xlu0 %v26, 64
  %v75 = vpop.permute.xlu0 %74
  %80 = vrot.lane.b32.xlu0 %v20, 48
  %v81 = vpop.permute.xlu0 %80
  %82 = vrot.lane.b32.xlu0 %v22, 48
  %v83 = vpop.permute.xlu0 %82
  %84 = vrot.lane.b32.xlu0 %v24, 48
  %v85 = vpop.permute.xlu0 %84
  %86 = vrot.lane.b32.xlu0 %v26, 48
  %v87 = vpop.permute.xlu0 %86
  %92 = vrot.lane.b32.xlu0 %v20, 32
  %v93 = vpop.permute.xlu0 %92
  %94 = vrot.lane.b32.xlu0 %v22, 32
  %v95 = vpop.permute.xlu0 %94
  %96 = vrot.lane.b32.xlu0 %v24, 32
  %v97 = vpop.permute.xlu0 %96
  %98 = vrot.lane.b32.xlu0 %v26, 32
  %v99 = vpop.permute.xlu0 %98
  %104 = vrot.lane.b32.xlu0 %v20, 16
  %v105 = vpop.permute.xlu0 %104
  %106 = vrot.lane.b32.xlu0 %v22, 16
  %v107 = vpop.permute.xlu0 %106
  %108 = vrot.lane.b32.xlu0 %v24, 16
  %v109 = vpop.permute.xlu0 %108
  %110 = vrot.lane.b32.xlu0 %v26, 16
  %v111 = vpop.permute.xlu0 %110
  %120 = vrot.lane.b32.xlu0 %v21, 112
  %v121 = vpop.permute.xlu0 %120
  %122 = vrot.lane.b32.xlu0 %v23, 112
  %v123 = vpop.permute.xlu0 %122
  %124 = vrot.lane.b32.xlu0 %v25, 112
  %v125 = vpop.permute.xlu0 %124
  %126 = vrot.lane.b32.xlu0 %v27, 112
  %v127 = vpop.permute.xlu0 %126
  %132 = vrot.lane.b32.xlu0 %v21, 96
  %v133 = vpop.permute.xlu0 %132
  %134 = vrot.lane.b32.xlu0 %v23, 96
  %v135 = vpop.permute.xlu0 %134
  %136 = vrot.lane.b32.xlu0 %v25, 96
  %v137 = vpop.permute.xlu0 %136
  %138 = vrot.lane.b32.xlu0 %v27, 96
  %v139 = vpop.permute.xlu0 %138
  %144 = vrot.lane.b32.xlu0 %v21, 80
  %v145 = vpop.permute.xlu0 %144
  %146 = vrot.lane.b32.xlu0 %v23, 80
  %v147 = vpop.permute.xlu0 %146
  %148 = vrot.lane.b32.xlu0 %v25, 80
  %v149 = vpop.permute.xlu0 %148
  %150 = vrot.lane.b32.xlu0 %v27, 80
  %v151 = vpop.permute.xlu0 %150
  %156 = vrot.lane.b32.xlu0 %v21, 64
  %v157 = vpop.permute.xlu0 %156
  %158 = vrot.lane.b32.xlu0 %v23, 64
  %v159 = vpop.permute.xlu0 %158
  %160 = vrot.lane.b32.xlu0 %v25, 64
  %v161 = vpop.permute.xlu0 %160
  %162 = vrot.lane.b32.xlu0 %v27, 64
  %v163 = vpop.permute.xlu0 %162
  %168 = vrot.lane.b32.xlu0 %v21, 48
  %v169 = vpop.permute.xlu0 %168
  %170 = vrot.lane.b32.xlu0 %v23, 48
  %v171 = vpop.permute.xlu0 %170
  %172 = vrot.lane.b32.xlu0 %v25, 48
  %v173 = vpop.permute.xlu0 %172
  %174 = vrot.lane.b32.xlu0 %v27, 48
  %v175 = vpop.permute.xlu0 %174
  %180 = vrot.lane.b32.xlu0 %v21, 32
  %v181 = vpop.permute.xlu0 %180
  %182 = vrot.lane.b32.xlu0 %v23, 32
  %v183 = vpop.permute.xlu0 %182
  %184 = vrot.lane.b32.xlu0 %v25, 32
  %v185 = vpop.permute.xlu0 %184
  %186 = vrot.lane.b32.xlu0 %v27, 32
  %v187 = vpop.permute.xlu0 %186
  %192 = vrot.lane.b32.xlu0 %v21, 16
  %v193 = vpop.permute.xlu0 %192
  %194 = vrot.lane.b32.xlu0 %v23, 16
  %v195 = vpop.permute.xlu0 %194
  %196 = vrot.lane.b32.xlu0 %v25, 16
  %v197 = vpop.permute.xlu0 %196
  %198 = vrot.lane.b32.xlu0 %v27, 16
  %v199 = vpop.permute.xlu0 %198
  %v204 = vld [vmem:[%s1] sm:$0xff]
  %v205 = vld [vmem:[%s1 + $0x8] sm:$0xff]
  %v206 = vld [vmem:[%s1 + $0x10] sm:$0xff]
  %v207 = vld [vmem:[%s1 + $0x18] sm:$0xff]
  %212 = vrot.lane.b32.xlu0 %v204, 124
  %v213 = vpop.permute.xlu0 %212
  %214 = vrot.lane.b32.xlu0 %v205, 124
  %v215 = vpop.permute.xlu0 %214
  %216 = vrot.lane.b32.xlu0 %v206, 124
  %v217 = vpop.permute.xlu0 %216
  %218 = vrot.lane.b32.xlu0 %v207, 124
  %v219 = vpop.permute.xlu0 %218
  %220 = vrot.lane.b32.xlu0 %v204, 120
  %v221 = vpop.permute.xlu0 %220
  %222 = vrot.lane.b32.xlu0 %v205, 120
  %v223 = vpop.permute.xlu0 %222
  %224 = vrot.lane.b32.xlu0 %v206, 120
  %v225 = vpop.permute.xlu0 %224
  %226 = vrot.lane.b32.xlu0 %v207, 120
  %v227 = vpop.permute.xlu0 %226
  %228 = vrot.lane.b32.xlu0 %v204, 116
  %v229 = vpop.permute.xlu0 %228
  %230 = vrot.lane.b32.xlu0 %v205, 116
  %v231 = vpop.permute.xlu0 %230
  %232 = vrot.lane.b32.xlu0 %v206, 116
  %v233 = vpop.permute.xlu0 %232
  %234 = vrot.lane.b32.xlu0 %v207, 116
  %v235 = vpop.permute.xlu0 %234
  %236 = vrot.lane.b32.xlu0 %v204, 112
  %v237 = vpop.permute.xlu0 %236
  %238 = vrot.lane.b32.xlu0 %v205, 112
  %v239 = vpop.permute.xlu0 %238
  %240 = vrot.lane.b32.xlu0 %v206, 112
  %v241 = vpop.permute.xlu0 %240
  %242 = vrot.lane.b32.xlu0 %v207, 112
  %v243 = vpop.permute.xlu0 %242
  %244 = vrot.lane.b32.xlu0 %v204, 108
  %v245 = vpop.permute.xlu0 %244
  %246 = vrot.lane.b32.xlu0 %v205, 108
  %v247 = vpop.permute.xlu0 %246
  %248 = vrot.lane.b32.xlu0 %v206, 108
  %v249 = vpop.permute.xlu0 %248
  %250 = vrot.lane.b32.xlu0 %v207, 108
  %v251 = vpop.permute.xlu0 %250
  %252 = vrot.lane.b32.xlu0 %v204, 104
  %v253 = vpop.permute.xlu0 %252
  %254 = vrot.lane.b32.xlu0 %v205, 104
  %v255 = vpop.permute.xlu0 %254
  %256 = vrot.lane.b32.xlu0 %v206, 104
  %v257 = vpop.permute.xlu0 %256
  %258 = vrot.lane.b32.xlu0 %v207, 104
  %v259 = vpop.permute.xlu0 %258
  %260 = vrot.lane.b32.xlu0 %v204, 100
  %v261 = vpop.permute.xlu0 %260
  %262 = vrot.lane.b32.xlu0 %v205, 100
  %v263 = vpop.permute.xlu0 %262
  %264 = vrot.lane.b32.xlu0 %v206, 100
  %v265 = vpop.permute.xlu0 %264
  %266 = vrot.lane.b32.xlu0 %v207, 100
  %v267 = vpop.permute.xlu0 %266
  %268 = vrot.lane.b32.xlu0 %v204, 96
  %v269 = vpop.permute.xlu0 %268
  %270 = vrot.lane.b32.xlu0 %v205, 96
  %v271 = vpop.permute.xlu0 %270
  %272 = vrot.lane.b32.xlu0 %v206, 96
  %v273 = vpop.permute.xlu0 %272
  %274 = vrot.lane.b32.xlu0 %v207, 96
  %v275 = vpop.permute.xlu0 %274
  %276 = vrot.lane.b32.xlu0 %v204, 92
  %v277 = vpop.permute.xlu0 %276
  %278 = vrot.lane.b32.xlu0 %v205, 92
  %v279 = vpop.permute.xlu0 %278
  %280 = vrot.lane.b32.xlu0 %v206, 92
  %v281 = vpop.permute.xlu0 %280
  %282 = vrot.lane.b32.xlu0 %v207, 92
  %v283 = vpop.permute.xlu0 %282
  %284 = vrot.lane.b32.xlu0 %v204, 88
  %v285 = vpop.permute.xlu0 %284
  %286 = vrot.lane.b32.xlu0 %v205, 88
  %v287 = vpop.permute.xlu0 %286
  %288 = vrot.lane.b32.xlu0 %v206, 88
  %v289 = vpop.permute.xlu0 %288
  %290 = vrot.lane.b32.xlu0 %v207, 88
  %v291 = vpop.permute.xlu0 %290
  %292 = vrot.lane.b32.xlu0 %v204, 84
  %v293 = vpop.permute.xlu0 %292
  %294 = vrot.lane.b32.xlu0 %v205, 84
  %v295 = vpop.permute.xlu0 %294
  %296 = vrot.lane.b32.xlu0 %v206, 84
  %v297 = vpop.permute.xlu0 %296
  %298 = vrot.lane.b32.xlu0 %v207, 84
  %v299 = vpop.permute.xlu0 %298
  %300 = vrot.lane.b32.xlu0 %v204, 80
  %v301 = vpop.permute.xlu0 %300
  %302 = vrot.lane.b32.xlu0 %v205, 80
  %v303 = vpop.permute.xlu0 %302
  %304 = vrot.lane.b32.xlu0 %v206, 80
  %v305 = vpop.permute.xlu0 %304
  %306 = vrot.lane.b32.xlu0 %v207, 80
  %v307 = vpop.permute.xlu0 %306
  %308 = vrot.lane.b32.xlu0 %v204, 76
  %v309 = vpop.permute.xlu0 %308
  %310 = vrot.lane.b32.xlu0 %v205, 76
  %v311 = vpop.permute.xlu0 %310
  %312 = vrot.lane.b32.xlu0 %v206, 76
  %v313 = vpop.permute.xlu0 %312
  %314 = vrot.lane.b32.xlu0 %v207, 76
  %v315 = vpop.permute.xlu0 %314
  %316 = vrot.lane.b32.xlu0 %v204, 72
  %v317 = vpop.permute.xlu0 %316
  %318 = vrot.lane.b32.xlu0 %v205, 72
  %v319 = vpop.permute.xlu0 %318
  %320 = vrot.lane.b32.xlu0 %v206, 72
  %v321 = vpop.permute.xlu0 %320
  %322 = vrot.lane.b32.xlu0 %v207, 72
  %v323 = vpop.permute.xlu0 %322
  %324 = vrot.lane.b32.xlu0 %v204, 68
  %v325 = vpop.permute.xlu0 %324
  %326 = vrot.lane.b32.xlu0 %v205, 68
  %v327 = vpop.permute.xlu0 %326
  %328 = vrot.lane.b32.xlu0 %v206, 68
  %v329 = vpop.permute.xlu0 %328
  %330 = vrot.lane.b32.xlu0 %v207, 68
  %v331 = vpop.permute.xlu0 %330
  %v332 = vld [vmem:[%s2] sm:$0x1]
  %v334 = vlaneseq
  %v335 = vshrl.u32 %v334, 7
  %v336 = vsub.s32 0, %v335
  %v337 = vrot.slane %v332, %v336
  %v339 = vmul.f32 %v20, %v337
  %v340 = vmul.f32 %v22, %v337
  %v341 = vmul.f32 %v24, %v337
  %v342 = vmul.f32 %v26, %v337
  %v343 = vmul.f32 %v33, %v337
  %v344 = vmul.f32 %v35, %v337
  %v345 = vmul.f32 %v37, %v337
  %v346 = vmul.f32 %v39, %v337
  %v347 = vmul.f32 %v45, %v337
  %v348 = vmul.f32 %v47, %v337
  %v349 = vmul.f32 %v49, %v337
  %v350 = vmul.f32 %v51, %v337
  %v351 = vmul.f32 %v57, %v337
  %v352 = vmul.f32 %v59, %v337
  %v353 = vmul.f32 %v61, %v337
  %v354 = vmul.f32 %v63, %v337
  %v355 = vmul.f32 %v69, %v337
  %v356 = vmul.f32 %v71, %v337
  %v357 = vmul.f32 %v73, %v337
  %v358 = vmul.f32 %v75, %v337
  %v359 = vmul.f32 %v81, %v337
  %v360 = vmul.f32 %v83, %v337
  %v361 = vmul.f32 %v85, %v337
  %v362 = vmul.f32 %v87, %v337
  %v363 = vmul.f32 %v93, %v337
  %v364 = vmul.f32 %v95, %v337
  %v365 = vmul.f32 %v97, %v337
  %v366 = vmul.f32 %v99, %v337
  %v367 = vmul.f32 %v105, %v337
  %v368 = vmul.f32 %v107, %v337
  %v369 = vmul.f32 %v109, %v337
  %v370 = vmul.f32 %v111, %v337
  %v371 = vmul.f32 %v21, %v337
  %v372 = vmul.f32 %v23, %v337
  %v373 = vmul.f32 %v25, %v337
  %v374 = vmul.f32 %v27, %v337
  %v375 = vmul.f32 %v121, %v337
  %v376 = vmul.f32 %v123, %v337
  %v377 = vmul.f32 %v125, %v337
  %v378 = vmul.f32 %v127, %v337
  %v379 = vmul.f32 %v133, %v337
  %v380 = vmul.f32 %v135, %v337
  %v381 = vmul.f32 %v137, %v337
  %v382 = vmul.f32 %v139, %v337
  %v383 = vmul.f32 %v145, %v337
  %v384 = vmul.f32 %v147, %v337
  %v385 = vmul.f32 %v149, %v337
  %v386 = vmul.f32 %v151, %v337
  %v387 = vmul.f32 %v157, %v337
  %v388 = vmul.f32 %v159, %v337
  %v389 = vmul.f32 %v161, %v337
  %v390 = vmul.f32 %v163, %v337
  %v391 = vmul.f32 %v169, %v337
  %v392 = vmul.f32 %v171, %v337
  %v393 = vmul.f32 %v173, %v337
  %v394 = vmul.f32 %v175, %v337
  %v395 = vmul.f32 %v181, %v337
  %v396 = vmul.f32 %v183, %v337
  %v397 = vmul.f32 %v185, %v337
  %v398 = vmul.f32 %v187, %v337
  %v399 = vmul.f32 %v193, %v337
  %v400 = vmul.f32 %v195, %v337
  %v401 = vmul.f32 %v197, %v337
  %v402 = vmul.f32 %v199, %v337
  %v403 = vld [vmem:[%s3] sm:$0x1]
  %v405 = vlaneseq
  %v406 = vshrl.u32 %v405, 7
  %v407 = vsub.s32 0, %v406
  %v408 = vrot.slane %v403, %v407
  %v410 = vadd.f32 %v339, %v408
  %v411 = vadd.f32 %v340, %v408
  %v412 = vadd.f32 %v341, %v408
  %v413 = vadd.f32 %v342, %v408
  %v414 = vadd.f32 %v343, %v408
  %v415 = vadd.f32 %v344, %v408
  %v416 = vadd.f32 %v345, %v408
  %v417 = vadd.f32 %v346, %v408
  %v418 = vadd.f32 %v347, %v408
  %v419 = vadd.f32 %v348, %v408
  %v420 = vadd.f32 %v349, %v408
  %v421 = vadd.f32 %v350, %v408
  %v422 = vadd.f32 %v351, %v408
  %v423 = vadd.f32 %v352, %v408
  %v424 = vadd.f32 %v353, %v408
  %v425 = vadd.f32 %v354, %v408
  %v426 = vadd.f32 %v355, %v408
  %v427 = vadd.f32 %v356, %v408
  %v428 = vadd.f32 %v357, %v408
  %v429 = vadd.f32 %v358, %v408
  %v430 = vadd.f32 %v359, %v408
  %v431 = vadd.f32 %v360, %v408
  %v432 = vadd.f32 %v361, %v408
  %v433 = vadd.f32 %v362, %v408
  %v434 = vadd.f32 %v363, %v408
  %v435 = vadd.f32 %v364, %v408
  %v436 = vadd.f32 %v365, %v408
  %v437 = vadd.f32 %v366, %v408
  %v438 = vadd.f32 %v367, %v408
  %v439 = vadd.f32 %v368, %v408
  %v440 = vadd.f32 %v369, %v408
  %v441 = vadd.f32 %v370, %v408
  %v442 = vadd.f32 %v371, %v408
  %v443 = vadd.f32 %v372, %v408
  %v444 = vadd.f32 %v373, %v408
  %v445 = vadd.f32 %v374, %v408
  %v446 = vadd.f32 %v375, %v408
  %v447 = vadd.f32 %v376, %v408
  %v448 = vadd.f32 %v377, %v408
  %v449 = vadd.f32 %v378, %v408
  %v450 = vadd.f32 %v379, %v408
  %v451 = vadd.f32 %v380, %v408
  %v452 = vadd.f32 %v381, %v408
  %v453 = vadd.f32 %v382, %v408
  %v454 = vadd.f32 %v383, %v408
  %v455 = vadd.f32 %v384, %v408
  %v456 = vadd.f32 %v385, %v408
  %v457 = vadd.f32 %v386, %v408
  %v458 = vadd.f32 %v387, %v408
  %v459 = vadd.f32 %v388, %v408
  %v460 = vadd.f32 %v389, %v408
  %v461 = vadd.f32 %v390, %v408
  %v462 = vadd.f32 %v391, %v408
  %v463 = vadd.f32 %v392, %v408
  %v464 = vadd.f32 %v393, %v408
  %v465 = vadd.f32 %v394, %v408
  %v466 = vadd.f32 %v395, %v408
  %v467 = vadd.f32 %v396, %v408
  %v468 = vadd.f32 %v397, %v408
  %v469 = vadd.f32 %v398, %v408
  %v470 = vadd.f32 %v399, %v408
  %v471 = vadd.f32 %v400, %v408
  %v472 = vadd.f32 %v401, %v408
  %v473 = vadd.f32 %v402, %v408
  %v474 = vld [vmem:[%s4] sm:$0xf]
  %vm475 = vcmask 31744
  %v476 = vsel %vm475, %v204, 0
  %v478 = vsel %vm475, %v205, 0
  %v480 = vsel %vm475, %v206, 0
  %v482 = vsel %vm475, %v207, 0
  %v484 = vsel %vm475, %v213, 0
  %v486 = vsel %vm475, %v215, 0
  %v488 = vsel %vm475, %v217, 0
  %v490 = vsel %vm475, %v219, 0
  %v492 = vsel %vm475, %v221, 0
  %v494 = vsel %vm475, %v223, 0
  %v496 = vsel %vm475, %v225, 0
  %v498 = vsel %vm475, %v227, 0
  %v500 = vsel %vm475, %v229, 0
  %v502 = vsel %vm475, %v231, 0
  %v504 = vsel %vm475, %v233, 0
  %v506 = vsel %vm475, %v235, 0
  %v508 = vsel %vm475, %v237, 0
  %v510 = vsel %vm475, %v239, 0
  %v512 = vsel %vm475, %v241, 0
  %v514 = vsel %vm475, %v243, 0
  %v516 = vsel %vm475, %v245, 0
  %v518 = vsel %vm475, %v247, 0
  %v520 = vsel %vm475, %v249, 0
  %v522 = vsel %vm475, %v251, 0
  %v524 = vsel %vm475, %v253, 0
  %v526 = vsel %vm475, %v255, 0
  %v528 = vsel %vm475, %v257, 0
  %v530 = vsel %vm475, %v259, 0
  %v532 = vsel %vm475, %v261, 0
  %v534 = vsel %vm475, %v263, 0
  %v536 = vsel %vm475, %v265, 0
  %v538 = vsel %vm475, %v267, 0
  %v540 = vsel %vm475, %v269, 0
  %v542 = vsel %vm475, %v271, 0
  %v544 = vsel %vm475, %v273, 0
  %v546 = vsel %vm475, %v275, 0
  %v548 = vsel %vm475, %v277, 0
  %v550 = vsel %vm475, %v279, 0
  %v552 = vsel %vm475, %v281, 0
  %v554 = vsel %vm475, %v283, 0
  %v556 = vsel %vm475, %v285, 0
  %v558 = vsel %vm475, %v287, 0
  %v560 = vsel %vm475, %v289, 0
  %v562 = vsel %vm475, %v291, 0
  %v564 = vsel %vm475, %v293, 0
  %v566 = vsel %vm475, %v295, 0
  %v568 = vsel %vm475, %v297, 0
  %v570 = vsel %vm475, %v299, 0
  %v572 = vsel %vm475, %v301, 0
  %v574 = vsel %vm475, %v303, 0
  %v576 = vsel %vm475, %v305, 0
  %v578 = vsel %vm475, %v307, 0
  %v580 = vsel %vm475, %v309, 0
  %v582 = vsel %vm475, %v311, 0
  %v584 = vsel %vm475, %v313, 0
  %v586 = vsel %vm475, %v315, 0
  %v588 = vsel %vm475, %v317, 0
  %v590 = vsel %vm475, %v319, 0
  %v592 = vsel %vm475, %v321, 0
  %v594 = vsel %vm475, %v323, 0
  %v596 = vsel %vm475, %v325, 0
  %v598 = vsel %vm475, %v327, 0
  %v600 = vsel %vm475, %v329, 0
  %v602 = vsel %vm475, %v331, 0
  %vm604 = vcmask 1043456
  %v606 = vsel %vm604, %v474, 0
  %608 = vmatprep.subr.mxu0 0.0
  %609 = vmatpush1.msra.mxu0 0.0
  %610 = vmatprep.subr.mxu0 0.0
  %611 = vmatpush1.msra.mxu0 0.0
  %612 = vmatprep.subr.mxu0 0.0
  %613 = vmatpush1.msra.mxu0 0.0
  %614 = vmatprep.subr.mxu0 0.0
  %615 = vmatpush1.msra.mxu0 0.0
  %616 = vmatprep.subr.mxu0 0.0
  %617 = vmatpush1.msra.mxu0 0.0
  %618 = vmatprep.subr.mxu0 0.0
  %619 = vmatpush1.msra.mxu0 0.0
  %620 = vmatprep.subr.mxu0 0.0
  %621 = vmatpush1.msra.mxu0 0.0
  %622 = vmatprep.subr.mxu0 0.0
  %623 = vmatpush1.msra.mxu0 0.0
  %624 = vmatprep.subr.mxu0 0.0
  %625 = vmatpush1.msra.mxu0 0.0
  %626 = vmatprep.subr.mxu0 0.0
  %627 = vmatpush1.msra.mxu0 0.0
  %628 = vmatprep.subr.mxu0 0.0
  %629 = vmatpush1.msra.mxu0 0.0
  %630 = vmatprep.subr.mxu0 0.0
  %631 = vmatpush1.msra.mxu0 0.0
  %632 = vmatprep.subr.mxu0 0.0
  %633 = vmatpush1.msra.mxu0 0.0
  %634 = vmatprep.subr.mxu0 0.0
  %635 = vmatpush1.msra.mxu0 0.0
  %636 = vmatprep.subr.mxu0 0.0
  %637 = vmatpush1.msra.mxu0 0.0
  %638 = vmatprep.subr.mxu0 0.0
  %639 = vmatpush1.msra.mxu0 %v606
  %640 = vmatprep.subr.mxu0 0.0
  %641 = vmatpush2.msra.mxu0 0.0
  %642 = vmatprep.subr.mxu0 0.0
  %643 = vmatpush2.msra.mxu0 0.0
  %644 = vmatprep.subr.mxu0 0.0
  %645 = vmatpush2.msra.mxu0 0.0
  %646 = vmatprep.subr.mxu0 0.0
  %647 = vmatpush2.msra.mxu0 0.0
  %648 = vmatprep.subr.mxu0 0.0
  %649 = vmatpush2.msra.mxu0 0.0
  %650 = vmatprep.subr.mxu0 0.0
  %651 = vmatpush2.msra.mxu0 0.0
  %652 = vmatprep.subr.mxu0 0.0
  %653 = vmatpush2.msra.mxu0 0.0
  %654 = vmatprep.subr.mxu0 0.0
  %655 = vmatpush2.msra.mxu0 0.0
  %656 = vmatprep.subr.mxu0 0.0
  %657 = vmatpush2.msra.mxu0 0.0
  %658 = vmatprep.subr.mxu0 0.0
  %659 = vmatpush2.msra.mxu0 0.0
  %660 = vmatprep.subr.mxu0 0.0
  %661 = vmatpush2.msra.mxu0 0.0
  %662 = vmatprep.subr.mxu0 0.0
  %663 = vmatpush2.msra.mxu0 0.0
  %664 = vmatprep.subr.mxu0 0.0
  %665 = vmatpush2.msra.mxu0 0.0
  %666 = vmatprep.subr.mxu0 0.0
  %667 = vmatpush2.msra.mxu0 0.0
  %668 = vmatprep.subr.mxu0 0.0
  %669 = vmatpush2.msra.mxu0 0.0
  %670 = vmatprep.subr.mxu0 0.0
  %671 = vmatpush2.msra.mxu0 0.0
  %672 = vmatprep.mubr.f32.mxu0 0.0
  %673 = vmatmul.mubr.f32.gmra.mxu0 %v476
  %v674 = vpop.f32.mrf.mxu0
  %v675 = vadd.f32 0.0, %v674
  %v676 = vpop.f32.mrf.mxu0
  %677 = vmatprep.mubr.f32.mxu0 0.0
  %678 = vmatmul.mubr.f32.gmra.mxu0 %v478
  %v679 = vpop.f32.mrf.mxu0
  %v680 = vadd.f32 0.0, %v679
  %v681 = vpop.f32.mrf.mxu0
  %682 = vmatprep.mubr.f32.mxu0 0.0
  %683 = vmatmul.mubr.f32.gmra.mxu0 %v480
  %v684 = vpop.f32.mrf.mxu0
  %v685 = vadd.f32 0.0, %v684
  %v686 = vpop.f32.mrf.mxu0
  %687 = vmatprep.mubr.f32.mxu0 0.0
  %688 = vmatmul.mubr.f32.gmra.mxu0 %v482
  %v689 = vpop.f32.mrf.mxu0
  %v690 = vadd.f32 0.0, %v689
  %v691 = vpop.f32.mrf.mxu0
  %692 = vmatprep.mubr.f32.mxu0 0.0
  %693 = vmatmul.mubr.f32.gmra.mxu0 %v484
  %v694 = vpop.f32.mrf.mxu0
  %v695 = vadd.f32 0.0, %v694
  %v696 = vpop.f32.mrf.mxu0
  %697 = vmatprep.mubr.f32.mxu0 0.0
  %698 = vmatmul.mubr.f32.gmra.mxu0 %v486
  %v699 = vpop.f32.mrf.mxu0
  %v700 = vadd.f32 0.0, %v699
  %v701 = vpop.f32.mrf.mxu0
  %702 = vmatprep.mubr.f32.mxu0 0.0
  %703 = vmatmul.mubr.f32.gmra.mxu0 %v488
  %v704 = vpop.f32.mrf.mxu0
  %v705 = vadd.f32 0.0, %v704
  %v706 = vpop.f32.mrf.mxu0
  %707 = vmatprep.mubr.f32.mxu0 0.0
  %708 = vmatmul.mubr.f32.gmra.mxu0 %v490
  %v709 = vpop.f32.mrf.mxu0
  %v710 = vadd.f32 0.0, %v709
  %v711 = vpop.f32.mrf.mxu0
  %712 = vmatprep.mubr.f32.mxu0 0.0
  %713 = vmatmul.mubr.f32.gmra.mxu0 %v492
  %v714 = vpop.f32.mrf.mxu0
  %v715 = vadd.f32 0.0, %v714
  %v716 = vpop.f32.mrf.mxu0
  %717 = vmatprep.mubr.f32.mxu0 0.0
  %718 = vmatmul.mubr.f32.gmra.mxu0 %v494
  %v719 = vpop.f32.mrf.mxu0
  %v720 = vadd.f32 0.0, %v719
  %v721 = vpop.f32.mrf.mxu0
  %722 = vmatprep.mubr.f32.mxu0 0.0
  %723 = vmatmul.mubr.f32.gmra.mxu0 %v496
  %v724 = vpop.f32.mrf.mxu0
  %v725 = vadd.f32 0.0, %v724
  %v726 = vpop.f32.mrf.mxu0
  %727 = vmatprep.mubr.f32.mxu0 0.0
  %728 = vmatmul.mubr.f32.gmra.mxu0 %v498
  %v729 = vpop.f32.mrf.mxu0
  %v730 = vadd.f32 0.0, %v729
  %v731 = vpop.f32.mrf.mxu0
  %732 = vmatprep.mubr.f32.mxu0 0.0
  %733 = vmatmul.mubr.f32.gmra.mxu0 %v500
  %v734 = vpop.f32.mrf.mxu0
  %v735 = vadd.f32 0.0, %v734
  %v736 = vpop.f32.mrf.mxu0
  %737 = vmatprep.mubr.f32.mxu0 0.0
  %738 = vmatmul.mubr.f32.gmra.mxu0 %v502
  %v739 = vpop.f32.mrf.mxu0
  %v740 = vadd.f32 0.0, %v739
  %v741 = vpop.f32.mrf.mxu0
  %742 = vmatprep.mubr.f32.mxu0 0.0
  %743 = vmatmul.mubr.f32.gmra.mxu0 %v504
  %v744 = vpop.f32.mrf.mxu0
  %v745 = vadd.f32 0.0, %v744
  %v746 = vpop.f32.mrf.mxu0
  %747 = vmatprep.mubr.f32.mxu0 0.0
  %748 = vmatmul.mubr.f32.gmra.mxu0 %v506
  %v749 = vpop.f32.mrf.mxu0
  %v750 = vadd.f32 0.0, %v749
  %v751 = vpop.f32.mrf.mxu0
  %752 = vmatprep.mubr.f32.mxu0 0.0
  %753 = vmatmul.mubr.f32.gmra.mxu0 %v508
  %v754 = vpop.f32.mrf.mxu0
  %v755 = vadd.f32 0.0, %v754
  %v756 = vpop.f32.mrf.mxu0
  %757 = vmatprep.mubr.f32.mxu0 0.0
  %758 = vmatmul.mubr.f32.gmra.mxu0 %v510
  %v759 = vpop.f32.mrf.mxu0
  %v760 = vadd.f32 0.0, %v759
  %v761 = vpop.f32.mrf.mxu0
  %762 = vmatprep.mubr.f32.mxu0 0.0
  %763 = vmatmul.mubr.f32.gmra.mxu0 %v512
  %v764 = vpop.f32.mrf.mxu0
  %v765 = vadd.f32 0.0, %v764
  %v766 = vpop.f32.mrf.mxu0
  %767 = vmatprep.mubr.f32.mxu0 0.0
  %768 = vmatmul.mubr.f32.gmra.mxu0 %v514
  %v769 = vpop.f32.mrf.mxu0
  %v770 = vadd.f32 0.0, %v769
  %v771 = vpop.f32.mrf.mxu0
  %772 = vmatprep.mubr.f32.mxu0 0.0
  %773 = vmatmul.mubr.f32.gmra.mxu0 %v516
  %v774 = vpop.f32.mrf.mxu0
  %v775 = vadd.f32 0.0, %v774
  %v776 = vpop.f32.mrf.mxu0
  %777 = vmatprep.mubr.f32.mxu0 0.0
  %778 = vmatmul.mubr.f32.gmra.mxu0 %v518
  %v779 = vpop.f32.mrf.mxu0
  %v780 = vadd.f32 0.0, %v779
  %v781 = vpop.f32.mrf.mxu0
  %782 = vmatprep.mubr.f32.mxu0 0.0
  %783 = vmatmul.mubr.f32.gmra.mxu0 %v520
  %v784 = vpop.f32.mrf.mxu0
  %v785 = vadd.f32 0.0, %v784
  %v786 = vpop.f32.mrf.mxu0
  %787 = vmatprep.mubr.f32.mxu0 0.0
  %788 = vmatmul.mubr.f32.gmra.mxu0 %v522
  %v789 = vpop.f32.mrf.mxu0
  %v790 = vadd.f32 0.0, %v789
  %v791 = vpop.f32.mrf.mxu0
  %792 = vmatprep.mubr.f32.mxu0 0.0
  %793 = vmatmul.mubr.f32.gmra.mxu0 %v524
  %v794 = vpop.f32.mrf.mxu0
  %v795 = vadd.f32 0.0, %v794
  %v796 = vpop.f32.mrf.mxu0
  %797 = vmatprep.mubr.f32.mxu0 0.0
  %798 = vmatmul.mubr.f32.gmra.mxu0 %v526
  %v799 = vpop.f32.mrf.mxu0
  %v800 = vadd.f32 0.0, %v799
  %v801 = vpop.f32.mrf.mxu0
  %802 = vmatprep.mubr.f32.mxu0 0.0
  %803 = vmatmul.mubr.f32.gmra.mxu0 %v528
  %v804 = vpop.f32.mrf.mxu0
  %v805 = vadd.f32 0.0, %v804
  %v806 = vpop.f32.mrf.mxu0
  %807 = vmatprep.mubr.f32.mxu0 0.0
  %808 = vmatmul.mubr.f32.gmra.mxu0 %v530
  %v809 = vpop.f32.mrf.mxu0
  %v810 = vadd.f32 0.0, %v809
  %v811 = vpop.f32.mrf.mxu0
  %812 = vmatprep.mubr.f32.mxu0 0.0
  %813 = vmatmul.mubr.f32.gmra.mxu0 %v532
  %v814 = vpop.f32.mrf.mxu0
  %v815 = vadd.f32 0.0, %v814
  %v816 = vpop.f32.mrf.mxu0
  %817 = vmatprep.mubr.f32.mxu0 0.0
  %818 = vmatmul.mubr.f32.gmra.mxu0 %v534
  %v819 = vpop.f32.mrf.mxu0
  %v820 = vadd.f32 0.0, %v819
  %v821 = vpop.f32.mrf.mxu0
  %822 = vmatprep.mubr.f32.mxu0 0.0
  %823 = vmatmul.mubr.f32.gmra.mxu0 %v536
  %v824 = vpop.f32.mrf.mxu0
  %v825 = vadd.f32 0.0, %v824
  %v826 = vpop.f32.mrf.mxu0
  %827 = vmatprep.mubr.f32.mxu0 0.0
  %828 = vmatmul.mubr.f32.gmra.mxu0 %v538
  %v829 = vpop.f32.mrf.mxu0
  %v830 = vadd.f32 0.0, %v829
  %v831 = vpop.f32.mrf.mxu0
  %832 = vmatprep.mubr.f32.mxu0 0.0
  %833 = vmatmul.mubr.f32.gmra.mxu0 %v540
  %v834 = vpop.f32.mrf.mxu0
  %v835 = vadd.f32 0.0, %v834
  %v836 = vpop.f32.mrf.mxu0
  %837 = vmatprep.mubr.f32.mxu0 0.0
  %838 = vmatmul.mubr.f32.gmra.mxu0 %v542
  %v839 = vpop.f32.mrf.mxu0
  %v840 = vadd.f32 0.0, %v839
  %v841 = vpop.f32.mrf.mxu0
  %842 = vmatprep.mubr.f32.mxu0 0.0
  %843 = vmatmul.mubr.f32.gmra.mxu0 %v544
  %v844 = vpop.f32.mrf.mxu0
  %v845 = vadd.f32 0.0, %v844
  %v846 = vpop.f32.mrf.mxu0
  %847 = vmatprep.mubr.f32.mxu0 0.0
  %848 = vmatmul.mubr.f32.gmra.mxu0 %v546
  %v849 = vpop.f32.mrf.mxu0
  %v850 = vadd.f32 0.0, %v849
  %v851 = vpop.f32.mrf.mxu0
  %852 = vmatprep.mubr.f32.mxu0 0.0
  %853 = vmatmul.mubr.f32.gmra.mxu0 %v548
  %v854 = vpop.f32.mrf.mxu0
  %v855 = vadd.f32 0.0, %v854
  %v856 = vpop.f32.mrf.mxu0
  %857 = vmatprep.mubr.f32.mxu0 0.0
  %858 = vmatmul.mubr.f32.gmra.mxu0 %v550
  %v859 = vpop.f32.mrf.mxu0
  %v860 = vadd.f32 0.0, %v859
  %v861 = vpop.f32.mrf.mxu0
  %862 = vmatprep.mubr.f32.mxu0 0.0
  %863 = vmatmul.mubr.f32.gmra.mxu0 %v552
  %v864 = vpop.f32.mrf.mxu0
  %v865 = vadd.f32 0.0, %v864
  %v866 = vpop.f32.mrf.mxu0
  %867 = vmatprep.mubr.f32.mxu0 0.0
  %868 = vmatmul.mubr.f32.gmra.mxu0 %v554
  %v869 = vpop.f32.mrf.mxu0
  %v870 = vadd.f32 0.0, %v869
  %v871 = vpop.f32.mrf.mxu0
  %872 = vmatprep.mubr.f32.mxu0 0.0
  %873 = vmatmul.mubr.f32.gmra.mxu0 %v556
  %v874 = vpop.f32.mrf.mxu0
  %v875 = vadd.f32 0.0, %v874
  %v876 = vpop.f32.mrf.mxu0
  %877 = vmatprep.mubr.f32.mxu0 0.0
  %878 = vmatmul.mubr.f32.gmra.mxu0 %v558
  %v879 = vpop.f32.mrf.mxu0
  %v880 = vadd.f32 0.0, %v879
  %v881 = vpop.f32.mrf.mxu0
  %882 = vmatprep.mubr.f32.mxu0 0.0
  %883 = vmatmul.mubr.f32.gmra.mxu0 %v560
  %v884 = vpop.f32.mrf.mxu0
  %v885 = vadd.f32 0.0, %v884
  %v886 = vpop.f32.mrf.mxu0
  %887 = vmatprep.mubr.f32.mxu0 0.0
  %888 = vmatmul.mubr.f32.gmra.mxu0 %v562
  %v889 = vpop.f32.mrf.mxu0
  %v890 = vadd.f32 0.0, %v889
  %v891 = vpop.f32.mrf.mxu0
  %892 = vmatprep.mubr.f32.mxu0 0.0
  %893 = vmatmul.mubr.f32.gmra.mxu0 %v564
  %v894 = vpop.f32.mrf.mxu0
  %v895 = vadd.f32 0.0, %v894
  %v896 = vpop.f32.mrf.mxu0
  %897 = vmatprep.mubr.f32.mxu0 0.0
  %898 = vmatmul.mubr.f32.gmra.mxu0 %v566
  %v899 = vpop.f32.mrf.mxu0
  %v900 = vadd.f32 0.0, %v899
  %v901 = vpop.f32.mrf.mxu0
  %902 = vmatprep.mubr.f32.mxu0 0.0
  %903 = vmatmul.mubr.f32.gmra.mxu0 %v568
  %v904 = vpop.f32.mrf.mxu0
  %v905 = vadd.f32 0.0, %v904
  %v906 = vpop.f32.mrf.mxu0
  %907 = vmatprep.mubr.f32.mxu0 0.0
  %908 = vmatmul.mubr.f32.gmra.mxu0 %v570
  %v909 = vpop.f32.mrf.mxu0
  %v910 = vadd.f32 0.0, %v909
  %v911 = vpop.f32.mrf.mxu0
  %912 = vmatprep.mubr.f32.mxu0 0.0
  %913 = vmatmul.mubr.f32.gmra.mxu0 %v572
  %v914 = vpop.f32.mrf.mxu0
  %v915 = vadd.f32 0.0, %v914
  %v916 = vpop.f32.mrf.mxu0
  %917 = vmatprep.mubr.f32.mxu0 0.0
  %918 = vmatmul.mubr.f32.gmra.mxu0 %v574
  %v919 = vpop.f32.mrf.mxu0
  %v920 = vadd.f32 0.0, %v919
  %v921 = vpop.f32.mrf.mxu0
  %922 = vmatprep.mubr.f32.mxu0 0.0
  %923 = vmatmul.mubr.f32.gmra.mxu0 %v576
  %v924 = vpop.f32.mrf.mxu0
  %v925 = vadd.f32 0.0, %v924
  %v926 = vpop.f32.mrf.mxu0
  %927 = vmatprep.mubr.f32.mxu0 0.0
  %928 = vmatmul.mubr.f32.gmra.mxu0 %v578
  %v929 = vpop.f32.mrf.mxu0
  %v930 = vadd.f32 0.0, %v929
  %v931 = vpop.f32.mrf.mxu0
  %932 = vmatprep.mubr.f32.mxu0 0.0
  %933 = vmatmul.mubr.f32.gmra.mxu0 %v580
  %v934 = vpop.f32.mrf.mxu0
  %v935 = vadd.f32 0.0, %v934
  %v936 = vpop.f32.mrf.mxu0
  %937 = vmatprep.mubr.f32.mxu0 0.0
  %938 = vmatmul.mubr.f32.gmra.mxu0 %v582
  %v939 = vpop.f32.mrf.mxu0
  %v940 = vadd.f32 0.0, %v939
  %v941 = vpop.f32.mrf.mxu0
  %942 = vmatprep.mubr.f32.mxu0 0.0
  %943 = vmatmul.mubr.f32.gmra.mxu0 %v584
  %v944 = vpop.f32.mrf.mxu0
  %v945 = vadd.f32 0.0, %v944
  %v946 = vpop.f32.mrf.mxu0
  %947 = vmatprep.mubr.f32.mxu0 0.0
  %948 = vmatmul.mubr.f32.gmra.mxu0 %v586
  %v949 = vpop.f32.mrf.mxu0
  %v950 = vadd.f32 0.0, %v949
  %v951 = vpop.f32.mrf.mxu0
  %952 = vmatprep.mubr.f32.mxu0 0.0
  %953 = vmatmul.mubr.f32.gmra.mxu0 %v588
  %v954 = vpop.f32.mrf.mxu0
  %v955 = vadd.f32 0.0, %v954
  %v956 = vpop.f32.mrf.mxu0
  %957 = vmatprep.mubr.f32.mxu0 0.0
  %958 = vmatmul.mubr.f32.gmra.mxu0 %v590
  %v959 = vpop.f32.mrf.mxu0
  %v960 = vadd.f32 0.0, %v959
  %v961 = vpop.f32.mrf.mxu0
  %962 = vmatprep.mubr.f32.mxu0 0.0
  %963 = vmatmul.mubr.f32.gmra.mxu0 %v592
  %v964 = vpop.f32.mrf.mxu0
  %v965 = vadd.f32 0.0, %v964
  %v966 = vpop.f32.mrf.mxu0
  %967 = vmatprep.mubr.f32.mxu0 0.0
  %968 = vmatmul.mubr.f32.gmra.mxu0 %v594
  %v969 = vpop.f32.mrf.mxu0
  %v970 = vadd.f32 0.0, %v969
  %v971 = vpop.f32.mrf.mxu0
  %972 = vmatprep.mubr.f32.mxu0 0.0
  %973 = vmatmul.mubr.f32.gmra.mxu0 %v596
  %v974 = vpop.f32.mrf.mxu0
  %v975 = vadd.f32 0.0, %v974
  %v976 = vpop.f32.mrf.mxu0
  %977 = vmatprep.mubr.f32.mxu0 0.0
  %978 = vmatmul.mubr.f32.gmra.mxu0 %v598
  %v979 = vpop.f32.mrf.mxu0
  %v980 = vadd.f32 0.0, %v979
  %v981 = vpop.f32.mrf.mxu0
  %982 = vmatprep.mubr.f32.mxu0 0.0
  %983 = vmatmul.mubr.f32.gmra.mxu0 %v600
  %v984 = vpop.f32.mrf.mxu0
  %v985 = vadd.f32 0.0, %v984
  %v986 = vpop.f32.mrf.mxu0
  %987 = vmatprep.mubr.f32.mxu0 0.0
  %988 = vmatmul.mubr.f32.gmra.mxu0 %v602
  %v989 = vpop.f32.mrf.mxu0
  %v990 = vadd.f32 0.0, %v989
  %v991 = vpop.f32.mrf.mxu0
  %992 = vdwg.mxu0
  %v993 = vadd.f32 %v410, %v675
  %v994 = vadd.f32 %v411, %v680
  %v995 = vadd.f32 %v412, %v685
  %v996 = vadd.f32 %v413, %v690
  %v997 = vadd.f32 %v414, %v695
  %v998 = vadd.f32 %v415, %v700
  %v999 = vadd.f32 %v416, %v705
  %v1000 = vadd.f32 %v417, %v710
  %v1001 = vadd.f32 %v418, %v715
  %v1002 = vadd.f32 %v419, %v720
  %v1003 = vadd.f32 %v420, %v725
  %v1004 = vadd.f32 %v421, %v730
  %v1005 = vadd.f32 %v422, %v735
  %v1006 = vadd.f32 %v423, %v740
  %v1007 = vadd.f32 %v424, %v745
  %v1008 = vadd.f32 %v425, %v750
  %v1009 = vadd.f32 %v426, %v755
  %v1010 = vadd.f32 %v427, %v760
  %v1011 = vadd.f32 %v428, %v765
  %v1012 = vadd.f32 %v429, %v770
  %v1013 = vadd.f32 %v430, %v775
  %v1014 = vadd.f32 %v431, %v780
  %v1015 = vadd.f32 %v432, %v785
  %v1016 = vadd.f32 %v433, %v790
  %v1017 = vadd.f32 %v434, %v795
  %v1018 = vadd.f32 %v435, %v800
  %v1019 = vadd.f32 %v436, %v805
  %v1020 = vadd.f32 %v437, %v810
  %v1021 = vadd.f32 %v438, %v815
  %v1022 = vadd.f32 %v439, %v820
  %v1023 = vadd.f32 %v440, %v825
  %v1024 = vadd.f32 %v441, %v830
  %v1025 = vadd.f32 %v442, %v835
  %v1026 = vadd.f32 %v443, %v840
  %v1027 = vadd.f32 %v444, %v845
  %v1028 = vadd.f32 %v445, %v850
  %v1029 = vadd.f32 %v446, %v855
  %v1030 = vadd.f32 %v447, %v860
  %v1031 = vadd.f32 %v448, %v865
  %v1032 = vadd.f32 %v449, %v870
  %v1033 = vadd.f32 %v450, %v875
  %v1034 = vadd.f32 %v451, %v880
  %v1035 = vadd.f32 %v452, %v885
  %v1036 = vadd.f32 %v453, %v890
  %v1037 = vadd.f32 %v454, %v895
  %v1038 = vadd.f32 %v455, %v900
  %v1039 = vadd.f32 %v456, %v905
  %v1040 = vadd.f32 %v457, %v910
  %v1041 = vadd.f32 %v458, %v915
  %v1042 = vadd.f32 %v459, %v920
  %v1043 = vadd.f32 %v460, %v925
  %v1044 = vadd.f32 %v461, %v930
  %v1045 = vadd.f32 %v462, %v935
  %v1046 = vadd.f32 %v463, %v940
  %v1047 = vadd.f32 %v464, %v945
  %v1048 = vadd.f32 %v465, %v950
  %v1049 = vadd.f32 %v466, %v955
  %v1050 = vadd.f32 %v467, %v960
  %v1051 = vadd.f32 %v468, %v965
  %v1052 = vadd.f32 %v469, %v970
  %v1053 = vadd.f32 %v470, %v975
  %v1054 = vadd.f32 %v471, %v980
  %v1055 = vadd.f32 %v472, %v985
  %v1056 = vadd.f32 %v473, %v990
  %v1057 = vmax.f32 %v993, 0.0
  %v1058 = vmax.f32 %v994, 0.0
  %v1059 = vmax.f32 %v995, 0.0
  %v1060 = vmax.f32 %v996, 0.0
  %v1061 = vmax.f32 %v997, 0.0
  %v1062 = vmax.f32 %v998, 0.0
  %v1063 = vmax.f32 %v999, 0.0
  %v1064 = vmax.f32 %v1000, 0.0
  %v1065 = vmax.f32 %v1001, 0.0
  %v1066 = vmax.f32 %v1002, 0.0
  %v1067 = vmax.f32 %v1003, 0.0
  %v1068 = vmax.f32 %v1004, 0.0
  %v1069 = vmax.f32 %v1005, 0.0
  %v1070 = vmax.f32 %v1006, 0.0
  %v1071 = vmax.f32 %v1007, 0.0
  %v1072 = vmax.f32 %v1008, 0.0
  %v1073 = vmax.f32 %v1009, 0.0
  %v1074 = vmax.f32 %v1010, 0.0
  %v1075 = vmax.f32 %v1011, 0.0
  %v1076 = vmax.f32 %v1012, 0.0
  %v1077 = vmax.f32 %v1013, 0.0
  %v1078 = vmax.f32 %v1014, 0.0
  %v1079 = vmax.f32 %v1015, 0.0
  %v1080 = vmax.f32 %v1016, 0.0
  %v1081 = vmax.f32 %v1017, 0.0
  %v1082 = vmax.f32 %v1018, 0.0
  %v1083 = vmax.f32 %v1019, 0.0
  %v1084 = vmax.f32 %v1020, 0.0
  %v1085 = vmax.f32 %v1021, 0.0
  %v1086 = vmax.f32 %v1022, 0.0
  %v1087 = vmax.f32 %v1023, 0.0
  %v1088 = vmax.f32 %v1024, 0.0
  %v1089 = vmax.f32 %v1025, 0.0
  %v1090 = vmax.f32 %v1026, 0.0
  %v1091 = vmax.f32 %v1027, 0.0
  %v1092 = vmax.f32 %v1028, 0.0
  %v1093 = vmax.f32 %v1029, 0.0
  %v1094 = vmax.f32 %v1030, 0.0
  %v1095 = vmax.f32 %v1031, 0.0
  %v1096 = vmax.f32 %v1032, 0.0
  %v1097 = vmax.f32 %v1033, 0.0
  %v1098 = vmax.f32 %v1034, 0.0
  %v1099 = vmax.f32 %v1035, 0.0
  %v1100 = vmax.f32 %v1036, 0.0
  %v1101 = vmax.f32 %v1037, 0.0
  %v1102 = vmax.f32 %v1038, 0.0
  %v1103 = vmax.f32 %v1039, 0.0
  %v1104 = vmax.f32 %v1040, 0.0
  %v1105 = vmax.f32 %v1041, 0.0
  %v1106 = vmax.f32 %v1042, 0.0
  %v1107 = vmax.f32 %v1043, 0.0
  %v1108 = vmax.f32 %v1044, 0.0
  %v1109 = vmax.f32 %v1045, 0.0
  %v1110 = vmax.f32 %v1046, 0.0
  %v1111 = vmax.f32 %v1047, 0.0
  %v1112 = vmax.f32 %v1048, 0.0
  %v1113 = vmax.f32 %v1049, 0.0
  %v1114 = vmax.f32 %v1050, 0.0
  %v1115 = vmax.f32 %v1051, 0.0
  %v1116 = vmax.f32 %v1052, 0.0
  %v1117 = vmax.f32 %v1053, 0.0
  %v1118 = vmax.f32 %v1054, 0.0
  %v1119 = vmax.f32 %v1055, 0.0
  %v1120 = vmax.f32 %v1056, 0.0
  %1125 = vrot.lane.b32.xlu0 %v1061, 16
  %v1126 = vpop.permute.xlu0 %1125
  %1127 = vrot.lane.b32.xlu0 %v1062, 16
  %v1128 = vpop.permute.xlu0 %1127
  %1129 = vrot.lane.b32.xlu0 %v1063, 16
  %v1130 = vpop.permute.xlu0 %1129
  %1131 = vrot.lane.b32.xlu0 %v1064, 16
  %v1132 = vpop.permute.xlu0 %1131
  %1141 = vrot.lane.b32.xlu0 %v1065, 32
  %v1142 = vpop.permute.xlu0 %1141
  %1143 = vrot.lane.b32.xlu0 %v1066, 32
  %v1144 = vpop.permute.xlu0 %1143
  %1145 = vrot.lane.b32.xlu0 %v1067, 32
  %v1146 = vpop.permute.xlu0 %1145
  %1147 = vrot.lane.b32.xlu0 %v1068, 32
  %v1148 = vpop.permute.xlu0 %1147
  %1157 = vrot.lane.b32.xlu0 %v1069, 48
  %v1158 = vpop.permute.xlu0 %1157
  %1159 = vrot.lane.b32.xlu0 %v1070, 48
  %v1160 = vpop.permute.xlu0 %1159
  %1161 = vrot.lane.b32.xlu0 %v1071, 48
  %v1162 = vpop.permute.xlu0 %1161
  %1163 = vrot.lane.b32.xlu0 %v1072, 48
  %v1164 = vpop.permute.xlu0 %1163
  %1173 = vrot.lane.b32.xlu0 %v1073, 64
  %v1174 = vpop.permute.xlu0 %1173
  %1175 = vrot.lane.b32.xlu0 %v1074, 64
  %v1176 = vpop.permute.xlu0 %1175
  %1177 = vrot.lane.b32.xlu0 %v1075, 64
  %v1178 = vpop.permute.xlu0 %1177
  %1179 = vrot.lane.b32.xlu0 %v1076, 64
  %v1180 = vpop.permute.xlu0 %1179
  %1189 = vrot.lane.b32.xlu0 %v1077, 80
  %v1190 = vpop.permute.xlu0 %1189
  %1191 = vrot.lane.b32.xlu0 %v1078, 80
  %v1192 = vpop.permute.xlu0 %1191
  %1193 = vrot.lane.b32.xlu0 %v1079, 80
  %v1194 = vpop.permute.xlu0 %1193
  %1195 = vrot.lane.b32.xlu0 %v1080, 80
  %v1196 = vpop.permute.xlu0 %1195
  %1205 = vrot.lane.b32.xlu0 %v1081, 96
  %v1206 = vpop.permute.xlu0 %1205
  %1207 = vrot.lane.b32.xlu0 %v1082, 96
  %v1208 = vpop.permute.xlu0 %1207
  %1209 = vrot.lane.b32.xlu0 %v1083, 96
  %v1210 = vpop.permute.xlu0 %1209
  %1211 = vrot.lane.b32.xlu0 %v1084, 96
  %v1212 = vpop.permute.xlu0 %1211
  %1221 = vrot.lane.b32.xlu0 %v1085, 112
  %v1222 = vpop.permute.xlu0 %1221
  %1223 = vrot.lane.b32.xlu0 %v1086, 112
  %v1224 = vpop.permute.xlu0 %1223
  %1225 = vrot.lane.b32.xlu0 %v1087, 112
  %v1226 = vpop.permute.xlu0 %1225
  %1227 = vrot.lane.b32.xlu0 %v1088, 112
  %v1228 = vpop.permute.xlu0 %1227
  %1237 = vrot.lane.b32.xlu0 %v1093, 16
  %v1238 = vpop.permute.xlu0 %1237
  %1239 = vrot.lane.b32.xlu0 %v1094, 16
  %v1240 = vpop.permute.xlu0 %1239
  %1241 = vrot.lane.b32.xlu0 %v1095, 16
  %v1242 = vpop.permute.xlu0 %1241
  %1243 = vrot.lane.b32.xlu0 %v1096, 16
  %v1244 = vpop.permute.xlu0 %1243
  %1253 = vrot.lane.b32.xlu0 %v1097, 32
  %v1254 = vpop.permute.xlu0 %1253
  %1255 = vrot.lane.b32.xlu0 %v1098, 32
  %v1256 = vpop.permute.xlu0 %1255
  %1257 = vrot.lane.b32.xlu0 %v1099, 32
  %v1258 = vpop.permute.xlu0 %1257
  %1259 = vrot.lane.b32.xlu0 %v1100, 32
  %v1260 = vpop.permute.xlu0 %1259
  %1269 = vrot.lane.b32.xlu0 %v1101, 48
  %v1270 = vpop.permute.xlu0 %1269
  %1271 = vrot.lane.b32.xlu0 %v1102, 48
  %v1272 = vpop.permute.xlu0 %1271
  %1273 = vrot.lane.b32.xlu0 %v1103, 48
  %v1274 = vpop.permute.xlu0 %1273
  %1275 = vrot.lane.b32.xlu0 %v1104, 48
  %v1276 = vpop.permute.xlu0 %1275
  %1285 = vrot.lane.b32.xlu0 %v1105, 64
  %v1286 = vpop.permute.xlu0 %1285
  %1287 = vrot.lane.b32.xlu0 %v1106, 64
  %v1288 = vpop.permute.xlu0 %1287
  %1289 = vrot.lane.b32.xlu0 %v1107, 64
  %v1290 = vpop.permute.xlu0 %1289
  %1291 = vrot.lane.b32.xlu0 %v1108, 64
  %v1292 = vpop.permute.xlu0 %1291
  %1301 = vrot.lane.b32.xlu0 %v1109, 80
  %v1302 = vpop.permute.xlu0 %1301
  %1303 = vrot.lane.b32.xlu0 %v1110, 80
  %v1304 = vpop.permute.xlu0 %1303
  %1305 = vrot.lane.b32.xlu0 %v1111, 80
  %v1306 = vpop.permute.xlu0 %1305
  %1307 = vrot.lane.b32.xlu0 %v1112, 80
  %v1308 = vpop.permute.xlu0 %1307
  %1317 = vrot.lane.b32.xlu0 %v1113, 96
  %v1318 = vpop.permute.xlu0 %1317
  %1319 = vrot.lane.b32.xlu0 %v1114, 96
  %v1320 = vpop.permute.xlu0 %1319
  %1321 = vrot.lane.b32.xlu0 %v1115, 96
  %v1322 = vpop.permute.xlu0 %1321
  %1323 = vrot.lane.b32.xlu0 %v1116, 96
  %v1324 = vpop.permute.xlu0 %1323
  %1333 = vrot.lane.b32.xlu0 %v1117, 112
  %v1334 = vpop.permute.xlu0 %1333
  %1335 = vrot.lane.b32.xlu0 %v1118, 112
  %v1336 = vpop.permute.xlu0 %1335
  %1337 = vrot.lane.b32.xlu0 %v1119, 112
  %v1338 = vpop.permute.xlu0 %1337
  %1339 = vrot.lane.b32.xlu0 %v1120, 112
  %v1340 = vpop.permute.xlu0 %1339
  %vm1345 = vcmask 130048
  %v1346 = vsel %vm1345, %v1057, %v1126
  %v1347 = vsel %vm1345, %v1058, %v1128
  %v1348 = vsel %vm1345, %v1059, %v1130
  %v1349 = vsel %vm1345, %v1060, %v1132
  %vm1350 = vcmask 261120
  %v1351 = vsel %vm1350, %v1346, %v1142
  %v1352 = vsel %vm1350, %v1347, %v1144
  %v1353 = vsel %vm1350, %v1348, %v1146
  %v1354 = vsel %vm1350, %v1349, %v1148
  %vm1355 = vcmask 392192
  %v1356 = vsel %vm1355, %v1351, %v1158
  %v1357 = vsel %vm1355, %v1352, %v1160
  %v1358 = vsel %vm1355, %v1353, %v1162
  %v1359 = vsel %vm1355, %v1354, %v1164
  %vm1360 = vcmask 523264
  %v1361 = vsel %vm1360, %v1356, %v1174
  %v1362 = vsel %vm1360, %v1357, %v1176
  %v1363 = vsel %vm1360, %v1358, %v1178
  %v1364 = vsel %vm1360, %v1359, %v1180
  %vm1365 = vcmask 654336
  %v1366 = vsel %vm1365, %v1361, %v1190
  %v1367 = vsel %vm1365, %v1362, %v1192
  %v1368 = vsel %vm1365, %v1363, %v1194
  %v1369 = vsel %vm1365, %v1364, %v1196
  %vm1370 = vcmask 785408
  %v1371 = vsel %vm1370, %v1366, %v1206
  %v1372 = vsel %vm1370, %v1367, %v1208
  %v1373 = vsel %vm1370, %v1368, %v1210
  %v1374 = vsel %vm1370, %v1369, %v1212
  %vm1375 = vcmask 916480
  %v1376 = vsel %vm1375, %v1371, %v1222
  %v1377 = vsel %vm1375, %v1372, %v1224
  %v1378 = vsel %vm1375, %v1373, %v1226
  %v1379 = vsel %vm1375, %v1374, %v1228
  %v1380 = vsel %vm1345, %v1089, %v1238
  %v1381 = vsel %vm1345, %v1090, %v1240
  %v1382 = vsel %vm1345, %v1091, %v1242
  %v1383 = vsel %vm1345, %v1092, %v1244
  %v1384 = vsel %vm1350, %v1380, %v1254
  %v1385 = vsel %vm1350, %v1381, %v1256
  %v1386 = vsel %vm1350, %v1382, %v1258
  %v1387 = vsel %vm1350, %v1383, %v1260
  %v1388 = vsel %vm1355, %v1384, %v1270
  %v1389 = vsel %vm1355, %v1385, %v1272
  %v1390 = vsel %vm1355, %v1386, %v1274
  %v1391 = vsel %vm1355, %v1387, %v1276
  %v1392 = vsel %vm1360, %v1388, %v1286
  %v1393 = vsel %vm1360, %v1389, %v1288
  %v1394 = vsel %vm1360, %v1390, %v1290
  %v1395 = vsel %vm1360, %v1391, %v1292
  %v1396 = vsel %vm1365, %v1392, %v1302
  %v1397 = vsel %vm1365, %v1393, %v1304
  %v1398 = vsel %vm1365, %v1394, %v1306
  %v1399 = vsel %vm1365, %v1395, %v1308
  %v1400 = vsel %vm1370, %v1396, %v1318
  %v1401 = vsel %vm1370, %v1397, %v1320
  %v1402 = vsel %vm1370, %v1398, %v1322
  %v1403 = vsel %vm1370, %v1399, %v1324
  %v1404 = vsel %vm1375, %v1400, %v1334
  %v1405 = vsel %vm1375, %v1401, %v1336
  %v1406 = vsel %vm1375, %v1402, %v1338
  %v1407 = vsel %vm1375, %v1403, %v1340
  %1408 = vst [vmem:[%s5] sm:$0xff] %v1376
  %1409 = vst [vmem:[%s5 + $0x8] sm:$0xff] %v1404
  %1410 = vst [vmem:[%s5 + $0x10] sm:$0xff] %v1377
  %1411 = vst [vmem:[%s5 + $0x18] sm:$0xff] %v1405
  %1412 = vst [vmem:[%s5 + $0x20] sm:$0xff] %v1378
  %1413 = vst [vmem:[%s5 + $0x28] sm:$0xff] %v1406
  %1414 = vst [vmem:[%s5 + $0x30] sm:$0xff] %v1379
  %1415 = vst [vmem:[%s5 + $0x38] sm:$0xff] %v1407
  // Predicated region
  $region22: #{_unnamed_function_.7} parent=0 // pred_check
    _
  $region23: #{_unnamed_function_.7} parent=0 // pred_check_branch
    %1417 = sbr.rel (0) target = $region25
  $region24: #{_unnamed_function_.7} parent=0 // pred_region
    _
  $region25: #{_unnamed_function_.7} parent=0 // pred_fallthru
    _
  // Predicated region
  $region26: #{_unnamed_function_.7} parent=0 // pred_check
    _
  $region27: #{_unnamed_function_.7} parent=0 // pred_check_branch
    %1419 = sbr.rel (0) target = $region29
  $region28: #{_unnamed_function_.7} parent=0 // pred_region
    _
  $region29: #{_unnamed_function_.7} parent=0 // pred_fallthru
    _

// kernel: _unnamed_function_.6
$region0: #{_unnamed_function_.6}
  #allocation0 [shape = 'u32[]', space=smem, size = 0x4, offset = 0x4, fixed_abs, tag = 'smem constant byte address 0x4 - core index']
  #allocation1 [shape = 'u32[144,128]{1,0:T(1,128)}', space=vmem, size = 0x12000, scoped, tag = 'internal scratch']
  %s0 = inlined_call_operand.vmem [shape: f32[32,128], index: 0, kind: input, shape index: {}]
  %s1 = inlined_call_operand.vmem [shape: f32[1,8], index: 1, kind: input, shape index: {}]
  %s2 = inlined_call_operand.vmem [shape: f32[1,8], index: 2, kind: input, shape index: {}]
  %s3 = inlined_call_operand.vmem [shape: bf16[8,16], index: 3, kind: input, shape index: {}]
  %s4 = inlined_call_operand.vmem [shape: f32[32,256], index: 4, kind: output, shape index: {0}]
  %s5 = inlined_call_operand.vmem [shape: f32[1,2,16], index: 5, kind: output, shape index: {1}]
  %6 = xla_tuple %s4, %s5
  %s7 = sld [smem:[#allocation0]]
  $region34: #{_unnamed_function_.6} parent=0
    _
  %s9 = ssub.s32 1, %s7
  %s10 = scalar_select 0, %s9, %s7
  // Predicated region
  $region2: #{_unnamed_function_.6} parent=0 // pred_check
    _
  $region3: #{_unnamed_function_.6} parent=0 // pred_check_branch
    %12 = sbr.rel (0) target = $region5
  $region4: #{_unnamed_function_.6} parent=0 // pred_region
    _
  $region5: #{_unnamed_function_.6} parent=0 // pred_fallthru
    _
  // Predicated region
  $region6: #{_unnamed_function_.6} parent=0 // pred_check
    _
  $region7: #{_unnamed_function_.6} parent=0 // pred_check_branch
    %14 = sbr.rel (0) target = $region9
  $region8: #{_unnamed_function_.6} parent=0 // pred_region
    _
  $region9: #{_unnamed_function_.6} parent=0 // pred_fallthru
    _
  // Predicated region
  $region10: #{_unnamed_function_.6} parent=0 // pred_check
    _
  $region11: #{_unnamed_function_.6} parent=0 // pred_check_branch
    %16 = sbr.rel (0) target = $region13
  $region12: #{_unnamed_function_.6} parent=0 // pred_region
    _
  $region13: #{_unnamed_function_.6} parent=0 // pred_fallthru
    _
  // Predicated region
  $region14: #{_unnamed_function_.6} parent=0 // pred_check
    _
  $region15: #{_unnamed_function_.6} parent=0 // pred_check_branch
    %18 = sbr.rel (0) target = $region17
  $region16: #{_unnamed_function_.6} parent=0 // pred_region
    _
  $region17: #{_unnamed_function_.6} parent=0 // pred_fallthru
    _
  %v20 = vld [vmem:[%s0] sm:$0xff]
  %v21 = vld [vmem:[%s0 + $0x8] sm:$0xff]
  %v22 = vld [vmem:[%s0 + $0x10] sm:$0xff]
  %v23 = vld [vmem:[%s0 + $0x18] sm:$0xff]
  %28 = vrot.lane.b32.xlu0 %v20, 120
  %v29 = vpop.permute.xlu0 %28
  %30 = vrot.lane.b32.xlu0 %v21, 120
  %v31 = vpop.permute.xlu0 %30
  %32 = vrot.lane.b32.xlu0 %v22, 120
  %v33 = vpop.permute.xlu0 %32
  %34 = vrot.lane.b32.xlu0 %v23, 120
  %v35 = vpop.permute.xlu0 %34
  %40 = vrot.lane.b32.xlu0 %v20, 112
  %v41 = vpop.permute.xlu0 %40
  %42 = vrot.lane.b32.xlu0 %v21, 112
  %v43 = vpop.permute.xlu0 %42
  %44 = vrot.lane.b32.xlu0 %v22, 112
  %v45 = vpop.permute.xlu0 %44
  %46 = vrot.lane.b32.xlu0 %v23, 112
  %v47 = vpop.permute.xlu0 %46
  %52 = vrot.lane.b32.xlu0 %v20, 104
  %v53 = vpop.permute.xlu0 %52
  %54 = vrot.lane.b32.xlu0 %v21, 104
  %v55 = vpop.permute.xlu0 %54
  %56 = vrot.lane.b32.xlu0 %v22, 104
  %v57 = vpop.permute.xlu0 %56
  %58 = vrot.lane.b32.xlu0 %v23, 104
  %v59 = vpop.permute.xlu0 %58
  %64 = vrot.lane.b32.xlu0 %v20, 96
  %v65 = vpop.permute.xlu0 %64
  %66 = vrot.lane.b32.xlu0 %v21, 96
  %v67 = vpop.permute.xlu0 %66
  %68 = vrot.lane.b32.xlu0 %v22, 96
  %v69 = vpop.permute.xlu0 %68
  %70 = vrot.lane.b32.xlu0 %v23, 96
  %v71 = vpop.permute.xlu0 %70
  %76 = vrot.lane.b32.xlu0 %v20, 88
  %v77 = vpop.permute.xlu0 %76
  %78 = vrot.lane.b32.xlu0 %v21, 88
  %v79 = vpop.permute.xlu0 %78
  %80 = vrot.lane.b32.xlu0 %v22, 88
  %v81 = vpop.permute.xlu0 %80
  %82 = vrot.lane.b32.xlu0 %v23, 88
  %v83 = vpop.permute.xlu0 %82
  %88 = vrot.lane.b32.xlu0 %v20, 80
  %v89 = vpop.permute.xlu0 %88
  %90 = vrot.lane.b32.xlu0 %v21, 80
  %v91 = vpop.permute.xlu0 %90
  %92 = vrot.lane.b32.xlu0 %v22, 80
  %v93 = vpop.permute.xlu0 %92
  %94 = vrot.lane.b32.xlu0 %v23, 80
  %v95 = vpop.permute.xlu0 %94
  %100 = vrot.lane.b32.xlu0 %v20, 72
  %v101 = vpop.permute.xlu0 %100
  %102 = vrot.lane.b32.xlu0 %v21, 72
  %v103 = vpop.permute.xlu0 %102
  %104 = vrot.lane.b32.xlu0 %v22, 72
  %v105 = vpop.permute.xlu0 %104
  %106 = vrot.lane.b32.xlu0 %v23, 72
  %v107 = vpop.permute.xlu0 %106
  %112 = vrot.lane.b32.xlu0 %v20, 64
  %v113 = vpop.permute.xlu0 %112
  %114 = vrot.lane.b32.xlu0 %v21, 64
  %v115 = vpop.permute.xlu0 %114
  %116 = vrot.lane.b32.xlu0 %v22, 64
  %v117 = vpop.permute.xlu0 %116
  %118 = vrot.lane.b32.xlu0 %v23, 64
  %v119 = vpop.permute.xlu0 %118
  %124 = vrot.lane.b32.xlu0 %v20, 56
  %v125 = vpop.permute.xlu0 %124
  %126 = vrot.lane.b32.xlu0 %v21, 56
  %v127 = vpop.permute.xlu0 %126
  %128 = vrot.lane.b32.xlu0 %v22, 56
  %v129 = vpop.permute.xlu0 %128
  %130 = vrot.lane.b32.xlu0 %v23, 56
  %v131 = vpop.permute.xlu0 %130
  %136 = vrot.lane.b32.xlu0 %v20, 48
  %v137 = vpop.permute.xlu0 %136
  %138 = vrot.lane.b32.xlu0 %v21, 48
  %v139 = vpop.permute.xlu0 %138
  %140 = vrot.lane.b32.xlu0 %v22, 48
  %v141 = vpop.permute.xlu0 %140
  %142 = vrot.lane.b32.xlu0 %v23, 48
  %v143 = vpop.permute.xlu0 %142
  %148 = vrot.lane.b32.xlu0 %v20, 40
  %v149 = vpop.permute.xlu0 %148
  %150 = vrot.lane.b32.xlu0 %v21, 40
  %v151 = vpop.permute.xlu0 %150
  %152 = vrot.lane.b32.xlu0 %v22, 40
  %v153 = vpop.permute.xlu0 %152
  %154 = vrot.lane.b32.xlu0 %v23, 40
  %v155 = vpop.permute.xlu0 %154
  %160 = vrot.lane.b32.xlu0 %v20, 32
  %v161 = vpop.permute.xlu0 %160
  %162 = vrot.lane.b32.xlu0 %v21, 32
  %v163 = vpop.permute.xlu0 %162
  %164 = vrot.lane.b32.xlu0 %v22, 32
  %v165 = vpop.permute.xlu0 %164
  %166 = vrot.lane.b32.xlu0 %v23, 32
  %v167 = vpop.permute.xlu0 %166
  %172 = vrot.lane.b32.xlu0 %v20, 24
  %v173 = vpop.permute.xlu0 %172
  %174 = vrot.lane.b32.xlu0 %v21, 24
  %v175 = vpop.permute.xlu0 %174
  %176 = vrot.lane.b32.xlu0 %v22, 24
  %v177 = vpop.permute.xlu0 %176
  %178 = vrot.lane.b32.xlu0 %v23, 24
  %v179 = vpop.permute.xlu0 %178
  %184 = vrot.lane.b32.xlu0 %v20, 16
  %v185 = vpop.permute.xlu0 %184
  %186 = vrot.lane.b32.xlu0 %v21, 16
  %v187 = vpop.permute.xlu0 %186
  %188 = vrot.lane.b32.xlu0 %v22, 16
  %v189 = vpop.permute.xlu0 %188
  %190 = vrot.lane.b32.xlu0 %v23, 16
  %v191 = vpop.permute.xlu0 %190
  %196 = vrot.lane.b32.xlu0 %v20, 8
  %v197 = vpop.permute.xlu0 %196
  %198 = vrot.lane.b32.xlu0 %v21, 8
  %v199 = vpop.permute.xlu0 %198
  %200 = vrot.lane.b32.xlu0 %v22, 8
  %v201 = vpop.permute.xlu0 %200
  %202 = vrot.lane.b32.xlu0 %v23, 8
  %v203 = vpop.permute.xlu0 %202
  %v208 = vld [vmem:[%s1] sm:$0x1]
  %v210 = vlaneseq
  %v211 = vshrl.u32 %v210, 7
  %v212 = vsub.s32 0, %v211
  %v213 = vrot.slane %v208, %v212
  %v215 = vmul.f32 %v20, %v213
  %v216 = vmul.f32 %v21, %v213
  %v217 = vmul.f32 %v22, %v213
  %v218 = vmul.f32 %v23, %v213
  %v219 = vmul.f32 %v29, %v213
  %v220 = vmul.f32 %v31, %v213
  %v221 = vmul.f32 %v33, %v213
  %v222 = vmul.f32 %v35, %v213
  %v223 = vmul.f32 %v41, %v213
  %v224 = vmul.f32 %v43, %v213
  %v225 = vmul.f32 %v45, %v213
  %v226 = vmul.f32 %v47, %v213
  %v227 = vmul.f32 %v53, %v213
  %v228 = vmul.f32 %v55, %v213
  %v229 = vmul.f32 %v57, %v213
  %v230 = vmul.f32 %v59, %v213
  %v231 = vmul.f32 %v65, %v213
  %v232 = vmul.f32 %v67, %v213
  %v233 = vmul.f32 %v69, %v213
  %v234 = vmul.f32 %v71, %v213
  %v235 = vmul.f32 %v77, %v213
  %v236 = vmul.f32 %v79, %v213
  %v237 = vmul.f32 %v81, %v213
  %v238 = vmul.f32 %v83, %v213
  %v239 = vmul.f32 %v89, %v213
  %v240 = vmul.f32 %v91, %v213
  %v241 = vmul.f32 %v93, %v213
  %v242 = vmul.f32 %v95, %v213
  %v243 = vmul.f32 %v101, %v213
  %v244 = vmul.f32 %v103, %v213
  %v245 = vmul.f32 %v105, %v213
  %v246 = vmul.f32 %v107, %v213
  %v247 = vmul.f32 %v113, %v213
  %v248 = vmul.f32 %v115, %v213
  %v249 = vmul.f32 %v117, %v213
  %v250 = vmul.f32 %v119, %v213
  %v251 = vmul.f32 %v125, %v213
  %v252 = vmul.f32 %v127, %v213
  %v253 = vmul.f32 %v129, %v213
  %v254 = vmul.f32 %v131, %v213
  %v255 = vmul.f32 %v137, %v213
  %v256 = vmul.f32 %v139, %v213
  %v257 = vmul.f32 %v141, %v213
  %v258 = vmul.f32 %v143, %v213
  %v259 = vmul.f32 %v149, %v213
  %v260 = vmul.f32 %v151, %v213
  %v261 = vmul.f32 %v153, %v213
  %v262 = vmul.f32 %v155, %v213
  %v263 = vmul.f32 %v161, %v213
  %v264 = vmul.f32 %v163, %v213
  %v265 = vmul.f32 %v165, %v213
  %v266 = vmul.f32 %v167, %v213
  %v267 = vmul.f32 %v173, %v213
  %v268 = vmul.f32 %v175, %v213
  %v269 = vmul.f32 %v177, %v213
  %v270 = vmul.f32 %v179, %v213
  %v271 = vmul.f32 %v185, %v213
  %v272 = vmul.f32 %v187, %v213
  %v273 = vmul.f32 %v189, %v213
  %v274 = vmul.f32 %v191, %v213
  %v275 = vmul.f32 %v197, %v213
  %v276 = vmul.f32 %v199, %v213
  %v277 = vmul.f32 %v201, %v213
  %v278 = vmul.f32 %v203, %v213
  %v279 = vld [vmem:[%s2] sm:$0x1]
  %v281 = vlaneseq
  %v282 = vshrl.u32 %v281, 7
  %v283 = vsub.s32 0, %v282
  %v284 = vrot.slane %v279, %v283
  %v286 = vadd.f32 %v215, %v284
  %v287 = vadd.f32 %v216, %v284
  %v288 = vadd.f32 %v217, %v284
  %v289 = vadd.f32 %v218, %v284
  %v290 = vadd.f32 %v219, %v284
  %v291 = vadd.f32 %v220, %v284
  %v292 = vadd.f32 %v221, %v284
  %v293 = vadd.f32 %v222, %v284
  %v294 = vadd.f32 %v223, %v284
  %v295 = vadd.f32 %v224, %v284
  %v296 = vadd.f32 %v225, %v284
  %v297 = vadd.f32 %v226, %v284
  %v298 = vadd.f32 %v227, %v284
  %v299 = vadd.f32 %v228, %v284
  %v300 = vadd.f32 %v229, %v284
  %v301 = vadd.f32 %v230, %v284
  %v302 = vadd.f32 %v231, %v284
  %v303 = vadd.f32 %v232, %v284
  %v304 = vadd.f32 %v233, %v284
  %v305 = vadd.f32 %v234, %v284
  %v306 = vadd.f32 %v235, %v284
  %v307 = vadd.f32 %v236, %v284
  %v308 = vadd.f32 %v237, %v284
  %v309 = vadd.f32 %v238, %v284
  %v310 = vadd.f32 %v239, %v284
  %v311 = vadd.f32 %v240, %v284
  %v312 = vadd.f32 %v241, %v284
  %v313 = vadd.f32 %v242, %v284
  %v314 = vadd.f32 %v243, %v284
  %v315 = vadd.f32 %v244, %v284
  %v316 = vadd.f32 %v245, %v284
  %v317 = vadd.f32 %v246, %v284
  %v318 = vadd.f32 %v247, %v284
  %v319 = vadd.f32 %v248, %v284
  %v320 = vadd.f32 %v249, %v284
  %v321 = vadd.f32 %v250, %v284
  %v322 = vadd.f32 %v251, %v284
  %v323 = vadd.f32 %v252, %v284
  %v324 = vadd.f32 %v253, %v284
  %v325 = vadd.f32 %v254, %v284
  %v326 = vadd.f32 %v255, %v284
  %v327 = vadd.f32 %v256, %v284
  %v328 = vadd.f32 %v257, %v284
  %v329 = vadd.f32 %v258, %v284
  %v330 = vadd.f32 %v259, %v284
  %v331 = vadd.f32 %v260, %v284
  %v332 = vadd.f32 %v261, %v284
  %v333 = vadd.f32 %v262, %v284
  %v334 = vadd.f32 %v263, %v284
  %v335 = vadd.f32 %v264, %v284
  %v336 = vadd.f32 %v265, %v284
  %v337 = vadd.f32 %v266, %v284
  %v338 = vadd.f32 %v267, %v284
  %v339 = vadd.f32 %v268, %v284
  %v340 = vadd.f32 %v269, %v284
  %v341 = vadd.f32 %v270, %v284
  %v342 = vadd.f32 %v271, %v284
  %v343 = vadd.f32 %v272, %v284
  %v344 = vadd.f32 %v273, %v284
  %v345 = vadd.f32 %v274, %v284
  %v346 = vadd.f32 %v275, %v284
  %v347 = vadd.f32 %v276, %v284
  %v348 = vadd.f32 %v277, %v284
  %v349 = vadd.f32 %v278, %v284
  %v350 = vmax.f32 %v286, 0.0
  %v351 = vmax.f32 %v287, 0.0
  %v352 = vmax.f32 %v288, 0.0
  %v353 = vmax.f32 %v289, 0.0
  %v354 = vmax.f32 %v290, 0.0
  %v355 = vmax.f32 %v291, 0.0
  %v356 = vmax.f32 %v292, 0.0
  %v357 = vmax.f32 %v293, 0.0
  %v358 = vmax.f32 %v294, 0.0
  %v359 = vmax.f32 %v295, 0.0
  %v360 = vmax.f32 %v296, 0.0
  %v361 = vmax.f32 %v297, 0.0
  %v362 = vmax.f32 %v298, 0.0
  %v363 = vmax.f32 %v299, 0.0
  %v364 = vmax.f32 %v300, 0.0
  %v365 = vmax.f32 %v301, 0.0
  %v366 = vmax.f32 %v302, 0.0
  %v367 = vmax.f32 %v303, 0.0
  %v368 = vmax.f32 %v304, 0.0
  %v369 = vmax.f32 %v305, 0.0
  %v370 = vmax.f32 %v306, 0.0
  %v371 = vmax.f32 %v307, 0.0
  %v372 = vmax.f32 %v308, 0.0
  %v373 = vmax.f32 %v309, 0.0
  %v374 = vmax.f32 %v310, 0.0
  %v375 = vmax.f32 %v311, 0.0
  %v376 = vmax.f32 %v312, 0.0
  %v377 = vmax.f32 %v313, 0.0
  %v378 = vmax.f32 %v314, 0.0
  %v379 = vmax.f32 %v315, 0.0
  %v380 = vmax.f32 %v316, 0.0
  %v381 = vmax.f32 %v317, 0.0
  %v382 = vmax.f32 %v318, 0.0
  %v383 = vmax.f32 %v319, 0.0
  %v384 = vmax.f32 %v320, 0.0
  %v385 = vmax.f32 %v321, 0.0
  %v386 = vmax.f32 %v322, 0.0
  %v387 = vmax.f32 %v323, 0.0
  %v388 = vmax.f32 %v324, 0.0
  %v389 = vmax.f32 %v325, 0.0
  %v390 = vmax.f32 %v326, 0.0
  %v391 = vmax.f32 %v327, 0.0
  %v392 = vmax.f32 %v328, 0.0
  %v393 = vmax.f32 %v329, 0.0
  %v394 = vmax.f32 %v330, 0.0
  %v395 = vmax.f32 %v331, 0.0
  %v396 = vmax.f32 %v332, 0.0
  %v397 = vmax.f32 %v333, 0.0
  %v398 = vmax.f32 %v334, 0.0
  %v399 = vmax.f32 %v335, 0.0
  %v400 = vmax.f32 %v336, 0.0
  %v401 = vmax.f32 %v337, 0.0
  %v402 = vmax.f32 %v338, 0.0
  %v403 = vmax.f32 %v339, 0.0
  %v404 = vmax.f32 %v340, 0.0
  %v405 = vmax.f32 %v341, 0.0
  %v406 = vmax.f32 %v342, 0.0
  %v407 = vmax.f32 %v343, 0.0
  %v408 = vmax.f32 %v344, 0.0
  %v409 = vmax.f32 %v345, 0.0
  %v410 = vmax.f32 %v346, 0.0
  %v411 = vmax.f32 %v347, 0.0
  %v412 = vmax.f32 %v348, 0.0
  %v413 = vmax.f32 %v349, 0.0
  %v414 = vpack.c.bf16 %v351, %v350
  %v415 = vpack.c.bf16 %v353, %v352
  %v416 = vpack.c.bf16 %v355, %v354
  %v417 = vpack.c.bf16 %v357, %v356
  %v418 = vpack.c.bf16 %v359, %v358
  %v419 = vpack.c.bf16 %v361, %v360
  %v420 = vpack.c.bf16 %v363, %v362
  %v421 = vpack.c.bf16 %v365, %v364
  %v422 = vpack.c.bf16 %v367, %v366
  %v423 = vpack.c.bf16 %v369, %v368
  %v424 = vpack.c.bf16 %v371, %v370
  %v425 = vpack.c.bf16 %v373, %v372
  %v426 = vpack.c.bf16 %v375, %v374
  %v427 = vpack.c.bf16 %v377, %v376
  %v428 = vpack.c.bf16 %v379, %v378
  %v429 = vpack.c.bf16 %v381, %v380
  %v430 = vpack.c.bf16 %v383, %v382
  %v431 = vpack.c.bf16 %v385, %v384
  %v432 = vpack.c.bf16 %v387, %v386
  %v433 = vpack.c.bf16 %v389, %v388
  %v434 = vpack.c.bf16 %v391, %v390
  %v435 = vpack.c.bf16 %v393, %v392
  %v436 = vpack.c.bf16 %v395, %v394
  %v437 = vpack.c.bf16 %v397, %v396
  %v438 = vpack.c.bf16 %v399, %v398
  %v439 = vpack.c.bf16 %v401, %v400
  %v440 = vpack.c.bf16 %v403, %v402
  %v441 = vpack.c.bf16 %v405, %v404
  %v442 = vpack.c.bf16 %v407, %v406
  %v443 = vpack.c.bf16 %v409, %v408
  %v444 = vpack.c.bf16 %v411, %v410
  %v445 = vpack.c.bf16 %v413, %v412
  %v446 = vld [vmem:[%s3] sm:$0xf]
  %vm447 = vcmask 64512
  %v449 = vsel %vm447, %v414, 0
  %v452 = vsel %vm447, %v415, 0
  %v455 = vsel %vm447, %v416, 0
  %v458 = vsel %vm447, %v417, 0
  %v461 = vsel %vm447, %v418, 0
  %v464 = vsel %vm447, %v419, 0
  %v467 = vsel %vm447, %v420, 0
  %v470 = vsel %vm447, %v421, 0
  %v473 = vsel %vm447, %v422, 0
  %v476 = vsel %vm447, %v423, 0
  %v479 = vsel %vm447, %v424, 0
  %v482 = vsel %vm447, %v425, 0
  %v485 = vsel %vm447, %v426, 0
  %v488 = vsel %vm447, %v427, 0
  %v491 = vsel %vm447, %v428, 0
  %v494 = vsel %vm447, %v429, 0
  %v497 = vsel %vm447, %v430, 0
  %v500 = vsel %vm447, %v431, 0
  %v503 = vsel %vm447, %v432, 0
  %v506 = vsel %vm447, %v433, 0
  %v509 = vsel %vm447, %v434, 0
  %v512 = vsel %vm447, %v435, 0
  %v515 = vsel %vm447, %v436, 0
  %v518 = vsel %vm447, %v437, 0
  %v521 = vsel %vm447, %v438, 0
  %v524 = vsel %vm447, %v439, 0
  %v527 = vsel %vm447, %v440, 0
  %v530 = vsel %vm447, %v441, 0
  %v533 = vsel %vm447, %v442, 0
  %v536 = vsel %vm447, %v443, 0
  %v539 = vsel %vm447, %v444, 0
  %v542 = vsel %vm447, %v445, 0
  %vm544 = vcmask 1043456
  %v546 = vsel %vm544, %v446, 0
  %548 = vmatprep.subr.bf16.mxu0 0
  %549 = vmatpush1.bf16.msra.mxu0 0
  %550 = vmatprep.subr.bf16.mxu0 0
  %551 = vmatpush1.bf16.msra.mxu0 0
  %552 = vmatprep.subr.bf16.mxu0 0
  %553 = vmatpush1.bf16.msra.mxu0 0
  %554 = vmatprep.subr.bf16.mxu0 0
  %555 = vmatpush1.bf16.msra.mxu0 0
  %556 = vmatprep.subr.bf16.mxu0 0
  %557 = vmatpush1.bf16.msra.mxu0 0
  %558 = vmatprep.subr.bf16.mxu0 0
  %559 = vmatpush1.bf16.msra.mxu0 0
  %560 = vmatprep.subr.bf16.mxu0 0
  %561 = vmatpush1.bf16.msra.mxu0 0
  %562 = vmatprep.subr.bf16.mxu0 0
  %563 = vmatpush1.bf16.msra.mxu0 %v546
  %564 = vmatprep.subr.bf16.mxu0 0
  %565 = vmatpush2.bf16.msra.mxu0 0
  %566 = vmatprep.subr.bf16.mxu0 0
  %567 = vmatpush2.bf16.msra.mxu0 0
  %568 = vmatprep.subr.bf16.mxu0 0
  %569 = vmatpush2.bf16.msra.mxu0 0
  %570 = vmatprep.subr.bf16.mxu0 0
  %571 = vmatpush2.bf16.msra.mxu0 0
  %572 = vmatprep.subr.bf16.mxu0 0
  %573 = vmatpush2.bf16.msra.mxu0 0
  %574 = vmatprep.subr.bf16.mxu0 0
  %575 = vmatpush2.bf16.msra.mxu0 0
  %576 = vmatprep.subr.bf16.mxu0 0
  %577 = vmatpush2.bf16.msra.mxu0 0
  %578 = vmatprep.subr.bf16.mxu0 0
  %579 = vmatpush2.bf16.msra.mxu0 0
  %580 = vmatprep.mubr.bf16.mxu0 0
  %581 = vmatmul.mubr.bf16.gmra.mxu0 %v449
  %v582 = vpop.f32.mrf.mxu0
  %v583 = vadd.f32 0.0, %v582
  %v584 = vpop.f32.mrf.mxu0
  %v585 = vpop.f32.mrf.mxu0
  %v586 = vadd.f32 0.0, %v585
  %v587 = vpop.f32.mrf.mxu0
  %588 = vmatprep.mubr.bf16.mxu0 0
  %589 = vmatmul.mubr.bf16.gmra.mxu0 %v452
  %v590 = vpop.f32.mrf.mxu0
  %v591 = vadd.f32 0.0, %v590
  %v592 = vpop.f32.mrf.mxu0
  %v593 = vpop.f32.mrf.mxu0
  %v594 = vadd.f32 0.0, %v593
  %v595 = vpop.f32.mrf.mxu0
  %596 = vmatprep.mubr.bf16.mxu0 0
  %597 = vmatmul.mubr.bf16.gmra.mxu0 %v455
  %v598 = vpop.f32.mrf.mxu0
  %v599 = vadd.f32 0.0, %v598
  %v600 = vpop.f32.mrf.mxu0
  %v601 = vpop.f32.mrf.mxu0
  %v602 = vadd.f32 0.0, %v601
  %v603 = vpop.f32.mrf.mxu0
  %604 = vmatprep.mubr.bf16.mxu0 0
  %605 = vmatmul.mubr.bf16.gmra.mxu0 %v458
  %v606 = vpop.f32.mrf.mxu0
  %v607 = vadd.f32 0.0, %v606
  %v608 = vpop.f32.mrf.mxu0
  %v609 = vpop.f32.mrf.mxu0
  %v610 = vadd.f32 0.0, %v609
  %v611 = vpop.f32.mrf.mxu0
  %612 = vmatprep.mubr.bf16.mxu0 0
  %613 = vmatmul.mubr.bf16.gmra.mxu0 %v461
  %v614 = vpop.f32.mrf.mxu0
  %v615 = vadd.f32 0.0, %v614
  %v616 = vpop.f32.mrf.mxu0
  %v617 = vpop.f32.mrf.mxu0
  %v618 = vadd.f32 0.0, %v617
  %v619 = vpop.f32.mrf.mxu0
  %620 = vmatprep.mubr.bf16.mxu0 0
  %621 = vmatmul.mubr.bf16.gmra.mxu0 %v464
  %v622 = vpop.f32.mrf.mxu0
  %v623 = vadd.f32 0.0, %v622
  %v624 = vpop.f32.mrf.mxu0
  %v625 = vpop.f32.mrf.mxu0
  %v626 = vadd.f32 0.0, %v625
  %v627 = vpop.f32.mrf.mxu0
  %628 = vmatprep.mubr.bf16.mxu0 0
  %629 = vmatmul.mubr.bf16.gmra.mxu0 %v467
  %v630 = vpop.f32.mrf.mxu0
  %v631 = vadd.f32 0.0, %v630
  %v632 = vpop.f32.mrf.mxu0
  %v633 = vpop.f32.mrf.mxu0
  %v634 = vadd.f32 0.0, %v633
  %v635 = vpop.f32.mrf.mxu0
  %636 = vmatprep.mubr.bf16.mxu0 0
  %637 = vmatmul.mubr.bf16.gmra.mxu0 %v470
  %v638 = vpop.f32.mrf.mxu0
  %v639 = vadd.f32 0.0, %v638
  %v640 = vpop.f32.mrf.mxu0
  %v641 = vpop.f32.mrf.mxu0
  %v642 = vadd.f32 0.0, %v641
  %v643 = vpop.f32.mrf.mxu0
  %644 = vmatprep.mubr.bf16.mxu0 0
  %645 = vmatmul.mubr.bf16.gmra.mxu0 %v473
  %v646 = vpop.f32.mrf.mxu0
  %v647 = vadd.f32 0.0, %v646
  %v648 = vpop.f32.mrf.mxu0
  %v649 = vpop.f32.mrf.mxu0
  %v650 = vadd.f32 0.0, %v649
  %v651 = vpop.f32.mrf.mxu0
  %652 = vmatprep.mubr.bf16.mxu0 0
  %653 = vmatmul.mubr.bf16.gmra.mxu0 %v476
  %v654 = vpop.f32.mrf.mxu0
  %v655 = vadd.f32 0.0, %v654
  %v656 = vpop.f32.mrf.mxu0
  %v657 = vpop.f32.mrf.mxu0
  %v658 = vadd.f32 0.0, %v657
  %v659 = vpop.f32.mrf.mxu0
  %660 = vmatprep.mubr.bf16.mxu0 0
  %661 = vmatmul.mubr.bf16.gmra.mxu0 %v479
  %v662 = vpop.f32.mrf.mxu0
  %v663 = vadd.f32 0.0, %v662
  %v664 = vpop.f32.mrf.mxu0
  %v665 = vpop.f32.mrf.mxu0
  %v666 = vadd.f32 0.0, %v665
  %v667 = vpop.f32.mrf.mxu0
  %668 = vmatprep.mubr.bf16.mxu0 0
  %669 = vmatmul.mubr.bf16.gmra.mxu0 %v482
  %v670 = vpop.f32.mrf.mxu0
  %v671 = vadd.f32 0.0, %v670
  %v672 = vpop.f32.mrf.mxu0
  %v673 = vpop.f32.mrf.mxu0
  %v674 = vadd.f32 0.0, %v673
  %v675 = vpop.f32.mrf.mxu0
  %676 = vmatprep.mubr.bf16.mxu0 0
  %677 = vmatmul.mubr.bf16.gmra.mxu0 %v485
  %v678 = vpop.f32.mrf.mxu0
  %v679 = vadd.f32 0.0, %v678
  %v680 = vpop.f32.mrf.mxu0
  %v681 = vpop.f32.mrf.mxu0
  %v682 = vadd.f32 0.0, %v681
  %v683 = vpop.f32.mrf.mxu0
  %684 = vmatprep.mubr.bf16.mxu0 0
  %685 = vmatmul.mubr.bf16.gmra.mxu0 %v488
  %v686 = vpop.f32.mrf.mxu0
  %v687 = vadd.f32 0.0, %v686
  %v688 = vpop.f32.mrf.mxu0
  %v689 = vpop.f32.mrf.mxu0
  %v690 = vadd.f32 0.0, %v689
  %v691 = vpop.f32.mrf.mxu0
  %692 = vmatprep.mubr.bf16.mxu0 0
  %693 = vmatmul.mubr.bf16.gmra.mxu0 %v491
  %v694 = vpop.f32.mrf.mxu0
  %v695 = vadd.f32 0.0, %v694
  %v696 = vpop.f32.mrf.mxu0
  %v697 = vpop.f32.mrf.mxu0
  %v698 = vadd.f32 0.0, %v697
  %v699 = vpop.f32.mrf.mxu0
  %700 = vmatprep.mubr.bf16.mxu0 0
  %701 = vmatmul.mubr.bf16.gmra.mxu0 %v494
  %v702 = vpop.f32.mrf.mxu0
  %v703 = vadd.f32 0.0, %v702
  %v704 = vpop.f32.mrf.mxu0
  %v705 = vpop.f32.mrf.mxu0
  %v706 = vadd.f32 0.0, %v705
  %v707 = vpop.f32.mrf.mxu0
  %708 = vmatprep.mubr.bf16.mxu0 0
  %709 = vmatmul.mubr.bf16.gmra.mxu0 %v497
  %v710 = vpop.f32.mrf.mxu0
  %v711 = vadd.f32 0.0, %v710
  %v712 = vpop.f32.mrf.mxu0
  %v713 = vpop.f32.mrf.mxu0
  %v714 = vadd.f32 0.0, %v713
  %v715 = vpop.f32.mrf.mxu0
  %716 = vmatprep.mubr.bf16.mxu0 0
  %717 = vmatmul.mubr.bf16.gmra.mxu0 %v500
  %v718 = vpop.f32.mrf.mxu0
  %v719 = vadd.f32 0.0, %v718
  %v720 = vpop.f32.mrf.mxu0
  %v721 = vpop.f32.mrf.mxu0
  %v722 = vadd.f32 0.0, %v721
  %v723 = vpop.f32.mrf.mxu0
  %724 = vmatprep.mubr.bf16.mxu0 0
  %725 = vmatmul.mubr.bf16.gmra.mxu0 %v503
  %v726 = vpop.f32.mrf.mxu0
  %v727 = vadd.f32 0.0, %v726
  %v728 = vpop.f32.mrf.mxu0
  %v729 = vpop.f32.mrf.mxu0
  %v730 = vadd.f32 0.0, %v729
  %v731 = vpop.f32.mrf.mxu0
  %732 = vmatprep.mubr.bf16.mxu0 0
  %733 = vmatmul.mubr.bf16.gmra.mxu0 %v506
  %v734 = vpop.f32.mrf.mxu0
  %v735 = vadd.f32 0.0, %v734
  %v736 = vpop.f32.mrf.mxu0
  %v737 = vpop.f32.mrf.mxu0
  %v738 = vadd.f32 0.0, %v737
  %v739 = vpop.f32.mrf.mxu0
  %740 = vmatprep.mubr.bf16.mxu0 0
  %741 = vmatmul.mubr.bf16.gmra.mxu0 %v509
  %v742 = vpop.f32.mrf.mxu0
  %v743 = vadd.f32 0.0, %v742
  %v744 = vpop.f32.mrf.mxu0
  %v745 = vpop.f32.mrf.mxu0
  %v746 = vadd.f32 0.0, %v745
  %v747 = vpop.f32.mrf.mxu0
  %748 = vmatprep.mubr.bf16.mxu0 0
  %749 = vmatmul.mubr.bf16.gmra.mxu0 %v512
  %v750 = vpop.f32.mrf.mxu0
  %v751 = vadd.f32 0.0, %v750
  %v752 = vpop.f32.mrf.mxu0
  %v753 = vpop.f32.mrf.mxu0
  %v754 = vadd.f32 0.0, %v753
  %v755 = vpop.f32.mrf.mxu0
  %756 = vmatprep.mubr.bf16.mxu0 0
  %757 = vmatmul.mubr.bf16.gmra.mxu0 %v515
  %v758 = vpop.f32.mrf.mxu0
  %v759 = vadd.f32 0.0, %v758
  %v760 = vpop.f32.mrf.mxu0
  %v761 = vpop.f32.mrf.mxu0
  %v762 = vadd.f32 0.0, %v761
  %v763 = vpop.f32.mrf.mxu0
  %764 = vmatprep.mubr.bf16.mxu0 0
  %765 = vmatmul.mubr.bf16.gmra.mxu0 %v518
  %v766 = vpop.f32.mrf.mxu0
  %v767 = vadd.f32 0.0, %v766
  %v768 = vpop.f32.mrf.mxu0
  %v769 = vpop.f32.mrf.mxu0
  %v770 = vadd.f32 0.0, %v769
  %v771 = vpop.f32.mrf.mxu0
  %772 = vmatprep.mubr.bf16.mxu0 0
  %773 = vmatmul.mubr.bf16.gmra.mxu0 %v521
  %v774 = vpop.f32.mrf.mxu0
  %v775 = vadd.f32 0.0, %v774
  %v776 = vpop.f32.mrf.mxu0
  %v777 = vpop.f32.mrf.mxu0
  %v778 = vadd.f32 0.0, %v777
  %v779 = vpop.f32.mrf.mxu0
  %780 = vmatprep.mubr.bf16.mxu0 0
  %781 = vmatmul.mubr.bf16.gmra.mxu0 %v524
  %v782 = vpop.f32.mrf.mxu0
  %v783 = vadd.f32 0.0, %v782
  %v784 = vpop.f32.mrf.mxu0
  %v785 = vpop.f32.mrf.mxu0
  %v786 = vadd.f32 0.0, %v785
  %v787 = vpop.f32.mrf.mxu0
  %788 = vmatprep.mubr.bf16.mxu0 0
  %789 = vmatmul.mubr.bf16.gmra.mxu0 %v527
  %v790 = vpop.f32.mrf.mxu0
  %v791 = vadd.f32 0.0, %v790
  %v792 = vpop.f32.mrf.mxu0
  %v793 = vpop.f32.mrf.mxu0
  %v794 = vadd.f32 0.0, %v793
  %v795 = vpop.f32.mrf.mxu0
  %796 = vmatprep.mubr.bf16.mxu0 0
  %797 = vmatmul.mubr.bf16.gmra.mxu0 %v530
  %v798 = vpop.f32.mrf.mxu0
  %v799 = vadd.f32 0.0, %v798
  %v800 = vpop.f32.mrf.mxu0
  %v801 = vpop.f32.mrf.mxu0
  %v802 = vadd.f32 0.0, %v801
  %v803 = vpop.f32.mrf.mxu0
  %804 = vmatprep.mubr.bf16.mxu0 0
  %805 = vmatmul.mubr.bf16.gmra.mxu0 %v533
  %v806 = vpop.f32.mrf.mxu0
  %v807 = vadd.f32 0.0, %v806
  %v808 = vpop.f32.mrf.mxu0
  %v809 = vpop.f32.mrf.mxu0
  %v810 = vadd.f32 0.0, %v809
  %v811 = vpop.f32.mrf.mxu0
  %812 = vmatprep.mubr.bf16.mxu0 0
  %813 = vmatmul.mubr.bf16.gmra.mxu0 %v536
  %v814 = vpop.f32.mrf.mxu0
  %v815 = vadd.f32 0.0, %v814
  %v816 = vpop.f32.mrf.mxu0
  %v817 = vpop.f32.mrf.mxu0
  %v818 = vadd.f32 0.0, %v817
  %v819 = vpop.f32.mrf.mxu0
  %820 = vmatprep.mubr.bf16.mxu0 0
  %821 = vmatmul.mubr.bf16.gmra.mxu0 %v539
  %v822 = vpop.f32.mrf.mxu0
  %v823 = vadd.f32 0.0, %v822
  %v824 = vpop.f32.mrf.mxu0
  %v825 = vpop.f32.mrf.mxu0
  %v826 = vadd.f32 0.0, %v825
  %v827 = vpop.f32.mrf.mxu0
  %828 = vmatprep.mubr.bf16.mxu0 0
  %829 = vmatmul.mubr.bf16.gmra.mxu0 %v542
  %v830 = vpop.f32.mrf.mxu0
  %v831 = vadd.f32 0.0, %v830
  %v832 = vpop.f32.mrf.mxu0
  %v833 = vpop.f32.mrf.mxu0
  %v834 = vadd.f32 0.0, %v833
  %v835 = vpop.f32.mrf.mxu0
  %836 = vdwg.mxu0
  %841 = vrot.lane.b32.xlu0 %v599, 16
  %v842 = vpop.permute.xlu0 %841
  %843 = vrot.lane.b32.xlu0 %v602, 16
  %v844 = vpop.permute.xlu0 %843
  %845 = vrot.lane.b32.xlu0 %v607, 16
  %v846 = vpop.permute.xlu0 %845
  %847 = vrot.lane.b32.xlu0 %v610, 16
  %v848 = vpop.permute.xlu0 %847
  %857 = vrot.lane.b32.xlu0 %v615, 32
  %v858 = vpop.permute.xlu0 %857
  %859 = vrot.lane.b32.xlu0 %v618, 32
  %v860 = vpop.permute.xlu0 %859
  %861 = vrot.lane.b32.xlu0 %v623, 32
  %v862 = vpop.permute.xlu0 %861
  %863 = vrot.lane.b32.xlu0 %v626, 32
  %v864 = vpop.permute.xlu0 %863
  %873 = vrot.lane.b32.xlu0 %v631, 48
  %v874 = vpop.permute.xlu0 %873
  %875 = vrot.lane.b32.xlu0 %v634, 48
  %v876 = vpop.permute.xlu0 %875
  %877 = vrot.lane.b32.xlu0 %v639, 48
  %v878 = vpop.permute.xlu0 %877
  %879 = vrot.lane.b32.xlu0 %v642, 48
  %v880 = vpop.permute.xlu0 %879
  %889 = vrot.lane.b32.xlu0 %v647, 64
  %v890 = vpop.permute.xlu0 %889
  %891 = vrot.lane.b32.xlu0 %v650, 64
  %v892 = vpop.permute.xlu0 %891
  %893 = vrot.lane.b32.xlu0 %v655, 64
  %v894 = vpop.permute.xlu0 %893
  %895 = vrot.lane.b32.xlu0 %v658, 64
  %v896 = vpop.permute.xlu0 %895
  %905 = vrot.lane.b32.xlu0 %v663, 80
  %v906 = vpop.permute.xlu0 %905
  %907 = vrot.lane.b32.xlu0 %v666, 80
  %v908 = vpop.permute.xlu0 %907
  %909 = vrot.lane.b32.xlu0 %v671, 80
  %v910 = vpop.permute.xlu0 %909
  %911 = vrot.lane.b32.xlu0 %v674, 80
  %v912 = vpop.permute.xlu0 %911
  %921 = vrot.lane.b32.xlu0 %v679, 96
  %v922 = vpop.permute.xlu0 %921
  %923 = vrot.lane.b32.xlu0 %v682, 96
  %v924 = vpop.permute.xlu0 %923
  %925 = vrot.lane.b32.xlu0 %v687, 96
  %v926 = vpop.permute.xlu0 %925
  %927 = vrot.lane.b32.xlu0 %v690, 96
  %v928 = vpop.permute.xlu0 %927
  %937 = vrot.lane.b32.xlu0 %v695, 112
  %v938 = vpop.permute.xlu0 %937
  %939 = vrot.lane.b32.xlu0 %v698, 112
  %v940 = vpop.permute.xlu0 %939
  %941 = vrot.lane.b32.xlu0 %v703, 112
  %v942 = vpop.permute.xlu0 %941
  %943 = vrot.lane.b32.xlu0 %v706, 112
  %v944 = vpop.permute.xlu0 %943
  %953 = vrot.lane.b32.xlu0 %v727, 16
  %v954 = vpop.permute.xlu0 %953
  %955 = vrot.lane.b32.xlu0 %v730, 16
  %v956 = vpop.permute.xlu0 %955
  %957 = vrot.lane.b32.xlu0 %v735, 16
  %v958 = vpop.permute.xlu0 %957
  %959 = vrot.lane.b32.xlu0 %v738, 16
  %v960 = vpop.permute.xlu0 %959
  %969 = vrot.lane.b32.xlu0 %v743, 32
  %v970 = vpop.permute.xlu0 %969
  %971 = vrot.lane.b32.xlu0 %v746, 32
  %v972 = vpop.permute.xlu0 %971
  %973 = vrot.lane.b32.xlu0 %v751, 32
  %v974 = vpop.permute.xlu0 %973
  %975 = vrot.lane.b32.xlu0 %v754, 32
  %v976 = vpop.permute.xlu0 %975
  %985 = vrot.lane.b32.xlu0 %v759, 48
  %v986 = vpop.permute.xlu0 %985
  %987 = vrot.lane.b32.xlu0 %v762, 48
  %v988 = vpop.permute.xlu0 %987
  %989 = vrot.lane.b32.xlu0 %v767, 48
  %v990 = vpop.permute.xlu0 %989
  %991 = vrot.lane.b32.xlu0 %v770, 48
  %v992 = vpop.permute.xlu0 %991
  %1001 = vrot.lane.b32.xlu0 %v775, 64
  %v1002 = vpop.permute.xlu0 %1001
  %1003 = vrot.lane.b32.xlu0 %v778, 64
  %v1004 = vpop.permute.xlu0 %1003
  %1005 = vrot.lane.b32.xlu0 %v783, 64
  %v1006 = vpop.permute.xlu0 %1005
  %1007 = vrot.lane.b32.xlu0 %v786, 64
  %v1008 = vpop.permute.xlu0 %1007
  %1017 = vrot.lane.b32.xlu0 %v791, 80
  %v1018 = vpop.permute.xlu0 %1017
  %1019 = vrot.lane.b32.xlu0 %v794, 80
  %v1020 = vpop.permute.xlu0 %1019
  %1021 = vrot.lane.b32.xlu0 %v799, 80
  %v1022 = vpop.permute.xlu0 %1021
  %1023 = vrot.lane.b32.xlu0 %v802, 80
  %v1024 = vpop.permute.xlu0 %1023
  %1033 = vrot.lane.b32.xlu0 %v807, 96
  %v1034 = vpop.permute.xlu0 %1033
  %1035 = vrot.lane.b32.xlu0 %v810, 96
  %v1036 = vpop.permute.xlu0 %1035
  %1037 = vrot.lane.b32.xlu0 %v815, 96
  %v1038 = vpop.permute.xlu0 %1037
  %1039 = vrot.lane.b32.xlu0 %v818, 96
  %v1040 = vpop.permute.xlu0 %1039
  %1049 = vrot.lane.b32.xlu0 %v823, 112
  %v1050 = vpop.permute.xlu0 %1049
  %1051 = vrot.lane.b32.xlu0 %v826, 112
  %v1052 = vpop.permute.xlu0 %1051
  %1053 = vrot.lane.b32.xlu0 %v831, 112
  %v1054 = vpop.permute.xlu0 %1053
  %1055 = vrot.lane.b32.xlu0 %v834, 112
  %v1056 = vpop.permute.xlu0 %1055
  %vm1061 = vcmask 130048
  %v1062 = vsel %vm1061, %v583, %v842
  %v1063 = vsel %vm1061, %v586, %v844
  %v1064 = vsel %vm1061, %v591, %v846
  %v1065 = vsel %vm1061, %v594, %v848
  %vm1066 = vcmask 261120
  %v1067 = vsel %vm1066, %v1062, %v858
  %v1068 = vsel %vm1066, %v1063, %v860
  %v1069 = vsel %vm1066, %v1064, %v862
  %v1070 = vsel %vm1066, %v1065, %v864
  %vm1071 = vcmask 392192
  %v1072 = vsel %vm1071, %v1067, %v874
  %v1073 = vsel %vm1071, %v1068, %v876
  %v1074 = vsel %vm1071, %v1069, %v878
  %v1075 = vsel %vm1071, %v1070, %v880
  %vm1076 = vcmask 523264
  %v1077 = vsel %vm1076, %v1072, %v890
  %v1078 = vsel %vm1076, %v1073, %v892
  %v1079 = vsel %vm1076, %v1074, %v894
  %v1080 = vsel %vm1076, %v1075, %v896
  %vm1081 = vcmask 654336
  %v1082 = vsel %vm1081, %v1077, %v906
  %v1083 = vsel %vm1081, %v1078, %v908
  %v1084 = vsel %vm1081, %v1079, %v910
  %v1085 = vsel %vm1081, %v1080, %v912
  %vm1086 = vcmask 785408
  %v1087 = vsel %vm1086, %v1082, %v922
  %v1088 = vsel %vm1086, %v1083, %v924
  %v1089 = vsel %vm1086, %v1084, %v926
  %v1090 = vsel %vm1086, %v1085, %v928
  %vm1091 = vcmask 916480
  %v1092 = vsel %vm1091, %v1087, %v938
  %v1093 = vsel %vm1091, %v1088, %v940
  %v1094 = vsel %vm1091, %v1089, %v942
  %v1095 = vsel %vm1091, %v1090, %v944
  %v1096 = vsel %vm1061, %v711, %v954
  %v1097 = vsel %vm1061, %v714, %v956
  %v1098 = vsel %vm1061, %v719, %v958
  %v1099 = vsel %vm1061, %v722, %v960
  %v1100 = vsel %vm1066, %v1096, %v970
  %v1101 = vsel %vm1066, %v1097, %v972
  %v1102 = vsel %vm1066, %v1098, %v974
  %v1103 = vsel %vm1066, %v1099, %v976
  %v1104 = vsel %vm1071, %v1100, %v986
  %v1105 = vsel %vm1071, %v1101, %v988
  %v1106 = vsel %vm1071, %v1102, %v990
  %v1107 = vsel %vm1071, %v1103, %v992
  %v1108 = vsel %vm1076, %v1104, %v1002
  %v1109 = vsel %vm1076, %v1105, %v1004
  %v1110 = vsel %vm1076, %v1106, %v1006
  %v1111 = vsel %vm1076, %v1107, %v1008
  %v1112 = vsel %vm1081, %v1108, %v1018
  %v1113 = vsel %vm1081, %v1109, %v1020
  %v1114 = vsel %vm1081, %v1110, %v1022
  %v1115 = vsel %vm1081, %v1111, %v1024
  %v1116 = vsel %vm1086, %v1112, %v1034
  %v1117 = vsel %vm1086, %v1113, %v1036
  %v1118 = vsel %vm1086, %v1114, %v1038
  %v1119 = vsel %vm1086, %v1115, %v1040
  %v1120 = vsel %vm1091, %v1116, %v1050
  %v1121 = vsel %vm1091, %v1117, %v1052
  %v1122 = vsel %vm1091, %v1118, %v1054
  %v1123 = vsel %vm1091, %v1119, %v1056
  %1124 = vst [vmem:[%s4] sm:$0xff] %v1092
  %1125 = vst [vmem:[%s4 + $0x8] sm:$0xff] %v1120
  %1126 = vst [vmem:[%s4 + $0x10] sm:$0xff] %v1093
  %1127 = vst [vmem:[%s4 + $0x18] sm:$0xff] %v1121
  %1128 = vst [vmem:[%s4 + $0x20] sm:$0xff] %v1094
  %1129 = vst [vmem:[%s4 + $0x28] sm:$0xff] %v1122
  %1130 = vst [vmem:[%s4 + $0x30] sm:$0xff] %v1095
  %1131 = vst [vmem:[%s4 + $0x38] sm:$0xff] %v1123
  %v1132 = vsel %vm1061, %v583, 0.0
  %v1133 = vsel %vm1061, %v586, 0.0
  %v1134 = vadd.f32 %v1132, %v1133
  %v1135 = vsel %vm1061, %v591, 0.0
  %v1136 = vadd.f32 %v1134, %v1135
  %v1137 = vsel %vm1061, %v594, 0.0
  %v1138 = vadd.f32 %v1136, %v1137
  %v1139 = vsel %vm1061, %v599, 0.0
  %v1140 = vadd.f32 %v1138, %v1139
  %v1141 = vsel %vm1061, %v602, 0.0
  %v1142 = vadd.f32 %v1140, %v1141
  %v1143 = vsel %vm1061, %v607, 0.0
  %v1144 = vadd.f32 %v1142, %v1143
  %v1145 = vsel %vm1061, %v610, 0.0
  %v1146 = vadd.f32 %v1144, %v1145
  %v1147 = vsel %vm1061, %v615, 0.0
  %v1148 = vadd.f32 %v1146, %v1147
  %v1149 = vsel %vm1061, %v618, 0.0
  %v1150 = vadd.f32 %v1148, %v1149
  %v1151 = vsel %vm1061, %v623, 0.0
  %v1152 = vadd.f32 %v1150, %v1151
  %v1153 = vsel %vm1061, %v626, 0.0
  %v1154 = vadd.f32 %v1152, %v1153
  %v1155 = vsel %vm1061, %v631, 0.0
  %v1156 = vadd.f32 %v1154, %v1155
  %v1157 = vsel %vm1061, %v634, 0.0
  %v1158 = vadd.f32 %v1156, %v1157
  %v1159 = vsel %vm1061, %v639, 0.0
  %v1160 = vadd.f32 %v1158, %v1159
  %v1161 = vsel %vm1061, %v642, 0.0
  %v1162 = vadd.f32 %v1160, %v1161
  %v1163 = vsel %vm1061, %v647, 0.0
  %v1164 = vadd.f32 %v1162, %v1163
  %v1165 = vsel %vm1061, %v650, 0.0
  %v1166 = vadd.f32 %v1164, %v1165
  %v1167 = vsel %vm1061, %v655, 0.0
  %v1168 = vadd.f32 %v1166, %v1167
  %v1169 = vsel %vm1061, %v658, 0.0
  %v1170 = vadd.f32 %v1168, %v1169
  %v1171 = vsel %vm1061, %v663, 0.0
  %v1172 = vadd.f32 %v1170, %v1171
  %v1173 = vsel %vm1061, %v666, 0.0
  %v1174 = vadd.f32 %v1172, %v1173
  %v1175 = vsel %vm1061, %v671, 0.0
  %v1176 = vadd.f32 %v1174, %v1175
  %v1177 = vsel %vm1061, %v674, 0.0
  %v1178 = vadd.f32 %v1176, %v1177
  %v1179 = vsel %vm1061, %v679, 0.0
  %v1180 = vadd.f32 %v1178, %v1179
  %v1181 = vsel %vm1061, %v682, 0.0
  %v1182 = vadd.f32 %v1180, %v1181
  %v1183 = vsel %vm1061, %v687, 0.0
  %v1184 = vadd.f32 %v1182, %v1183
  %v1185 = vsel %vm1061, %v690, 0.0
  %v1186 = vadd.f32 %v1184, %v1185
  %v1187 = vsel %vm1061, %v695, 0.0
  %v1188 = vadd.f32 %v1186, %v1187
  %v1189 = vsel %vm1061, %v698, 0.0
  %v1190 = vadd.f32 %v1188, %v1189
  %v1191 = vsel %vm1061, %v703, 0.0
  %v1192 = vadd.f32 %v1190, %v1191
  %v1193 = vsel %vm1061, %v706, 0.0
  %v1194 = vadd.f32 %v1192, %v1193
  %v1195 = vsel %vm1061, %v711, 0.0
  %v1196 = vadd.f32 %v1194, %v1195
  %v1197 = vsel %vm1061, %v714, 0.0
  %v1198 = vadd.f32 %v1196, %v1197
  %v1199 = vsel %vm1061, %v719, 0.0
  %v1200 = vadd.f32 %v1198, %v1199
  %v1201 = vsel %vm1061, %v722, 0.0
  %v1202 = vadd.f32 %v1200, %v1201
  %v1203 = vsel %vm1061, %v727, 0.0
  %v1204 = vadd.f32 %v1202, %v1203
  %v1205 = vsel %vm1061, %v730, 0.0
  %v1206 = vadd.f32 %v1204, %v1205
  %v1207 = vsel %vm1061, %v735, 0.0
  %v1208 = vadd.f32 %v1206, %v1207
  %v1209 = vsel %vm1061, %v738, 0.0
  %v1210 = vadd.f32 %v1208, %v1209
  %v1211 = vsel %vm1061, %v743, 0.0
  %v1212 = vadd.f32 %v1210, %v1211
  %v1213 = vsel %vm1061, %v746, 0.0
  %v1214 = vadd.f32 %v1212, %v1213
  %v1215 = vsel %vm1061, %v751, 0.0
  %v1216 = vadd.f32 %v1214, %v1215
  %v1217 = vsel %vm1061, %v754, 0.0
  %v1218 = vadd.f32 %v1216, %v1217
  %v1219 = vsel %vm1061, %v759, 0.0
  %v1220 = vadd.f32 %v1218, %v1219
  %v1221 = vsel %vm1061, %v762, 0.0
  %v1222 = vadd.f32 %v1220, %v1221
  %v1223 = vsel %vm1061, %v767, 0.0
  %v1224 = vadd.f32 %v1222, %v1223
  %v1225 = vsel %vm1061, %v770, 0.0
  %v1226 = vadd.f32 %v1224, %v1225
  %v1227 = vsel %vm1061, %v775, 0.0
  %v1228 = vadd.f32 %v1226, %v1227
  %v1229 = vsel %vm1061, %v778, 0.0
  %v1230 = vadd.f32 %v1228, %v1229
  %v1231 = vsel %vm1061, %v783, 0.0
  %v1232 = vadd.f32 %v1230, %v1231
  %v1233 = vsel %vm1061, %v786, 0.0
  %v1234 = vadd.f32 %v1232, %v1233
  %v1235 = vsel %vm1061, %v791, 0.0
  %v1236 = vadd.f32 %v1234, %v1235
  %v1237 = vsel %vm1061, %v794, 0.0
  %v1238 = vadd.f32 %v1236, %v1237
  %v1239 = vsel %vm1061, %v799, 0.0
  %v1240 = vadd.f32 %v1238, %v1239
  %v1241 = vsel %vm1061, %v802, 0.0
  %v1242 = vadd.f32 %v1240, %v1241
  %v1243 = vsel %vm1061, %v807, 0.0
  %v1244 = vadd.f32 %v1242, %v1243
  %v1245 = vsel %vm1061, %v810, 0.0
  %v1246 = vadd.f32 %v1244, %v1245
  %v1247 = vsel %vm1061, %v815, 0.0
  %v1248 = vadd.f32 %v1246, %v1247
  %v1249 = vsel %vm1061, %v818, 0.0
  %v1250 = vadd.f32 %v1248, %v1249
  %v1251 = vsel %vm1061, %v823, 0.0
  %v1252 = vadd.f32 %v1250, %v1251
  %v1253 = vsel %vm1061, %v826, 0.0
  %v1254 = vadd.f32 %v1252, %v1253
  %v1255 = vsel %vm1061, %v831, 0.0
  %v1256 = vadd.f32 %v1254, %v1255
  %v1257 = vsel %vm1061, %v834, 0.0
  %v1258 = vadd.f32 %v1256, %v1257
  %v1259 = vrot.slane %v1258, 4
  %v1260 = vadd.f32 %v1258, %v1259
  %v1261 = vrot.slane %v1260, 2
  %v1262 = vadd.f32 %v1260, %v1261
  %v1263 = vrot.slane %v1262, 1
  %v1264 = vadd.f32 %v1262, %v1263
  %vm1265 = vcmask 122880
  %1266 = vst.msk [vmem:[%s5] sm:$0x1] %vm1265, %v1264
  %v1267 = vmul.f32 %v583, %v583
  %v1268 = vmul.f32 %v586, %v586
  %v1269 = vmul.f32 %v591, %v591
  %v1270 = vmul.f32 %v594, %v594
  %v1271 = vmul.f32 %v599, %v599
  %v1272 = vmul.f32 %v602, %v602
  %v1273 = vmul.f32 %v607, %v607
  %v1274 = vmul.f32 %v610, %v610
  %v1275 = vmul.f32 %v615, %v615
  %v1276 = vmul.f32 %v618, %v618
  %v1277 = vmul.f32 %v623, %v623
  %v1278 = vmul.f32 %v626, %v626
  %v1279 = vmul.f32 %v631, %v631
  %v1280 = vmul.f32 %v634, %v634
  %v1281 = vmul.f32 %v639, %v639
  %v1282 = vmul.f32 %v642, %v642
  %v1283 = vmul.f32 %v647, %v647
  %v1284 = vmul.f32 %v650, %v650
  %v1285 = vmul.f32 %v655, %v655
  %v1286 = vmul.f32 %v658, %v658
  %v1287 = vmul.f32 %v663, %v663
  %v1288 = vmul.f32 %v666, %v666
  %v1289 = vmul.f32 %v671, %v671
  %v1290 = vmul.f32 %v674, %v674
  %v1291 = vmul.f32 %v679, %v679
  %v1292 = vmul.f32 %v682, %v682
  %v1293 = vmul.f32 %v687, %v687
  %v1294 = vmul.f32 %v690, %v690
  %v1295 = vmul.f32 %v695, %v695
  %v1296 = vmul.f32 %v698, %v698
  %v1297 = vmul.f32 %v703, %v703
  %v1298 = vmul.f32 %v706, %v706
  %v1299 = vmul.f32 %v711, %v711
  %v1300 = vmul.f32 %v714, %v714
  %v1301 = vmul.f32 %v719, %v719
  %v1302 = vmul.f32 %v722, %v722
  %v1303 = vmul.f32 %v727, %v727
  %v1304 = vmul.f32 %v730, %v730
  %v1305 = vmul.f32 %v735, %v735
  %v1306 = vmul.f32 %v738, %v738
  %v1307 = vmul.f32 %v743, %v743
  %v1308 = vmul.f32 %v746, %v746
  %v1309 = vmul.f32 %v751, %v751
  %v1310 = vmul.f32 %v754, %v754
  %v1311 = vmul.f32 %v759, %v759
  %v1312 = vmul.f32 %v762, %v762
  %v1313 = vmul.f32 %v767, %v767
  %v1314 = vmul.f32 %v770, %v770
  %v1315 = vmul.f32 %v775, %v775
  %v1316 = vmul.f32 %v778, %v778
  %v1317 = vmul.f32 %v783, %v783
  %v1318 = vmul.f32 %v786, %v786
  %v1319 = vmul.f32 %v791, %v791
  %v1320 = vmul.f32 %v794, %v794
  %v1321 = vmul.f32 %v799, %v799
  %v1322 = vmul.f32 %v802, %v802
  %v1323 = vmul.f32 %v807, %v807
  %v1324 = vmul.f32 %v810, %v810
  %v1325 = vmul.f32 %v815, %v815
  %v1326 = vmul.f32 %v818, %v818
  %v1327 = vmul.f32 %v823, %v823
  %v1328 = vmul.f32 %v826, %v826
  %v1329 = vmul.f32 %v831, %v831
  %v1330 = vmul.f32 %v834, %v834
  %v1331 = vsel %vm1061, %v1267, 0.0
  %v1332 = vsel %vm1061, %v1268, 0.0
  %v1333 = vadd.f32 %v1331, %v1332
  %v1334 = vsel %vm1061, %v1269, 0.0
  %v1335 = vadd.f32 %v1333, %v1334
  %v1336 = vsel %vm1061, %v1270, 0.0
  %v1337 = vadd.f32 %v1335, %v1336
  %v1338 = vsel %vm1061, %v1271, 0.0
  %v1339 = vadd.f32 %v1337, %v1338
  %v1340 = vsel %vm1061, %v1272, 0.0
  %v1341 = vadd.f32 %v1339, %v1340
  %v1342 = vsel %vm1061, %v1273, 0.0
  %v1343 = vadd.f32 %v1341, %v1342
  %v1344 = vsel %vm1061, %v1274, 0.0
  %v1345 = vadd.f32 %v1343, %v1344
  %v1346 = vsel %vm1061, %v1275, 0.0
  %v1347 = vadd.f32 %v1345, %v1346
  %v1348 = vsel %vm1061, %v1276, 0.0
  %v1349 = vadd.f32 %v1347, %v1348
  %v1350 = vsel %vm1061, %v1277, 0.0
  %v1351 = vadd.f32 %v1349, %v1350
  %v1352 = vsel %vm1061, %v1278, 0.0
  %v1353 = vadd.f32 %v1351, %v1352
  %v1354 = vsel %vm1061, %v1279, 0.0
  %v1355 = vadd.f32 %v1353, %v1354
  %v1356 = vsel %vm1061, %v1280, 0.0
  %v1357 = vadd.f32 %v1355, %v1356
  %v1358 = vsel %vm1061, %v1281, 0.0
  %v1359 = vadd.f32 %v1357, %v1358
  %v1360 = vsel %vm1061, %v1282, 0.0
  %v1361 = vadd.f32 %v1359, %v1360
  %v1362 = vsel %vm1061, %v1283, 0.0
  %v1363 = vadd.f32 %v1361, %v1362
  %v1364 = vsel %vm1061, %v1284, 0.0
  %v1365 = vadd.f32 %v1363, %v1364
  %v1366 = vsel %vm1061, %v1285, 0.0
  %v1367 = vadd.f32 %v1365, %v1366
  %v1368 = vsel %vm1061, %v1286, 0.0
  %v1369 = vadd.f32 %v1367, %v1368
  %v1370 = vsel %vm1061, %v1287, 0.0
  %v1371 = vadd.f32 %v1369, %v1370
  %v1372 = vsel %vm1061, %v1288, 0.0
  %v1373 = vadd.f32 %v1371, %v1372
  %v1374 = vsel %vm1061, %v1289, 0.0
  %v1375 = vadd.f32 %v1373, %v1374
  %v1376 = vsel %vm1061, %v1290, 0.0
  %v1377 = vadd.f32 %v1375, %v1376
  %v1378 = vsel %vm1061, %v1291, 0.0
  %v1379 = vadd.f32 %v1377, %v1378
  %v1380 = vsel %vm1061, %v1292, 0.0
  %v1381 = vadd.f32 %v1379, %v1380
  %v1382 = vsel %vm1061, %v1293, 0.0
  %v1383 = vadd.f32 %v1381, %v1382
  %v1384 = vsel %vm1061, %v1294, 0.0
  %v1385 = vadd.f32 %v1383, %v1384
  %v1386 = vsel %vm1061, %v1295, 0.0
  %v1387 = vadd.f32 %v1385, %v1386
  %v1388 = vsel %vm1061, %v1296, 0.0
  %v1389 = vadd.f32 %v1387, %v1388
  %v1390 = vsel %vm1061, %v1297, 0.0
  %v1391 = vadd.f32 %v1389, %v1390
  %v1392 = vsel %vm1061, %v1298, 0.0
  %v1393 = vadd.f32 %v1391, %v1392
  %v1394 = vsel %vm1061, %v1299, 0.0
  %v1395 = vadd.f32 %v1393, %v1394
  %v1396 = vsel %vm1061, %v1300, 0.0
  %v1397 = vadd.f32 %v1395, %v1396
  %v1398 = vsel %vm1061, %v1301, 0.0
  %v1399 = vadd.f32 %v1397, %v1398
  %v1400 = vsel %vm1061, %v1302, 0.0
  %v1401 = vadd.f32 %v1399, %v1400
  %v1402 = vsel %vm1061, %v1303, 0.0
  %v1403 = vadd.f32 %v1401, %v1402
  %v1404 = vsel %vm1061, %v1304, 0.0
  %v1405 = vadd.f32 %v1403, %v1404
  %v1406 = vsel %vm1061, %v1305, 0.0
  %v1407 = vadd.f32 %v1405, %v1406
  %v1408 = vsel %vm1061, %v1306, 0.0
  %v1409 = vadd.f32 %v1407, %v1408
  %v1410 = vsel %vm1061, %v1307, 0.0
  %v1411 = vadd.f32 %v1409, %v1410
  %v1412 = vsel %vm1061, %v1308, 0.0
  %v1413 = vadd.f32 %v1411, %v1412
  %v1414 = vsel %vm1061, %v1309, 0.0
  %v1415 = vadd.f32 %v1413, %v1414
  %v1416 = vsel %vm1061, %v1310, 0.0
  %v1417 = vadd.f32 %v1415, %v1416
  %v1418 = vsel %vm1061, %v1311, 0.0
  %v1419 = vadd.f32 %v1417, %v1418
  %v1420 = vsel %vm1061, %v1312, 0.0
  %v1421 = vadd.f32 %v1419, %v1420
  %v1422 = vsel %vm1061, %v1313, 0.0
  %v1423 = vadd.f32 %v1421, %v1422
  %v1424 = vsel %vm1061, %v1314, 0.0
  %v1425 = vadd.f32 %v1423, %v1424
  %v1426 = vsel %vm1061, %v1315, 0.0
  %v1427 = vadd.f32 %v1425, %v1426
  %v1428 = vsel %vm1061, %v1316, 0.0
  %v1429 = vadd.f32 %v1427, %v1428
  %v1430 = vsel %vm1061, %v1317, 0.0
  %v1431 = vadd.f32 %v1429, %v1430
  %v1432 = vsel %vm1061, %v1318, 0.0
  %v1433 = vadd.f32 %v1431, %v1432
  %v1434 = vsel %vm1061, %v1319, 0.0
  %v1435 = vadd.f32 %v1433, %v1434
  %v1436 = vsel %vm1061, %v1320, 0.0
  %v1437 = vadd.f32 %v1435, %v1436
  %v1438 = vsel %vm1061, %v1321, 0.0
  %v1439 = vadd.f32 %v1437, %v1438
  %v1440 = vsel %vm1061, %v1322, 0.0
  %v1441 = vadd.f32 %v1439, %v1440
  %v1442 = vsel %vm1061, %v1323, 0.0
  %v1443 = vadd.f32 %v1441, %v1442
  %v1444 = vsel %vm1061, %v1324, 0.0
  %v1445 = vadd.f32 %v1443, %v1444
  %v1446 = vsel %vm1061, %v1325, 0.0
  %v1447 = vadd.f32 %v1445, %v1446
  %v1448 = vsel %vm1061, %v1326, 0.0
  %v1449 = vadd.f32 %v1447, %v1448
  %v1450 = vsel %vm1061, %v1327, 0.0
  %v1451 = vadd.f32 %v1449, %v1450
  %v1452 = vsel %vm1061, %v1328, 0.0
  %v1453 = vadd.f32 %v1451, %v1452
  %v1454 = vsel %vm1061, %v1329, 0.0
  %v1455 = vadd.f32 %v1453, %v1454
  %v1456 = vsel %vm1061, %v1330, 0.0
  %v1457 = vadd.f32 %v1455, %v1456
  %v1458 = vrot.slane %v1457, 4
  %v1459 = vadd.f32 %v1457, %v1458
  %v1460 = vrot.slane %v1459, 2
  %v1461 = vadd.f32 %v1459, %v1460
  %v1462 = vrot.slane %v1461, 1
  %v1463 = vadd.f32 %v1461, %v1462
  %1464 = vst.msk [vmem:[%s5 + $0x1] sm:$0x1] %vm1265, %v1463
  // Predicated region
  $region18: #{_unnamed_function_.6} parent=0 // pred_check
    _
  $region19: #{_unnamed_function_.6} parent=0 // pred_check_branch
    %1466 = sbr.rel (0) target = $region21
  $region20: #{_unnamed_function_.6} parent=0 // pred_region
    _
  $region21: #{_unnamed_function_.6} parent=0 // pred_fallthru
    _
  // Predicated region
  $region22: #{_unnamed_function_.6} parent=0 // pred_check
    _
  $region23: #{_unnamed_function_.6} parent=0 // pred_check_branch
    %1468 = sbr.rel (0) target = $region25
  $region24: #{_unnamed_function_.6} parent=0 // pred_region
    _
  $region25: #{_unnamed_function_.6} parent=0 // pred_fallthru
    _
  // Predicated region
  $region26: #{_unnamed_function_.6} parent=0 // pred_check
    _
  $region27: #{_unnamed_function_.6} parent=0 // pred_check_branch
    %1470 = sbr.rel (0) target = $region29
  $region28: #{_unnamed_function_.6} parent=0 // pred_region
    _
  $region29: #{_unnamed_function_.6} parent=0 // pred_fallthru
    _
  // Predicated region
  $region30: #{_unnamed_function_.6} parent=0 // pred_check
    _
  $region31: #{_unnamed_function_.6} parent=0 // pred_check_branch
    %1472 = sbr.rel (0) target = $region33
  $region32: #{_unnamed_function_.6} parent=0 // pred_region
    _
  $region33: #{_unnamed_function_.6} parent=0 // pred_fallthru
    _

</llo_original>
